<compile_context>
chip_gen: v6e
topology: v6e:2x2x1
jax: 0.10.0
libtpu: 0.0.40
codegen_flags: <defaults>
</compile_context>

<pallas_src>
import jax
import jax.numpy as jnp
from jax.experimental import pallas as pl
from jax.experimental.pallas import tpu as pltpu

# ----- fixed (small) problem sizes, consistent with ASPP(inc, midc, outc) -----
N = 2
INC = 128       # in channels
MIDC = 128      # mid channels
OUTC = 256      # out channels (tail=True)
H = W = 16      # spatial
HW = H * W
DILS = (6, 12)  # dilations whose off-center taps can land inside the image
DIL4 = 18       # branch-4 dilation: every off-center tap reads pure zero padding

# 3x3 kernel positions excluding the center, fixed order (must match weight packing)
OFF_TAPS = ((0, 0), (0, 1), (0, 2), (1, 0), (1, 2), (2, 0), (2, 1), (2, 2))

# W must be a power of two so the in-kernel (y, x) recovery is a shift/and
# (avoids vector integer div/mod, which is not a cheap/portable Mosaic op).
assert W & (W - 1) == 0, "W must be a power of two for the shift/and index math"
W_SHIFT = W.bit_length() - 1


def _aspp_kernel(x_ref,
                 w0_ref, b0_ref,
                 wc_ref, bc_ref,
                 woff_ref,
                 w6g_ref, w6r_ref, b6_ref,
                 out_ref):
    f32 = jnp.float32
    bf16 = jnp.bfloat16

    xc = x_ref[...]                                             # (HW, INC) bf16

    # flat-row -> (y, x) coordinates, used to mask out conv zero-padding taps
    r_idx = jax.lax.broadcasted_iota(jnp.int32, (HW, MIDC), 0)
    y_idx = jax.lax.shift_right_logical(r_idx, W_SHIFT)
    x_idx = jax.lax.bitwise_and(r_idx, W - 1)

    # ---- global branch: avg pool -> 1x1 conv -> ReLU -> fused layer6 row ----
    gmean = jnp.mean(xc.astype(f32), axis=0, keepdims=True)     # (1, INC) f32
    g = jnp.maximum(
        jnp.dot(gmean.astype(bf16), w0_ref[...], preferred_element_type=f32)
        + b0_ref[...], 0.0)                                     # (1, MIDC) f32
    out = jnp.dot(g.astype(bf16), w6g_ref[...],
                  preferred_element_type=f32) + b6_ref[...]     # (1, OUTC) f32

    # ---- center taps of branches 1..4 (branch 1 is a true 1x1 conv;
    #      branch 4 (d=18) is center-only because H,W <= 18) --------------------
    accs = [jnp.dot(xc, wc_ref[j], preferred_element_type=f32) + bc_ref[j]
            for j in range(4)]                                  # 4 x (HW, MIDC) f32

    # ---- off-center taps of the d=6 / d=12 branches: per-tap matmul, then
    #      shift-on-output via an XLU sublane roll + zero-padding validity mask.
    for acc_idx, d, base in ((1, DILS[0], 0), (2, DILS[1], len(OFF_TAPS))):
        acc = accs[acc_idx]
        for t, (ky, kx) in enumerate(OFF_TAPS):
            dy = (ky - 1) * d
            dx = (kx - 1) * d
            partial = jnp.dot(xc, woff_ref[base + t],
                              preferred_element_type=f32)       # (HW, MIDC) f32
            # out[r] needs partial[r + dy*W + dx]  ->  roll by -(dy*W + dx)
            shifted = pltpu.roll(partial, (-(dy * W + dx)) % HW, axis=0)
            conds = []
            if dy > 0:
                conds.append(y_idx < H - dy)
            elif dy < 0:
                conds.append(y_idx >= -dy)
            if dx > 0:
                conds.append(x_idx < W - dx)
            elif dx < 0:
                conds.append(x_idx >= -dx)
            mask = conds[0]
            for c in conds[1:]:
                mask = mask & c
            acc = acc + jnp.where(mask, shifted, 0.0)
        accs[acc_idx] = acc

    # ---- ReLU per branch + fused layer6 (1x1 conv over the 5-branch concat) ---
    for j in range(4):
        h = jnp.maximum(accs[j], 0.0).astype(bf16)
        out = out + jnp.dot(h, w6r_ref[j], preferred_element_type=f32)
    out_ref[...] = out                                           # (HW, OUTC) f32


def _const_spec(shape):
    rank = len(shape)
    return pl.BlockSpec(shape, lambda b, rank=rank: (0,) * rank)


def aspp_forward(x_nchw, params):
    """ASPP forward (inference). x_nchw: (N, INC, H, W) f32 -> (N, OUTC, H, W) f32."""
    bf16 = jnp.bfloat16
    f32 = jnp.float32

    # d=18 branch is treated as center-only: valid iff all off-center taps read
    # pure zero padding, i.e. H <= 18 and W <= 18 (padding == dilation == 18).
    assert H <= DIL4 and W <= DIL4, "d=18 center-only elimination needs H, W <= 18"

    x = jnp.transpose(x_nchw, (0, 2, 3, 1)).reshape(N, HW, INC).astype(bf16)

    # ---- repack PyTorch-layout weights (bf16 MXU operands, f32 biases) --------
    w0 = params["w0"][:, :, 0, 0].T.astype(bf16)                       # (INC, MIDC)
    # center taps of the four spatial branches, stacked on a leading axis
    wc = jnp.stack([params["w1"][:, :, 0, 0].T,
                    params["w2"][:, :, 1, 1].T,
                    params["w3"][:, :, 1, 1].T,
                    params["w4"][:, :, 1, 1].T], axis=0).astype(bf16)  # (4, INC, MIDC)
    bc = jnp.stack([params["b1"], params["b2"],
                    params["b3"], params["b4"]],
                   axis=0).reshape(4, 1, MIDC).astype(f32)             # (4, 1, MIDC)
    # off-center taps of the d=6 / d=12 branches, stacked per tap (OFF_TAPS order)
    woff = jnp.stack(
        [params["w2"][:, :, ky, kx].T for (ky, kx) in OFF_TAPS]
        + [params["w3"][:, :, ky, kx].T for (ky, kx) in OFF_TAPS],
        axis=0).astype(bf16)                                           # (16, INC, MIDC)
    # layer6: (OUTC, 5*MIDC, 1, 1) -> (5*MIDC, OUTC); split global vs branch rows
    w6_all = params["w6"][:, :, 0, 0].T
    w6g = w6_all[:MIDC].astype(bf16)                                   # (MIDC, OUTC)
    w6r = w6_all[MIDC:].reshape(4, MIDC, OUTC).astype(bf16)            # (4, MIDC, OUTC)

    b0 = params["b0"].reshape(1, MIDC).astype(f32)
    b6 = params["b6"].reshape(1, OUTC).astype(f32)

    out_flat = pl.pallas_call(
        _aspp_kernel,
        out_shape=jax.ShapeDtypeStruct((N, HW, OUTC), f32),
        grid=(N,),
        in_specs=[
            pl.BlockSpec((None, HW, INC), lambda b: (b, 0, 0)),   # x (per-batch tile)
            _const_spec((INC, MIDC)),                             # w0
            _const_spec((1, MIDC)),                               # b0
            _const_spec((4, INC, MIDC)),                          # center-tap weights
            _const_spec((4, 1, MIDC)),                            # branch biases
            _const_spec((2 * len(OFF_TAPS), INC, MIDC)),          # off-center taps
            _const_spec((MIDC, OUTC)),                            # w6 global rows
            _const_spec((4, MIDC, OUTC)),                         # w6 branch rows
            _const_spec((1, OUTC)),                               # b6
        ],
        out_specs=pl.BlockSpec((None, HW, OUTC), lambda b: (b, 0, 0)),
        compiler_params=pltpu.CompilerParams(
            dimension_semantics=("parallel",),     # batch -> both TCs on v7x
            vmem_limit_bytes=32 * 1024 * 1024,
        ),
    )(x, w0, b0, wc, bc, woff, w6g, w6r, b6)

    out = out_flat.reshape(N, H, W, OUTC)
    return jnp.transpose(out, (0, 3, 1, 2))                           # NHWC -> NCHW


# ----------------------------- pure-JAX reference -----------------------------
def _conv_ref(x, w, b, dilation=1, padding=0):
    out = jax.lax.conv_general_dilated(
        x, w, window_strides=(1, 1),
        padding=[(padding, padding), (padding, padding)],
        rhs_dilation=(dilation, dilation),
        dimension_numbers=("NCHW", "OIHW", "NCHW"),
        precision=jax.lax.Precision.HIGHEST)
    return out + b[None, :, None, None]


def aspp_reference(x, p):
    g = jnp.mean(x, axis=(2, 3), keepdims=True)
    g = jax.nn.relu(_conv_ref(g, p["w0"], p["b0"]))
    g = jnp.broadcast_to(g, (x.shape[0], g.shape[1], x.shape[2], x.shape[3]))
    a1 = jax.nn.relu(_conv_ref(x, p["w1"], p["b1"]))
    a2 = jax.nn.relu(_conv_ref(x, p["w2"], p["b2"], dilation=6, padding=6))
    a3 = jax.nn.relu(_conv_ref(x, p["w3"], p["b3"], dilation=12, padding=12))
    a4 = jax.nn.relu(_conv_ref(x, p["w4"], p["b4"], dilation=18, padding=18))
    cat = jnp.concatenate([g, a1, a2, a3, a4], axis=1)
    return _conv_ref(cat, p["w6"], p["b6"])


# ----------------------------------- main -------------------------------------
def _init_params(key):
    ks = jax.random.split(key, 12)

    def conv_w(k, o, i, kh, kw):
        fan_in = i * kh * kw
        return jax.random.normal(k, (o, i, kh, kw), jnp.float32) / jnp.sqrt(fan_in)

    def conv_b(k, o):
        return jax.random.normal(k, (o,), jnp.float32) * 0.05

    return {
        "w0": conv_w(ks[0], MIDC, INC, 1, 1), "b0": conv_b(ks[1], MIDC),
        "w1": conv_w(ks[2], MIDC, INC, 1, 1), "b1": conv_b(ks[3], MIDC),
        "w2": conv_w(ks[4], MIDC, INC, 3, 3), "b2": conv_b(ks[5], MIDC),
        "w3": conv_w(ks[6], MIDC, INC, 3, 3), "b3": conv_b(ks[7], MIDC),
        "w4": conv_w(ks[8], MIDC, INC, 3, 3), "b4": conv_b(ks[9], MIDC),
        "w6": conv_w(ks[10], OUTC, 5 * MIDC, 1, 1), "b6": conv_b(ks[11], OUTC),
    }


if __name__ == "__main__":
    key = jax.random.PRNGKey(0)
    kx, kp = jax.random.split(key)
    x = jax.random.normal(kx, (N, INC, H, W), jnp.float32)
    params = _init_params(kp)

    out = aspp_forward(x, params)
    out = jax.block_until_ready(out)
    assert out.shape == (N, OUTC, H, W), out.shape

    ref = jax.block_until_ready(aspp_reference(x, params))
    err = jnp.max(jnp.abs(out - ref))
    # tolerance covers bf16 MXU operands with f32 accumulation vs f32-HIGHEST reference
    assert jnp.isfinite(err) and err < 3e-2, f"max abs error {err}"

    print("KERNEL_OK")
</pallas_src>

<mosaic_0001>
module attributes {stable_mosaic.version = 11 : i64} {
  func.func @_aspp_kernel(%arg0: i32, %arg1: memref<1x256x128xbf16, #tpu.memory_space<vmem>>, %arg2: memref<128x128xbf16, #tpu.memory_space<vmem>>, %arg3: memref<1x128xf32, #tpu.memory_space<vmem>>, %arg4: memref<4x128x128xbf16, #tpu.memory_space<vmem>>, %arg5: memref<4x1x128xf32, #tpu.memory_space<vmem>>, %arg6: memref<16x128x128xbf16, #tpu.memory_space<vmem>>, %arg7: memref<128x256xbf16, #tpu.memory_space<vmem>>, %arg8: memref<4x128x256xbf16, #tpu.memory_space<vmem>>, %arg9: memref<1x256xf32, #tpu.memory_space<vmem>>, %arg10: memref<1x256x256xf32, #tpu.memory_space<vmem>>) attributes {dimension_semantics = [#tpu.dimension_semantics<parallel>], iteration_bounds = array<i64: 2>, scalar_prefetch = 0 : i64, scratch_operands = 0 : i64, tpu.core_type = #tpu.core_type<tc>, window_params = [{transform_indices = @transform_0, window_bounds = array<i64: 1, 256, 128>}, {pipeline_mode = #tpu.pipeline_mode<synchronous>, transform_indices = @transform_1, window_bounds = array<i64: 128, 128>}, {pipeline_mode = #tpu.pipeline_mode<synchronous>, transform_indices = @transform_2, window_bounds = array<i64: 1, 128>}, {pipeline_mode = #tpu.pipeline_mode<synchronous>, transform_indices = @transform_3, window_bounds = array<i64: 4, 128, 128>}, {pipeline_mode = #tpu.pipeline_mode<synchronous>, transform_indices = @transform_4, window_bounds = array<i64: 4, 1, 128>}, {pipeline_mode = #tpu.pipeline_mode<synchronous>, transform_indices = @transform_5, window_bounds = array<i64: 16, 128, 128>}, {pipeline_mode = #tpu.pipeline_mode<synchronous>, transform_indices = @transform_6, window_bounds = array<i64: 128, 256>}, {pipeline_mode = #tpu.pipeline_mode<synchronous>, transform_indices = @transform_7, window_bounds = array<i64: 4, 128, 256>}, {pipeline_mode = #tpu.pipeline_mode<synchronous>, transform_indices = @transform_8, window_bounds = array<i64: 1, 256>}, {transform_indices = @transform_9, window_bounds = array<i64: 1, 256, 256>}]} {
    %c0 = arith.constant 0 : index
    %c0_0 = arith.constant 0 : index
    %c0_1 = arith.constant 0 : index
    %0 = vector.load %arg1[%c0, %c0_0, %c0_1] : memref<1x256x128xbf16, #tpu.memory_space<vmem>>, vector<1x256x128xbf16>
    %1 = vector.shape_cast %0 : vector<1x256x128xbf16> to vector<256x128xbf16>
    %2 = tpu.iota {dimensions = array<i32: 0>} : vector<256x128xi32>
    %c4_i32 = arith.constant 4 : i32
    %3 = vector.broadcast %c4_i32 : i32 to vector<256x128xi32>
    %4 = arith.shrui %2, %3 : vector<256x128xi32>
    %c15_i32 = arith.constant 15 : i32
    %5 = vector.broadcast %c15_i32 : i32 to vector<256x128xi32>
    %6 = arith.andi %2, %5 : vector<256x128xi32>
    %7 = arith.extf %1 : vector<256x128xbf16> to vector<256x128xf32>
    %cst = arith.constant dense<0.000000e+00> : vector<128xf32>
    %8 = vector.multi_reduction <add>, %7, %cst [0] : vector<256x128xf32> to vector<128xf32>
    %9 = vector.shape_cast %8 : vector<128xf32> to vector<1x128xf32>
    %cst_2 = arith.constant 2.560000e+02 : f32
    %10 = vector.broadcast %cst_2 : f32 to vector<1x128xf32>
    %11 = arith.divf %9, %10 : vector<1x128xf32>
    %12 = arith.truncf %11 : vector<1x128xf32> to vector<1x128xbf16>
    %c0_3 = arith.constant 0 : index
    %c0_4 = arith.constant 0 : index
    %13 = vector.load %arg2[%c0_3, %c0_4] : memref<128x128xbf16, #tpu.memory_space<vmem>>, vector<128x128xbf16>
    %cst_5 = arith.constant dense<0.000000e+00> : vector<1x128xf32>
    %14 = tpu.matmul %12, %13, %cst_5 {dimension_numbers = #tpu.dot_dimension_numbers<[1], [0], [0], [1], [0, 0, 1, 1], [], []>} : vector<1x128xbf16>, vector<128x128xbf16>, vector<1x128xf32> -> vector<1x128xf32>
    %c0_6 = arith.constant 0 : index
    %c0_7 = arith.constant 0 : index
    %15 = vector.load %arg3[%c0_6, %c0_7] : memref<1x128xf32, #tpu.memory_space<vmem>>, vector<1x128xf32>
    %16 = arith.addf %14, %15 : vector<1x128xf32>
    %cst_8 = arith.constant 0.000000e+00 : f32
    %17 = vector.broadcast %cst_8 : f32 to vector<1x128xf32>
    %18 = arith.maximumf %16, %17 : vector<1x128xf32>
    %19 = arith.truncf %18 : vector<1x128xf32> to vector<1x128xbf16>
    %c0_9 = arith.constant 0 : index
    %c0_10 = arith.constant 0 : index
    %20 = vector.load %arg7[%c0_9, %c0_10] : memref<128x256xbf16, #tpu.memory_space<vmem>>, vector<128x256xbf16>
    %cst_11 = arith.constant dense<0.000000e+00> : vector<1x256xf32>
    %21 = tpu.matmul %19, %20, %cst_11 {dimension_numbers = #tpu.dot_dimension_numbers<[1], [0], [0], [1], [0, 0, 1, 1], [], []>} : vector<1x128xbf16>, vector<128x256xbf16>, vector<1x256xf32> -> vector<1x256xf32>
    %c0_12 = arith.constant 0 : index
    %c0_13 = arith.constant 0 : index
    %22 = vector.load %arg9[%c0_12, %c0_13] : memref<1x256xf32, #tpu.memory_space<vmem>>, vector<1x256xf32>
    %23 = arith.addf %21, %22 : vector<1x256xf32>
    %c0_14 = arith.constant 0 : index
    %c0_15 = arith.constant 0 : index
    %c0_16 = arith.constant 0 : index
    %24 = vector.load %arg4[%c0_14, %c0_15, %c0_16] : memref<4x128x128xbf16, #tpu.memory_space<vmem>>, vector<1x128x128xbf16>
    %25 = vector.shape_cast %24 : vector<1x128x128xbf16> to vector<128x128xbf16>
    %cst_17 = arith.constant dense<0.000000e+00> : vector<256x128xf32>
    %26 = tpu.matmul %1, %25, %cst_17 {dimension_numbers = #tpu.dot_dimension_numbers<[1], [0], [0], [1], [0, 0, 1, 1], [], []>} : vector<256x128xbf16>, vector<128x128xbf16>, vector<256x128xf32> -> vector<256x128xf32>
    %c0_18 = arith.constant 0 : index
    %c0_19 = arith.constant 0 : index
    %c0_20 = arith.constant 0 : index
    %27 = vector.load %arg5[%c0_18, %c0_19, %c0_20] : memref<4x1x128xf32, #tpu.memory_space<vmem>>, vector<1x1x128xf32>
    %28 = vector.shape_cast %27 : vector<1x1x128xf32> to vector<1x128xf32>
    %29 = vector.broadcast %28 : vector<1x128xf32> to vector<256x128xf32>
    %30 = arith.addf %26, %29 : vector<256x128xf32>
    %c1 = arith.constant 1 : index
    %c0_21 = arith.constant 0 : index
    %c0_22 = arith.constant 0 : index
    %31 = vector.load %arg4[%c1, %c0_21, %c0_22] : memref<4x128x128xbf16, #tpu.memory_space<vmem>>, vector<1x128x128xbf16>
    %32 = vector.shape_cast %31 : vector<1x128x128xbf16> to vector<128x128xbf16>
    %cst_23 = arith.constant dense<0.000000e+00> : vector<256x128xf32>
    %33 = tpu.matmul %1, %32, %cst_23 {dimension_numbers = #tpu.dot_dimension_numbers<[1], [0], [0], [1], [0, 0, 1, 1], [], []>} : vector<256x128xbf16>, vector<128x128xbf16>, vector<256x128xf32> -> vector<256x128xf32>
    %c1_24 = arith.constant 1 : index
    %c0_25 = arith.constant 0 : index
    %c0_26 = arith.constant 0 : index
    %34 = vector.load %arg5[%c1_24, %c0_25, %c0_26] : memref<4x1x128xf32, #tpu.memory_space<vmem>>, vector<1x1x128xf32>
    %35 = vector.shape_cast %34 : vector<1x1x128xf32> to vector<1x128xf32>
    %36 = vector.broadcast %35 : vector<1x128xf32> to vector<256x128xf32>
    %37 = arith.addf %33, %36 : vector<256x128xf32>
    %c2 = arith.constant 2 : index
    %c0_27 = arith.constant 0 : index
    %c0_28 = arith.constant 0 : index
    %38 = vector.load %arg4[%c2, %c0_27, %c0_28] : memref<4x128x128xbf16, #tpu.memory_space<vmem>>, vector<1x128x128xbf16>
    %39 = vector.shape_cast %38 : vector<1x128x128xbf16> to vector<128x128xbf16>
    %cst_29 = arith.constant dense<0.000000e+00> : vector<256x128xf32>
    %40 = tpu.matmul %1, %39, %cst_29 {dimension_numbers = #tpu.dot_dimension_numbers<[1], [0], [0], [1], [0, 0, 1, 1], [], []>} : vector<256x128xbf16>, vector<128x128xbf16>, vector<256x128xf32> -> vector<256x128xf32>
    %c2_30 = arith.constant 2 : index
    %c0_31 = arith.constant 0 : index
    %c0_32 = arith.constant 0 : index
    %41 = vector.load %arg5[%c2_30, %c0_31, %c0_32] : memref<4x1x128xf32, #tpu.memory_space<vmem>>, vector<1x1x128xf32>
    %42 = vector.shape_cast %41 : vector<1x1x128xf32> to vector<1x128xf32>
    %43 = vector.broadcast %42 : vector<1x128xf32> to vector<256x128xf32>
    %44 = arith.addf %40, %43 : vector<256x128xf32>
    %c3 = arith.constant 3 : index
    %c0_33 = arith.constant 0 : index
    %c0_34 = arith.constant 0 : index
    %45 = vector.load %arg4[%c3, %c0_33, %c0_34] : memref<4x128x128xbf16, #tpu.memory_space<vmem>>, vector<1x128x128xbf16>
    %46 = vector.shape_cast %45 : vector<1x128x128xbf16> to vector<128x128xbf16>
    %cst_35 = arith.constant dense<0.000000e+00> : vector<256x128xf32>
    %47 = tpu.matmul %1, %46, %cst_35 {dimension_numbers = #tpu.dot_dimension_numbers<[1], [0], [0], [1], [0, 0, 1, 1], [], []>} : vector<256x128xbf16>, vector<128x128xbf16>, vector<256x128xf32> -> vector<256x128xf32>
    %c3_36 = arith.constant 3 : index
    %c0_37 = arith.constant 0 : index
    %c0_38 = arith.constant 0 : index
    %48 = vector.load %arg5[%c3_36, %c0_37, %c0_38] : memref<4x1x128xf32, #tpu.memory_space<vmem>>, vector<1x1x128xf32>
    %49 = vector.shape_cast %48 : vector<1x1x128xf32> to vector<1x128xf32>
    %50 = vector.broadcast %49 : vector<1x128xf32> to vector<256x128xf32>
    %51 = arith.addf %47, %50 : vector<256x128xf32>
    %c0_39 = arith.constant 0 : index
    %c0_40 = arith.constant 0 : index
    %c0_41 = arith.constant 0 : index
    %52 = vector.load %arg6[%c0_39, %c0_40, %c0_41] : memref<16x128x128xbf16, #tpu.memory_space<vmem>>, vector<1x128x128xbf16>
    %53 = vector.shape_cast %52 : vector<1x128x128xbf16> to vector<128x128xbf16>
    %cst_42 = arith.constant dense<0.000000e+00> : vector<256x128xf32>
    %54 = tpu.matmul %1, %53, %cst_42 {dimension_numbers = #tpu.dot_dimension_numbers<[1], [0], [0], [1], [0, 0, 1, 1], [], []>} : vector<256x128xbf16>, vector<128x128xbf16>, vector<256x128xf32> -> vector<256x128xf32>
    %c102_i32 = arith.constant 102 : i32
    %55 = tpu.dynamic_rotate %54 by %c102_i32 dim 0 : vector<256x128xf32>, i32 -> vector<256x128xf32>
    %c6_i32 = arith.constant 6 : i32
    %56 = vector.broadcast %c6_i32 : i32 to vector<256x128xi32>
    %57 = arith.cmpi sge, %4, %56 : vector<256x128xi32>
    %c6_i32_43 = arith.constant 6 : i32
    %58 = vector.broadcast %c6_i32_43 : i32 to vector<256x128xi32>
    %59 = arith.cmpi sge, %6, %58 : vector<256x128xi32>
    %60 = arith.andi %57, %59 : vector<256x128xi1>
    %cst_44 = arith.constant 0.000000e+00 : f32
    %61 = vector.broadcast %cst_44 : f32 to vector<256x128xf32>
    %62 = arith.select %60, %55, %61 : vector<256x128xi1>, vector<256x128xf32>
    %63 = arith.addf %37, %62 : vector<256x128xf32>
    %c1_45 = arith.constant 1 : index
    %c0_46 = arith.constant 0 : index
    %c0_47 = arith.constant 0 : index
    %64 = vector.load %arg6[%c1_45, %c0_46, %c0_47] : memref<16x128x128xbf16, #tpu.memory_space<vmem>>, vector<1x128x128xbf16>
    %65 = vector.shape_cast %64 : vector<1x128x128xbf16> to vector<128x128xbf16>
    %cst_48 = arith.constant dense<0.000000e+00> : vector<256x128xf32>
    %66 = tpu.matmul %1, %65, %cst_48 {dimension_numbers = #tpu.dot_dimension_numbers<[1], [0], [0], [1], [0, 0, 1, 1], [], []>} : vector<256x128xbf16>, vector<128x128xbf16>, vector<256x128xf32> -> vector<256x128xf32>
    %c96_i32 = arith.constant 96 : i32
    %67 = tpu.dynamic_rotate %66 by %c96_i32 dim 0 : vector<256x128xf32>, i32 -> vector<256x128xf32>
    %c6_i32_49 = arith.constant 6 : i32
    %68 = vector.broadcast %c6_i32_49 : i32 to vector<256x128xi32>
    %69 = arith.cmpi sge, %4, %68 : vector<256x128xi32>
    %cst_50 = arith.constant 0.000000e+00 : f32
    %70 = vector.broadcast %cst_50 : f32 to vector<256x128xf32>
    %71 = arith.select %69, %67, %70 : vector<256x128xi1>, vector<256x128xf32>
    %72 = arith.addf %63, %71 : vector<256x128xf32>
    %c2_51 = arith.constant 2 : index
    %c0_52 = arith.constant 0 : index
    %c0_53 = arith.constant 0 : index
    %73 = vector.load %arg6[%c2_51, %c0_52, %c0_53] : memref<16x128x128xbf16, #tpu.memory_space<vmem>>, vector<1x128x128xbf16>
    %74 = vector.shape_cast %73 : vector<1x128x128xbf16> to vector<128x128xbf16>
    %cst_54 = arith.constant dense<0.000000e+00> : vector<256x128xf32>
    %75 = tpu.matmul %1, %74, %cst_54 {dimension_numbers = #tpu.dot_dimension_numbers<[1], [0], [0], [1], [0, 0, 1, 1], [], []>} : vector<256x128xbf16>, vector<128x128xbf16>, vector<256x128xf32> -> vector<256x128xf32>
    %c90_i32 = arith.constant 90 : i32
    %76 = tpu.dynamic_rotate %75 by %c90_i32 dim 0 : vector<256x128xf32>, i32 -> vector<256x128xf32>
    %c6_i32_55 = arith.constant 6 : i32
    %77 = vector.broadcast %c6_i32_55 : i32 to vector<256x128xi32>
    %78 = arith.cmpi sge, %4, %77 : vector<256x128xi32>
    %c10_i32 = arith.constant 10 : i32
    %79 = vector.broadcast %c10_i32 : i32 to vector<256x128xi32>
    %80 = arith.cmpi slt, %6, %79 : vector<256x128xi32>
    %81 = arith.andi %78, %80 : vector<256x128xi1>
    %cst_56 = arith.constant 0.000000e+00 : f32
    %82 = vector.broadcast %cst_56 : f32 to vector<256x128xf32>
    %83 = arith.select %81, %76, %82 : vector<256x128xi1>, vector<256x128xf32>
    %84 = arith.addf %72, %83 : vector<256x128xf32>
    %c3_57 = arith.constant 3 : index
    %c0_58 = arith.constant 0 : index
    %c0_59 = arith.constant 0 : index
    %85 = vector.load %arg6[%c3_57, %c0_58, %c0_59] : memref<16x128x128xbf16, #tpu.memory_space<vmem>>, vector<1x128x128xbf16>
    %86 = vector.shape_cast %85 : vector<1x128x128xbf16> to vector<128x128xbf16>
    %cst_60 = arith.constant dense<0.000000e+00> : vector<256x128xf32>
    %87 = tpu.matmul %1, %86, %cst_60 {dimension_numbers = #tpu.dot_dimension_numbers<[1], [0], [0], [1], [0, 0, 1, 1], [], []>} : vector<256x128xbf16>, vector<128x128xbf16>, vector<256x128xf32> -> vector<256x128xf32>
    %c6_i32_61 = arith.constant 6 : i32
    %88 = tpu.dynamic_rotate %87 by %c6_i32_61 dim 0 : vector<256x128xf32>, i32 -> vector<256x128xf32>
    %c6_i32_62 = arith.constant 6 : i32
    %89 = vector.broadcast %c6_i32_62 : i32 to vector<256x128xi32>
    %90 = arith.cmpi sge, %6, %89 : vector<256x128xi32>
    %cst_63 = arith.constant 0.000000e+00 : f32
    %91 = vector.broadcast %cst_63 : f32 to vector<256x128xf32>
    %92 = arith.select %90, %88, %91 : vector<256x128xi1>, vector<256x128xf32>
    %93 = arith.addf %84, %92 : vector<256x128xf32>
    %c4 = arith.constant 4 : index
    %c0_64 = arith.constant 0 : index
    %c0_65 = arith.constant 0 : index
    %94 = vector.load %arg6[%c4, %c0_64, %c0_65] : memref<16x128x128xbf16, #tpu.memory_space<vmem>>, vector<1x128x128xbf16>
    %95 = vector.shape_cast %94 : vector<1x128x128xbf16> to vector<128x128xbf16>
    %cst_66 = arith.constant dense<0.000000e+00> : vector<256x128xf32>
    %96 = tpu.matmul %1, %95, %cst_66 {dimension_numbers = #tpu.dot_dimension_numbers<[1], [0], [0], [1], [0, 0, 1, 1], [], []>} : vector<256x128xbf16>, vector<128x128xbf16>, vector<256x128xf32> -> vector<256x128xf32>
    %c250_i32 = arith.constant 250 : i32
    %97 = tpu.dynamic_rotate %96 by %c250_i32 dim 0 : vector<256x128xf32>, i32 -> vector<256x128xf32>
    %c10_i32_67 = arith.constant 10 : i32
    %98 = vector.broadcast %c10_i32_67 : i32 to vector<256x128xi32>
    %99 = arith.cmpi slt, %6, %98 : vector<256x128xi32>
    %cst_68 = arith.constant 0.000000e+00 : f32
    %100 = vector.broadcast %cst_68 : f32 to vector<256x128xf32>
    %101 = arith.select %99, %97, %100 : vector<256x128xi1>, vector<256x128xf32>
    %102 = arith.addf %93, %101 : vector<256x128xf32>
    %c5 = arith.constant 5 : index
    %c0_69 = arith.constant 0 : index
    %c0_70 = arith.constant 0 : index
    %103 = vector.load %arg6[%c5, %c0_69, %c0_70] : memref<16x128x128xbf16, #tpu.memory_space<vmem>>, vector<1x128x128xbf16>
    %104 = vector.shape_cast %103 : vector<1x128x128xbf16> to vector<128x128xbf16>
    %cst_71 = arith.constant dense<0.000000e+00> : vector<256x128xf32>
    %105 = tpu.matmul %1, %104, %cst_71 {dimension_numbers = #tpu.dot_dimension_numbers<[1], [0], [0], [1], [0, 0, 1, 1], [], []>} : vector<256x128xbf16>, vector<128x128xbf16>, vector<256x128xf32> -> vector<256x128xf32>
    %c166_i32 = arith.constant 166 : i32
    %106 = tpu.dynamic_rotate %105 by %c166_i32 dim 0 : vector<256x128xf32>, i32 -> vector<256x128xf32>
    %c10_i32_72 = arith.constant 10 : i32
    %107 = vector.broadcast %c10_i32_72 : i32 to vector<256x128xi32>
    %108 = arith.cmpi slt, %4, %107 : vector<256x128xi32>
    %c6_i32_73 = arith.constant 6 : i32
    %109 = vector.broadcast %c6_i32_73 : i32 to vector<256x128xi32>
    %110 = arith.cmpi sge, %6, %109 : vector<256x128xi32>
    %111 = arith.andi %108, %110 : vector<256x128xi1>
    %cst_74 = arith.constant 0.000000e+00 : f32
    %112 = vector.broadcast %cst_74 : f32 to vector<256x128xf32>
    %113 = arith.select %111, %106, %112 : vector<256x128xi1>, vector<256x128xf32>
    %114 = arith.addf %102, %113 : vector<256x128xf32>
    %c6 = arith.constant 6 : index
    %c0_75 = arith.constant 0 : index
    %c0_76 = arith.constant 0 : index
    %115 = vector.load %arg6[%c6, %c0_75, %c0_76] : memref<16x128x128xbf16, #tpu.memory_space<vmem>>, vector<1x128x128xbf16>
    %116 = vector.shape_cast %115 : vector<1x128x128xbf16> to vector<128x128xbf16>
    %cst_77 = arith.constant dense<0.000000e+00> : vector<256x128xf32>
    %117 = tpu.matmul %1, %116, %cst_77 {dimension_numbers = #tpu.dot_dimension_numbers<[1], [0], [0], [1], [0, 0, 1, 1], [], []>} : vector<256x128xbf16>, vector<128x128xbf16>, vector<256x128xf32> -> vector<256x128xf32>
    %c160_i32 = arith.constant 160 : i32
    %118 = tpu.dynamic_rotate %117 by %c160_i32 dim 0 : vector<256x128xf32>, i32 -> vector<256x128xf32>
    %c10_i32_78 = arith.constant 10 : i32
    %119 = vector.broadcast %c10_i32_78 : i32 to vector<256x128xi32>
    %120 = arith.cmpi slt, %4, %119 : vector<256x128xi32>
    %cst_79 = arith.constant 0.000000e+00 : f32
    %121 = vector.broadcast %cst_79 : f32 to vector<256x128xf32>
    %122 = arith.select %120, %118, %121 : vector<256x128xi1>, vector<256x128xf32>
    %123 = arith.addf %114, %122 : vector<256x128xf32>
    %c7 = arith.constant 7 : index
    %c0_80 = arith.constant 0 : index
    %c0_81 = arith.constant 0 : index
    %124 = vector.load %arg6[%c7, %c0_80, %c0_81] : memref<16x128x128xbf16, #tpu.memory_space<vmem>>, vector<1x128x128xbf16>
    %125 = vector.shape_cast %124 : vector<1x128x128xbf16> to vector<128x128xbf16>
    %cst_82 = arith.constant dense<0.000000e+00> : vector<256x128xf32>
    %126 = tpu.matmul %1, %125, %cst_82 {dimension_numbers = #tpu.dot_dimension_numbers<[1], [0], [0], [1], [0, 0, 1, 1], [], []>} : vector<256x128xbf16>, vector<128x128xbf16>, vector<256x128xf32> -> vector<256x128xf32>
    %c154_i32 = arith.constant 154 : i32
    %127 = tpu.dynamic_rotate %126 by %c154_i32 dim 0 : vector<256x128xf32>, i32 -> vector<256x128xf32>
    %c10_i32_83 = arith.constant 10 : i32
    %128 = vector.broadcast %c10_i32_83 : i32 to vector<256x128xi32>
    %129 = arith.cmpi slt, %4, %128 : vector<256x128xi32>
    %c10_i32_84 = arith.constant 10 : i32
    %130 = vector.broadcast %c10_i32_84 : i32 to vector<256x128xi32>
    %131 = arith.cmpi slt, %6, %130 : vector<256x128xi32>
    %132 = arith.andi %129, %131 : vector<256x128xi1>
    %cst_85 = arith.constant 0.000000e+00 : f32
    %133 = vector.broadcast %cst_85 : f32 to vector<256x128xf32>
    %134 = arith.select %132, %127, %133 : vector<256x128xi1>, vector<256x128xf32>
    %135 = arith.addf %123, %134 : vector<256x128xf32>
    %c8 = arith.constant 8 : index
    %c0_86 = arith.constant 0 : index
    %c0_87 = arith.constant 0 : index
    %136 = vector.load %arg6[%c8, %c0_86, %c0_87] : memref<16x128x128xbf16, #tpu.memory_space<vmem>>, vector<1x128x128xbf16>
    %137 = vector.shape_cast %136 : vector<1x128x128xbf16> to vector<128x128xbf16>
    %cst_88 = arith.constant dense<0.000000e+00> : vector<256x128xf32>
    %138 = tpu.matmul %1, %137, %cst_88 {dimension_numbers = #tpu.dot_dimension_numbers<[1], [0], [0], [1], [0, 0, 1, 1], [], []>} : vector<256x128xbf16>, vector<128x128xbf16>, vector<256x128xf32> -> vector<256x128xf32>
    %c204_i32 = arith.constant 204 : i32
    %139 = tpu.dynamic_rotate %138 by %c204_i32 dim 0 : vector<256x128xf32>, i32 -> vector<256x128xf32>
    %c12_i32 = arith.constant 12 : i32
    %140 = vector.broadcast %c12_i32 : i32 to vector<256x128xi32>
    %141 = arith.cmpi sge, %4, %140 : vector<256x128xi32>
    %c12_i32_89 = arith.constant 12 : i32
    %142 = vector.broadcast %c12_i32_89 : i32 to vector<256x128xi32>
    %143 = arith.cmpi sge, %6, %142 : vector<256x128xi32>
    %144 = arith.andi %141, %143 : vector<256x128xi1>
    %cst_90 = arith.constant 0.000000e+00 : f32
    %145 = vector.broadcast %cst_90 : f32 to vector<256x128xf32>
    %146 = arith.select %144, %139, %145 : vector<256x128xi1>, vector<256x128xf32>
    %147 = arith.addf %44, %146 : vector<256x128xf32>
    %c9 = arith.constant 9 : index
    %c0_91 = arith.constant 0 : index
    %c0_92 = arith.constant 0 : index
    %148 = vector.load %arg6[%c9, %c0_91, %c0_92] : memref<16x128x128xbf16, #tpu.memory_space<vmem>>, vector<1x128x128xbf16>
    %149 = vector.shape_cast %148 : vector<1x128x128xbf16> to vector<128x128xbf16>
    %cst_93 = arith.constant dense<0.000000e+00> : vector<256x128xf32>
    %150 = tpu.matmul %1, %149, %cst_93 {dimension_numbers = #tpu.dot_dimension_numbers<[1], [0], [0], [1], [0, 0, 1, 1], [], []>} : vector<256x128xbf16>, vector<128x128xbf16>, vector<256x128xf32> -> vector<256x128xf32>
    %c192_i32 = arith.constant 192 : i32
    %151 = tpu.dynamic_rotate %150 by %c192_i32 dim 0 : vector<256x128xf32>, i32 -> vector<256x128xf32>
    %c12_i32_94 = arith.constant 12 : i32
    %152 = vector.broadcast %c12_i32_94 : i32 to vector<256x128xi32>
    %153 = arith.cmpi sge, %4, %152 : vector<256x128xi32>
    %cst_95 = arith.constant 0.000000e+00 : f32
    %154 = vector.broadcast %cst_95 : f32 to vector<256x128xf32>
    %155 = arith.select %153, %151, %154 : vector<256x128xi1>, vector<256x128xf32>
    %156 = arith.addf %147, %155 : vector<256x128xf32>
    %c10 = arith.constant 10 : index
    %c0_96 = arith.constant 0 : index
    %c0_97 = arith.constant 0 : index
    %157 = vector.load %arg6[%c10, %c0_96, %c0_97] : memref<16x128x128xbf16, #tpu.memory_space<vmem>>, vector<1x128x128xbf16>
    %158 = vector.shape_cast %157 : vector<1x128x128xbf16> to vector<128x128xbf16>
    %cst_98 = arith.constant dense<0.000000e+00> : vector<256x128xf32>
    %159 = tpu.matmul %1, %158, %cst_98 {dimension_numbers = #tpu.dot_dimension_numbers<[1], [0], [0], [1], [0, 0, 1, 1], [], []>} : vector<256x128xbf16>, vector<128x128xbf16>, vector<256x128xf32> -> vector<256x128xf32>
    %c180_i32 = arith.constant 180 : i32
    %160 = tpu.dynamic_rotate %159 by %c180_i32 dim 0 : vector<256x128xf32>, i32 -> vector<256x128xf32>
    %c12_i32_99 = arith.constant 12 : i32
    %161 = vector.broadcast %c12_i32_99 : i32 to vector<256x128xi32>
    %162 = arith.cmpi sge, %4, %161 : vector<256x128xi32>
    %c4_i32_100 = arith.constant 4 : i32
    %163 = vector.broadcast %c4_i32_100 : i32 to vector<256x128xi32>
    %164 = arith.cmpi slt, %6, %163 : vector<256x128xi32>
    %165 = arith.andi %162, %164 : vector<256x128xi1>
    %cst_101 = arith.constant 0.000000e+00 : f32
    %166 = vector.broadcast %cst_101 : f32 to vector<256x128xf32>
    %167 = arith.select %165, %160, %166 : vector<256x128xi1>, vector<256x128xf32>
    %168 = arith.addf %156, %167 : vector<256x128xf32>
    %c11 = arith.constant 11 : index
    %c0_102 = arith.constant 0 : index
    %c0_103 = arith.constant 0 : index
    %169 = vector.load %arg6[%c11, %c0_102, %c0_103] : memref<16x128x128xbf16, #tpu.memory_space<vmem>>, vector<1x128x128xbf16>
    %170 = vector.shape_cast %169 : vector<1x128x128xbf16> to vector<128x128xbf16>
    %cst_104 = arith.constant dense<0.000000e+00> : vector<256x128xf32>
    %171 = tpu.matmul %1, %170, %cst_104 {dimension_numbers = #tpu.dot_dimension_numbers<[1], [0], [0], [1], [0, 0, 1, 1], [], []>} : vector<256x128xbf16>, vector<128x128xbf16>, vector<256x128xf32> -> vector<256x128xf32>
    %c12_i32_105 = arith.constant 12 : i32
    %172 = tpu.dynamic_rotate %171 by %c12_i32_105 dim 0 : vector<256x128xf32>, i32 -> vector<256x128xf32>
    %c12_i32_106 = arith.constant 12 : i32
    %173 = vector.broadcast %c12_i32_106 : i32 to vector<256x128xi32>
    %174 = arith.cmpi sge, %6, %173 : vector<256x128xi32>
    %cst_107 = arith.constant 0.000000e+00 : f32
    %175 = vector.broadcast %cst_107 : f32 to vector<256x128xf32>
    %176 = arith.select %174, %172, %175 : vector<256x128xi1>, vector<256x128xf32>
    %177 = arith.addf %168, %176 : vector<256x128xf32>
    %c12 = arith.constant 12 : index
    %c0_108 = arith.constant 0 : index
    %c0_109 = arith.constant 0 : index
    %178 = vector.load %arg6[%c12, %c0_108, %c0_109] : memref<16x128x128xbf16, #tpu.memory_space<vmem>>, vector<1x128x128xbf16>
    %179 = vector.shape_cast %178 : vector<1x128x128xbf16> to vector<128x128xbf16>
    %cst_110 = arith.constant dense<0.000000e+00> : vector<256x128xf32>
    %180 = tpu.matmul %1, %179, %cst_110 {dimension_numbers = #tpu.dot_dimension_numbers<[1], [0], [0], [1], [0, 0, 1, 1], [], []>} : vector<256x128xbf16>, vector<128x128xbf16>, vector<256x128xf32> -> vector<256x128xf32>
    %c244_i32 = arith.constant 244 : i32
    %181 = tpu.dynamic_rotate %180 by %c244_i32 dim 0 : vector<256x128xf32>, i32 -> vector<256x128xf32>
    %c4_i32_111 = arith.constant 4 : i32
    %182 = vector.broadcast %c4_i32_111 : i32 to vector<256x128xi32>
    %183 = arith.cmpi slt, %6, %182 : vector<256x128xi32>
    %cst_112 = arith.constant 0.000000e+00 : f32
    %184 = vector.broadcast %cst_112 : f32 to vector<256x128xf32>
    %185 = arith.select %183, %181, %184 : vector<256x128xi1>, vector<256x128xf32>
    %186 = arith.addf %177, %185 : vector<256x128xf32>
    %c13 = arith.constant 13 : index
    %c0_113 = arith.constant 0 : index
    %c0_114 = arith.constant 0 : index
    %187 = vector.load %arg6[%c13, %c0_113, %c0_114] : memref<16x128x128xbf16, #tpu.memory_space<vmem>>, vector<1x128x128xbf16>
    %188 = vector.shape_cast %187 : vector<1x128x128xbf16> to vector<128x128xbf16>
    %cst_115 = arith.constant dense<0.000000e+00> : vector<256x128xf32>
    %189 = tpu.matmul %1, %188, %cst_115 {dimension_numbers = #tpu.dot_dimension_numbers<[1], [0], [0], [1], [0, 0, 1, 1], [], []>} : vector<256x128xbf16>, vector<128x128xbf16>, vector<256x128xf32> -> vector<256x128xf32>
    %c76_i32 = arith.constant 76 : i32
    %190 = tpu.dynamic_rotate %189 by %c76_i32 dim 0 : vector<256x128xf32>, i32 -> vector<256x128xf32>
    %c4_i32_116 = arith.constant 4 : i32
    %191 = vector.broadcast %c4_i32_116 : i32 to vector<256x128xi32>
    %192 = arith.cmpi slt, %4, %191 : vector<256x128xi32>
    %c12_i32_117 = arith.constant 12 : i32
    %193 = vector.broadcast %c12_i32_117 : i32 to vector<256x128xi32>
    %194 = arith.cmpi sge, %6, %193 : vector<256x128xi32>
    %195 = arith.andi %192, %194 : vector<256x128xi1>
    %cst_118 = arith.constant 0.000000e+00 : f32
    %196 = vector.broadcast %cst_118 : f32 to vector<256x128xf32>
    %197 = arith.select %195, %190, %196 : vector<256x128xi1>, vector<256x128xf32>
    %198 = arith.addf %186, %197 : vector<256x128xf32>
    %c14 = arith.constant 14 : index
    %c0_119 = arith.constant 0 : index
    %c0_120 = arith.constant 0 : index
    %199 = vector.load %arg6[%c14, %c0_119, %c0_120] : memref<16x128x128xbf16, #tpu.memory_space<vmem>>, vector<1x128x128xbf16>
    %200 = vector.shape_cast %199 : vector<1x128x128xbf16> to vector<128x128xbf16>
    %cst_121 = arith.constant dense<0.000000e+00> : vector<256x128xf32>
    %201 = tpu.matmul %1, %200, %cst_121 {dimension_numbers = #tpu.dot_dimension_numbers<[1], [0], [0], [1], [0, 0, 1, 1], [], []>} : vector<256x128xbf16>, vector<128x128xbf16>, vector<256x128xf32> -> vector<256x128xf32>
    %c64_i32 = arith.constant 64 : i32
    %202 = tpu.dynamic_rotate %201 by %c64_i32 dim 0 : vector<256x128xf32>, i32 -> vector<256x128xf32>
    %c4_i32_122 = arith.constant 4 : i32
    %203 = vector.broadcast %c4_i32_122 : i32 to vector<256x128xi32>
    %204 = arith.cmpi slt, %4, %203 : vector<256x128xi32>
    %cst_123 = arith.constant 0.000000e+00 : f32
    %205 = vector.broadcast %cst_123 : f32 to vector<256x128xf32>
    %206 = arith.select %204, %202, %205 : vector<256x128xi1>, vector<256x128xf32>
    %207 = arith.addf %198, %206 : vector<256x128xf32>
    %c15 = arith.constant 15 : index
    %c0_124 = arith.constant 0 : index
    %c0_125 = arith.constant 0 : index
    %208 = vector.load %arg6[%c15, %c0_124, %c0_125] : memref<16x128x128xbf16, #tpu.memory_space<vmem>>, vector<1x128x128xbf16>
    %209 = vector.shape_cast %208 : vector<1x128x128xbf16> to vector<128x128xbf16>
    %cst_126 = arith.constant dense<0.000000e+00> : vector<256x128xf32>
    %210 = tpu.matmul %1, %209, %cst_126 {dimension_numbers = #tpu.dot_dimension_numbers<[1], [0], [0], [1], [0, 0, 1, 1], [], []>} : vector<256x128xbf16>, vector<128x128xbf16>, vector<256x128xf32> -> vector<256x128xf32>
    %c52_i32 = arith.constant 52 : i32
    %211 = tpu.dynamic_rotate %210 by %c52_i32 dim 0 : vector<256x128xf32>, i32 -> vector<256x128xf32>
    %c4_i32_127 = arith.constant 4 : i32
    %212 = vector.broadcast %c4_i32_127 : i32 to vector<256x128xi32>
    %213 = arith.cmpi slt, %4, %212 : vector<256x128xi32>
    %c4_i32_128 = arith.constant 4 : i32
    %214 = vector.broadcast %c4_i32_128 : i32 to vector<256x128xi32>
    %215 = arith.cmpi slt, %6, %214 : vector<256x128xi32>
    %216 = arith.andi %213, %215 : vector<256x128xi1>
    %cst_129 = arith.constant 0.000000e+00 : f32
    %217 = vector.broadcast %cst_129 : f32 to vector<256x128xf32>
    %218 = arith.select %216, %211, %217 : vector<256x128xi1>, vector<256x128xf32>
    %219 = arith.addf %207, %218 : vector<256x128xf32>
    %cst_130 = arith.constant 0.000000e+00 : f32
    %220 = vector.broadcast %cst_130 : f32 to vector<256x128xf32>
    %221 = arith.maximumf %30, %220 : vector<256x128xf32>
    %222 = arith.truncf %221 : vector<256x128xf32> to vector<256x128xbf16>
    %c0_131 = arith.constant 0 : index
    %c0_132 = arith.constant 0 : index
    %c0_133 = arith.constant 0 : index
    %223 = vector.load %arg8[%c0_131, %c0_132, %c0_133] : memref<4x128x256xbf16, #tpu.memory_space<vmem>>, vector<1x128x256xbf16>
    %224 = vector.shape_cast %223 : vector<1x128x256xbf16> to vector<128x256xbf16>
    %cst_134 = arith.constant dense<0.000000e+00> : vector<256x256xf32>
    %225 = tpu.matmul %222, %224, %cst_134 {dimension_numbers = #tpu.dot_dimension_numbers<[1], [0], [0], [1], [0, 0, 1, 1], [], []>} : vector<256x128xbf16>, vector<128x256xbf16>, vector<256x256xf32> -> vector<256x256xf32>
    %226 = vector.broadcast %23 : vector<1x256xf32> to vector<256x256xf32>
    %227 = arith.addf %226, %225 : vector<256x256xf32>
    %cst_135 = arith.constant 0.000000e+00 : f32
    %228 = vector.broadcast %cst_135 : f32 to vector<256x128xf32>
    %229 = arith.maximumf %135, %228 : vector<256x128xf32>
    %230 = arith.truncf %229 : vector<256x128xf32> to vector<256x128xbf16>
    %c1_136 = arith.constant 1 : index
    %c0_137 = arith.constant 0 : index
    %c0_138 = arith.constant 0 : index
    %231 = vector.load %arg8[%c1_136, %c0_137, %c0_138] : memref<4x128x256xbf16, #tpu.memory_space<vmem>>, vector<1x128x256xbf16>
    %232 = vector.shape_cast %231 : vector<1x128x256xbf16> to vector<128x256xbf16>
    %cst_139 = arith.constant dense<0.000000e+00> : vector<256x256xf32>
    %233 = tpu.matmul %230, %232, %cst_139 {dimension_numbers = #tpu.dot_dimension_numbers<[1], [0], [0], [1], [0, 0, 1, 1], [], []>} : vector<256x128xbf16>, vector<128x256xbf16>, vector<256x256xf32> -> vector<256x256xf32>
    %234 = arith.addf %227, %233 : vector<256x256xf32>
    %cst_140 = arith.constant 0.000000e+00 : f32
    %235 = vector.broadcast %cst_140 : f32 to vector<256x128xf32>
    %236 = arith.maximumf %219, %235 : vector<256x128xf32>
    %237 = arith.truncf %236 : vector<256x128xf32> to vector<256x128xbf16>
    %c2_141 = arith.constant 2 : index
    %c0_142 = arith.constant 0 : index
    %c0_143 = arith.constant 0 : index
    %238 = vector.load %arg8[%c2_141, %c0_142, %c0_143] : memref<4x128x256xbf16, #tpu.memory_space<vmem>>, vector<1x128x256xbf16>
    %239 = vector.shape_cast %238 : vector<1x128x256xbf16> to vector<128x256xbf16>
    %cst_144 = arith.constant dense<0.000000e+00> : vector<256x256xf32>
    %240 = tpu.matmul %237, %239, %cst_144 {dimension_numbers = #tpu.dot_dimension_numbers<[1], [0], [0], [1], [0, 0, 1, 1], [], []>} : vector<256x128xbf16>, vector<128x256xbf16>, vector<256x256xf32> -> vector<256x256xf32>
    %241 = arith.addf %234, %240 : vector<256x256xf32>
    %cst_145 = arith.constant 0.000000e+00 : f32
    %242 = vector.broadcast %cst_145 : f32 to vector<256x128xf32>
    %243 = arith.maximumf %51, %242 : vector<256x128xf32>
    %244 = arith.truncf %243 : vector<256x128xf32> to vector<256x128xbf16>
    %c3_146 = arith.constant 3 : index
    %c0_147 = arith.constant 0 : index
    %c0_148 = arith.constant 0 : index
    %245 = vector.load %arg8[%c3_146, %c0_147, %c0_148] : memref<4x128x256xbf16, #tpu.memory_space<vmem>>, vector<1x128x256xbf16>
    %246 = vector.shape_cast %245 : vector<1x128x256xbf16> to vector<128x256xbf16>
    %cst_149 = arith.constant dense<0.000000e+00> : vector<256x256xf32>
    %247 = tpu.matmul %244, %246, %cst_149 {dimension_numbers = #tpu.dot_dimension_numbers<[1], [0], [0], [1], [0, 0, 1, 1], [], []>} : vector<256x128xbf16>, vector<128x256xbf16>, vector<256x256xf32> -> vector<256x256xf32>
    %248 = arith.addf %241, %247 : vector<256x256xf32>
    %c0_150 = arith.constant 0 : index
    %c0_151 = arith.constant 0 : index
    %c0_152 = arith.constant 0 : index
    %249 = vector.load %arg10[%c0_150, %c0_151, %c0_152] : memref<1x256x256xf32, #tpu.memory_space<vmem>>, vector<1x256x256xf32>
    %250 = vector.shape_cast %249 : vector<1x256x256xf32> to vector<256x256xf32>
    %251 = vector.shape_cast %248 : vector<256x256xf32> to vector<1x256x256xf32>
    tpu.vector_store %arg10[%c0_150, %c0_151, %c0_152], %251 {strides = array<i32>} : memref<1x256x256xf32, #tpu.memory_space<vmem>>, vector<1x256x256xf32>,
    return
  }
  func.func @transform_0(%arg0: i32) -> (i32, i32, i32) {
    %c0_i32 = arith.constant 0 : i32
    %c0_i32_0 = arith.constant 0 : i32
    %c0_i32_1 = arith.constant 0 : i32
    return %arg0, %c0_i32, %c0_i32_0 : i32, i32, i32
  }
  func.func @transform_1(%arg0: i32) -> (i32, i32) {
    %c0_i32 = arith.constant 0 : i32
    %c0_i32_0 = arith.constant 0 : i32
    %c0_i32_1 = arith.constant 0 : i32
    return %c0_i32, %c0_i32_0 : i32, i32
  }
  func.func @transform_2(%arg0: i32) -> (i32, i32) {
    %c0_i32 = arith.constant 0 : i32
    %c0_i32_0 = arith.constant 0 : i32
    %c0_i32_1 = arith.constant 0 : i32
    return %c0_i32, %c0_i32_0 : i32, i32
  }
  func.func @transform_3(%arg0: i32) -> (i32, i32, i32) {
    %c0_i32 = arith.constant 0 : i32
    %c0_i32_0 = arith.constant 0 : i32
    %c0_i32_1 = arith.constant 0 : i32
    %c0_i32_2 = arith.constant 0 : i32
    return %c0_i32, %c0_i32_0, %c0_i32_1 : i32, i32, i32
  }
  func.func @transform_4(%arg0: i32) -> (i32, i32, i32) {
    %c0_i32 = arith.constant 0 : i32
    %c0_i32_0 = arith.constant 0 : i32
    %c0_i32_1 = arith.constant 0 : i32
    %c0_i32_2 = arith.constant 0 : i32
    return %c0_i32, %c0_i32_0, %c0_i32_1 : i32, i32, i32
  }
  func.func @transform_5(%arg0: i32) -> (i32, i32, i32) {
    %c0_i32 = arith.constant 0 : i32
    %c0_i32_0 = arith.constant 0 : i32
    %c0_i32_1 = arith.constant 0 : i32
    %c0_i32_2 = arith.constant 0 : i32
    return %c0_i32, %c0_i32_0, %c0_i32_1 : i32, i32, i32
  }
  func.func @transform_6(%arg0: i32) -> (i32, i32) {
    %c0_i32 = arith.constant 0 : i32
    %c0_i32_0 = arith.constant 0 : i32
    %c0_i32_1 = arith.constant 0 : i32
    return %c0_i32, %c0_i32_0 : i32, i32
  }
  func.func @transform_7(%arg0: i32) -> (i32, i32, i32) {
    %c0_i32 = arith.constant 0 : i32
    %c0_i32_0 = arith.constant 0 : i32
    %c0_i32_1 = arith.constant 0 : i32
    %c0_i32_2 = arith.constant 0 : i32
    return %c0_i32, %c0_i32_0, %c0_i32_1 : i32, i32, i32
  }
  func.func @transform_8(%arg0: i32) -> (i32, i32) {
    %c0_i32 = arith.constant 0 : i32
    %c0_i32_0 = arith.constant 0 : i32
    %c0_i32_1 = arith.constant 0 : i32
    return %c0_i32, %c0_i32_0 : i32, i32
  }
  func.func @transform_9(%arg0: i32) -> (i32, i32, i32) {
    %c0_i32 = arith.constant 0 : i32
    %c0_i32_0 = arith.constant 0 : i32
    %c0_i32_1 = arith.constant 0 : i32
    return %arg0, %c0_i32, %c0_i32_0 : i32, i32, i32
  }
}

</mosaic_0001>

<llo_original>
// kernel: tpu_custom_call.1
$region0: #{tpu_custom_call.1}
  #allocation0 [shape = 'u32[]', space=smem, size = 0x4, offset = 0x4, fixed_abs, tag = 'smem constant byte address 0x4 - core index']
  #allocation1 [shape = 'u32[144,128]{1,0:T(1,128)}', space=vmem, size = 0x12000, scoped, tag = 'internal scratch']
  %s0 = inlined_call_operand.hbm [shape: bf16[2,256,128], index: 0, kind: input, shape index: {}]
  %s1 = inlined_call_operand.hbm [shape: bf16[128,128], index: 1, kind: input, shape index: {}]
  %s2 = inlined_call_operand.vmem [shape: f32[1,128], index: 2, kind: input, shape index: {}]
  %s3 = inlined_call_operand.hbm [shape: bf16[4,128,128], index: 3, kind: input, shape index: {}]
  %s4 = inlined_call_operand.vmem [shape: f32[4,1,128], index: 4, kind: input, shape index: {}]
  %s5 = inlined_call_operand.hbm [shape: bf16[16,128,128], index: 5, kind: input, shape index: {}]
  %s6 = inlined_call_operand.hbm [shape: bf16[128,256], index: 6, kind: input, shape index: {}]
  %s7 = inlined_call_operand.hbm [shape: bf16[4,128,256], index: 7, kind: input, shape index: {}]
  %s8 = inlined_call_operand.vmem [shape: f32[1,256], index: 8, kind: input, shape index: {}]
  %s9 = inlined_call_operand.hbm [shape: f32[2,256,256], index: 9, kind: output, shape index: {}]
  %s10 = sld [smem:[#allocation0]]
  $region93: #{tpu_custom_call.1} parent=0
    _
  %s12 = ssub.s32 1, %s10
  %s13 = scalar_select 0, %s12, %s10
  $region1: #{tpu_custom_call.1} parent=0
    #allocation2 [shape = 'u8[131072]{0}', space=vmem, size = 0x20000, scoped, tag = 'input window, operand 0']
    #allocation3 [shape = 's32[2]{0}', space=sflag, size = 0x8, scoped, tag = 'scoped memory for tpu_custom_call.1']
    #allocation4 [shape = 's32[2]{0}', space=sflag, size = 0x8, scoped, tag = 'scoped memory for tpu_custom_call.1']
    #allocation5 [shape = 'u8[32768]{0}', space=vmem, size = 0x8000, scoped, tag = 'input window, operand 1, single buffered']
    #allocation6 [shape = 's32[1]{0}', space=sflag, size = 0x4, scoped, tag = 'scoped memory for tpu_custom_call.1']
    #allocation7 [shape = 'u8[131072]{0}', space=vmem, size = 0x20000, scoped, tag = 'input window, operand 3, single buffered']
    #allocation8 [shape = 'u8[524288]{0}', space=vmem, size = 0x80000, scoped, tag = 'input window, operand 5, single buffered']
    #allocation9 [shape = 's32[1]{0}', space=sflag, size = 0x4, scoped, tag = 'scoped memory for tpu_custom_call.1']
    #allocation10 [shape = 'u8[65536]{0}', space=vmem, size = 0x10000, scoped, tag = 'input window, operand 6, single buffered']
    #allocation11 [shape = 'u8[262144]{0}', space=vmem, size = 0x40000, scoped, tag = 'input window, operand 7, single buffered']
    #allocation12 [shape = 's32[1]{0}', space=sflag, size = 0x4, scoped, tag = 'scoped memory for tpu_custom_call.1']
    #allocation13 [shape = 'u8[524288]{0}', space=vmem, size = 0x80000, scoped, tag = 'output window, operand 0']
    %14 = vsyncpa [#allocation3], 0
    %s15 = scalar_lea.sflag [#allocation3], 1
    %16 = vsyncpa %s15, 0
    %17 = vsyncpa [#allocation6], 0
    %18 = vsyncpa [#allocation9], 0
    %19 = vsyncpa [#allocation12], 0
    %20 = vsyncpa [#allocation4], 0
    %s21 = scalar_lea.sflag [#allocation4], 1
    %22 = vsyncpa %s21, 0
    loop: start=0, step=1, limit=4
    $region2: #{tpu_custom_call.1} parent=1 // loop_pre_header
      _
    $region3: #{tpu_custom_call.1} parent=1 // loop_header
      %s24 = sphi 0, %s28
      %p25 = scmp.ge.s32.totalorder %s24, 4
      %s34 = sphi 0, %s36
      %s37 = sphi 0, %s34
      %s38 = sphi 0, %s37
      %s54 = sphi 0, %s38
      %s58 = sphi 0, %s58
      %s60 = sphi 0, %s58
      %s61 = sphi 0, %s60
      %s75 = sphi 0, %s61
      %s79 = sphi 0, %s79
      %s81 = sphi 0, %s79
      %s82 = sphi 0, %s81
      %s96 = sphi 0, %s82
      %s100 = sphi 0, %s100
      %s102 = sphi 0, %s100
      %s103 = sphi 0, %s102
      %s117 = sphi 0, %s103
      %s121 = sphi 0, %s121
      %s123 = sphi 0, %s121
      %s124 = sphi 0, %s123
      %s138 = sphi 0, %s124
      %s142 = sphi 0, %s142
      %s144 = sphi 0, %s142
      %s145 = sphi 0, %s144
      %s159 = sphi 0, %s145
      %s163 = sphi 0, %s163
      %s165 = sphi 0, %s163
      %s166 = sphi 0, %s165
      %s180 = sphi 0, %s166
      %s184 = sphi 0, %s184
      %s186 = sphi 0, %s184
      %s187 = sphi 0, %s186
      %s201 = sphi 0, %s187
      %s205 = sphi 0, %s205
      %s207 = sphi 0, %s205
      %s208 = sphi 0, %s207
      %s222 = sphi 0, %s208
      %s228 = sphi 0, %s230
      %s231 = sphi 0, %s228
      %s232 = sphi 0, %s231
      %s248 = sphi 0, %s232
    $region4: #{tpu_custom_call.1} parent=1 // loop_header_branch
      %27 = sbr.rel (%p25) target = $region8
    $region5: #{tpu_custom_call.1} parent=1 // loop_body
      %s29 = ssub.s32 %s24, 1
      %s30 = ssub.s32 %s24, 2
      %s31 = sadd.s32 %s24, 1
      %s32 = ssub.s32 %s24, %s31
      %p33 = scmp.eq.s32.totalorder %s32, 0
      %s35 = sadd.s32 %s34, 1
      %s36 = scalar_select %p33, %s34, %s35
      %p39 = pneg %p33
      %p40 = scmp.eq.s32.totalorder %s24, 1
      %p41 = por %p39, %p40
      %p42 = scmp.ne.s32.totalorder %s34, %s37
      %p43 = scmp.eq.s32.totalorder %s24, 0
      %p44 = por %p42, %p43
      %p45 = scmp.ne.s32.totalorder %s34, %s37
      %p46 = scmp.eq.s32.totalorder %s29, 1
      %p47 = por %p45, %p46
      %p48 = scmp.ne.s32.totalorder %s37, %s38
      %p49 = scmp.eq.s32.totalorder %s29, 0
      %p50 = por %p48, %p49
      %p51 = scmp.ne.s32.totalorder %s37, %s38
      %p52 = scmp.eq.s32.totalorder %s30, 1
      %p53 = por %p51, %p52
      %p55 = scmp.ne.s32.totalorder %s38, %s54
      %p56 = scmp.eq.s32.totalorder %s30, 0
      %p57 = por %p55, %p56
      %s59 = sadd.s32 %s58, 1
      %p62 = scmp.eq.s32.totalorder %s24, 1
      %p63 = scmp.ne.s32.totalorder %s58, %s60
      %p64 = scmp.eq.s32.totalorder %s24, 0
      %p65 = por %p63, %p64
      %p66 = scmp.ne.s32.totalorder %s58, %s60
      %p67 = scmp.eq.s32.totalorder %s29, 1
      %p68 = por %p66, %p67
      %p69 = scmp.ne.s32.totalorder %s60, %s61
      %p70 = scmp.eq.s32.totalorder %s29, 0
      %p71 = por %p69, %p70
      %p72 = scmp.ne.s32.totalorder %s60, %s61
      %p73 = scmp.eq.s32.totalorder %s30, 1
      %p74 = por %p72, %p73
      %p76 = scmp.ne.s32.totalorder %s61, %s75
      %p77 = scmp.eq.s32.totalorder %s30, 0
      %p78 = por %p76, %p77
      %s80 = sadd.s32 %s79, 1
      %p83 = scmp.eq.s32.totalorder %s24, 1
      %p84 = scmp.ne.s32.totalorder %s79, %s81
      %p85 = scmp.eq.s32.totalorder %s24, 0
      %p86 = por %p84, %p85
      %p87 = scmp.ne.s32.totalorder %s79, %s81
      %p88 = scmp.eq.s32.totalorder %s29, 1
      %p89 = por %p87, %p88
      %p90 = scmp.ne.s32.totalorder %s81, %s82
      %p91 = scmp.eq.s32.totalorder %s29, 0
      %p92 = por %p90, %p91
      %p93 = scmp.ne.s32.totalorder %s81, %s82
      %p94 = scmp.eq.s32.totalorder %s30, 1
      %p95 = por %p93, %p94
      %p97 = scmp.ne.s32.totalorder %s82, %s96
      %p98 = scmp.eq.s32.totalorder %s30, 0
      %p99 = por %p97, %p98
      %s101 = sadd.s32 %s100, 1
      %p104 = scmp.eq.s32.totalorder %s24, 1
      %p105 = scmp.ne.s32.totalorder %s100, %s102
      %p106 = scmp.eq.s32.totalorder %s24, 0
      %p107 = por %p105, %p106
      %p108 = scmp.ne.s32.totalorder %s100, %s102
      %p109 = scmp.eq.s32.totalorder %s29, 1
      %p110 = por %p108, %p109
      %p111 = scmp.ne.s32.totalorder %s102, %s103
      %p112 = scmp.eq.s32.totalorder %s29, 0
      %p113 = por %p111, %p112
      %p114 = scmp.ne.s32.totalorder %s102, %s103
      %p115 = scmp.eq.s32.totalorder %s30, 1
      %p116 = por %p114, %p115
      %p118 = scmp.ne.s32.totalorder %s103, %s117
      %p119 = scmp.eq.s32.totalorder %s30, 0
      %p120 = por %p118, %p119
      %s122 = sadd.s32 %s121, 1
      %p125 = scmp.eq.s32.totalorder %s24, 1
      %p126 = scmp.ne.s32.totalorder %s121, %s123
      %p127 = scmp.eq.s32.totalorder %s24, 0
      %p128 = por %p126, %p127
      %p129 = scmp.ne.s32.totalorder %s121, %s123
      %p130 = scmp.eq.s32.totalorder %s29, 1
      %p131 = por %p129, %p130
      %p132 = scmp.ne.s32.totalorder %s123, %s124
      %p133 = scmp.eq.s32.totalorder %s29, 0
      %p134 = por %p132, %p133
      %p135 = scmp.ne.s32.totalorder %s123, %s124
      %p136 = scmp.eq.s32.totalorder %s30, 1
      %p137 = por %p135, %p136
      %p139 = scmp.ne.s32.totalorder %s124, %s138
      %p140 = scmp.eq.s32.totalorder %s30, 0
      %p141 = por %p139, %p140
      %s143 = sadd.s32 %s142, 1
      %p146 = scmp.eq.s32.totalorder %s24, 1
      %p147 = scmp.ne.s32.totalorder %s142, %s144
      %p148 = scmp.eq.s32.totalorder %s24, 0
      %p149 = por %p147, %p148
      %p150 = scmp.ne.s32.totalorder %s142, %s144
      %p151 = scmp.eq.s32.totalorder %s29, 1
      %p152 = por %p150, %p151
      %p153 = scmp.ne.s32.totalorder %s144, %s145
      %p154 = scmp.eq.s32.totalorder %s29, 0
      %p155 = por %p153, %p154
      %p156 = scmp.ne.s32.totalorder %s144, %s145
      %p157 = scmp.eq.s32.totalorder %s30, 1
      %p158 = por %p156, %p157
      %p160 = scmp.ne.s32.totalorder %s145, %s159
      %p161 = scmp.eq.s32.totalorder %s30, 0
      %p162 = por %p160, %p161
      %s164 = sadd.s32 %s163, 1
      %p167 = scmp.eq.s32.totalorder %s24, 1
      %p168 = scmp.ne.s32.totalorder %s163, %s165
      %p169 = scmp.eq.s32.totalorder %s24, 0
      %p170 = por %p168, %p169
      %p171 = scmp.ne.s32.totalorder %s163, %s165
      %p172 = scmp.eq.s32.totalorder %s29, 1
      %p173 = por %p171, %p172
      %p174 = scmp.ne.s32.totalorder %s165, %s166
      %p175 = scmp.eq.s32.totalorder %s29, 0
      %p176 = por %p174, %p175
      %p177 = scmp.ne.s32.totalorder %s165, %s166
      %p178 = scmp.eq.s32.totalorder %s30, 1
      %p179 = por %p177, %p178
      %p181 = scmp.ne.s32.totalorder %s166, %s180
      %p182 = scmp.eq.s32.totalorder %s30, 0
      %p183 = por %p181, %p182
      %s185 = sadd.s32 %s184, 1
      %p188 = scmp.eq.s32.totalorder %s24, 1
      %p189 = scmp.ne.s32.totalorder %s184, %s186
      %p190 = scmp.eq.s32.totalorder %s24, 0
      %p191 = por %p189, %p190
      %p192 = scmp.ne.s32.totalorder %s184, %s186
      %p193 = scmp.eq.s32.totalorder %s29, 1
      %p194 = por %p192, %p193
      %p195 = scmp.ne.s32.totalorder %s186, %s187
      %p196 = scmp.eq.s32.totalorder %s29, 0
      %p197 = por %p195, %p196
      %p198 = scmp.ne.s32.totalorder %s186, %s187
      %p199 = scmp.eq.s32.totalorder %s30, 1
      %p200 = por %p198, %p199
      %p202 = scmp.ne.s32.totalorder %s187, %s201
      %p203 = scmp.eq.s32.totalorder %s30, 0
      %p204 = por %p202, %p203
      %s206 = sadd.s32 %s205, 1
      %p209 = scmp.eq.s32.totalorder %s24, 1
      %p210 = scmp.ne.s32.totalorder %s205, %s207
      %p211 = scmp.eq.s32.totalorder %s24, 0
      %p212 = por %p210, %p211
      %p213 = scmp.ne.s32.totalorder %s205, %s207
      %p214 = scmp.eq.s32.totalorder %s29, 1
      %p215 = por %p213, %p214
      %p216 = scmp.ne.s32.totalorder %s207, %s208
      %p217 = scmp.eq.s32.totalorder %s29, 0
      %p218 = por %p216, %p217
      %p219 = scmp.ne.s32.totalorder %s207, %s208
      %p220 = scmp.eq.s32.totalorder %s30, 1
      %p221 = por %p219, %p220
      %p223 = scmp.ne.s32.totalorder %s208, %s222
      %p224 = scmp.eq.s32.totalorder %s30, 0
      %p225 = por %p223, %p224
      %s226 = ssub.s32 %s24, %s31
      %p227 = scmp.eq.s32.totalorder %s226, 0
      %s229 = sadd.s32 %s228, 1
      %s230 = scalar_select %p227, %s228, %s229
      %p233 = pneg %p227
      %p234 = scmp.eq.s32.totalorder %s24, 1
      %p235 = por %p233, %p234
      %p236 = scmp.ne.s32.totalorder %s228, %s231
      %p237 = scmp.eq.s32.totalorder %s24, 0
      %p238 = por %p236, %p237
      %p239 = scmp.ne.s32.totalorder %s228, %s231
      %p240 = scmp.eq.s32.totalorder %s29, 1
      %p241 = por %p239, %p240
      %p242 = scmp.ne.s32.totalorder %s231, %s232
      %p243 = scmp.eq.s32.totalorder %s29, 0
      %p244 = por %p242, %p243
      %p245 = scmp.ne.s32.totalorder %s231, %s232
      %p246 = scmp.eq.s32.totalorder %s30, 1
      %p247 = por %p245, %p246
      %p249 = scmp.ne.s32.totalorder %s232, %s248
      %p250 = scmp.eq.s32.totalorder %s30, 0
      %p251 = por %p249, %p250
      %p252 = scmp.le.s32.totalorder 1, %s24
      %p253 = scmp.lt.s32.totalorder %s24, 3
      %p254 = pnand %p252, %p253
      %p255 = pneg %p254
      // Predicated region
      $region9: #{tpu_custom_call.1} parent=5 // pred_check
        _
      $region10: #{tpu_custom_call.1} parent=5 // pred_check_branch
        %257 = sbr.rel (%p254) target = $region12
      $region11: #{tpu_custom_call.1} parent=5 // pred_region
        %s258 = ssub.s32 %s24, 1
        // Predicated region
        $region13: #{tpu_custom_call.1} parent=11 // pred_check
          %p259 = pneg %p71
        $region14: #{tpu_custom_call.1} parent=11 // pred_check_branch
          %261 = sbr.rel (%p259) target = $region16
        $region15: #{tpu_custom_call.1} parent=11 // pred_region
          %s263 = ssub.s32 1024, 1024
          %264 = vsyncadd [#allocation6], %s263
          %s265 = sshll.u32 [#allocation5], 4
          %s266 = int_to_ptr.vmem [resolvable:$true] %s265
          %271 = dma.hbm_to_vmem [thread:$0]  %s1, 1024, %s266, [#allocation6], 64, 64, 4
        $region16: #{tpu_custom_call.1} parent=11 // pred_fallthru
          _
        // Predicated region
        $region17: #{tpu_custom_call.1} parent=11 // pred_check
          %p272 = pneg %p92
        $region18: #{tpu_custom_call.1} parent=11 // pred_check_branch
          %274 = sbr.rel (%p272) target = $region20
        $region19: #{tpu_custom_call.1} parent=11 // pred_region
          _
        $region20: #{tpu_custom_call.1} parent=11 // pred_fallthru
          _
        // Predicated region
        $region21: #{tpu_custom_call.1} parent=11 // pred_check
          %p275 = pneg %p113
        $region22: #{tpu_custom_call.1} parent=11 // pred_check_branch
          %277 = sbr.rel (%p275) target = $region24
        $region23: #{tpu_custom_call.1} parent=11 // pred_region
          %s279 = ssub.s32 4096, 4096
          %280 = vsyncadd [#allocation6], %s279
          %s281 = sshll.u32 [#allocation7], 4
          %s282 = int_to_ptr.vmem [resolvable:$true] %s281
          %287 = dma.hbm_to_vmem [thread:$0]  %s3, 4096, %s282, [#allocation6], 64, 64, 4
        $region24: #{tpu_custom_call.1} parent=11 // pred_fallthru
          _
        // Predicated region
        $region25: #{tpu_custom_call.1} parent=11 // pred_check
          %p288 = pneg %p134
        $region26: #{tpu_custom_call.1} parent=11 // pred_check_branch
          %290 = sbr.rel (%p288) target = $region28
        $region27: #{tpu_custom_call.1} parent=11 // pred_region
          _
        $region28: #{tpu_custom_call.1} parent=11 // pred_fallthru
          _
        // Predicated region
        $region29: #{tpu_custom_call.1} parent=11 // pred_check
          %p291 = pneg %p155
        $region30: #{tpu_custom_call.1} parent=11 // pred_check_branch
          %293 = sbr.rel (%p291) target = $region32
        $region31: #{tpu_custom_call.1} parent=11 // pred_region
          %s295 = ssub.s32 16384, 16384
          %296 = vsyncadd [#allocation9], %s295
          %s297 = sshll.u32 [#allocation8], 4
          %s298 = int_to_ptr.vmem [resolvable:$true] %s297
          %303 = dma.hbm_to_vmem [thread:$0]  %s5, 16384, %s298, [#allocation9], 64, 64, 4
        $region32: #{tpu_custom_call.1} parent=11 // pred_fallthru
          _
        // Predicated region
        $region33: #{tpu_custom_call.1} parent=11 // pred_check
          %p304 = pneg %p176
        $region34: #{tpu_custom_call.1} parent=11 // pred_check_branch
          %306 = sbr.rel (%p304) target = $region36
        $region35: #{tpu_custom_call.1} parent=11 // pred_region
          %s308 = ssub.s32 2048, 2048
          %309 = vsyncadd [#allocation9], %s308
          %s310 = sshll.u32 [#allocation10], 4
          %s311 = int_to_ptr.vmem [resolvable:$true] %s310
          %316 = dma.hbm_to_vmem [thread:$0]  %s6, 2048, %s311, [#allocation9], 128, 128, 8
        $region36: #{tpu_custom_call.1} parent=11 // pred_fallthru
          _
        // Predicated region
        $region37: #{tpu_custom_call.1} parent=11 // pred_check
          %p317 = pneg %p197
        $region38: #{tpu_custom_call.1} parent=11 // pred_check_branch
          %319 = sbr.rel (%p317) target = $region40
        $region39: #{tpu_custom_call.1} parent=11 // pred_region
          %s321 = ssub.s32 8192, 8192
          %322 = vsyncadd [#allocation12], %s321
          %s323 = sshll.u32 [#allocation11], 4
          %s324 = int_to_ptr.vmem [resolvable:$true] %s323
          %329 = dma.hbm_to_vmem [thread:$0]  %s7, 8192, %s324, [#allocation12], 128, 128, 8
        $region40: #{tpu_custom_call.1} parent=11 // pred_fallthru
          _
        // Predicated region
        $region41: #{tpu_custom_call.1} parent=11 // pred_check
          %p330 = pneg %p218
        $region42: #{tpu_custom_call.1} parent=11 // pred_check_branch
          %332 = sbr.rel (%p330) target = $region44
        $region43: #{tpu_custom_call.1} parent=11 // pred_region
          _
        $region44: #{tpu_custom_call.1} parent=11 // pred_fallthru
          _
      $region12: #{tpu_custom_call.1} parent=5 // pred_fallthru
        _
      %p333 = scmp.lt.s32.totalorder %s24, 2
      // Predicated region
      $region45: #{tpu_custom_call.1} parent=5 // pred_check
        %p334 = pneg %p333
      $region46: #{tpu_custom_call.1} parent=5 // pred_check_branch
        %336 = sbr.rel (%p334) target = $region48
      $region47: #{tpu_custom_call.1} parent=5 // pred_region
        // Predicated region
        $region49: #{tpu_custom_call.1} parent=47 // pred_check
          %p337 = pneg %p44
        $region50: #{tpu_custom_call.1} parent=47 // pred_check_branch
          %339 = sbr.rel (%p337) target = $region52
        $region51: #{tpu_custom_call.1} parent=47 // pred_region
          %s340 = sand.u32 %s34, 1
          %s341 = scalar_lea.sflag [#allocation3], %s340
          %s342 = sand.u32 %s34, 1
          %s343 = smul.addr %s342, 128
          %s344 = scalar_lea.vmem [#allocation2], %s343
          %s346 = ssub.s32 2048, 2048
          %347 = vsyncadd %s341, %s346
          %s348 = smul.addr %s24, 32
          %s349 = smul.addr %s348, 64
          %s350 = scalar_lea.hbm %s0, %s349
          %s351 = sshll.u32 %s344, 4
          %s352 = int_to_ptr.vmem [resolvable:$true] %s351
          %357 = dma.hbm_to_vmem [thread:$0]  %s350, 2048, %s352, %s341, 64, 64, 4
        $region52: #{tpu_custom_call.1} parent=47 // pred_fallthru
          _
      $region48: #{tpu_custom_call.1} parent=5 // pred_fallthru
        _
      %p358 = scmp.le.s32.totalorder 1, %s24
      %p359 = scmp.lt.s32.totalorder %s24, 3
      %p360 = pnand %p358, %p359
      %p361 = pneg %p360
      // Predicated region
      $region53: #{tpu_custom_call.1} parent=5 // pred_check
        _
      $region54: #{tpu_custom_call.1} parent=5 // pred_check_branch
        %363 = sbr.rel (%p360) target = $region56
      $region55: #{tpu_custom_call.1} parent=5 // pred_region
        %s364 = ssub.s32 %s24, 1
        %s365 = sand.u32 %s37, 1
        %s366 = scalar_lea.sflag [#allocation3], %s365
        %s367 = sand.u32 %s37, 1
        %s368 = smul.addr %s367, 128
        %s369 = scalar_lea.vmem [#allocation2], %s368
        // Predicated region
        $region57: #{tpu_custom_call.1} parent=55 // pred_check
          %p370 = pneg %p50
        $region58: #{tpu_custom_call.1} parent=55 // pred_check_branch
          %372 = sbr.rel (%p370) target = $region60
        $region59: #{tpu_custom_call.1} parent=55 // pred_region
          %373 = dma.done %s366, 2048
        $region60: #{tpu_custom_call.1} parent=55 // pred_fallthru
          _
        // Predicated region
        $region61: #{tpu_custom_call.1} parent=55 // pred_check
          %p374 = pneg %p71
        $region62: #{tpu_custom_call.1} parent=55 // pred_check_branch
          %376 = sbr.rel (%p374) target = $region64
        $region63: #{tpu_custom_call.1} parent=55 // pred_region
          %377 = dma.done [#allocation6], 1024
        $region64: #{tpu_custom_call.1} parent=55 // pred_fallthru
          _
        // Predicated region
        $region65: #{tpu_custom_call.1} parent=55 // pred_check
          %p378 = pneg %p113
        $region66: #{tpu_custom_call.1} parent=55 // pred_check_branch
          %380 = sbr.rel (%p378) target = $region68
        $region67: #{tpu_custom_call.1} parent=55 // pred_region
          %381 = dma.done [#allocation6], 4096
        $region68: #{tpu_custom_call.1} parent=55 // pred_fallthru
          _
        // Predicated region
        $region69: #{tpu_custom_call.1} parent=55 // pred_check
          %p382 = pneg %p155
        $region70: #{tpu_custom_call.1} parent=55 // pred_check_branch
          %384 = sbr.rel (%p382) target = $region72
        $region71: #{tpu_custom_call.1} parent=55 // pred_region
          %385 = dma.done [#allocation9], 16384
        $region72: #{tpu_custom_call.1} parent=55 // pred_fallthru
          _
        // Predicated region
        $region73: #{tpu_custom_call.1} parent=55 // pred_check
          %p386 = pneg %p176
        $region74: #{tpu_custom_call.1} parent=55 // pred_check_branch
          %388 = sbr.rel (%p386) target = $region76
        $region75: #{tpu_custom_call.1} parent=55 // pred_region
          %389 = dma.done [#allocation9], 2048
        $region76: #{tpu_custom_call.1} parent=55 // pred_fallthru
          _
        // Predicated region
        $region77: #{tpu_custom_call.1} parent=55 // pred_check
          %p390 = pneg %p197
        $region78: #{tpu_custom_call.1} parent=55 // pred_check_branch
          %392 = sbr.rel (%p390) target = $region80
        $region79: #{tpu_custom_call.1} parent=55 // pred_region
          %393 = dma.done [#allocation12], 8192
        $region80: #{tpu_custom_call.1} parent=55 // pred_fallthru
          _
        %s394 = sand.u32 %s37, 1
        %s395 = scalar_lea.sflag [#allocation3], %s394
        %s396 = sand.u32 %s37, 1
        %s397 = smul.addr %s396, 128
        %s398 = scalar_lea.vmem [#allocation2], %s397
        %p399 = pneg %p50
        %p400 = pneg %p47
        %p401 = pneg %p71
        %p402 = pneg %p68
        %p403 = pneg %p92
        %p404 = pneg %p89
        %p405 = pneg %p113
        %p406 = pneg %p110
        %p407 = pneg %p134
        %p408 = pneg %p131
        %p409 = pneg %p155
        %p410 = pneg %p152
        %p411 = pneg %p176
        %p412 = pneg %p173
        %p413 = pneg %p197
        %p414 = pneg %p194
        %p415 = pneg %p218
        %p416 = pneg %p215
        %p417 = pneg %p244
        %p418 = pneg %p241
        %s419 = sand.u32 %s231, 1
        %s420 = scalar_lea.sflag [#allocation4], %s419
        %s421 = sand.u32 %s231, 1
        %s422 = smul.addr %s421, 512
        %s423 = scalar_lea.vmem [#allocation13], %s422
        %v425 = vld [vmem:[%s369] sm:$0xf]
        %v426 = vld [vmem:[%s369 + $0x4] sm:$0xf]
        %v427 = vld [vmem:[%s369 + $0x8] sm:$0xf]
        %v428 = vld [vmem:[%s369 + $0xc] sm:$0xf]
        %v429 = vld [vmem:[%s369 + $0x10] sm:$0xf]
        %v430 = vld [vmem:[%s369 + $0x14] sm:$0xf]
        %v431 = vld [vmem:[%s369 + $0x18] sm:$0xf]
        %v432 = vld [vmem:[%s369 + $0x1c] sm:$0xf]
        %v433 = vld [vmem:[%s369 + $0x20] sm:$0xf]
        %v434 = vld [vmem:[%s369 + $0x24] sm:$0xf]
        %v435 = vld [vmem:[%s369 + $0x28] sm:$0xf]
        %v436 = vld [vmem:[%s369 + $0x2c] sm:$0xf]
        %v437 = vld [vmem:[%s369 + $0x30] sm:$0xf]
        %v438 = vld [vmem:[%s369 + $0x34] sm:$0xf]
        %v439 = vld [vmem:[%s369 + $0x38] sm:$0xf]
        %v440 = vld [vmem:[%s369 + $0x3c] sm:$0xf]
        %v441 = vld [vmem:[%s369 + $0x40] sm:$0xf]
        %v442 = vld [vmem:[%s369 + $0x44] sm:$0xf]
        %v443 = vld [vmem:[%s369 + $0x48] sm:$0xf]
        %v444 = vld [vmem:[%s369 + $0x4c] sm:$0xf]
        %v445 = vld [vmem:[%s369 + $0x50] sm:$0xf]
        %v446 = vld [vmem:[%s369 + $0x54] sm:$0xf]
        %v447 = vld [vmem:[%s369 + $0x58] sm:$0xf]
        %v448 = vld [vmem:[%s369 + $0x5c] sm:$0xf]
        %v449 = vld [vmem:[%s369 + $0x60] sm:$0xf]
        %v450 = vld [vmem:[%s369 + $0x64] sm:$0xf]
        %v451 = vld [vmem:[%s369 + $0x68] sm:$0xf]
        %v452 = vld [vmem:[%s369 + $0x6c] sm:$0xf]
        %v453 = vld [vmem:[%s369 + $0x70] sm:$0xf]
        %v454 = vld [vmem:[%s369 + $0x74] sm:$0xf]
        %v455 = vld [vmem:[%s369 + $0x78] sm:$0xf]
        %v456 = vld [vmem:[%s369 + $0x7c] sm:$0xf]
        %v457 = vlaneseq
        %v458 = vshrl.u32 %v457, 7
        %v459 = vadd.s32 %v458, 8
        %v460 = vadd.s32 %v458, 16
        %v461 = vadd.s32 %v458, 24
        %v462 = vadd.s32 %v458, 32
        %v463 = vadd.s32 %v458, 40
        %v464 = vadd.s32 %v458, 48
        %v465 = vadd.s32 %v458, 56
        %v466 = vadd.s32 %v458, 64
        %v467 = vadd.s32 %v458, 72
        %v468 = vadd.s32 %v458, 80
        %v469 = vadd.s32 %v458, 88
        %v470 = vadd.s32 %v458, 96
        %v471 = vadd.s32 %v458, 104
        %v472 = vadd.s32 %v458, 112
        %v473 = vadd.s32 %v458, 120
        %v474 = vadd.s32 %v458, 128
        %v475 = vadd.s32 %v458, 136
        %v476 = vadd.s32 %v458, 144
        %v477 = vadd.s32 %v458, 152
        %v478 = vadd.s32 %v458, 160
        %v479 = vadd.s32 %v458, 168
        %v480 = vadd.s32 %v458, 176
        %v481 = vadd.s32 %v458, 184
        %v482 = vadd.s32 %v458, 192
        %v483 = vadd.s32 %v458, 200
        %v484 = vadd.s32 %v458, 208
        %v485 = vadd.s32 %v458, 216
        %v486 = vadd.s32 %v458, 224
        %v487 = vadd.s32 %v458, 232
        %v488 = vadd.s32 %v458, 240
        %v489 = vadd.s32 %v458, 248
        %v490 = vshrl.u32 %v458, 4
        %v491 = vshrl.u32 %v459, 4
        %v492 = vshrl.u32 %v460, 4
        %v493 = vshrl.u32 %v461, 4
        %v494 = vshrl.u32 %v462, 4
        %v495 = vshrl.u32 %v463, 4
        %v496 = vshrl.u32 %v464, 4
        %v497 = vshrl.u32 %v465, 4
        %v498 = vshrl.u32 %v466, 4
        %v499 = vshrl.u32 %v467, 4
        %v500 = vshrl.u32 %v468, 4
        %v501 = vshrl.u32 %v469, 4
        %v502 = vshrl.u32 %v470, 4
        %v503 = vshrl.u32 %v471, 4
        %v504 = vshrl.u32 %v472, 4
        %v505 = vshrl.u32 %v473, 4
        %v506 = vshrl.u32 %v474, 4
        %v507 = vshrl.u32 %v475, 4
        %v508 = vshrl.u32 %v476, 4
        %v509 = vshrl.u32 %v477, 4
        %v510 = vshrl.u32 %v478, 4
        %v511 = vshrl.u32 %v479, 4
        %v512 = vshrl.u32 %v480, 4
        %v513 = vshrl.u32 %v481, 4
        %v514 = vshrl.u32 %v482, 4
        %v515 = vshrl.u32 %v483, 4
        %v516 = vshrl.u32 %v484, 4
        %v517 = vshrl.u32 %v485, 4
        %v518 = vshrl.u32 %v486, 4
        %v519 = vshrl.u32 %v487, 4
        %v520 = vshrl.u32 %v488, 4
        %v521 = vshrl.u32 %v489, 4
        %v522 = vand.u32 %v458, 15
        %v523 = vand.u32 %v459, 15
        %v524 = vand.u32 %v460, 15
        %v525 = vand.u32 %v461, 15
        %v526 = vand.u32 %v462, 15
        %v527 = vand.u32 %v463, 15
        %v528 = vand.u32 %v464, 15
        %v529 = vand.u32 %v465, 15
        %v530 = vand.u32 %v466, 15
        %v531 = vand.u32 %v467, 15
        %v532 = vand.u32 %v468, 15
        %v533 = vand.u32 %v469, 15
        %v534 = vand.u32 %v470, 15
        %v535 = vand.u32 %v471, 15
        %v536 = vand.u32 %v472, 15
        %v537 = vand.u32 %v473, 15
        %v538 = vand.u32 %v474, 15
        %v539 = vand.u32 %v475, 15
        %v540 = vand.u32 %v476, 15
        %v541 = vand.u32 %v477, 15
        %v542 = vand.u32 %v478, 15
        %v543 = vand.u32 %v479, 15
        %v544 = vand.u32 %v480, 15
        %v545 = vand.u32 %v481, 15
        %v546 = vand.u32 %v482, 15
        %v547 = vand.u32 %v483, 15
        %v548 = vand.u32 %v484, 15
        %v549 = vand.u32 %v485, 15
        %v550 = vand.u32 %v486, 15
        %v551 = vand.u32 %v487, 15
        %v552 = vand.u32 %v488, 15
        %v553 = vand.u32 %v489, 15
        %v554 = vunpack.c.l.bf16 %v425
        %v555 = vunpack.c.l.bf16 %v426
        %v556 = vunpack.c.l.bf16 %v427
        %v557 = vunpack.c.l.bf16 %v428
        %v558 = vunpack.c.l.bf16 %v429
        %v559 = vunpack.c.l.bf16 %v430
        %v560 = vunpack.c.l.bf16 %v431
        %v561 = vunpack.c.l.bf16 %v432
        %v562 = vunpack.c.l.bf16 %v433
        %v563 = vunpack.c.l.bf16 %v434
        %v564 = vunpack.c.l.bf16 %v435
        %v565 = vunpack.c.l.bf16 %v436
        %v566 = vunpack.c.l.bf16 %v437
        %v567 = vunpack.c.l.bf16 %v438
        %v568 = vunpack.c.l.bf16 %v439
        %v569 = vunpack.c.l.bf16 %v440
        %v570 = vunpack.c.l.bf16 %v441
        %v571 = vunpack.c.l.bf16 %v442
        %v572 = vunpack.c.l.bf16 %v443
        %v573 = vunpack.c.l.bf16 %v444
        %v574 = vunpack.c.l.bf16 %v445
        %v575 = vunpack.c.l.bf16 %v446
        %v576 = vunpack.c.l.bf16 %v447
        %v577 = vunpack.c.l.bf16 %v448
        %v578 = vunpack.c.l.bf16 %v449
        %v579 = vunpack.c.l.bf16 %v450
        %v580 = vunpack.c.l.bf16 %v451
        %v581 = vunpack.c.l.bf16 %v452
        %v582 = vunpack.c.l.bf16 %v453
        %v583 = vunpack.c.l.bf16 %v454
        %v584 = vunpack.c.l.bf16 %v455
        %v585 = vunpack.c.l.bf16 %v456
        %v586 = vadd.f32 %v554, %v555
        %v587 = vadd.f32 %v586, %v556
        %v588 = vadd.f32 %v587, %v557
        %v589 = vadd.f32 %v588, %v558
        %v590 = vadd.f32 %v589, %v559
        %v591 = vadd.f32 %v590, %v560
        %v592 = vadd.f32 %v591, %v561
        %v593 = vadd.f32 %v592, %v562
        %v594 = vadd.f32 %v593, %v563
        %v595 = vadd.f32 %v594, %v564
        %v596 = vadd.f32 %v595, %v565
        %v597 = vadd.f32 %v596, %v566
        %v598 = vadd.f32 %v597, %v567
        %v599 = vadd.f32 %v598, %v568
        %v600 = vadd.f32 %v599, %v569
        %v601 = vadd.f32 %v600, %v570
        %v602 = vadd.f32 %v601, %v571
        %v603 = vadd.f32 %v602, %v572
        %v604 = vadd.f32 %v603, %v573
        %v605 = vadd.f32 %v604, %v574
        %v606 = vadd.f32 %v605, %v575
        %v607 = vadd.f32 %v606, %v576
        %v608 = vadd.f32 %v607, %v577
        %v609 = vadd.f32 %v608, %v578
        %v610 = vadd.f32 %v609, %v579
        %v611 = vadd.f32 %v610, %v580
        %v612 = vadd.f32 %v611, %v581
        %v613 = vadd.f32 %v612, %v582
        %v614 = vadd.f32 %v613, %v583
        %v615 = vadd.f32 %v614, %v584
        %v616 = vadd.f32 %v615, %v585
        %v617 = vrot.slane %v616, 4
        %v618 = vadd.f32 %v616, %v617
        %v619 = vrot.slane %v618, 2
        %v620 = vadd.f32 %v618, %v619
        %v621 = vrot.slane %v620, 1
        %v622 = vadd.f32 %v620, %v621
        %v623 = vrcp.pop 256.0
        %v624 = vmul.f32 %v622, %v623
        %v625 = vpack.c.bf16 %v624, %v624
        %v626 = vld [vmem:[#allocation5] sm:$0xf]
        %v627 = vld [vmem:[#allocation5 + $0x4] sm:$0xf]
        %v628 = vld [vmem:[#allocation5 + $0x8] sm:$0xf]
        %v629 = vld [vmem:[#allocation5 + $0xc] sm:$0xf]
        %v630 = vld [vmem:[#allocation5 + $0x10] sm:$0xf]
        %v631 = vld [vmem:[#allocation5 + $0x14] sm:$0xf]
        %v632 = vld [vmem:[#allocation5 + $0x18] sm:$0xf]
        %v633 = vld [vmem:[#allocation5 + $0x1c] sm:$0xf]
        %v634 = vld [vmem:[#allocation5 + $0x20] sm:$0xf]
        %v635 = vld [vmem:[#allocation5 + $0x24] sm:$0xf]
        %v636 = vld [vmem:[#allocation5 + $0x28] sm:$0xf]
        %v637 = vld [vmem:[#allocation5 + $0x2c] sm:$0xf]
        %v638 = vld [vmem:[#allocation5 + $0x30] sm:$0xf]
        %v639 = vld [vmem:[#allocation5 + $0x34] sm:$0xf]
        %v640 = vld [vmem:[#allocation5 + $0x38] sm:$0xf]
        %v641 = vld [vmem:[#allocation5 + $0x3c] sm:$0xf]
        %v642 = vld [vmem:[%s2] sm:$0x1]
        %v659 = vunpack.c.l.b16 %v626
        %v660 = vunpack.c.l.b16 %v627
        %v661 = vunpack.c.l.b16 %v628
        %v662 = vunpack.c.l.b16 %v629
        %v663 = vunpack.c.l.b16 %v630
        %v664 = vunpack.c.l.b16 %v631
        %v665 = vunpack.c.l.b16 %v632
        %v666 = vunpack.c.l.b16 %v633
        %v667 = vunpack.c.l.b16 %v634
        %v668 = vunpack.c.l.b16 %v635
        %v669 = vunpack.c.l.b16 %v636
        %v670 = vunpack.c.l.b16 %v637
        %v671 = vunpack.c.l.b16 %v638
        %v672 = vunpack.c.l.b16 %v639
        %v673 = vunpack.c.l.b16 %v640
        %v674 = vunpack.c.l.b16 %v641
        %v675 = vpack.c.b16 %v660, %v659
        %v676 = vpack.c.b16 %v662, %v661
        %v677 = vpack.c.b16 %v664, %v663
        %v678 = vpack.c.b16 %v666, %v665
        %v679 = vpack.c.b16 %v668, %v667
        %v680 = vpack.c.b16 %v670, %v669
        %v681 = vpack.c.b16 %v672, %v671
        %v682 = vpack.c.b16 %v674, %v673
        %691 = vmatprep.subr.bf16.mxu0 0
        %692 = vmatpush1.bf16.msra.mxu0 %v682
        %693 = vmatprep.subr.bf16.mxu0 0
        %694 = vmatpush1.bf16.msra.mxu0 %v681
        %695 = vmatprep.subr.bf16.mxu0 0
        %696 = vmatpush1.bf16.msra.mxu0 %v680
        %697 = vmatprep.subr.bf16.mxu0 0
        %698 = vmatpush1.bf16.msra.mxu0 %v679
        %699 = vmatprep.subr.bf16.mxu0 0
        %700 = vmatpush1.bf16.msra.mxu0 %v678
        %701 = vmatprep.subr.bf16.mxu0 0
        %702 = vmatpush1.bf16.msra.mxu0 %v677
        %703 = vmatprep.subr.bf16.mxu0 0
        %704 = vmatpush1.bf16.msra.mxu0 %v676
        %705 = vmatprep.subr.bf16.mxu0 0
        %706 = vmatpush1.bf16.msra.mxu0 %v675
        %707 = vmatprep.subr.bf16.mxu0 0
        %708 = vmatpush2.bf16.msra.mxu0 0
        %709 = vmatprep.subr.bf16.mxu0 0
        %710 = vmatpush2.bf16.msra.mxu0 0
        %711 = vmatprep.subr.bf16.mxu0 0
        %712 = vmatpush2.bf16.msra.mxu0 0
        %713 = vmatprep.subr.bf16.mxu0 0
        %714 = vmatpush2.bf16.msra.mxu0 0
        %715 = vmatprep.subr.bf16.mxu0 0
        %716 = vmatpush2.bf16.msra.mxu0 0
        %717 = vmatprep.subr.bf16.mxu0 0
        %718 = vmatpush2.bf16.msra.mxu0 0
        %719 = vmatprep.subr.bf16.mxu0 0
        %720 = vmatpush2.bf16.msra.mxu0 0
        %721 = vmatprep.subr.bf16.mxu0 0
        %722 = vmatpush2.bf16.msra.mxu0 0
        %723 = vmatprep.mubr.bf16.mxu0 0
        %724 = vmatmul.mubr.bf16.gmra.mxu0 %v625
        %v725 = vpop.f32.mrf.mxu0
        %v726 = vadd.f32 %v642, %v725
        %v727 = vpop.f32.mrf.mxu0
        %v728 = vpop.f32.mrf.mxu0
        %v729 = vpop.f32.mrf.mxu0
        %730 = vdwg.mxu0
        %v731 = vmax.f32 %v726, 0.0
        %v732 = vpack.c.bf16 %v731, %v731
        %v733 = vld [vmem:[#allocation10] sm:$0xff]
        %v734 = vld [vmem:[#allocation10 + $0x8] sm:$0xff]
        %v735 = vld [vmem:[#allocation10 + $0x10] sm:$0xff]
        %v736 = vld [vmem:[#allocation10 + $0x18] sm:$0xff]
        %v737 = vld [vmem:[#allocation10 + $0x20] sm:$0xff]
        %v738 = vld [vmem:[#allocation10 + $0x28] sm:$0xff]
        %v739 = vld [vmem:[#allocation10 + $0x30] sm:$0xff]
        %v740 = vld [vmem:[#allocation10 + $0x38] sm:$0xff]
        %v741 = vld [vmem:[#allocation10 + $0x40] sm:$0xff]
        %v742 = vld [vmem:[#allocation10 + $0x48] sm:$0xff]
        %v743 = vld [vmem:[#allocation10 + $0x50] sm:$0xff]
        %v744 = vld [vmem:[#allocation10 + $0x58] sm:$0xff]
        %v745 = vld [vmem:[#allocation10 + $0x60] sm:$0xff]
        %v746 = vld [vmem:[#allocation10 + $0x68] sm:$0xff]
        %v747 = vld [vmem:[#allocation10 + $0x70] sm:$0xff]
        %v748 = vld [vmem:[#allocation10 + $0x78] sm:$0xff]
        %v749 = vld [vmem:[%s8] sm:$0x3]
        %v766 = vunpack.c.l.b16 %v733
        %v767 = vunpack.c.h.b16 %v733
        %v768 = vunpack.c.l.b16 %v734
        %v769 = vunpack.c.h.b16 %v734
        %v770 = vunpack.c.l.b16 %v735
        %v771 = vunpack.c.h.b16 %v735
        %v772 = vunpack.c.l.b16 %v736
        %v773 = vunpack.c.h.b16 %v736
        %v774 = vunpack.c.l.b16 %v737
        %v775 = vunpack.c.h.b16 %v737
        %v776 = vunpack.c.l.b16 %v738
        %v777 = vunpack.c.h.b16 %v738
        %v778 = vunpack.c.l.b16 %v739
        %v779 = vunpack.c.h.b16 %v739
        %v780 = vunpack.c.l.b16 %v740
        %v781 = vunpack.c.h.b16 %v740
        %v782 = vunpack.c.l.b16 %v741
        %v783 = vunpack.c.h.b16 %v741
        %v784 = vunpack.c.l.b16 %v742
        %v785 = vunpack.c.h.b16 %v742
        %v786 = vunpack.c.l.b16 %v743
        %v787 = vunpack.c.h.b16 %v743
        %v788 = vunpack.c.l.b16 %v744
        %v789 = vunpack.c.h.b16 %v744
        %v790 = vunpack.c.l.b16 %v745
        %v791 = vunpack.c.h.b16 %v745
        %v792 = vunpack.c.l.b16 %v746
        %v793 = vunpack.c.h.b16 %v746
        %v794 = vunpack.c.l.b16 %v747
        %v795 = vunpack.c.h.b16 %v747
        %v796 = vunpack.c.l.b16 %v748
        %v797 = vunpack.c.h.b16 %v748
        %v798 = vpack.c.b16 %v768, %v766
        %v799 = vpack.c.b16 %v769, %v767
        %v800 = vpack.c.b16 %v772, %v770
        %v801 = vpack.c.b16 %v773, %v771
        %v802 = vpack.c.b16 %v776, %v774
        %v803 = vpack.c.b16 %v777, %v775
        %v804 = vpack.c.b16 %v780, %v778
        %v805 = vpack.c.b16 %v781, %v779
        %v806 = vpack.c.b16 %v784, %v782
        %v807 = vpack.c.b16 %v785, %v783
        %v808 = vpack.c.b16 %v788, %v786
        %v809 = vpack.c.b16 %v789, %v787
        %v810 = vpack.c.b16 %v792, %v790
        %v811 = vpack.c.b16 %v793, %v791
        %v812 = vpack.c.b16 %v796, %v794
        %v813 = vpack.c.b16 %v797, %v795
        %v831 = vlaneseq
        %v832 = vshrl.u32 %v831, 7
        %v833 = vsub.s32 0, %v832
        %v834 = vrot.slane %v749, %v833
        %v835 = vlaneseq
        %v836 = vshrl.u32 %v835, 7
        %v837 = vsub.s32 1, %v836
        %v838 = vrot.slane %v749, %v837
        %841 = vmatprep.subr.bf16.mxu0 %v813
        %842 = vmatpush1.bf16.msra.mxu0 %v812
        %843 = vmatprep.subr.bf16.mxu0 %v811
        %844 = vmatpush1.bf16.msra.mxu0 %v810
        %845 = vmatprep.subr.bf16.mxu0 %v809
        %846 = vmatpush1.bf16.msra.mxu0 %v808
        %847 = vmatprep.subr.bf16.mxu0 %v807
        %848 = vmatpush1.bf16.msra.mxu0 %v806
        %849 = vmatprep.subr.bf16.mxu0 %v805
        %850 = vmatpush1.bf16.msra.mxu0 %v804
        %851 = vmatprep.subr.bf16.mxu0 %v803
        %852 = vmatpush1.bf16.msra.mxu0 %v802
        %853 = vmatprep.subr.bf16.mxu0 %v801
        %854 = vmatpush1.bf16.msra.mxu0 %v800
        %855 = vmatprep.subr.bf16.mxu0 %v799
        %856 = vmatpush1.bf16.msra.mxu0 %v798
        %857 = vmatprep.subr.bf16.mxu0 0
        %858 = vmatpush2.bf16.msra.mxu0 0
        %859 = vmatprep.subr.bf16.mxu0 0
        %860 = vmatpush2.bf16.msra.mxu0 0
        %861 = vmatprep.subr.bf16.mxu0 0
        %862 = vmatpush2.bf16.msra.mxu0 0
        %863 = vmatprep.subr.bf16.mxu0 0
        %864 = vmatpush2.bf16.msra.mxu0 0
        %865 = vmatprep.subr.bf16.mxu0 0
        %866 = vmatpush2.bf16.msra.mxu0 0
        %867 = vmatprep.subr.bf16.mxu0 0
        %868 = vmatpush2.bf16.msra.mxu0 0
        %869 = vmatprep.subr.bf16.mxu0 0
        %870 = vmatpush2.bf16.msra.mxu0 0
        %871 = vmatprep.subr.bf16.mxu0 0
        %872 = vmatpush2.bf16.msra.mxu0 0
        %873 = vmatprep.mubr.bf16.mxu0 0
        %874 = vmatmul.mubr.bf16.gmra.mxu0 %v732
        %v875 = vpop.f32.mrf.mxu0
        %v876 = vadd.f32 %v834, %v875
        %v877 = vpop.f32.mrf.mxu0
        %v878 = vadd.f32 %v838, %v877
        %v879 = vpop.f32.mrf.mxu0
        %v880 = vpop.f32.mrf.mxu0
        %881 = vdwg.mxu0
        %v882 = vld [vmem:[#allocation7] sm:$0xf]
        %v883 = vld [vmem:[#allocation7 + $0x4] sm:$0xf]
        %v884 = vld [vmem:[#allocation7 + $0x8] sm:$0xf]
        %v885 = vld [vmem:[#allocation7 + $0xc] sm:$0xf]
        %v886 = vld [vmem:[#allocation7 + $0x10] sm:$0xf]
        %v887 = vld [vmem:[#allocation7 + $0x14] sm:$0xf]
        %v888 = vld [vmem:[#allocation7 + $0x18] sm:$0xf]
        %v889 = vld [vmem:[#allocation7 + $0x1c] sm:$0xf]
        %v890 = vld [vmem:[#allocation7 + $0x20] sm:$0xf]
        %v891 = vld [vmem:[#allocation7 + $0x24] sm:$0xf]
        %v892 = vld [vmem:[#allocation7 + $0x28] sm:$0xf]
        %v893 = vld [vmem:[#allocation7 + $0x2c] sm:$0xf]
        %v894 = vld [vmem:[#allocation7 + $0x30] sm:$0xf]
        %v895 = vld [vmem:[#allocation7 + $0x34] sm:$0xf]
        %v896 = vld [vmem:[#allocation7 + $0x38] sm:$0xf]
        %v897 = vld [vmem:[#allocation7 + $0x3c] sm:$0xf]
        %v898 = vld [vmem:[%s4] sm:$0x1]
        %v900 = vlaneseq
        %v901 = vshrl.u32 %v900, 7
        %v902 = vsub.s32 0, %v901
        %v903 = vrot.slane %v898, %v902
        %v937 = vunpack.c.l.b16 %v425
        %v938 = vunpack.c.l.b16 %v426
        %v939 = vunpack.c.l.b16 %v427
        %v940 = vunpack.c.l.b16 %v428
        %v941 = vunpack.c.l.b16 %v429
        %v942 = vunpack.c.l.b16 %v430
        %v943 = vunpack.c.l.b16 %v431
        %v944 = vunpack.c.l.b16 %v432
        %v945 = vunpack.c.l.b16 %v433
        %v946 = vunpack.c.l.b16 %v434
        %v947 = vunpack.c.l.b16 %v435
        %v948 = vunpack.c.l.b16 %v436
        %v949 = vunpack.c.l.b16 %v437
        %v950 = vunpack.c.l.b16 %v438
        %v951 = vunpack.c.l.b16 %v439
        %v952 = vunpack.c.l.b16 %v440
        %v953 = vunpack.c.l.b16 %v441
        %v954 = vunpack.c.l.b16 %v442
        %v955 = vunpack.c.l.b16 %v443
        %v956 = vunpack.c.l.b16 %v444
        %v957 = vunpack.c.l.b16 %v445
        %v958 = vunpack.c.l.b16 %v446
        %v959 = vunpack.c.l.b16 %v447
        %v960 = vunpack.c.l.b16 %v448
        %v961 = vunpack.c.l.b16 %v449
        %v962 = vunpack.c.l.b16 %v450
        %v963 = vunpack.c.l.b16 %v451
        %v964 = vunpack.c.l.b16 %v452
        %v965 = vunpack.c.l.b16 %v453
        %v966 = vunpack.c.l.b16 %v454
        %v967 = vunpack.c.l.b16 %v455
        %v968 = vunpack.c.l.b16 %v456
        %v969 = vpack.c.b16 %v938, %v937
        %v970 = vpack.c.b16 %v940, %v939
        %v971 = vpack.c.b16 %v942, %v941
        %v972 = vpack.c.b16 %v944, %v943
        %v973 = vpack.c.b16 %v946, %v945
        %v974 = vpack.c.b16 %v948, %v947
        %v975 = vpack.c.b16 %v950, %v949
        %v976 = vpack.c.b16 %v952, %v951
        %v977 = vpack.c.b16 %v954, %v953
        %v978 = vpack.c.b16 %v956, %v955
        %v979 = vpack.c.b16 %v958, %v957
        %v980 = vpack.c.b16 %v960, %v959
        %v981 = vpack.c.b16 %v962, %v961
        %v982 = vpack.c.b16 %v964, %v963
        %v983 = vpack.c.b16 %v966, %v965
        %v984 = vpack.c.b16 %v968, %v967
        %v1017 = vunpack.c.l.b16 %v882
        %v1018 = vunpack.c.l.b16 %v883
        %v1019 = vunpack.c.l.b16 %v884
        %v1020 = vunpack.c.l.b16 %v885
        %v1021 = vunpack.c.l.b16 %v886
        %v1022 = vunpack.c.l.b16 %v887
        %v1023 = vunpack.c.l.b16 %v888
        %v1024 = vunpack.c.l.b16 %v889
        %v1025 = vunpack.c.l.b16 %v890
        %v1026 = vunpack.c.l.b16 %v891
        %v1027 = vunpack.c.l.b16 %v892
        %v1028 = vunpack.c.l.b16 %v893
        %v1029 = vunpack.c.l.b16 %v894
        %v1030 = vunpack.c.l.b16 %v895
        %v1031 = vunpack.c.l.b16 %v896
        %v1032 = vunpack.c.l.b16 %v897
        %v1033 = vpack.c.b16 %v1018, %v1017
        %v1034 = vpack.c.b16 %v1020, %v1019
        %v1035 = vpack.c.b16 %v1022, %v1021
        %v1036 = vpack.c.b16 %v1024, %v1023
        %v1037 = vpack.c.b16 %v1026, %v1025
        %v1038 = vpack.c.b16 %v1028, %v1027
        %v1039 = vpack.c.b16 %v1030, %v1029
        %v1040 = vpack.c.b16 %v1032, %v1031
        %1049 = vmatprep.subr.bf16.mxu0 0
        %1050 = vmatpush1.bf16.msra.mxu0 %v1040
        %1051 = vmatprep.subr.bf16.mxu0 0
        %1052 = vmatpush1.bf16.msra.mxu0 %v1039
        %1053 = vmatprep.subr.bf16.mxu0 0
        %1054 = vmatpush1.bf16.msra.mxu0 %v1038
        %1055 = vmatprep.subr.bf16.mxu0 0
        %1056 = vmatpush1.bf16.msra.mxu0 %v1037
        %1057 = vmatprep.subr.bf16.mxu0 0
        %1058 = vmatpush1.bf16.msra.mxu0 %v1036
        %1059 = vmatprep.subr.bf16.mxu0 0
        %1060 = vmatpush1.bf16.msra.mxu0 %v1035
        %1061 = vmatprep.subr.bf16.mxu0 0
        %1062 = vmatpush1.bf16.msra.mxu0 %v1034
        %1063 = vmatprep.subr.bf16.mxu0 0
        %1064 = vmatpush1.bf16.msra.mxu0 %v1033
        %1065 = vmatprep.subr.bf16.mxu0 0
        %1066 = vmatpush2.bf16.msra.mxu0 0
        %1067 = vmatprep.subr.bf16.mxu0 0
        %1068 = vmatpush2.bf16.msra.mxu0 0
        %1069 = vmatprep.subr.bf16.mxu0 0
        %1070 = vmatpush2.bf16.msra.mxu0 0
        %1071 = vmatprep.subr.bf16.mxu0 0
        %1072 = vmatpush2.bf16.msra.mxu0 0
        %1073 = vmatprep.subr.bf16.mxu0 0
        %1074 = vmatpush2.bf16.msra.mxu0 0
        %1075 = vmatprep.subr.bf16.mxu0 0
        %1076 = vmatpush2.bf16.msra.mxu0 0
        %1077 = vmatprep.subr.bf16.mxu0 0
        %1078 = vmatpush2.bf16.msra.mxu0 0
        %1079 = vmatprep.subr.bf16.mxu0 0
        %1080 = vmatpush2.bf16.msra.mxu0 0
        %1081 = vmatprep.mubr.bf16.mxu0 0
        %1082 = vmatmul.mubr.bf16.gmra.mxu0 %v969
        %v1083 = vpop.f32.mrf.mxu0
        %v1084 = vadd.f32 %v903, %v1083
        %v1085 = vpop.f32.mrf.mxu0
        %v1086 = vpop.f32.mrf.mxu0
        %v1087 = vadd.f32 %v903, %v1086
        %v1088 = vpop.f32.mrf.mxu0
        %1089 = vmatprep.mubr.bf16.mxu0 0
        %1090 = vmatmul.mubr.bf16.gmra.mxu0 %v970
        %v1091 = vpop.f32.mrf.mxu0
        %v1092 = vadd.f32 %v903, %v1091
        %v1093 = vpop.f32.mrf.mxu0
        %v1094 = vpop.f32.mrf.mxu0
        %v1095 = vadd.f32 %v903, %v1094
        %v1096 = vpop.f32.mrf.mxu0
        %1097 = vmatprep.mubr.bf16.mxu0 0
        %1098 = vmatmul.mubr.bf16.gmra.mxu0 %v971
        %v1099 = vpop.f32.mrf.mxu0
        %v1100 = vadd.f32 %v903, %v1099
        %v1101 = vpop.f32.mrf.mxu0
        %v1102 = vpop.f32.mrf.mxu0
        %v1103 = vadd.f32 %v903, %v1102
        %v1104 = vpop.f32.mrf.mxu0
        %1105 = vmatprep.mubr.bf16.mxu0 0
        %1106 = vmatmul.mubr.bf16.gmra.mxu0 %v972
        %v1107 = vpop.f32.mrf.mxu0
        %v1108 = vadd.f32 %v903, %v1107
        %v1109 = vpop.f32.mrf.mxu0
        %v1110 = vpop.f32.mrf.mxu0
        %v1111 = vadd.f32 %v903, %v1110
        %v1112 = vpop.f32.mrf.mxu0
        %1113 = vmatprep.mubr.bf16.mxu0 0
        %1114 = vmatmul.mubr.bf16.gmra.mxu0 %v973
        %v1115 = vpop.f32.mrf.mxu0
        %v1116 = vadd.f32 %v903, %v1115
        %v1117 = vpop.f32.mrf.mxu0
        %v1118 = vpop.f32.mrf.mxu0
        %v1119 = vadd.f32 %v903, %v1118
        %v1120 = vpop.f32.mrf.mxu0
        %1121 = vmatprep.mubr.bf16.mxu0 0
        %1122 = vmatmul.mubr.bf16.gmra.mxu0 %v974
        %v1123 = vpop.f32.mrf.mxu0
        %v1124 = vadd.f32 %v903, %v1123
        %v1125 = vpop.f32.mrf.mxu0
        %v1126 = vpop.f32.mrf.mxu0
        %v1127 = vadd.f32 %v903, %v1126
        %v1128 = vpop.f32.mrf.mxu0
        %1129 = vmatprep.mubr.bf16.mxu0 0
        %1130 = vmatmul.mubr.bf16.gmra.mxu0 %v975
        %v1131 = vpop.f32.mrf.mxu0
        %v1132 = vadd.f32 %v903, %v1131
        %v1133 = vpop.f32.mrf.mxu0
        %v1134 = vpop.f32.mrf.mxu0
        %v1135 = vadd.f32 %v903, %v1134
        %v1136 = vpop.f32.mrf.mxu0
        %1137 = vmatprep.mubr.bf16.mxu0 0
        %1138 = vmatmul.mubr.bf16.gmra.mxu0 %v976
        %v1139 = vpop.f32.mrf.mxu0
        %v1140 = vadd.f32 %v903, %v1139
        %v1141 = vpop.f32.mrf.mxu0
        %v1142 = vpop.f32.mrf.mxu0
        %v1143 = vadd.f32 %v903, %v1142
        %v1144 = vpop.f32.mrf.mxu0
        %1145 = vmatprep.mubr.bf16.mxu0 0
        %1146 = vmatmul.mubr.bf16.gmra.mxu0 %v977
        %v1147 = vpop.f32.mrf.mxu0
        %v1148 = vadd.f32 %v903, %v1147
        %v1149 = vpop.f32.mrf.mxu0
        %v1150 = vpop.f32.mrf.mxu0
        %v1151 = vadd.f32 %v903, %v1150
        %v1152 = vpop.f32.mrf.mxu0
        %1153 = vmatprep.mubr.bf16.mxu0 0
        %1154 = vmatmul.mubr.bf16.gmra.mxu0 %v978
        %v1155 = vpop.f32.mrf.mxu0
        %v1156 = vadd.f32 %v903, %v1155
        %v1157 = vpop.f32.mrf.mxu0
        %v1158 = vpop.f32.mrf.mxu0
        %v1159 = vadd.f32 %v903, %v1158
        %v1160 = vpop.f32.mrf.mxu0
        %1161 = vmatprep.mubr.bf16.mxu0 0
        %1162 = vmatmul.mubr.bf16.gmra.mxu0 %v979
        %v1163 = vpop.f32.mrf.mxu0
        %v1164 = vadd.f32 %v903, %v1163
        %v1165 = vpop.f32.mrf.mxu0
        %v1166 = vpop.f32.mrf.mxu0
        %v1167 = vadd.f32 %v903, %v1166
        %v1168 = vpop.f32.mrf.mxu0
        %1169 = vmatprep.mubr.bf16.mxu0 0
        %1170 = vmatmul.mubr.bf16.gmra.mxu0 %v980
        %v1171 = vpop.f32.mrf.mxu0
        %v1172 = vadd.f32 %v903, %v1171
        %v1173 = vpop.f32.mrf.mxu0
        %v1174 = vpop.f32.mrf.mxu0
        %v1175 = vadd.f32 %v903, %v1174
        %v1176 = vpop.f32.mrf.mxu0
        %1177 = vmatprep.mubr.bf16.mxu0 0
        %1178 = vmatmul.mubr.bf16.gmra.mxu0 %v981
        %v1179 = vpop.f32.mrf.mxu0
        %v1180 = vadd.f32 %v903, %v1179
        %v1181 = vpop.f32.mrf.mxu0
        %v1182 = vpop.f32.mrf.mxu0
        %v1183 = vadd.f32 %v903, %v1182
        %v1184 = vpop.f32.mrf.mxu0
        %1185 = vmatprep.mubr.bf16.mxu0 0
        %1186 = vmatmul.mubr.bf16.gmra.mxu0 %v982
        %v1187 = vpop.f32.mrf.mxu0
        %v1188 = vadd.f32 %v903, %v1187
        %v1189 = vpop.f32.mrf.mxu0
        %v1190 = vpop.f32.mrf.mxu0
        %v1191 = vadd.f32 %v903, %v1190
        %v1192 = vpop.f32.mrf.mxu0
        %1193 = vmatprep.mubr.bf16.mxu0 0
        %1194 = vmatmul.mubr.bf16.gmra.mxu0 %v983
        %v1195 = vpop.f32.mrf.mxu0
        %v1196 = vadd.f32 %v903, %v1195
        %v1197 = vpop.f32.mrf.mxu0
        %v1198 = vpop.f32.mrf.mxu0
        %v1199 = vadd.f32 %v903, %v1198
        %v1200 = vpop.f32.mrf.mxu0
        %1201 = vmatprep.mubr.bf16.mxu0 0
        %1202 = vmatmul.mubr.bf16.gmra.mxu0 %v984
        %v1203 = vpop.f32.mrf.mxu0
        %v1204 = vadd.f32 %v903, %v1203
        %v1205 = vpop.f32.mrf.mxu0
        %v1206 = vpop.f32.mrf.mxu0
        %v1207 = vadd.f32 %v903, %v1206
        %v1208 = vpop.f32.mrf.mxu0
        %1209 = vdwg.mxu0
        %s1210 = scalar_lea.vmem [#allocation7], 64
        %v1211 = vld [vmem:[%s1210] sm:$0xf]
        %v1212 = vld [vmem:[%s1210 + $0x4] sm:$0xf]
        %v1213 = vld [vmem:[%s1210 + $0x8] sm:$0xf]
        %v1214 = vld [vmem:[%s1210 + $0xc] sm:$0xf]
        %v1215 = vld [vmem:[%s1210 + $0x10] sm:$0xf]
        %v1216 = vld [vmem:[%s1210 + $0x14] sm:$0xf]
        %v1217 = vld [vmem:[%s1210 + $0x18] sm:$0xf]
        %v1218 = vld [vmem:[%s1210 + $0x1c] sm:$0xf]
        %v1219 = vld [vmem:[%s1210 + $0x20] sm:$0xf]
        %v1220 = vld [vmem:[%s1210 + $0x24] sm:$0xf]
        %v1221 = vld [vmem:[%s1210 + $0x28] sm:$0xf]
        %v1222 = vld [vmem:[%s1210 + $0x2c] sm:$0xf]
        %v1223 = vld [vmem:[%s1210 + $0x30] sm:$0xf]
        %v1224 = vld [vmem:[%s1210 + $0x34] sm:$0xf]
        %v1225 = vld [vmem:[%s1210 + $0x38] sm:$0xf]
        %v1226 = vld [vmem:[%s1210 + $0x3c] sm:$0xf]
        %s1227 = scalar_lea.vmem %s4, 1
        %v1228 = vld [vmem:[%s1227] sm:$0x1]
        %v1230 = vlaneseq
        %v1231 = vshrl.u32 %v1230, 7
        %v1232 = vsub.s32 0, %v1231
        %v1233 = vrot.slane %v1228, %v1232
        %v1251 = vunpack.c.l.b16 %v1211
        %v1252 = vunpack.c.l.b16 %v1212
        %v1253 = vunpack.c.l.b16 %v1213
        %v1254 = vunpack.c.l.b16 %v1214
        %v1255 = vunpack.c.l.b16 %v1215
        %v1256 = vunpack.c.l.b16 %v1216
        %v1257 = vunpack.c.l.b16 %v1217
        %v1258 = vunpack.c.l.b16 %v1218
        %v1259 = vunpack.c.l.b16 %v1219
        %v1260 = vunpack.c.l.b16 %v1220
        %v1261 = vunpack.c.l.b16 %v1221
        %v1262 = vunpack.c.l.b16 %v1222
        %v1263 = vunpack.c.l.b16 %v1223
        %v1264 = vunpack.c.l.b16 %v1224
        %v1265 = vunpack.c.l.b16 %v1225
        %v1266 = vunpack.c.l.b16 %v1226
        %v1267 = vpack.c.b16 %v1252, %v1251
        %v1268 = vpack.c.b16 %v1254, %v1253
        %v1269 = vpack.c.b16 %v1256, %v1255
        %v1270 = vpack.c.b16 %v1258, %v1257
        %v1271 = vpack.c.b16 %v1260, %v1259
        %v1272 = vpack.c.b16 %v1262, %v1261
        %v1273 = vpack.c.b16 %v1264, %v1263
        %v1274 = vpack.c.b16 %v1266, %v1265
        %1283 = vmatprep.subr.bf16.mxu0 0
        %1284 = vmatpush1.bf16.msra.mxu0 %v1274
        %1285 = vmatprep.subr.bf16.mxu0 0
        %1286 = vmatpush1.bf16.msra.mxu0 %v1273
        %1287 = vmatprep.subr.bf16.mxu0 0
        %1288 = vmatpush1.bf16.msra.mxu0 %v1272
        %1289 = vmatprep.subr.bf16.mxu0 0
        %1290 = vmatpush1.bf16.msra.mxu0 %v1271
        %1291 = vmatprep.subr.bf16.mxu0 0
        %1292 = vmatpush1.bf16.msra.mxu0 %v1270
        %1293 = vmatprep.subr.bf16.mxu0 0
        %1294 = vmatpush1.bf16.msra.mxu0 %v1269
        %1295 = vmatprep.subr.bf16.mxu0 0
        %1296 = vmatpush1.bf16.msra.mxu0 %v1268
        %1297 = vmatprep.subr.bf16.mxu0 0
        %1298 = vmatpush1.bf16.msra.mxu0 %v1267
        %1299 = vmatprep.subr.bf16.mxu0 0
        %1300 = vmatpush2.bf16.msra.mxu0 0
        %1301 = vmatprep.subr.bf16.mxu0 0
        %1302 = vmatpush2.bf16.msra.mxu0 0
        %1303 = vmatprep.subr.bf16.mxu0 0
        %1304 = vmatpush2.bf16.msra.mxu0 0
        %1305 = vmatprep.subr.bf16.mxu0 0
        %1306 = vmatpush2.bf16.msra.mxu0 0
        %1307 = vmatprep.subr.bf16.mxu0 0
        %1308 = vmatpush2.bf16.msra.mxu0 0
        %1309 = vmatprep.subr.bf16.mxu0 0
        %1310 = vmatpush2.bf16.msra.mxu0 0
        %1311 = vmatprep.subr.bf16.mxu0 0
        %1312 = vmatpush2.bf16.msra.mxu0 0
        %1313 = vmatprep.subr.bf16.mxu0 0
        %1314 = vmatpush2.bf16.msra.mxu0 0
        %1315 = vmatprep.mubr.bf16.mxu0 0
        %1316 = vmatmul.mubr.bf16.gmra.mxu0 %v969
        %v1317 = vpop.f32.mrf.mxu0
        %v1318 = vadd.f32 %v1233, %v1317
        %v1319 = vpop.f32.mrf.mxu0
        %v1320 = vpop.f32.mrf.mxu0
        %v1321 = vadd.f32 %v1233, %v1320
        %v1322 = vpop.f32.mrf.mxu0
        %1323 = vmatprep.mubr.bf16.mxu0 0
        %1324 = vmatmul.mubr.bf16.gmra.mxu0 %v970
        %v1325 = vpop.f32.mrf.mxu0
        %v1326 = vadd.f32 %v1233, %v1325
        %v1327 = vpop.f32.mrf.mxu0
        %v1328 = vpop.f32.mrf.mxu0
        %v1329 = vadd.f32 %v1233, %v1328
        %v1330 = vpop.f32.mrf.mxu0
        %1331 = vmatprep.mubr.bf16.mxu0 0
        %1332 = vmatmul.mubr.bf16.gmra.mxu0 %v971
        %v1333 = vpop.f32.mrf.mxu0
        %v1334 = vadd.f32 %v1233, %v1333
        %v1335 = vpop.f32.mrf.mxu0
        %v1336 = vpop.f32.mrf.mxu0
        %v1337 = vadd.f32 %v1233, %v1336
        %v1338 = vpop.f32.mrf.mxu0
        %1339 = vmatprep.mubr.bf16.mxu0 0
        %1340 = vmatmul.mubr.bf16.gmra.mxu0 %v972
        %v1341 = vpop.f32.mrf.mxu0
        %v1342 = vadd.f32 %v1233, %v1341
        %v1343 = vpop.f32.mrf.mxu0
        %v1344 = vpop.f32.mrf.mxu0
        %v1345 = vadd.f32 %v1233, %v1344
        %v1346 = vpop.f32.mrf.mxu0
        %1347 = vmatprep.mubr.bf16.mxu0 0
        %1348 = vmatmul.mubr.bf16.gmra.mxu0 %v973
        %v1349 = vpop.f32.mrf.mxu0
        %v1350 = vadd.f32 %v1233, %v1349
        %v1351 = vpop.f32.mrf.mxu0
        %v1352 = vpop.f32.mrf.mxu0
        %v1353 = vadd.f32 %v1233, %v1352
        %v1354 = vpop.f32.mrf.mxu0
        %1355 = vmatprep.mubr.bf16.mxu0 0
        %1356 = vmatmul.mubr.bf16.gmra.mxu0 %v974
        %v1357 = vpop.f32.mrf.mxu0
        %v1358 = vadd.f32 %v1233, %v1357
        %v1359 = vpop.f32.mrf.mxu0
        %v1360 = vpop.f32.mrf.mxu0
        %v1361 = vadd.f32 %v1233, %v1360
        %v1362 = vpop.f32.mrf.mxu0
        %1363 = vmatprep.mubr.bf16.mxu0 0
        %1364 = vmatmul.mubr.bf16.gmra.mxu0 %v975
        %v1365 = vpop.f32.mrf.mxu0
        %v1366 = vadd.f32 %v1233, %v1365
        %v1367 = vpop.f32.mrf.mxu0
        %v1368 = vpop.f32.mrf.mxu0
        %v1369 = vadd.f32 %v1233, %v1368
        %v1370 = vpop.f32.mrf.mxu0
        %1371 = vmatprep.mubr.bf16.mxu0 0
        %1372 = vmatmul.mubr.bf16.gmra.mxu0 %v976
        %v1373 = vpop.f32.mrf.mxu0
        %v1374 = vadd.f32 %v1233, %v1373
        %v1375 = vpop.f32.mrf.mxu0
        %v1376 = vpop.f32.mrf.mxu0
        %v1377 = vadd.f32 %v1233, %v1376
        %v1378 = vpop.f32.mrf.mxu0
        %1379 = vmatprep.mubr.bf16.mxu0 0
        %1380 = vmatmul.mubr.bf16.gmra.mxu0 %v977
        %v1381 = vpop.f32.mrf.mxu0
        %v1382 = vadd.f32 %v1233, %v1381
        %v1383 = vpop.f32.mrf.mxu0
        %v1384 = vpop.f32.mrf.mxu0
        %v1385 = vadd.f32 %v1233, %v1384
        %v1386 = vpop.f32.mrf.mxu0
        %1387 = vmatprep.mubr.bf16.mxu0 0
        %1388 = vmatmul.mubr.bf16.gmra.mxu0 %v978
        %v1389 = vpop.f32.mrf.mxu0
        %v1390 = vadd.f32 %v1233, %v1389
        %v1391 = vpop.f32.mrf.mxu0
        %v1392 = vpop.f32.mrf.mxu0
        %v1393 = vadd.f32 %v1233, %v1392
        %v1394 = vpop.f32.mrf.mxu0
        %1395 = vmatprep.mubr.bf16.mxu0 0
        %1396 = vmatmul.mubr.bf16.gmra.mxu0 %v979
        %v1397 = vpop.f32.mrf.mxu0
        %v1398 = vadd.f32 %v1233, %v1397
        %v1399 = vpop.f32.mrf.mxu0
        %v1400 = vpop.f32.mrf.mxu0
        %v1401 = vadd.f32 %v1233, %v1400
        %v1402 = vpop.f32.mrf.mxu0
        %1403 = vmatprep.mubr.bf16.mxu0 0
        %1404 = vmatmul.mubr.bf16.gmra.mxu0 %v980
        %v1405 = vpop.f32.mrf.mxu0
        %v1406 = vadd.f32 %v1233, %v1405
        %v1407 = vpop.f32.mrf.mxu0
        %v1408 = vpop.f32.mrf.mxu0
        %v1409 = vadd.f32 %v1233, %v1408
        %v1410 = vpop.f32.mrf.mxu0
        %1411 = vmatprep.mubr.bf16.mxu0 0
        %1412 = vmatmul.mubr.bf16.gmra.mxu0 %v981
        %v1413 = vpop.f32.mrf.mxu0
        %v1414 = vadd.f32 %v1233, %v1413
        %v1415 = vpop.f32.mrf.mxu0
        %v1416 = vpop.f32.mrf.mxu0
        %v1417 = vadd.f32 %v1233, %v1416
        %v1418 = vpop.f32.mrf.mxu0
        %1419 = vmatprep.mubr.bf16.mxu0 0
        %1420 = vmatmul.mubr.bf16.gmra.mxu0 %v982
        %v1421 = vpop.f32.mrf.mxu0
        %v1422 = vadd.f32 %v1233, %v1421
        %v1423 = vpop.f32.mrf.mxu0
        %v1424 = vpop.f32.mrf.mxu0
        %v1425 = vadd.f32 %v1233, %v1424
        %v1426 = vpop.f32.mrf.mxu0
        %1427 = vmatprep.mubr.bf16.mxu0 0
        %1428 = vmatmul.mubr.bf16.gmra.mxu0 %v983
        %v1429 = vpop.f32.mrf.mxu0
        %v1430 = vadd.f32 %v1233, %v1429
        %v1431 = vpop.f32.mrf.mxu0
        %v1432 = vpop.f32.mrf.mxu0
        %v1433 = vadd.f32 %v1233, %v1432
        %v1434 = vpop.f32.mrf.mxu0
        %1435 = vmatprep.mubr.bf16.mxu0 0
        %1436 = vmatmul.mubr.bf16.gmra.mxu0 %v984
        %v1437 = vpop.f32.mrf.mxu0
        %v1438 = vadd.f32 %v1233, %v1437
        %v1439 = vpop.f32.mrf.mxu0
        %v1440 = vpop.f32.mrf.mxu0
        %v1441 = vadd.f32 %v1233, %v1440
        %v1442 = vpop.f32.mrf.mxu0
        %1443 = vdwg.mxu0
        %s1444 = scalar_lea.vmem [#allocation7], 128
        %v1445 = vld [vmem:[%s1444] sm:$0xf]
        %v1446 = vld [vmem:[%s1444 + $0x4] sm:$0xf]
        %v1447 = vld [vmem:[%s1444 + $0x8] sm:$0xf]
        %v1448 = vld [vmem:[%s1444 + $0xc] sm:$0xf]
        %v1449 = vld [vmem:[%s1444 + $0x10] sm:$0xf]
        %v1450 = vld [vmem:[%s1444 + $0x14] sm:$0xf]
        %v1451 = vld [vmem:[%s1444 + $0x18] sm:$0xf]
        %v1452 = vld [vmem:[%s1444 + $0x1c] sm:$0xf]
        %v1453 = vld [vmem:[%s1444 + $0x20] sm:$0xf]
        %v1454 = vld [vmem:[%s1444 + $0x24] sm:$0xf]
        %v1455 = vld [vmem:[%s1444 + $0x28] sm:$0xf]
        %v1456 = vld [vmem:[%s1444 + $0x2c] sm:$0xf]
        %v1457 = vld [vmem:[%s1444 + $0x30] sm:$0xf]
        %v1458 = vld [vmem:[%s1444 + $0x34] sm:$0xf]
        %v1459 = vld [vmem:[%s1444 + $0x38] sm:$0xf]
        %v1460 = vld [vmem:[%s1444 + $0x3c] sm:$0xf]
        %s1461 = scalar_lea.vmem %s4, 2
        %v1462 = vld [vmem:[%s1461] sm:$0x1]
        %v1464 = vlaneseq
        %v1465 = vshrl.u32 %v1464, 7
        %v1466 = vsub.s32 0, %v1465
        %v1467 = vrot.slane %v1462, %v1466
        %v1485 = vunpack.c.l.b16 %v1445
        %v1486 = vunpack.c.l.b16 %v1446
        %v1487 = vunpack.c.l.b16 %v1447
        %v1488 = vunpack.c.l.b16 %v1448
        %v1489 = vunpack.c.l.b16 %v1449
        %v1490 = vunpack.c.l.b16 %v1450
        %v1491 = vunpack.c.l.b16 %v1451
        %v1492 = vunpack.c.l.b16 %v1452
        %v1493 = vunpack.c.l.b16 %v1453
        %v1494 = vunpack.c.l.b16 %v1454
        %v1495 = vunpack.c.l.b16 %v1455
        %v1496 = vunpack.c.l.b16 %v1456
        %v1497 = vunpack.c.l.b16 %v1457
        %v1498 = vunpack.c.l.b16 %v1458
        %v1499 = vunpack.c.l.b16 %v1459
        %v1500 = vunpack.c.l.b16 %v1460
        %v1501 = vpack.c.b16 %v1486, %v1485
        %v1502 = vpack.c.b16 %v1488, %v1487
        %v1503 = vpack.c.b16 %v1490, %v1489
        %v1504 = vpack.c.b16 %v1492, %v1491
        %v1505 = vpack.c.b16 %v1494, %v1493
        %v1506 = vpack.c.b16 %v1496, %v1495
        %v1507 = vpack.c.b16 %v1498, %v1497
        %v1508 = vpack.c.b16 %v1500, %v1499
        %1517 = vmatprep.subr.bf16.mxu0 0
        %1518 = vmatpush1.bf16.msra.mxu0 %v1508
        %1519 = vmatprep.subr.bf16.mxu0 0
        %1520 = vmatpush1.bf16.msra.mxu0 %v1507
        %1521 = vmatprep.subr.bf16.mxu0 0
        %1522 = vmatpush1.bf16.msra.mxu0 %v1506
        %1523 = vmatprep.subr.bf16.mxu0 0
        %1524 = vmatpush1.bf16.msra.mxu0 %v1505
        %1525 = vmatprep.subr.bf16.mxu0 0
        %1526 = vmatpush1.bf16.msra.mxu0 %v1504
        %1527 = vmatprep.subr.bf16.mxu0 0
        %1528 = vmatpush1.bf16.msra.mxu0 %v1503
        %1529 = vmatprep.subr.bf16.mxu0 0
        %1530 = vmatpush1.bf16.msra.mxu0 %v1502
        %1531 = vmatprep.subr.bf16.mxu0 0
        %1532 = vmatpush1.bf16.msra.mxu0 %v1501
        %1533 = vmatprep.subr.bf16.mxu0 0
        %1534 = vmatpush2.bf16.msra.mxu0 0
        %1535 = vmatprep.subr.bf16.mxu0 0
        %1536 = vmatpush2.bf16.msra.mxu0 0
        %1537 = vmatprep.subr.bf16.mxu0 0
        %1538 = vmatpush2.bf16.msra.mxu0 0
        %1539 = vmatprep.subr.bf16.mxu0 0
        %1540 = vmatpush2.bf16.msra.mxu0 0
        %1541 = vmatprep.subr.bf16.mxu0 0
        %1542 = vmatpush2.bf16.msra.mxu0 0
        %1543 = vmatprep.subr.bf16.mxu0 0
        %1544 = vmatpush2.bf16.msra.mxu0 0
        %1545 = vmatprep.subr.bf16.mxu0 0
        %1546 = vmatpush2.bf16.msra.mxu0 0
        %1547 = vmatprep.subr.bf16.mxu0 0
        %1548 = vmatpush2.bf16.msra.mxu0 0
        %1549 = vmatprep.mubr.bf16.mxu0 0
        %1550 = vmatmul.mubr.bf16.gmra.mxu0 %v969
        %v1551 = vpop.f32.mrf.mxu0
        %v1552 = vadd.f32 %v1467, %v1551
        %v1553 = vpop.f32.mrf.mxu0
        %v1554 = vpop.f32.mrf.mxu0
        %v1555 = vadd.f32 %v1467, %v1554
        %v1556 = vpop.f32.mrf.mxu0
        %1557 = vmatprep.mubr.bf16.mxu0 0
        %1558 = vmatmul.mubr.bf16.gmra.mxu0 %v970
        %v1559 = vpop.f32.mrf.mxu0
        %v1560 = vadd.f32 %v1467, %v1559
        %v1561 = vpop.f32.mrf.mxu0
        %v1562 = vpop.f32.mrf.mxu0
        %v1563 = vadd.f32 %v1467, %v1562
        %v1564 = vpop.f32.mrf.mxu0
        %1565 = vmatprep.mubr.bf16.mxu0 0
        %1566 = vmatmul.mubr.bf16.gmra.mxu0 %v971
        %v1567 = vpop.f32.mrf.mxu0
        %v1568 = vadd.f32 %v1467, %v1567
        %v1569 = vpop.f32.mrf.mxu0
        %v1570 = vpop.f32.mrf.mxu0
        %v1571 = vadd.f32 %v1467, %v1570
        %v1572 = vpop.f32.mrf.mxu0
        %1573 = vmatprep.mubr.bf16.mxu0 0
        %1574 = vmatmul.mubr.bf16.gmra.mxu0 %v972
        %v1575 = vpop.f32.mrf.mxu0
        %v1576 = vadd.f32 %v1467, %v1575
        %v1577 = vpop.f32.mrf.mxu0
        %v1578 = vpop.f32.mrf.mxu0
        %v1579 = vadd.f32 %v1467, %v1578
        %v1580 = vpop.f32.mrf.mxu0
        %1581 = vmatprep.mubr.bf16.mxu0 0
        %1582 = vmatmul.mubr.bf16.gmra.mxu0 %v973
        %v1583 = vpop.f32.mrf.mxu0
        %v1584 = vadd.f32 %v1467, %v1583
        %v1585 = vpop.f32.mrf.mxu0
        %v1586 = vpop.f32.mrf.mxu0
        %v1587 = vadd.f32 %v1467, %v1586
        %v1588 = vpop.f32.mrf.mxu0
        %1589 = vmatprep.mubr.bf16.mxu0 0
        %1590 = vmatmul.mubr.bf16.gmra.mxu0 %v974
        %v1591 = vpop.f32.mrf.mxu0
        %v1592 = vadd.f32 %v1467, %v1591
        %v1593 = vpop.f32.mrf.mxu0
        %v1594 = vpop.f32.mrf.mxu0
        %v1595 = vadd.f32 %v1467, %v1594
        %v1596 = vpop.f32.mrf.mxu0
        %1597 = vmatprep.mubr.bf16.mxu0 0
        %1598 = vmatmul.mubr.bf16.gmra.mxu0 %v975
        %v1599 = vpop.f32.mrf.mxu0
        %v1600 = vadd.f32 %v1467, %v1599
        %v1601 = vpop.f32.mrf.mxu0
        %v1602 = vpop.f32.mrf.mxu0
        %v1603 = vadd.f32 %v1467, %v1602
        %v1604 = vpop.f32.mrf.mxu0
        %1605 = vmatprep.mubr.bf16.mxu0 0
        %1606 = vmatmul.mubr.bf16.gmra.mxu0 %v976
        %v1607 = vpop.f32.mrf.mxu0
        %v1608 = vadd.f32 %v1467, %v1607
        %v1609 = vpop.f32.mrf.mxu0
        %v1610 = vpop.f32.mrf.mxu0
        %v1611 = vadd.f32 %v1467, %v1610
        %v1612 = vpop.f32.mrf.mxu0
        %1613 = vmatprep.mubr.bf16.mxu0 0
        %1614 = vmatmul.mubr.bf16.gmra.mxu0 %v977
        %v1615 = vpop.f32.mrf.mxu0
        %v1616 = vadd.f32 %v1467, %v1615
        %v1617 = vpop.f32.mrf.mxu0
        %v1618 = vpop.f32.mrf.mxu0
        %v1619 = vadd.f32 %v1467, %v1618
        %v1620 = vpop.f32.mrf.mxu0
        %1621 = vmatprep.mubr.bf16.mxu0 0
        %1622 = vmatmul.mubr.bf16.gmra.mxu0 %v978
        %v1623 = vpop.f32.mrf.mxu0
        %v1624 = vadd.f32 %v1467, %v1623
        %v1625 = vpop.f32.mrf.mxu0
        %v1626 = vpop.f32.mrf.mxu0
        %v1627 = vadd.f32 %v1467, %v1626
        %v1628 = vpop.f32.mrf.mxu0
        %1629 = vmatprep.mubr.bf16.mxu0 0
        %1630 = vmatmul.mubr.bf16.gmra.mxu0 %v979
        %v1631 = vpop.f32.mrf.mxu0
        %v1632 = vadd.f32 %v1467, %v1631
        %v1633 = vpop.f32.mrf.mxu0
        %v1634 = vpop.f32.mrf.mxu0
        %v1635 = vadd.f32 %v1467, %v1634
        %v1636 = vpop.f32.mrf.mxu0
        %1637 = vmatprep.mubr.bf16.mxu0 0
        %1638 = vmatmul.mubr.bf16.gmra.mxu0 %v980
        %v1639 = vpop.f32.mrf.mxu0
        %v1640 = vadd.f32 %v1467, %v1639
        %v1641 = vpop.f32.mrf.mxu0
        %v1642 = vpop.f32.mrf.mxu0
        %v1643 = vadd.f32 %v1467, %v1642
        %v1644 = vpop.f32.mrf.mxu0
        %1645 = vmatprep.mubr.bf16.mxu0 0
        %1646 = vmatmul.mubr.bf16.gmra.mxu0 %v981
        %v1647 = vpop.f32.mrf.mxu0
        %v1648 = vadd.f32 %v1467, %v1647
        %v1649 = vpop.f32.mrf.mxu0
        %v1650 = vpop.f32.mrf.mxu0
        %v1651 = vadd.f32 %v1467, %v1650
        %v1652 = vpop.f32.mrf.mxu0
        %1653 = vmatprep.mubr.bf16.mxu0 0
        %1654 = vmatmul.mubr.bf16.gmra.mxu0 %v982
        %v1655 = vpop.f32.mrf.mxu0
        %v1656 = vadd.f32 %v1467, %v1655
        %v1657 = vpop.f32.mrf.mxu0
        %v1658 = vpop.f32.mrf.mxu0
        %v1659 = vadd.f32 %v1467, %v1658
        %v1660 = vpop.f32.mrf.mxu0
        %1661 = vmatprep.mubr.bf16.mxu0 0
        %1662 = vmatmul.mubr.bf16.gmra.mxu0 %v983
        %v1663 = vpop.f32.mrf.mxu0
        %v1664 = vadd.f32 %v1467, %v1663
        %v1665 = vpop.f32.mrf.mxu0
        %v1666 = vpop.f32.mrf.mxu0
        %v1667 = vadd.f32 %v1467, %v1666
        %v1668 = vpop.f32.mrf.mxu0
        %1669 = vmatprep.mubr.bf16.mxu0 0
        %1670 = vmatmul.mubr.bf16.gmra.mxu0 %v984
        %v1671 = vpop.f32.mrf.mxu0
        %v1672 = vadd.f32 %v1467, %v1671
        %v1673 = vpop.f32.mrf.mxu0
        %v1674 = vpop.f32.mrf.mxu0
        %v1675 = vadd.f32 %v1467, %v1674
        %v1676 = vpop.f32.mrf.mxu0
        %1677 = vdwg.mxu0
        %s1678 = scalar_lea.vmem [#allocation7], 192
        %v1679 = vld [vmem:[%s1678] sm:$0xf]
        %v1680 = vld [vmem:[%s1678 + $0x4] sm:$0xf]
        %v1681 = vld [vmem:[%s1678 + $0x8] sm:$0xf]
        %v1682 = vld [vmem:[%s1678 + $0xc] sm:$0xf]
        %v1683 = vld [vmem:[%s1678 + $0x10] sm:$0xf]
        %v1684 = vld [vmem:[%s1678 + $0x14] sm:$0xf]
        %v1685 = vld [vmem:[%s1678 + $0x18] sm:$0xf]
        %v1686 = vld [vmem:[%s1678 + $0x1c] sm:$0xf]
        %v1687 = vld [vmem:[%s1678 + $0x20] sm:$0xf]
        %v1688 = vld [vmem:[%s1678 + $0x24] sm:$0xf]
        %v1689 = vld [vmem:[%s1678 + $0x28] sm:$0xf]
        %v1690 = vld [vmem:[%s1678 + $0x2c] sm:$0xf]
        %v1691 = vld [vmem:[%s1678 + $0x30] sm:$0xf]
        %v1692 = vld [vmem:[%s1678 + $0x34] sm:$0xf]
        %v1693 = vld [vmem:[%s1678 + $0x38] sm:$0xf]
        %v1694 = vld [vmem:[%s1678 + $0x3c] sm:$0xf]
        %s1695 = scalar_lea.vmem %s4, 3
        %v1696 = vld [vmem:[%s1695] sm:$0x1]
        %v1698 = vlaneseq
        %v1699 = vshrl.u32 %v1698, 7
        %v1700 = vsub.s32 0, %v1699
        %v1701 = vrot.slane %v1696, %v1700
        %v1719 = vunpack.c.l.b16 %v1679
        %v1720 = vunpack.c.l.b16 %v1680
        %v1721 = vunpack.c.l.b16 %v1681
        %v1722 = vunpack.c.l.b16 %v1682
        %v1723 = vunpack.c.l.b16 %v1683
        %v1724 = vunpack.c.l.b16 %v1684
        %v1725 = vunpack.c.l.b16 %v1685
        %v1726 = vunpack.c.l.b16 %v1686
        %v1727 = vunpack.c.l.b16 %v1687
        %v1728 = vunpack.c.l.b16 %v1688
        %v1729 = vunpack.c.l.b16 %v1689
        %v1730 = vunpack.c.l.b16 %v1690
        %v1731 = vunpack.c.l.b16 %v1691
        %v1732 = vunpack.c.l.b16 %v1692
        %v1733 = vunpack.c.l.b16 %v1693
        %v1734 = vunpack.c.l.b16 %v1694
        %v1735 = vpack.c.b16 %v1720, %v1719
        %v1736 = vpack.c.b16 %v1722, %v1721
        %v1737 = vpack.c.b16 %v1724, %v1723
        %v1738 = vpack.c.b16 %v1726, %v1725
        %v1739 = vpack.c.b16 %v1728, %v1727
        %v1740 = vpack.c.b16 %v1730, %v1729
        %v1741 = vpack.c.b16 %v1732, %v1731
        %v1742 = vpack.c.b16 %v1734, %v1733
        %1751 = vmatprep.subr.bf16.mxu0 0
        %1752 = vmatpush1.bf16.msra.mxu0 %v1742
        %1753 = vmatprep.subr.bf16.mxu0 0
        %1754 = vmatpush1.bf16.msra.mxu0 %v1741
        %1755 = vmatprep.subr.bf16.mxu0 0
        %1756 = vmatpush1.bf16.msra.mxu0 %v1740
        %1757 = vmatprep.subr.bf16.mxu0 0
        %1758 = vmatpush1.bf16.msra.mxu0 %v1739
        %1759 = vmatprep.subr.bf16.mxu0 0
        %1760 = vmatpush1.bf16.msra.mxu0 %v1738
        %1761 = vmatprep.subr.bf16.mxu0 0
        %1762 = vmatpush1.bf16.msra.mxu0 %v1737
        %1763 = vmatprep.subr.bf16.mxu0 0
        %1764 = vmatpush1.bf16.msra.mxu0 %v1736
        %1765 = vmatprep.subr.bf16.mxu0 0
        %1766 = vmatpush1.bf16.msra.mxu0 %v1735
        %1767 = vmatprep.subr.bf16.mxu0 0
        %1768 = vmatpush2.bf16.msra.mxu0 0
        %1769 = vmatprep.subr.bf16.mxu0 0
        %1770 = vmatpush2.bf16.msra.mxu0 0
        %1771 = vmatprep.subr.bf16.mxu0 0
        %1772 = vmatpush2.bf16.msra.mxu0 0
        %1773 = vmatprep.subr.bf16.mxu0 0
        %1774 = vmatpush2.bf16.msra.mxu0 0
        %1775 = vmatprep.subr.bf16.mxu0 0
        %1776 = vmatpush2.bf16.msra.mxu0 0
        %1777 = vmatprep.subr.bf16.mxu0 0
        %1778 = vmatpush2.bf16.msra.mxu0 0
        %1779 = vmatprep.subr.bf16.mxu0 0
        %1780 = vmatpush2.bf16.msra.mxu0 0
        %1781 = vmatprep.subr.bf16.mxu0 0
        %1782 = vmatpush2.bf16.msra.mxu0 0
        %1783 = vmatprep.mubr.bf16.mxu0 0
        %1784 = vmatmul.mubr.bf16.gmra.mxu0 %v969
        %v1785 = vpop.f32.mrf.mxu0
        %v1786 = vadd.f32 %v1701, %v1785
        %v1787 = vpop.f32.mrf.mxu0
        %v1788 = vpop.f32.mrf.mxu0
        %v1789 = vadd.f32 %v1701, %v1788
        %v1790 = vpop.f32.mrf.mxu0
        %1791 = vmatprep.mubr.bf16.mxu0 0
        %1792 = vmatmul.mubr.bf16.gmra.mxu0 %v970
        %v1793 = vpop.f32.mrf.mxu0
        %v1794 = vadd.f32 %v1701, %v1793
        %v1795 = vpop.f32.mrf.mxu0
        %v1796 = vpop.f32.mrf.mxu0
        %v1797 = vadd.f32 %v1701, %v1796
        %v1798 = vpop.f32.mrf.mxu0
        %1799 = vmatprep.mubr.bf16.mxu0 0
        %1800 = vmatmul.mubr.bf16.gmra.mxu0 %v971
        %v1801 = vpop.f32.mrf.mxu0
        %v1802 = vadd.f32 %v1701, %v1801
        %v1803 = vpop.f32.mrf.mxu0
        %v1804 = vpop.f32.mrf.mxu0
        %v1805 = vadd.f32 %v1701, %v1804
        %v1806 = vpop.f32.mrf.mxu0
        %1807 = vmatprep.mubr.bf16.mxu0 0
        %1808 = vmatmul.mubr.bf16.gmra.mxu0 %v972
        %v1809 = vpop.f32.mrf.mxu0
        %v1810 = vadd.f32 %v1701, %v1809
        %v1811 = vpop.f32.mrf.mxu0
        %v1812 = vpop.f32.mrf.mxu0
        %v1813 = vadd.f32 %v1701, %v1812
        %v1814 = vpop.f32.mrf.mxu0
        %1815 = vmatprep.mubr.bf16.mxu0 0
        %1816 = vmatmul.mubr.bf16.gmra.mxu0 %v973
        %v1817 = vpop.f32.mrf.mxu0
        %v1818 = vadd.f32 %v1701, %v1817
        %v1819 = vpop.f32.mrf.mxu0
        %v1820 = vpop.f32.mrf.mxu0
        %v1821 = vadd.f32 %v1701, %v1820
        %v1822 = vpop.f32.mrf.mxu0
        %1823 = vmatprep.mubr.bf16.mxu0 0
        %1824 = vmatmul.mubr.bf16.gmra.mxu0 %v974
        %v1825 = vpop.f32.mrf.mxu0
        %v1826 = vadd.f32 %v1701, %v1825
        %v1827 = vpop.f32.mrf.mxu0
        %v1828 = vpop.f32.mrf.mxu0
        %v1829 = vadd.f32 %v1701, %v1828
        %v1830 = vpop.f32.mrf.mxu0
        %1831 = vmatprep.mubr.bf16.mxu0 0
        %1832 = vmatmul.mubr.bf16.gmra.mxu0 %v975
        %v1833 = vpop.f32.mrf.mxu0
        %v1834 = vadd.f32 %v1701, %v1833
        %v1835 = vpop.f32.mrf.mxu0
        %v1836 = vpop.f32.mrf.mxu0
        %v1837 = vadd.f32 %v1701, %v1836
        %v1838 = vpop.f32.mrf.mxu0
        %1839 = vmatprep.mubr.bf16.mxu0 0
        %1840 = vmatmul.mubr.bf16.gmra.mxu0 %v976
        %v1841 = vpop.f32.mrf.mxu0
        %v1842 = vadd.f32 %v1701, %v1841
        %v1843 = vpop.f32.mrf.mxu0
        %v1844 = vpop.f32.mrf.mxu0
        %v1845 = vadd.f32 %v1701, %v1844
        %v1846 = vpop.f32.mrf.mxu0
        %1847 = vmatprep.mubr.bf16.mxu0 0
        %1848 = vmatmul.mubr.bf16.gmra.mxu0 %v977
        %v1849 = vpop.f32.mrf.mxu0
        %v1850 = vadd.f32 %v1701, %v1849
        %v1851 = vpop.f32.mrf.mxu0
        %v1852 = vpop.f32.mrf.mxu0
        %v1853 = vadd.f32 %v1701, %v1852
        %v1854 = vpop.f32.mrf.mxu0
        %1855 = vmatprep.mubr.bf16.mxu0 0
        %1856 = vmatmul.mubr.bf16.gmra.mxu0 %v978
        %v1857 = vpop.f32.mrf.mxu0
        %v1858 = vadd.f32 %v1701, %v1857
        %v1859 = vpop.f32.mrf.mxu0
        %v1860 = vpop.f32.mrf.mxu0
        %v1861 = vadd.f32 %v1701, %v1860
        %v1862 = vpop.f32.mrf.mxu0
        %1863 = vmatprep.mubr.bf16.mxu0 0
        %1864 = vmatmul.mubr.bf16.gmra.mxu0 %v979
        %v1865 = vpop.f32.mrf.mxu0
        %v1866 = vadd.f32 %v1701, %v1865
        %v1867 = vpop.f32.mrf.mxu0
        %v1868 = vpop.f32.mrf.mxu0
        %v1869 = vadd.f32 %v1701, %v1868
        %v1870 = vpop.f32.mrf.mxu0
        %1871 = vmatprep.mubr.bf16.mxu0 0
        %1872 = vmatmul.mubr.bf16.gmra.mxu0 %v980
        %v1873 = vpop.f32.mrf.mxu0
        %v1874 = vadd.f32 %v1701, %v1873
        %v1875 = vpop.f32.mrf.mxu0
        %v1876 = vpop.f32.mrf.mxu0
        %v1877 = vadd.f32 %v1701, %v1876
        %v1878 = vpop.f32.mrf.mxu0
        %1879 = vmatprep.mubr.bf16.mxu0 0
        %1880 = vmatmul.mubr.bf16.gmra.mxu0 %v981
        %v1881 = vpop.f32.mrf.mxu0
        %v1882 = vadd.f32 %v1701, %v1881
        %v1883 = vpop.f32.mrf.mxu0
        %v1884 = vpop.f32.mrf.mxu0
        %v1885 = vadd.f32 %v1701, %v1884
        %v1886 = vpop.f32.mrf.mxu0
        %1887 = vmatprep.mubr.bf16.mxu0 0
        %1888 = vmatmul.mubr.bf16.gmra.mxu0 %v982
        %v1889 = vpop.f32.mrf.mxu0
        %v1890 = vadd.f32 %v1701, %v1889
        %v1891 = vpop.f32.mrf.mxu0
        %v1892 = vpop.f32.mrf.mxu0
        %v1893 = vadd.f32 %v1701, %v1892
        %v1894 = vpop.f32.mrf.mxu0
        %1895 = vmatprep.mubr.bf16.mxu0 0
        %1896 = vmatmul.mubr.bf16.gmra.mxu0 %v983
        %v1897 = vpop.f32.mrf.mxu0
        %v1898 = vadd.f32 %v1701, %v1897
        %v1899 = vpop.f32.mrf.mxu0
        %v1900 = vpop.f32.mrf.mxu0
        %v1901 = vadd.f32 %v1701, %v1900
        %v1902 = vpop.f32.mrf.mxu0
        %1903 = vmatprep.mubr.bf16.mxu0 0
        %1904 = vmatmul.mubr.bf16.gmra.mxu0 %v984
        %v1905 = vpop.f32.mrf.mxu0
        %v1906 = vadd.f32 %v1701, %v1905
        %v1907 = vpop.f32.mrf.mxu0
        %v1908 = vpop.f32.mrf.mxu0
        %v1909 = vadd.f32 %v1701, %v1908
        %v1910 = vpop.f32.mrf.mxu0
        %1911 = vdwg.mxu0
        %v1912 = vld [vmem:[#allocation8] sm:$0xf]
        %v1913 = vld [vmem:[#allocation8 + $0x4] sm:$0xf]
        %v1914 = vld [vmem:[#allocation8 + $0x8] sm:$0xf]
        %v1915 = vld [vmem:[#allocation8 + $0xc] sm:$0xf]
        %v1916 = vld [vmem:[#allocation8 + $0x10] sm:$0xf]
        %v1917 = vld [vmem:[#allocation8 + $0x14] sm:$0xf]
        %v1918 = vld [vmem:[#allocation8 + $0x18] sm:$0xf]
        %v1919 = vld [vmem:[#allocation8 + $0x1c] sm:$0xf]
        %v1920 = vld [vmem:[#allocation8 + $0x20] sm:$0xf]
        %v1921 = vld [vmem:[#allocation8 + $0x24] sm:$0xf]
        %v1922 = vld [vmem:[#allocation8 + $0x28] sm:$0xf]
        %v1923 = vld [vmem:[#allocation8 + $0x2c] sm:$0xf]
        %v1924 = vld [vmem:[#allocation8 + $0x30] sm:$0xf]
        %v1925 = vld [vmem:[#allocation8 + $0x34] sm:$0xf]
        %v1926 = vld [vmem:[#allocation8 + $0x38] sm:$0xf]
        %v1927 = vld [vmem:[#allocation8 + $0x3c] sm:$0xf]
        %v1944 = vunpack.c.l.b16 %v1912
        %v1945 = vunpack.c.l.b16 %v1913
        %v1946 = vunpack.c.l.b16 %v1914
        %v1947 = vunpack.c.l.b16 %v1915
        %v1948 = vunpack.c.l.b16 %v1916
        %v1949 = vunpack.c.l.b16 %v1917
        %v1950 = vunpack.c.l.b16 %v1918
        %v1951 = vunpack.c.l.b16 %v1919
        %v1952 = vunpack.c.l.b16 %v1920
        %v1953 = vunpack.c.l.b16 %v1921
        %v1954 = vunpack.c.l.b16 %v1922
        %v1955 = vunpack.c.l.b16 %v1923
        %v1956 = vunpack.c.l.b16 %v1924
        %v1957 = vunpack.c.l.b16 %v1925
        %v1958 = vunpack.c.l.b16 %v1926
        %v1959 = vunpack.c.l.b16 %v1927
        %v1960 = vpack.c.b16 %v1945, %v1944
        %v1961 = vpack.c.b16 %v1947, %v1946
        %v1962 = vpack.c.b16 %v1949, %v1948
        %v1963 = vpack.c.b16 %v1951, %v1950
        %v1964 = vpack.c.b16 %v1953, %v1952
        %v1965 = vpack.c.b16 %v1955, %v1954
        %v1966 = vpack.c.b16 %v1957, %v1956
        %v1967 = vpack.c.b16 %v1959, %v1958
        %1976 = vmatprep.subr.bf16.mxu0 0
        %1977 = vmatpush1.bf16.msra.mxu0 %v1967
        %1978 = vmatprep.subr.bf16.mxu0 0
        %1979 = vmatpush1.bf16.msra.mxu0 %v1966
        %1980 = vmatprep.subr.bf16.mxu0 0
        %1981 = vmatpush1.bf16.msra.mxu0 %v1965
        %1982 = vmatprep.subr.bf16.mxu0 0
        %1983 = vmatpush1.bf16.msra.mxu0 %v1964
        %1984 = vmatprep.subr.bf16.mxu0 0
        %1985 = vmatpush1.bf16.msra.mxu0 %v1963
        %1986 = vmatprep.subr.bf16.mxu0 0
        %1987 = vmatpush1.bf16.msra.mxu0 %v1962
        %1988 = vmatprep.subr.bf16.mxu0 0
        %1989 = vmatpush1.bf16.msra.mxu0 %v1961
        %1990 = vmatprep.subr.bf16.mxu0 0
        %1991 = vmatpush1.bf16.msra.mxu0 %v1960
        %1992 = vmatprep.subr.bf16.mxu0 0
        %1993 = vmatpush2.bf16.msra.mxu0 0
        %1994 = vmatprep.subr.bf16.mxu0 0
        %1995 = vmatpush2.bf16.msra.mxu0 0
        %1996 = vmatprep.subr.bf16.mxu0 0
        %1997 = vmatpush2.bf16.msra.mxu0 0
        %1998 = vmatprep.subr.bf16.mxu0 0
        %1999 = vmatpush2.bf16.msra.mxu0 0
        %2000 = vmatprep.subr.bf16.mxu0 0
        %2001 = vmatpush2.bf16.msra.mxu0 0
        %2002 = vmatprep.subr.bf16.mxu0 0
        %2003 = vmatpush2.bf16.msra.mxu0 0
        %2004 = vmatprep.subr.bf16.mxu0 0
        %2005 = vmatpush2.bf16.msra.mxu0 0
        %2006 = vmatprep.subr.bf16.mxu0 0
        %2007 = vmatpush2.bf16.msra.mxu0 0
        %2008 = vmatprep.mubr.bf16.mxu0 0
        %2009 = vmatmul.mubr.bf16.gmra.mxu0 %v969
        %v2010 = vpop.f32.mrf.mxu0
        %v2011 = vadd.f32 0.0, %v2010
        %v2012 = vpop.f32.mrf.mxu0
        %v2013 = vpop.f32.mrf.mxu0
        %v2014 = vadd.f32 0.0, %v2013
        %v2015 = vpop.f32.mrf.mxu0
        %2016 = vmatprep.mubr.bf16.mxu0 0
        %2017 = vmatmul.mubr.bf16.gmra.mxu0 %v970
        %v2018 = vpop.f32.mrf.mxu0
        %v2019 = vadd.f32 0.0, %v2018
        %v2020 = vpop.f32.mrf.mxu0
        %v2021 = vpop.f32.mrf.mxu0
        %v2022 = vadd.f32 0.0, %v2021
        %v2023 = vpop.f32.mrf.mxu0
        %2024 = vmatprep.mubr.bf16.mxu0 0
        %2025 = vmatmul.mubr.bf16.gmra.mxu0 %v971
        %v2026 = vpop.f32.mrf.mxu0
        %v2027 = vadd.f32 0.0, %v2026
        %v2028 = vpop.f32.mrf.mxu0
        %v2029 = vpop.f32.mrf.mxu0
        %v2030 = vadd.f32 0.0, %v2029
        %v2031 = vpop.f32.mrf.mxu0
        %2032 = vmatprep.mubr.bf16.mxu0 0
        %2033 = vmatmul.mubr.bf16.gmra.mxu0 %v972
        %v2034 = vpop.f32.mrf.mxu0
        %v2035 = vadd.f32 0.0, %v2034
        %v2036 = vpop.f32.mrf.mxu0
        %v2037 = vpop.f32.mrf.mxu0
        %v2038 = vadd.f32 0.0, %v2037
        %v2039 = vpop.f32.mrf.mxu0
        %2040 = vmatprep.mubr.bf16.mxu0 0
        %2041 = vmatmul.mubr.bf16.gmra.mxu0 %v973
        %v2042 = vpop.f32.mrf.mxu0
        %v2043 = vadd.f32 0.0, %v2042
        %v2044 = vpop.f32.mrf.mxu0
        %v2045 = vpop.f32.mrf.mxu0
        %v2046 = vadd.f32 0.0, %v2045
        %v2047 = vpop.f32.mrf.mxu0
        %2048 = vmatprep.mubr.bf16.mxu0 0
        %2049 = vmatmul.mubr.bf16.gmra.mxu0 %v974
        %v2050 = vpop.f32.mrf.mxu0
        %v2051 = vadd.f32 0.0, %v2050
        %v2052 = vpop.f32.mrf.mxu0
        %v2053 = vpop.f32.mrf.mxu0
        %v2054 = vadd.f32 0.0, %v2053
        %v2055 = vpop.f32.mrf.mxu0
        %2056 = vmatprep.mubr.bf16.mxu0 0
        %2057 = vmatmul.mubr.bf16.gmra.mxu0 %v975
        %v2058 = vpop.f32.mrf.mxu0
        %v2059 = vadd.f32 0.0, %v2058
        %v2060 = vpop.f32.mrf.mxu0
        %v2061 = vpop.f32.mrf.mxu0
        %v2062 = vadd.f32 0.0, %v2061
        %v2063 = vpop.f32.mrf.mxu0
        %2064 = vmatprep.mubr.bf16.mxu0 0
        %2065 = vmatmul.mubr.bf16.gmra.mxu0 %v976
        %v2066 = vpop.f32.mrf.mxu0
        %v2067 = vadd.f32 0.0, %v2066
        %v2068 = vpop.f32.mrf.mxu0
        %v2069 = vpop.f32.mrf.mxu0
        %v2070 = vadd.f32 0.0, %v2069
        %v2071 = vpop.f32.mrf.mxu0
        %2072 = vmatprep.mubr.bf16.mxu0 0
        %2073 = vmatmul.mubr.bf16.gmra.mxu0 %v977
        %v2074 = vpop.f32.mrf.mxu0
        %v2075 = vadd.f32 0.0, %v2074
        %v2076 = vpop.f32.mrf.mxu0
        %v2077 = vpop.f32.mrf.mxu0
        %v2078 = vadd.f32 0.0, %v2077
        %v2079 = vpop.f32.mrf.mxu0
        %2080 = vmatprep.mubr.bf16.mxu0 0
        %2081 = vmatmul.mubr.bf16.gmra.mxu0 %v978
        %v2082 = vpop.f32.mrf.mxu0
        %v2083 = vadd.f32 0.0, %v2082
        %v2084 = vpop.f32.mrf.mxu0
        %v2085 = vpop.f32.mrf.mxu0
        %v2086 = vadd.f32 0.0, %v2085
        %v2087 = vpop.f32.mrf.mxu0
        %2088 = vmatprep.mubr.bf16.mxu0 0
        %2089 = vmatmul.mubr.bf16.gmra.mxu0 %v979
        %v2090 = vpop.f32.mrf.mxu0
        %v2091 = vadd.f32 0.0, %v2090
        %v2092 = vpop.f32.mrf.mxu0
        %v2093 = vpop.f32.mrf.mxu0
        %v2094 = vadd.f32 0.0, %v2093
        %v2095 = vpop.f32.mrf.mxu0
        %2096 = vmatprep.mubr.bf16.mxu0 0
        %2097 = vmatmul.mubr.bf16.gmra.mxu0 %v980
        %v2098 = vpop.f32.mrf.mxu0
        %v2099 = vadd.f32 0.0, %v2098
        %v2100 = vpop.f32.mrf.mxu0
        %v2101 = vpop.f32.mrf.mxu0
        %v2102 = vadd.f32 0.0, %v2101
        %v2103 = vpop.f32.mrf.mxu0
        %2104 = vmatprep.mubr.bf16.mxu0 0
        %2105 = vmatmul.mubr.bf16.gmra.mxu0 %v981
        %v2106 = vpop.f32.mrf.mxu0
        %v2107 = vadd.f32 0.0, %v2106
        %v2108 = vpop.f32.mrf.mxu0
        %v2109 = vpop.f32.mrf.mxu0
        %v2110 = vadd.f32 0.0, %v2109
        %v2111 = vpop.f32.mrf.mxu0
        %2112 = vmatprep.mubr.bf16.mxu0 0
        %2113 = vmatmul.mubr.bf16.gmra.mxu0 %v982
        %v2114 = vpop.f32.mrf.mxu0
        %v2115 = vadd.f32 0.0, %v2114
        %v2116 = vpop.f32.mrf.mxu0
        %v2117 = vpop.f32.mrf.mxu0
        %v2118 = vadd.f32 0.0, %v2117
        %v2119 = vpop.f32.mrf.mxu0
        %2120 = vmatprep.mubr.bf16.mxu0 0
        %2121 = vmatmul.mubr.bf16.gmra.mxu0 %v983
        %v2122 = vpop.f32.mrf.mxu0
        %v2123 = vadd.f32 0.0, %v2122
        %v2124 = vpop.f32.mrf.mxu0
        %v2125 = vpop.f32.mrf.mxu0
        %v2126 = vadd.f32 0.0, %v2125
        %v2127 = vpop.f32.mrf.mxu0
        %2128 = vmatprep.mubr.bf16.mxu0 0
        %2129 = vmatmul.mubr.bf16.gmra.mxu0 %v984
        %v2130 = vpop.f32.mrf.mxu0
        %v2131 = vadd.f32 0.0, %v2130
        %v2132 = vpop.f32.mrf.mxu0
        %v2133 = vpop.f32.mrf.mxu0
        %v2134 = vadd.f32 0.0, %v2133
        %v2135 = vpop.f32.mrf.mxu0
        %2136 = vdwg.mxu0
        %v2137 = vrot.slane %v2011, 2
        %v2138 = vrot.slane %v2014, 2
        %v2139 = vrot.slane %v2019, 2
        %v2140 = vrot.slane %v2022, 2
        %v2141 = vrot.slane %v2027, 2
        %v2142 = vrot.slane %v2030, 2
        %v2143 = vrot.slane %v2035, 2
        %v2144 = vrot.slane %v2038, 2
        %v2145 = vrot.slane %v2043, 2
        %v2146 = vrot.slane %v2046, 2
        %v2147 = vrot.slane %v2051, 2
        %v2148 = vrot.slane %v2054, 2
        %v2149 = vrot.slane %v2059, 2
        %v2150 = vrot.slane %v2062, 2
        %v2151 = vrot.slane %v2067, 2
        %v2152 = vrot.slane %v2070, 2
        %v2153 = vrot.slane %v2075, 2
        %v2154 = vrot.slane %v2078, 2
        %v2155 = vrot.slane %v2083, 2
        %v2156 = vrot.slane %v2086, 2
        %v2157 = vrot.slane %v2091, 2
        %v2158 = vrot.slane %v2094, 2
        %v2159 = vrot.slane %v2099, 2
        %v2160 = vrot.slane %v2102, 2
        %v2161 = vrot.slane %v2107, 2
        %v2162 = vrot.slane %v2110, 2
        %v2163 = vrot.slane %v2115, 2
        %v2164 = vrot.slane %v2118, 2
        %v2165 = vrot.slane %v2123, 2
        %v2166 = vrot.slane %v2126, 2
        %v2167 = vrot.slane %v2131, 2
        %v2168 = vrot.slane %v2134, 2
        %vm2169 = vcmp.lt.s32.totalorder %v458, 6
        %v2170 = vsel %vm2169, %v2167, %v2168
        %v2171 = vsel %vm2169, %v2166, %v2167
        %v2172 = vsel %vm2169, %v2165, %v2166
        %v2173 = vsel %vm2169, %v2164, %v2165
        %v2174 = vsel %vm2169, %v2163, %v2164
        %v2175 = vsel %vm2169, %v2162, %v2163
        %v2176 = vsel %vm2169, %v2161, %v2162
        %v2177 = vsel %vm2169, %v2160, %v2161
        %v2178 = vsel %vm2169, %v2159, %v2160
        %v2179 = vsel %vm2169, %v2158, %v2159
        %v2180 = vsel %vm2169, %v2157, %v2158
        %v2181 = vsel %vm2169, %v2156, %v2157
        %v2182 = vsel %vm2169, %v2155, %v2156
        %v2183 = vsel %vm2169, %v2154, %v2155
        %v2184 = vsel %vm2169, %v2153, %v2154
        %v2185 = vsel %vm2169, %v2152, %v2153
        %v2186 = vsel %vm2169, %v2151, %v2152
        %v2187 = vsel %vm2169, %v2150, %v2151
        %v2188 = vsel %vm2169, %v2149, %v2150
        %v2189 = vsel %vm2169, %v2148, %v2149
        %v2190 = vsel %vm2169, %v2147, %v2148
        %v2191 = vsel %vm2169, %v2146, %v2147
        %v2192 = vsel %vm2169, %v2145, %v2146
        %v2193 = vsel %vm2169, %v2144, %v2145
        %v2194 = vsel %vm2169, %v2143, %v2144
        %v2195 = vsel %vm2169, %v2142, %v2143
        %v2196 = vsel %vm2169, %v2141, %v2142
        %v2197 = vsel %vm2169, %v2140, %v2141
        %v2198 = vsel %vm2169, %v2139, %v2140
        %v2199 = vsel %vm2169, %v2138, %v2139
        %v2200 = vsel %vm2169, %v2137, %v2138
        %v2201 = vsel %vm2169, %v2168, %v2137
        %vm2202 = vcmp.ge.s32.totalorder %v490, 6
        %vm2203 = vcmp.ge.s32.totalorder %v491, 6
        %vm2204 = vcmp.ge.s32.totalorder %v492, 6
        %vm2205 = vcmp.ge.s32.totalorder %v493, 6
        %vm2206 = vcmp.ge.s32.totalorder %v494, 6
        %vm2207 = vcmp.ge.s32.totalorder %v495, 6
        %vm2208 = vcmp.ge.s32.totalorder %v496, 6
        %vm2209 = vcmp.ge.s32.totalorder %v497, 6
        %vm2210 = vcmp.ge.s32.totalorder %v498, 6
        %vm2211 = vcmp.ge.s32.totalorder %v499, 6
        %vm2212 = vcmp.ge.s32.totalorder %v500, 6
        %vm2213 = vcmp.ge.s32.totalorder %v501, 6
        %vm2214 = vcmp.ge.s32.totalorder %v502, 6
        %vm2215 = vcmp.ge.s32.totalorder %v503, 6
        %vm2216 = vcmp.ge.s32.totalorder %v504, 6
        %vm2217 = vcmp.ge.s32.totalorder %v505, 6
        %vm2218 = vcmp.ge.s32.totalorder %v506, 6
        %vm2219 = vcmp.ge.s32.totalorder %v507, 6
        %vm2220 = vcmp.ge.s32.totalorder %v508, 6
        %vm2221 = vcmp.ge.s32.totalorder %v509, 6
        %vm2222 = vcmp.ge.s32.totalorder %v510, 6
        %vm2223 = vcmp.ge.s32.totalorder %v511, 6
        %vm2224 = vcmp.ge.s32.totalorder %v512, 6
        %vm2225 = vcmp.ge.s32.totalorder %v513, 6
        %vm2226 = vcmp.ge.s32.totalorder %v514, 6
        %vm2227 = vcmp.ge.s32.totalorder %v515, 6
        %vm2228 = vcmp.ge.s32.totalorder %v516, 6
        %vm2229 = vcmp.ge.s32.totalorder %v517, 6
        %vm2230 = vcmp.ge.s32.totalorder %v518, 6
        %vm2231 = vcmp.ge.s32.totalorder %v519, 6
        %vm2232 = vcmp.ge.s32.totalorder %v520, 6
        %vm2233 = vcmp.ge.s32.totalorder %v521, 6
        %vm2234 = vcmp.ge.s32.totalorder %v522, 6
        %vm2235 = vcmp.ge.s32.totalorder %v523, 6
        %vm2236 = vcmp.ge.s32.totalorder %v524, 6
        %vm2237 = vcmp.ge.s32.totalorder %v525, 6
        %vm2238 = vcmp.ge.s32.totalorder %v526, 6
        %vm2239 = vcmp.ge.s32.totalorder %v527, 6
        %vm2240 = vcmp.ge.s32.totalorder %v528, 6
        %vm2241 = vcmp.ge.s32.totalorder %v529, 6
        %vm2242 = vcmp.ge.s32.totalorder %v530, 6
        %vm2243 = vcmp.ge.s32.totalorder %v531, 6
        %vm2244 = vcmp.ge.s32.totalorder %v532, 6
        %vm2245 = vcmp.ge.s32.totalorder %v533, 6
        %vm2246 = vcmp.ge.s32.totalorder %v534, 6
        %vm2247 = vcmp.ge.s32.totalorder %v535, 6
        %vm2248 = vcmp.ge.s32.totalorder %v536, 6
        %vm2249 = vcmp.ge.s32.totalorder %v537, 6
        %vm2250 = vcmp.ge.s32.totalorder %v538, 6
        %vm2251 = vcmp.ge.s32.totalorder %v539, 6
        %vm2252 = vcmp.ge.s32.totalorder %v540, 6
        %vm2253 = vcmp.ge.s32.totalorder %v541, 6
        %vm2254 = vcmp.ge.s32.totalorder %v542, 6
        %vm2255 = vcmp.ge.s32.totalorder %v543, 6
        %vm2256 = vcmp.ge.s32.totalorder %v544, 6
        %vm2257 = vcmp.ge.s32.totalorder %v545, 6
        %vm2258 = vcmp.ge.s32.totalorder %v546, 6
        %vm2259 = vcmp.ge.s32.totalorder %v547, 6
        %vm2260 = vcmp.ge.s32.totalorder %v548, 6
        %vm2261 = vcmp.ge.s32.totalorder %v549, 6
        %vm2262 = vcmp.ge.s32.totalorder %v550, 6
        %vm2263 = vcmp.ge.s32.totalorder %v551, 6
        %vm2264 = vcmp.ge.s32.totalorder %v552, 6
        %vm2265 = vcmp.ge.s32.totalorder %v553, 6
        %vm2266 = vmand %vm2202, %vm2234
        %vm2267 = vmand %vm2203, %vm2235
        %vm2268 = vmand %vm2204, %vm2236
        %vm2269 = vmand %vm2205, %vm2237
        %vm2270 = vmand %vm2206, %vm2238
        %vm2271 = vmand %vm2207, %vm2239
        %vm2272 = vmand %vm2208, %vm2240
        %vm2273 = vmand %vm2209, %vm2241
        %vm2274 = vmand %vm2210, %vm2242
        %vm2275 = vmand %vm2211, %vm2243
        %vm2276 = vmand %vm2212, %vm2244
        %vm2277 = vmand %vm2213, %vm2245
        %vm2278 = vmand %vm2214, %vm2246
        %vm2279 = vmand %vm2215, %vm2247
        %vm2280 = vmand %vm2216, %vm2248
        %vm2281 = vmand %vm2217, %vm2249
        %vm2282 = vmand %vm2218, %vm2250
        %vm2283 = vmand %vm2219, %vm2251
        %vm2284 = vmand %vm2220, %vm2252
        %vm2285 = vmand %vm2221, %vm2253
        %vm2286 = vmand %vm2222, %vm2254
        %vm2287 = vmand %vm2223, %vm2255
        %vm2288 = vmand %vm2224, %vm2256
        %vm2289 = vmand %vm2225, %vm2257
        %vm2290 = vmand %vm2226, %vm2258
        %vm2291 = vmand %vm2227, %vm2259
        %vm2292 = vmand %vm2228, %vm2260
        %vm2293 = vmand %vm2229, %vm2261
        %vm2294 = vmand %vm2230, %vm2262
        %vm2295 = vmand %vm2231, %vm2263
        %vm2296 = vmand %vm2232, %vm2264
        %vm2297 = vmand %vm2233, %vm2265
        %v2298 = vsel %vm2266, %v2181, 0.0
        %v2299 = vsel %vm2267, %v2180, 0.0
        %v2300 = vsel %vm2268, %v2179, 0.0
        %v2301 = vsel %vm2269, %v2178, 0.0
        %v2302 = vsel %vm2270, %v2177, 0.0
        %v2303 = vsel %vm2271, %v2176, 0.0
        %v2304 = vsel %vm2272, %v2175, 0.0
        %v2305 = vsel %vm2273, %v2174, 0.0
        %v2306 = vsel %vm2274, %v2173, 0.0
        %v2307 = vsel %vm2275, %v2172, 0.0
        %v2308 = vsel %vm2276, %v2171, 0.0
        %v2309 = vsel %vm2277, %v2170, 0.0
        %v2310 = vsel %vm2278, %v2201, 0.0
        %v2311 = vsel %vm2279, %v2200, 0.0
        %v2312 = vsel %vm2280, %v2199, 0.0
        %v2313 = vsel %vm2281, %v2198, 0.0
        %v2314 = vsel %vm2282, %v2197, 0.0
        %v2315 = vsel %vm2283, %v2196, 0.0
        %v2316 = vsel %vm2284, %v2195, 0.0
        %v2317 = vsel %vm2285, %v2194, 0.0
        %v2318 = vsel %vm2286, %v2193, 0.0
        %v2319 = vsel %vm2287, %v2192, 0.0
        %v2320 = vsel %vm2288, %v2191, 0.0
        %v2321 = vsel %vm2289, %v2190, 0.0
        %v2322 = vsel %vm2290, %v2189, 0.0
        %v2323 = vsel %vm2291, %v2188, 0.0
        %v2324 = vsel %vm2292, %v2187, 0.0
        %v2325 = vsel %vm2293, %v2186, 0.0
        %v2326 = vsel %vm2294, %v2185, 0.0
        %v2327 = vsel %vm2295, %v2184, 0.0
        %v2328 = vsel %vm2296, %v2183, 0.0
        %v2329 = vsel %vm2297, %v2182, 0.0
        %v2330 = vadd.f32 %v1318, %v2298
        %v2331 = vadd.f32 %v1321, %v2299
        %v2332 = vadd.f32 %v1326, %v2300
        %v2333 = vadd.f32 %v1329, %v2301
        %v2334 = vadd.f32 %v1334, %v2302
        %v2335 = vadd.f32 %v1337, %v2303
        %v2336 = vadd.f32 %v1342, %v2304
        %v2337 = vadd.f32 %v1345, %v2305
        %v2338 = vadd.f32 %v1350, %v2306
        %v2339 = vadd.f32 %v1353, %v2307
        %v2340 = vadd.f32 %v1358, %v2308
        %v2341 = vadd.f32 %v1361, %v2309
        %v2342 = vadd.f32 %v1366, %v2310
        %v2343 = vadd.f32 %v1369, %v2311
        %v2344 = vadd.f32 %v1374, %v2312
        %v2345 = vadd.f32 %v1377, %v2313
        %v2346 = vadd.f32 %v1382, %v2314
        %v2347 = vadd.f32 %v1385, %v2315
        %v2348 = vadd.f32 %v1390, %v2316
        %v2349 = vadd.f32 %v1393, %v2317
        %v2350 = vadd.f32 %v1398, %v2318
        %v2351 = vadd.f32 %v1401, %v2319
        %v2352 = vadd.f32 %v1406, %v2320
        %v2353 = vadd.f32 %v1409, %v2321
        %v2354 = vadd.f32 %v1414, %v2322
        %v2355 = vadd.f32 %v1417, %v2323
        %v2356 = vadd.f32 %v1422, %v2324
        %v2357 = vadd.f32 %v1425, %v2325
        %v2358 = vadd.f32 %v1430, %v2326
        %v2359 = vadd.f32 %v1433, %v2327
        %v2360 = vadd.f32 %v1438, %v2328
        %v2361 = vadd.f32 %v1441, %v2329
        %s2362 = scalar_lea.vmem [#allocation8], 64
        %v2363 = vld [vmem:[%s2362] sm:$0xf]
        %v2364 = vld [vmem:[%s2362 + $0x4] sm:$0xf]
        %v2365 = vld [vmem:[%s2362 + $0x8] sm:$0xf]
        %v2366 = vld [vmem:[%s2362 + $0xc] sm:$0xf]
        %v2367 = vld [vmem:[%s2362 + $0x10] sm:$0xf]
        %v2368 = vld [vmem:[%s2362 + $0x14] sm:$0xf]
        %v2369 = vld [vmem:[%s2362 + $0x18] sm:$0xf]
        %v2370 = vld [vmem:[%s2362 + $0x1c] sm:$0xf]
        %v2371 = vld [vmem:[%s2362 + $0x20] sm:$0xf]
        %v2372 = vld [vmem:[%s2362 + $0x24] sm:$0xf]
        %v2373 = vld [vmem:[%s2362 + $0x28] sm:$0xf]
        %v2374 = vld [vmem:[%s2362 + $0x2c] sm:$0xf]
        %v2375 = vld [vmem:[%s2362 + $0x30] sm:$0xf]
        %v2376 = vld [vmem:[%s2362 + $0x34] sm:$0xf]
        %v2377 = vld [vmem:[%s2362 + $0x38] sm:$0xf]
        %v2378 = vld [vmem:[%s2362 + $0x3c] sm:$0xf]
        %v2395 = vunpack.c.l.b16 %v2363
        %v2396 = vunpack.c.l.b16 %v2364
        %v2397 = vunpack.c.l.b16 %v2365
        %v2398 = vunpack.c.l.b16 %v2366
        %v2399 = vunpack.c.l.b16 %v2367
        %v2400 = vunpack.c.l.b16 %v2368
        %v2401 = vunpack.c.l.b16 %v2369
        %v2402 = vunpack.c.l.b16 %v2370
        %v2403 = vunpack.c.l.b16 %v2371
        %v2404 = vunpack.c.l.b16 %v2372
        %v2405 = vunpack.c.l.b16 %v2373
        %v2406 = vunpack.c.l.b16 %v2374
        %v2407 = vunpack.c.l.b16 %v2375
        %v2408 = vunpack.c.l.b16 %v2376
        %v2409 = vunpack.c.l.b16 %v2377
        %v2410 = vunpack.c.l.b16 %v2378
        %v2411 = vpack.c.b16 %v2396, %v2395
        %v2412 = vpack.c.b16 %v2398, %v2397
        %v2413 = vpack.c.b16 %v2400, %v2399
        %v2414 = vpack.c.b16 %v2402, %v2401
        %v2415 = vpack.c.b16 %v2404, %v2403
        %v2416 = vpack.c.b16 %v2406, %v2405
        %v2417 = vpack.c.b16 %v2408, %v2407
        %v2418 = vpack.c.b16 %v2410, %v2409
        %2427 = vmatprep.subr.bf16.mxu0 0
        %2428 = vmatpush1.bf16.msra.mxu0 %v2418
        %2429 = vmatprep.subr.bf16.mxu0 0
        %2430 = vmatpush1.bf16.msra.mxu0 %v2417
        %2431 = vmatprep.subr.bf16.mxu0 0
        %2432 = vmatpush1.bf16.msra.mxu0 %v2416
        %2433 = vmatprep.subr.bf16.mxu0 0
        %2434 = vmatpush1.bf16.msra.mxu0 %v2415
        %2435 = vmatprep.subr.bf16.mxu0 0
        %2436 = vmatpush1.bf16.msra.mxu0 %v2414
        %2437 = vmatprep.subr.bf16.mxu0 0
        %2438 = vmatpush1.bf16.msra.mxu0 %v2413
        %2439 = vmatprep.subr.bf16.mxu0 0
        %2440 = vmatpush1.bf16.msra.mxu0 %v2412
        %2441 = vmatprep.subr.bf16.mxu0 0
        %2442 = vmatpush1.bf16.msra.mxu0 %v2411
        %2443 = vmatprep.subr.bf16.mxu0 0
        %2444 = vmatpush2.bf16.msra.mxu0 0
        %2445 = vmatprep.subr.bf16.mxu0 0
        %2446 = vmatpush2.bf16.msra.mxu0 0
        %2447 = vmatprep.subr.bf16.mxu0 0
        %2448 = vmatpush2.bf16.msra.mxu0 0
        %2449 = vmatprep.subr.bf16.mxu0 0
        %2450 = vmatpush2.bf16.msra.mxu0 0
        %2451 = vmatprep.subr.bf16.mxu0 0
        %2452 = vmatpush2.bf16.msra.mxu0 0
        %2453 = vmatprep.subr.bf16.mxu0 0
        %2454 = vmatpush2.bf16.msra.mxu0 0
        %2455 = vmatprep.subr.bf16.mxu0 0
        %2456 = vmatpush2.bf16.msra.mxu0 0
        %2457 = vmatprep.subr.bf16.mxu0 0
        %2458 = vmatpush2.bf16.msra.mxu0 0
        %2459 = vmatprep.mubr.bf16.mxu0 0
        %2460 = vmatmul.mubr.bf16.gmra.mxu0 %v969
        %v2461 = vpop.f32.mrf.mxu0
        %v2462 = vadd.f32 0.0, %v2461
        %v2463 = vpop.f32.mrf.mxu0
        %v2464 = vpop.f32.mrf.mxu0
        %v2465 = vadd.f32 0.0, %v2464
        %v2466 = vpop.f32.mrf.mxu0
        %2467 = vmatprep.mubr.bf16.mxu0 0
        %2468 = vmatmul.mubr.bf16.gmra.mxu0 %v970
        %v2469 = vpop.f32.mrf.mxu0
        %v2470 = vadd.f32 0.0, %v2469
        %v2471 = vpop.f32.mrf.mxu0
        %v2472 = vpop.f32.mrf.mxu0
        %v2473 = vadd.f32 0.0, %v2472
        %v2474 = vpop.f32.mrf.mxu0
        %2475 = vmatprep.mubr.bf16.mxu0 0
        %2476 = vmatmul.mubr.bf16.gmra.mxu0 %v971
        %v2477 = vpop.f32.mrf.mxu0
        %v2478 = vadd.f32 0.0, %v2477
        %v2479 = vpop.f32.mrf.mxu0
        %v2480 = vpop.f32.mrf.mxu0
        %v2481 = vadd.f32 0.0, %v2480
        %v2482 = vpop.f32.mrf.mxu0
        %2483 = vmatprep.mubr.bf16.mxu0 0
        %2484 = vmatmul.mubr.bf16.gmra.mxu0 %v972
        %v2485 = vpop.f32.mrf.mxu0
        %v2486 = vadd.f32 0.0, %v2485
        %v2487 = vpop.f32.mrf.mxu0
        %v2488 = vpop.f32.mrf.mxu0
        %v2489 = vadd.f32 0.0, %v2488
        %v2490 = vpop.f32.mrf.mxu0
        %2491 = vmatprep.mubr.bf16.mxu0 0
        %2492 = vmatmul.mubr.bf16.gmra.mxu0 %v973
        %v2493 = vpop.f32.mrf.mxu0
        %v2494 = vadd.f32 0.0, %v2493
        %v2495 = vpop.f32.mrf.mxu0
        %v2496 = vpop.f32.mrf.mxu0
        %v2497 = vadd.f32 0.0, %v2496
        %v2498 = vpop.f32.mrf.mxu0
        %2499 = vmatprep.mubr.bf16.mxu0 0
        %2500 = vmatmul.mubr.bf16.gmra.mxu0 %v974
        %v2501 = vpop.f32.mrf.mxu0
        %v2502 = vadd.f32 0.0, %v2501
        %v2503 = vpop.f32.mrf.mxu0
        %v2504 = vpop.f32.mrf.mxu0
        %v2505 = vadd.f32 0.0, %v2504
        %v2506 = vpop.f32.mrf.mxu0
        %2507 = vmatprep.mubr.bf16.mxu0 0
        %2508 = vmatmul.mubr.bf16.gmra.mxu0 %v975
        %v2509 = vpop.f32.mrf.mxu0
        %v2510 = vadd.f32 0.0, %v2509
        %v2511 = vpop.f32.mrf.mxu0
        %v2512 = vpop.f32.mrf.mxu0
        %v2513 = vadd.f32 0.0, %v2512
        %v2514 = vpop.f32.mrf.mxu0
        %2515 = vmatprep.mubr.bf16.mxu0 0
        %2516 = vmatmul.mubr.bf16.gmra.mxu0 %v976
        %v2517 = vpop.f32.mrf.mxu0
        %v2518 = vadd.f32 0.0, %v2517
        %v2519 = vpop.f32.mrf.mxu0
        %v2520 = vpop.f32.mrf.mxu0
        %v2521 = vadd.f32 0.0, %v2520
        %v2522 = vpop.f32.mrf.mxu0
        %2523 = vmatprep.mubr.bf16.mxu0 0
        %2524 = vmatmul.mubr.bf16.gmra.mxu0 %v977
        %v2525 = vpop.f32.mrf.mxu0
        %v2526 = vadd.f32 0.0, %v2525
        %v2527 = vpop.f32.mrf.mxu0
        %v2528 = vpop.f32.mrf.mxu0
        %v2529 = vadd.f32 0.0, %v2528
        %v2530 = vpop.f32.mrf.mxu0
        %2531 = vmatprep.mubr.bf16.mxu0 0
        %2532 = vmatmul.mubr.bf16.gmra.mxu0 %v978
        %v2533 = vpop.f32.mrf.mxu0
        %v2534 = vadd.f32 0.0, %v2533
        %v2535 = vpop.f32.mrf.mxu0
        %v2536 = vpop.f32.mrf.mxu0
        %v2537 = vadd.f32 0.0, %v2536
        %v2538 = vpop.f32.mrf.mxu0
        %2539 = vmatprep.mubr.bf16.mxu0 0
        %2540 = vmatmul.mubr.bf16.gmra.mxu0 %v979
        %v2541 = vpop.f32.mrf.mxu0
        %v2542 = vadd.f32 0.0, %v2541
        %v2543 = vpop.f32.mrf.mxu0
        %v2544 = vpop.f32.mrf.mxu0
        %v2545 = vadd.f32 0.0, %v2544
        %v2546 = vpop.f32.mrf.mxu0
        %2547 = vmatprep.mubr.bf16.mxu0 0
        %2548 = vmatmul.mubr.bf16.gmra.mxu0 %v980
        %v2549 = vpop.f32.mrf.mxu0
        %v2550 = vadd.f32 0.0, %v2549
        %v2551 = vpop.f32.mrf.mxu0
        %v2552 = vpop.f32.mrf.mxu0
        %v2553 = vadd.f32 0.0, %v2552
        %v2554 = vpop.f32.mrf.mxu0
        %2555 = vmatprep.mubr.bf16.mxu0 0
        %2556 = vmatmul.mubr.bf16.gmra.mxu0 %v981
        %v2557 = vpop.f32.mrf.mxu0
        %v2558 = vadd.f32 0.0, %v2557
        %v2559 = vpop.f32.mrf.mxu0
        %v2560 = vpop.f32.mrf.mxu0
        %v2561 = vadd.f32 0.0, %v2560
        %v2562 = vpop.f32.mrf.mxu0
        %2563 = vmatprep.mubr.bf16.mxu0 0
        %2564 = vmatmul.mubr.bf16.gmra.mxu0 %v982
        %v2565 = vpop.f32.mrf.mxu0
        %v2566 = vadd.f32 0.0, %v2565
        %v2567 = vpop.f32.mrf.mxu0
        %v2568 = vpop.f32.mrf.mxu0
        %v2569 = vadd.f32 0.0, %v2568
        %v2570 = vpop.f32.mrf.mxu0
        %2571 = vmatprep.mubr.bf16.mxu0 0
        %2572 = vmatmul.mubr.bf16.gmra.mxu0 %v983
        %v2573 = vpop.f32.mrf.mxu0
        %v2574 = vadd.f32 0.0, %v2573
        %v2575 = vpop.f32.mrf.mxu0
        %v2576 = vpop.f32.mrf.mxu0
        %v2577 = vadd.f32 0.0, %v2576
        %v2578 = vpop.f32.mrf.mxu0
        %2579 = vmatprep.mubr.bf16.mxu0 0
        %2580 = vmatmul.mubr.bf16.gmra.mxu0 %v984
        %v2581 = vpop.f32.mrf.mxu0
        %v2582 = vadd.f32 0.0, %v2581
        %v2583 = vpop.f32.mrf.mxu0
        %v2584 = vpop.f32.mrf.mxu0
        %v2585 = vadd.f32 0.0, %v2584
        %v2586 = vpop.f32.mrf.mxu0
        %2587 = vdwg.mxu0
        %v2588 = vsel %vm2202, %v2542, 0.0
        %v2589 = vsel %vm2203, %v2545, 0.0
        %v2590 = vsel %vm2204, %v2550, 0.0
        %v2591 = vsel %vm2205, %v2553, 0.0
        %v2592 = vsel %vm2206, %v2558, 0.0
        %v2593 = vsel %vm2207, %v2561, 0.0
        %v2594 = vsel %vm2208, %v2566, 0.0
        %v2595 = vsel %vm2209, %v2569, 0.0
        %v2596 = vsel %vm2210, %v2574, 0.0
        %v2597 = vsel %vm2211, %v2577, 0.0
        %v2598 = vsel %vm2212, %v2582, 0.0
        %v2599 = vsel %vm2213, %v2585, 0.0
        %v2600 = vsel %vm2214, %v2462, 0.0
        %v2601 = vsel %vm2215, %v2465, 0.0
        %v2602 = vsel %vm2216, %v2470, 0.0
        %v2603 = vsel %vm2217, %v2473, 0.0
        %v2604 = vsel %vm2218, %v2478, 0.0
        %v2605 = vsel %vm2219, %v2481, 0.0
        %v2606 = vsel %vm2220, %v2486, 0.0
        %v2607 = vsel %vm2221, %v2489, 0.0
        %v2608 = vsel %vm2222, %v2494, 0.0
        %v2609 = vsel %vm2223, %v2497, 0.0
        %v2610 = vsel %vm2224, %v2502, 0.0
        %v2611 = vsel %vm2225, %v2505, 0.0
        %v2612 = vsel %vm2226, %v2510, 0.0
        %v2613 = vsel %vm2227, %v2513, 0.0
        %v2614 = vsel %vm2228, %v2518, 0.0
        %v2615 = vsel %vm2229, %v2521, 0.0
        %v2616 = vsel %vm2230, %v2526, 0.0
        %v2617 = vsel %vm2231, %v2529, 0.0
        %v2618 = vsel %vm2232, %v2534, 0.0
        %v2619 = vsel %vm2233, %v2537, 0.0
        %v2620 = vadd.f32 %v2330, %v2588
        %v2621 = vadd.f32 %v2331, %v2589
        %v2622 = vadd.f32 %v2332, %v2590
        %v2623 = vadd.f32 %v2333, %v2591
        %v2624 = vadd.f32 %v2334, %v2592
        %v2625 = vadd.f32 %v2335, %v2593
        %v2626 = vadd.f32 %v2336, %v2594
        %v2627 = vadd.f32 %v2337, %v2595
        %v2628 = vadd.f32 %v2338, %v2596
        %v2629 = vadd.f32 %v2339, %v2597
        %v2630 = vadd.f32 %v2340, %v2598
        %v2631 = vadd.f32 %v2341, %v2599
        %v2632 = vadd.f32 %v2342, %v2600
        %v2633 = vadd.f32 %v2343, %v2601
        %v2634 = vadd.f32 %v2344, %v2602
        %v2635 = vadd.f32 %v2345, %v2603
        %v2636 = vadd.f32 %v2346, %v2604
        %v2637 = vadd.f32 %v2347, %v2605
        %v2638 = vadd.f32 %v2348, %v2606
        %v2639 = vadd.f32 %v2349, %v2607
        %v2640 = vadd.f32 %v2350, %v2608
        %v2641 = vadd.f32 %v2351, %v2609
        %v2642 = vadd.f32 %v2352, %v2610
        %v2643 = vadd.f32 %v2353, %v2611
        %v2644 = vadd.f32 %v2354, %v2612
        %v2645 = vadd.f32 %v2355, %v2613
        %v2646 = vadd.f32 %v2356, %v2614
        %v2647 = vadd.f32 %v2357, %v2615
        %v2648 = vadd.f32 %v2358, %v2616
        %v2649 = vadd.f32 %v2359, %v2617
        %v2650 = vadd.f32 %v2360, %v2618
        %v2651 = vadd.f32 %v2361, %v2619
        %s2652 = scalar_lea.vmem [#allocation8], 128
        %v2653 = vld [vmem:[%s2652] sm:$0xf]
        %v2654 = vld [vmem:[%s2652 + $0x4] sm:$0xf]
        %v2655 = vld [vmem:[%s2652 + $0x8] sm:$0xf]
        %v2656 = vld [vmem:[%s2652 + $0xc] sm:$0xf]
        %v2657 = vld [vmem:[%s2652 + $0x10] sm:$0xf]
        %v2658 = vld [vmem:[%s2652 + $0x14] sm:$0xf]
        %v2659 = vld [vmem:[%s2652 + $0x18] sm:$0xf]
        %v2660 = vld [vmem:[%s2652 + $0x1c] sm:$0xf]
        %v2661 = vld [vmem:[%s2652 + $0x20] sm:$0xf]
        %v2662 = vld [vmem:[%s2652 + $0x24] sm:$0xf]
        %v2663 = vld [vmem:[%s2652 + $0x28] sm:$0xf]
        %v2664 = vld [vmem:[%s2652 + $0x2c] sm:$0xf]
        %v2665 = vld [vmem:[%s2652 + $0x30] sm:$0xf]
        %v2666 = vld [vmem:[%s2652 + $0x34] sm:$0xf]
        %v2667 = vld [vmem:[%s2652 + $0x38] sm:$0xf]
        %v2668 = vld [vmem:[%s2652 + $0x3c] sm:$0xf]
        %v2685 = vunpack.c.l.b16 %v2653
        %v2686 = vunpack.c.l.b16 %v2654
        %v2687 = vunpack.c.l.b16 %v2655
        %v2688 = vunpack.c.l.b16 %v2656
        %v2689 = vunpack.c.l.b16 %v2657
        %v2690 = vunpack.c.l.b16 %v2658
        %v2691 = vunpack.c.l.b16 %v2659
        %v2692 = vunpack.c.l.b16 %v2660
        %v2693 = vunpack.c.l.b16 %v2661
        %v2694 = vunpack.c.l.b16 %v2662
        %v2695 = vunpack.c.l.b16 %v2663
        %v2696 = vunpack.c.l.b16 %v2664
        %v2697 = vunpack.c.l.b16 %v2665
        %v2698 = vunpack.c.l.b16 %v2666
        %v2699 = vunpack.c.l.b16 %v2667
        %v2700 = vunpack.c.l.b16 %v2668
        %v2701 = vpack.c.b16 %v2686, %v2685
        %v2702 = vpack.c.b16 %v2688, %v2687
        %v2703 = vpack.c.b16 %v2690, %v2689
        %v2704 = vpack.c.b16 %v2692, %v2691
        %v2705 = vpack.c.b16 %v2694, %v2693
        %v2706 = vpack.c.b16 %v2696, %v2695
        %v2707 = vpack.c.b16 %v2698, %v2697
        %v2708 = vpack.c.b16 %v2700, %v2699
        %2717 = vmatprep.subr.bf16.mxu0 0
        %2718 = vmatpush1.bf16.msra.mxu0 %v2708
        %2719 = vmatprep.subr.bf16.mxu0 0
        %2720 = vmatpush1.bf16.msra.mxu0 %v2707
        %2721 = vmatprep.subr.bf16.mxu0 0
        %2722 = vmatpush1.bf16.msra.mxu0 %v2706
        %2723 = vmatprep.subr.bf16.mxu0 0
        %2724 = vmatpush1.bf16.msra.mxu0 %v2705
        %2725 = vmatprep.subr.bf16.mxu0 0
        %2726 = vmatpush1.bf16.msra.mxu0 %v2704
        %2727 = vmatprep.subr.bf16.mxu0 0
        %2728 = vmatpush1.bf16.msra.mxu0 %v2703
        %2729 = vmatprep.subr.bf16.mxu0 0
        %2730 = vmatpush1.bf16.msra.mxu0 %v2702
        %2731 = vmatprep.subr.bf16.mxu0 0
        %2732 = vmatpush1.bf16.msra.mxu0 %v2701
        %2733 = vmatprep.subr.bf16.mxu0 0
        %2734 = vmatpush2.bf16.msra.mxu0 0
        %2735 = vmatprep.subr.bf16.mxu0 0
        %2736 = vmatpush2.bf16.msra.mxu0 0
        %2737 = vmatprep.subr.bf16.mxu0 0
        %2738 = vmatpush2.bf16.msra.mxu0 0
        %2739 = vmatprep.subr.bf16.mxu0 0
        %2740 = vmatpush2.bf16.msra.mxu0 0
        %2741 = vmatprep.subr.bf16.mxu0 0
        %2742 = vmatpush2.bf16.msra.mxu0 0
        %2743 = vmatprep.subr.bf16.mxu0 0
        %2744 = vmatpush2.bf16.msra.mxu0 0
        %2745 = vmatprep.subr.bf16.mxu0 0
        %2746 = vmatpush2.bf16.msra.mxu0 0
        %2747 = vmatprep.subr.bf16.mxu0 0
        %2748 = vmatpush2.bf16.msra.mxu0 0
        %2749 = vmatprep.mubr.bf16.mxu0 0
        %2750 = vmatmul.mubr.bf16.gmra.mxu0 %v969
        %v2751 = vpop.f32.mrf.mxu0
        %v2752 = vadd.f32 0.0, %v2751
        %v2753 = vpop.f32.mrf.mxu0
        %v2754 = vpop.f32.mrf.mxu0
        %v2755 = vadd.f32 0.0, %v2754
        %v2756 = vpop.f32.mrf.mxu0
        %2757 = vmatprep.mubr.bf16.mxu0 0
        %2758 = vmatmul.mubr.bf16.gmra.mxu0 %v970
        %v2759 = vpop.f32.mrf.mxu0
        %v2760 = vadd.f32 0.0, %v2759
        %v2761 = vpop.f32.mrf.mxu0
        %v2762 = vpop.f32.mrf.mxu0
        %v2763 = vadd.f32 0.0, %v2762
        %v2764 = vpop.f32.mrf.mxu0
        %2765 = vmatprep.mubr.bf16.mxu0 0
        %2766 = vmatmul.mubr.bf16.gmra.mxu0 %v971
        %v2767 = vpop.f32.mrf.mxu0
        %v2768 = vadd.f32 0.0, %v2767
        %v2769 = vpop.f32.mrf.mxu0
        %v2770 = vpop.f32.mrf.mxu0
        %v2771 = vadd.f32 0.0, %v2770
        %v2772 = vpop.f32.mrf.mxu0
        %2773 = vmatprep.mubr.bf16.mxu0 0
        %2774 = vmatmul.mubr.bf16.gmra.mxu0 %v972
        %v2775 = vpop.f32.mrf.mxu0
        %v2776 = vadd.f32 0.0, %v2775
        %v2777 = vpop.f32.mrf.mxu0
        %v2778 = vpop.f32.mrf.mxu0
        %v2779 = vadd.f32 0.0, %v2778
        %v2780 = vpop.f32.mrf.mxu0
        %2781 = vmatprep.mubr.bf16.mxu0 0
        %2782 = vmatmul.mubr.bf16.gmra.mxu0 %v973
        %v2783 = vpop.f32.mrf.mxu0
        %v2784 = vadd.f32 0.0, %v2783
        %v2785 = vpop.f32.mrf.mxu0
        %v2786 = vpop.f32.mrf.mxu0
        %v2787 = vadd.f32 0.0, %v2786
        %v2788 = vpop.f32.mrf.mxu0
        %2789 = vmatprep.mubr.bf16.mxu0 0
        %2790 = vmatmul.mubr.bf16.gmra.mxu0 %v974
        %v2791 = vpop.f32.mrf.mxu0
        %v2792 = vadd.f32 0.0, %v2791
        %v2793 = vpop.f32.mrf.mxu0
        %v2794 = vpop.f32.mrf.mxu0
        %v2795 = vadd.f32 0.0, %v2794
        %v2796 = vpop.f32.mrf.mxu0
        %2797 = vmatprep.mubr.bf16.mxu0 0
        %2798 = vmatmul.mubr.bf16.gmra.mxu0 %v975
        %v2799 = vpop.f32.mrf.mxu0
        %v2800 = vadd.f32 0.0, %v2799
        %v2801 = vpop.f32.mrf.mxu0
        %v2802 = vpop.f32.mrf.mxu0
        %v2803 = vadd.f32 0.0, %v2802
        %v2804 = vpop.f32.mrf.mxu0
        %2805 = vmatprep.mubr.bf16.mxu0 0
        %2806 = vmatmul.mubr.bf16.gmra.mxu0 %v976
        %v2807 = vpop.f32.mrf.mxu0
        %v2808 = vadd.f32 0.0, %v2807
        %v2809 = vpop.f32.mrf.mxu0
        %v2810 = vpop.f32.mrf.mxu0
        %v2811 = vadd.f32 0.0, %v2810
        %v2812 = vpop.f32.mrf.mxu0
        %2813 = vmatprep.mubr.bf16.mxu0 0
        %2814 = vmatmul.mubr.bf16.gmra.mxu0 %v977
        %v2815 = vpop.f32.mrf.mxu0
        %v2816 = vadd.f32 0.0, %v2815
        %v2817 = vpop.f32.mrf.mxu0
        %v2818 = vpop.f32.mrf.mxu0
        %v2819 = vadd.f32 0.0, %v2818
        %v2820 = vpop.f32.mrf.mxu0
        %2821 = vmatprep.mubr.bf16.mxu0 0
        %2822 = vmatmul.mubr.bf16.gmra.mxu0 %v978
        %v2823 = vpop.f32.mrf.mxu0
        %v2824 = vadd.f32 0.0, %v2823
        %v2825 = vpop.f32.mrf.mxu0
        %v2826 = vpop.f32.mrf.mxu0
        %v2827 = vadd.f32 0.0, %v2826
        %v2828 = vpop.f32.mrf.mxu0
        %2829 = vmatprep.mubr.bf16.mxu0 0
        %2830 = vmatmul.mubr.bf16.gmra.mxu0 %v979
        %v2831 = vpop.f32.mrf.mxu0
        %v2832 = vadd.f32 0.0, %v2831
        %v2833 = vpop.f32.mrf.mxu0
        %v2834 = vpop.f32.mrf.mxu0
        %v2835 = vadd.f32 0.0, %v2834
        %v2836 = vpop.f32.mrf.mxu0
        %2837 = vmatprep.mubr.bf16.mxu0 0
        %2838 = vmatmul.mubr.bf16.gmra.mxu0 %v980
        %v2839 = vpop.f32.mrf.mxu0
        %v2840 = vadd.f32 0.0, %v2839
        %v2841 = vpop.f32.mrf.mxu0
        %v2842 = vpop.f32.mrf.mxu0
        %v2843 = vadd.f32 0.0, %v2842
        %v2844 = vpop.f32.mrf.mxu0
        %2845 = vmatprep.mubr.bf16.mxu0 0
        %2846 = vmatmul.mubr.bf16.gmra.mxu0 %v981
        %v2847 = vpop.f32.mrf.mxu0
        %v2848 = vadd.f32 0.0, %v2847
        %v2849 = vpop.f32.mrf.mxu0
        %v2850 = vpop.f32.mrf.mxu0
        %v2851 = vadd.f32 0.0, %v2850
        %v2852 = vpop.f32.mrf.mxu0
        %2853 = vmatprep.mubr.bf16.mxu0 0
        %2854 = vmatmul.mubr.bf16.gmra.mxu0 %v982
        %v2855 = vpop.f32.mrf.mxu0
        %v2856 = vadd.f32 0.0, %v2855
        %v2857 = vpop.f32.mrf.mxu0
        %v2858 = vpop.f32.mrf.mxu0
        %v2859 = vadd.f32 0.0, %v2858
        %v2860 = vpop.f32.mrf.mxu0
        %2861 = vmatprep.mubr.bf16.mxu0 0
        %2862 = vmatmul.mubr.bf16.gmra.mxu0 %v983
        %v2863 = vpop.f32.mrf.mxu0
        %v2864 = vadd.f32 0.0, %v2863
        %v2865 = vpop.f32.mrf.mxu0
        %v2866 = vpop.f32.mrf.mxu0
        %v2867 = vadd.f32 0.0, %v2866
        %v2868 = vpop.f32.mrf.mxu0
        %2869 = vmatprep.mubr.bf16.mxu0 0
        %2870 = vmatmul.mubr.bf16.gmra.mxu0 %v984
        %v2871 = vpop.f32.mrf.mxu0
        %v2872 = vadd.f32 0.0, %v2871
        %v2873 = vpop.f32.mrf.mxu0
        %v2874 = vpop.f32.mrf.mxu0
        %v2875 = vadd.f32 0.0, %v2874
        %v2876 = vpop.f32.mrf.mxu0
        %2877 = vdwg.mxu0
        %v2878 = vrot.slane %v2752, 6
        %v2879 = vrot.slane %v2755, 6
        %v2880 = vrot.slane %v2760, 6
        %v2881 = vrot.slane %v2763, 6
        %v2882 = vrot.slane %v2768, 6
        %v2883 = vrot.slane %v2771, 6
        %v2884 = vrot.slane %v2776, 6
        %v2885 = vrot.slane %v2779, 6
        %v2886 = vrot.slane %v2784, 6
        %v2887 = vrot.slane %v2787, 6
        %v2888 = vrot.slane %v2792, 6
        %v2889 = vrot.slane %v2795, 6
        %v2890 = vrot.slane %v2800, 6
        %v2891 = vrot.slane %v2803, 6
        %v2892 = vrot.slane %v2808, 6
        %v2893 = vrot.slane %v2811, 6
        %v2894 = vrot.slane %v2816, 6
        %v2895 = vrot.slane %v2819, 6
        %v2896 = vrot.slane %v2824, 6
        %v2897 = vrot.slane %v2827, 6
        %v2898 = vrot.slane %v2832, 6
        %v2899 = vrot.slane %v2835, 6
        %v2900 = vrot.slane %v2840, 6
        %v2901 = vrot.slane %v2843, 6
        %v2902 = vrot.slane %v2848, 6
        %v2903 = vrot.slane %v2851, 6
        %v2904 = vrot.slane %v2856, 6
        %v2905 = vrot.slane %v2859, 6
        %v2906 = vrot.slane %v2864, 6
        %v2907 = vrot.slane %v2867, 6
        %v2908 = vrot.slane %v2872, 6
        %v2909 = vrot.slane %v2875, 6
        %vm2910 = vcmp.lt.s32.totalorder %v458, 2
        %v2911 = vsel %vm2910, %v2908, %v2909
        %v2912 = vsel %vm2910, %v2907, %v2908
        %v2913 = vsel %vm2910, %v2906, %v2907
        %v2914 = vsel %vm2910, %v2905, %v2906
        %v2915 = vsel %vm2910, %v2904, %v2905
        %v2916 = vsel %vm2910, %v2903, %v2904
        %v2917 = vsel %vm2910, %v2902, %v2903
        %v2918 = vsel %vm2910, %v2901, %v2902
        %v2919 = vsel %vm2910, %v2900, %v2901
        %v2920 = vsel %vm2910, %v2899, %v2900
        %v2921 = vsel %vm2910, %v2898, %v2899
        %v2922 = vsel %vm2910, %v2897, %v2898
        %v2923 = vsel %vm2910, %v2896, %v2897
        %v2924 = vsel %vm2910, %v2895, %v2896
        %v2925 = vsel %vm2910, %v2894, %v2895
        %v2926 = vsel %vm2910, %v2893, %v2894
        %v2927 = vsel %vm2910, %v2892, %v2893
        %v2928 = vsel %vm2910, %v2891, %v2892
        %v2929 = vsel %vm2910, %v2890, %v2891
        %v2930 = vsel %vm2910, %v2889, %v2890
        %v2931 = vsel %vm2910, %v2888, %v2889
        %v2932 = vsel %vm2910, %v2887, %v2888
        %v2933 = vsel %vm2910, %v2886, %v2887
        %v2934 = vsel %vm2910, %v2885, %v2886
        %v2935 = vsel %vm2910, %v2884, %v2885
        %v2936 = vsel %vm2910, %v2883, %v2884
        %v2937 = vsel %vm2910, %v2882, %v2883
        %v2938 = vsel %vm2910, %v2881, %v2882
        %v2939 = vsel %vm2910, %v2880, %v2881
        %v2940 = vsel %vm2910, %v2879, %v2880
        %v2941 = vsel %vm2910, %v2878, %v2879
        %v2942 = vsel %vm2910, %v2909, %v2878
        %vm2943 = vcmp.lt.s32.totalorder %v522, 10
        %vm2944 = vcmp.lt.s32.totalorder %v523, 10
        %vm2945 = vcmp.lt.s32.totalorder %v524, 10
        %vm2946 = vcmp.lt.s32.totalorder %v525, 10
        %vm2947 = vcmp.lt.s32.totalorder %v526, 10
        %vm2948 = vcmp.lt.s32.totalorder %v527, 10
        %vm2949 = vcmp.lt.s32.totalorder %v528, 10
        %vm2950 = vcmp.lt.s32.totalorder %v529, 10
        %vm2951 = vcmp.lt.s32.totalorder %v530, 10
        %vm2952 = vcmp.lt.s32.totalorder %v531, 10
        %vm2953 = vcmp.lt.s32.totalorder %v532, 10
        %vm2954 = vcmp.lt.s32.totalorder %v533, 10
        %vm2955 = vcmp.lt.s32.totalorder %v534, 10
        %vm2956 = vcmp.lt.s32.totalorder %v535, 10
        %vm2957 = vcmp.lt.s32.totalorder %v536, 10
        %vm2958 = vcmp.lt.s32.totalorder %v537, 10
        %vm2959 = vcmp.lt.s32.totalorder %v538, 10
        %vm2960 = vcmp.lt.s32.totalorder %v539, 10
        %vm2961 = vcmp.lt.s32.totalorder %v540, 10
        %vm2962 = vcmp.lt.s32.totalorder %v541, 10
        %vm2963 = vcmp.lt.s32.totalorder %v542, 10
        %vm2964 = vcmp.lt.s32.totalorder %v543, 10
        %vm2965 = vcmp.lt.s32.totalorder %v544, 10
        %vm2966 = vcmp.lt.s32.totalorder %v545, 10
        %vm2967 = vcmp.lt.s32.totalorder %v546, 10
        %vm2968 = vcmp.lt.s32.totalorder %v547, 10
        %vm2969 = vcmp.lt.s32.totalorder %v548, 10
        %vm2970 = vcmp.lt.s32.totalorder %v549, 10
        %vm2971 = vcmp.lt.s32.totalorder %v550, 10
        %vm2972 = vcmp.lt.s32.totalorder %v551, 10
        %vm2973 = vcmp.lt.s32.totalorder %v552, 10
        %vm2974 = vcmp.lt.s32.totalorder %v553, 10
        %vm2975 = vmand %vm2202, %vm2943
        %vm2976 = vmand %vm2203, %vm2944
        %vm2977 = vmand %vm2204, %vm2945
        %vm2978 = vmand %vm2205, %vm2946
        %vm2979 = vmand %vm2206, %vm2947
        %vm2980 = vmand %vm2207, %vm2948
        %vm2981 = vmand %vm2208, %vm2949
        %vm2982 = vmand %vm2209, %vm2950
        %vm2983 = vmand %vm2210, %vm2951
        %vm2984 = vmand %vm2211, %vm2952
        %vm2985 = vmand %vm2212, %vm2953
        %vm2986 = vmand %vm2213, %vm2954
        %vm2987 = vmand %vm2214, %vm2955
        %vm2988 = vmand %vm2215, %vm2956
        %vm2989 = vmand %vm2216, %vm2957
        %vm2990 = vmand %vm2217, %vm2958
        %vm2991 = vmand %vm2218, %vm2959
        %vm2992 = vmand %vm2219, %vm2960
        %vm2993 = vmand %vm2220, %vm2961
        %vm2994 = vmand %vm2221, %vm2962
        %vm2995 = vmand %vm2222, %vm2963
        %vm2996 = vmand %vm2223, %vm2964
        %vm2997 = vmand %vm2224, %vm2965
        %vm2998 = vmand %vm2225, %vm2966
        %vm2999 = vmand %vm2226, %vm2967
        %vm3000 = vmand %vm2227, %vm2968
        %vm3001 = vmand %vm2228, %vm2969
        %vm3002 = vmand %vm2229, %vm2970
        %vm3003 = vmand %vm2230, %vm2971
        %vm3004 = vmand %vm2231, %vm2972
        %vm3005 = vmand %vm2232, %vm2973
        %vm3006 = vmand %vm2233, %vm2974
        %v3007 = vsel %vm2975, %v2921, 0.0
        %v3008 = vsel %vm2976, %v2920, 0.0
        %v3009 = vsel %vm2977, %v2919, 0.0
        %v3010 = vsel %vm2978, %v2918, 0.0
        %v3011 = vsel %vm2979, %v2917, 0.0
        %v3012 = vsel %vm2980, %v2916, 0.0
        %v3013 = vsel %vm2981, %v2915, 0.0
        %v3014 = vsel %vm2982, %v2914, 0.0
        %v3015 = vsel %vm2983, %v2913, 0.0
        %v3016 = vsel %vm2984, %v2912, 0.0
        %v3017 = vsel %vm2985, %v2911, 0.0
        %v3018 = vsel %vm2986, %v2942, 0.0
        %v3019 = vsel %vm2987, %v2941, 0.0
        %v3020 = vsel %vm2988, %v2940, 0.0
        %v3021 = vsel %vm2989, %v2939, 0.0
        %v3022 = vsel %vm2990, %v2938, 0.0
        %v3023 = vsel %vm2991, %v2937, 0.0
        %v3024 = vsel %vm2992, %v2936, 0.0
        %v3025 = vsel %vm2993, %v2935, 0.0
        %v3026 = vsel %vm2994, %v2934, 0.0
        %v3027 = vsel %vm2995, %v2933, 0.0
        %v3028 = vsel %vm2996, %v2932, 0.0
        %v3029 = vsel %vm2997, %v2931, 0.0
        %v3030 = vsel %vm2998, %v2930, 0.0
        %v3031 = vsel %vm2999, %v2929, 0.0
        %v3032 = vsel %vm3000, %v2928, 0.0
        %v3033 = vsel %vm3001, %v2927, 0.0
        %v3034 = vsel %vm3002, %v2926, 0.0
        %v3035 = vsel %vm3003, %v2925, 0.0
        %v3036 = vsel %vm3004, %v2924, 0.0
        %v3037 = vsel %vm3005, %v2923, 0.0
        %v3038 = vsel %vm3006, %v2922, 0.0
        %v3039 = vadd.f32 %v2620, %v3007
        %v3040 = vadd.f32 %v2621, %v3008
        %v3041 = vadd.f32 %v2622, %v3009
        %v3042 = vadd.f32 %v2623, %v3010
        %v3043 = vadd.f32 %v2624, %v3011
        %v3044 = vadd.f32 %v2625, %v3012
        %v3045 = vadd.f32 %v2626, %v3013
        %v3046 = vadd.f32 %v2627, %v3014
        %v3047 = vadd.f32 %v2628, %v3015
        %v3048 = vadd.f32 %v2629, %v3016
        %v3049 = vadd.f32 %v2630, %v3017
        %v3050 = vadd.f32 %v2631, %v3018
        %v3051 = vadd.f32 %v2632, %v3019
        %v3052 = vadd.f32 %v2633, %v3020
        %v3053 = vadd.f32 %v2634, %v3021
        %v3054 = vadd.f32 %v2635, %v3022
        %v3055 = vadd.f32 %v2636, %v3023
        %v3056 = vadd.f32 %v2637, %v3024
        %v3057 = vadd.f32 %v2638, %v3025
        %v3058 = vadd.f32 %v2639, %v3026
        %v3059 = vadd.f32 %v2640, %v3027
        %v3060 = vadd.f32 %v2641, %v3028
        %v3061 = vadd.f32 %v2642, %v3029
        %v3062 = vadd.f32 %v2643, %v3030
        %v3063 = vadd.f32 %v2644, %v3031
        %v3064 = vadd.f32 %v2645, %v3032
        %v3065 = vadd.f32 %v2646, %v3033
        %v3066 = vadd.f32 %v2647, %v3034
        %v3067 = vadd.f32 %v2648, %v3035
        %v3068 = vadd.f32 %v2649, %v3036
        %v3069 = vadd.f32 %v2650, %v3037
        %v3070 = vadd.f32 %v2651, %v3038
        %s3071 = scalar_lea.vmem [#allocation8], 192
        %v3072 = vld [vmem:[%s3071] sm:$0xf]
        %v3073 = vld [vmem:[%s3071 + $0x4] sm:$0xf]
        %v3074 = vld [vmem:[%s3071 + $0x8] sm:$0xf]
        %v3075 = vld [vmem:[%s3071 + $0xc] sm:$0xf]
        %v3076 = vld [vmem:[%s3071 + $0x10] sm:$0xf]
        %v3077 = vld [vmem:[%s3071 + $0x14] sm:$0xf]
        %v3078 = vld [vmem:[%s3071 + $0x18] sm:$0xf]
        %v3079 = vld [vmem:[%s3071 + $0x1c] sm:$0xf]
        %v3080 = vld [vmem:[%s3071 + $0x20] sm:$0xf]
        %v3081 = vld [vmem:[%s3071 + $0x24] sm:$0xf]
        %v3082 = vld [vmem:[%s3071 + $0x28] sm:$0xf]
        %v3083 = vld [vmem:[%s3071 + $0x2c] sm:$0xf]
        %v3084 = vld [vmem:[%s3071 + $0x30] sm:$0xf]
        %v3085 = vld [vmem:[%s3071 + $0x34] sm:$0xf]
        %v3086 = vld [vmem:[%s3071 + $0x38] sm:$0xf]
        %v3087 = vld [vmem:[%s3071 + $0x3c] sm:$0xf]
        %v3104 = vunpack.c.l.b16 %v3072
        %v3105 = vunpack.c.l.b16 %v3073
        %v3106 = vunpack.c.l.b16 %v3074
        %v3107 = vunpack.c.l.b16 %v3075
        %v3108 = vunpack.c.l.b16 %v3076
        %v3109 = vunpack.c.l.b16 %v3077
        %v3110 = vunpack.c.l.b16 %v3078
        %v3111 = vunpack.c.l.b16 %v3079
        %v3112 = vunpack.c.l.b16 %v3080
        %v3113 = vunpack.c.l.b16 %v3081
        %v3114 = vunpack.c.l.b16 %v3082
        %v3115 = vunpack.c.l.b16 %v3083
        %v3116 = vunpack.c.l.b16 %v3084
        %v3117 = vunpack.c.l.b16 %v3085
        %v3118 = vunpack.c.l.b16 %v3086
        %v3119 = vunpack.c.l.b16 %v3087
        %v3120 = vpack.c.b16 %v3105, %v3104
        %v3121 = vpack.c.b16 %v3107, %v3106
        %v3122 = vpack.c.b16 %v3109, %v3108
        %v3123 = vpack.c.b16 %v3111, %v3110
        %v3124 = vpack.c.b16 %v3113, %v3112
        %v3125 = vpack.c.b16 %v3115, %v3114
        %v3126 = vpack.c.b16 %v3117, %v3116
        %v3127 = vpack.c.b16 %v3119, %v3118
        %3136 = vmatprep.subr.bf16.mxu0 0
        %3137 = vmatpush1.bf16.msra.mxu0 %v3127
        %3138 = vmatprep.subr.bf16.mxu0 0
        %3139 = vmatpush1.bf16.msra.mxu0 %v3126
        %3140 = vmatprep.subr.bf16.mxu0 0
        %3141 = vmatpush1.bf16.msra.mxu0 %v3125
        %3142 = vmatprep.subr.bf16.mxu0 0
        %3143 = vmatpush1.bf16.msra.mxu0 %v3124
        %3144 = vmatprep.subr.bf16.mxu0 0
        %3145 = vmatpush1.bf16.msra.mxu0 %v3123
        %3146 = vmatprep.subr.bf16.mxu0 0
        %3147 = vmatpush1.bf16.msra.mxu0 %v3122
        %3148 = vmatprep.subr.bf16.mxu0 0
        %3149 = vmatpush1.bf16.msra.mxu0 %v3121
        %3150 = vmatprep.subr.bf16.mxu0 0
        %3151 = vmatpush1.bf16.msra.mxu0 %v3120
        %3152 = vmatprep.subr.bf16.mxu0 0
        %3153 = vmatpush2.bf16.msra.mxu0 0
        %3154 = vmatprep.subr.bf16.mxu0 0
        %3155 = vmatpush2.bf16.msra.mxu0 0
        %3156 = vmatprep.subr.bf16.mxu0 0
        %3157 = vmatpush2.bf16.msra.mxu0 0
        %3158 = vmatprep.subr.bf16.mxu0 0
        %3159 = vmatpush2.bf16.msra.mxu0 0
        %3160 = vmatprep.subr.bf16.mxu0 0
        %3161 = vmatpush2.bf16.msra.mxu0 0
        %3162 = vmatprep.subr.bf16.mxu0 0
        %3163 = vmatpush2.bf16.msra.mxu0 0
        %3164 = vmatprep.subr.bf16.mxu0 0
        %3165 = vmatpush2.bf16.msra.mxu0 0
        %3166 = vmatprep.subr.bf16.mxu0 0
        %3167 = vmatpush2.bf16.msra.mxu0 0
        %3168 = vmatprep.mubr.bf16.mxu0 0
        %3169 = vmatmul.mubr.bf16.gmra.mxu0 %v969
        %v3170 = vpop.f32.mrf.mxu0
        %v3171 = vadd.f32 0.0, %v3170
        %v3172 = vpop.f32.mrf.mxu0
        %v3173 = vpop.f32.mrf.mxu0
        %v3174 = vadd.f32 0.0, %v3173
        %v3175 = vpop.f32.mrf.mxu0
        %3176 = vmatprep.mubr.bf16.mxu0 0
        %3177 = vmatmul.mubr.bf16.gmra.mxu0 %v970
        %v3178 = vpop.f32.mrf.mxu0
        %v3179 = vadd.f32 0.0, %v3178
        %v3180 = vpop.f32.mrf.mxu0
        %v3181 = vpop.f32.mrf.mxu0
        %v3182 = vadd.f32 0.0, %v3181
        %v3183 = vpop.f32.mrf.mxu0
        %3184 = vmatprep.mubr.bf16.mxu0 0
        %3185 = vmatmul.mubr.bf16.gmra.mxu0 %v971
        %v3186 = vpop.f32.mrf.mxu0
        %v3187 = vadd.f32 0.0, %v3186
        %v3188 = vpop.f32.mrf.mxu0
        %v3189 = vpop.f32.mrf.mxu0
        %v3190 = vadd.f32 0.0, %v3189
        %v3191 = vpop.f32.mrf.mxu0
        %3192 = vmatprep.mubr.bf16.mxu0 0
        %3193 = vmatmul.mubr.bf16.gmra.mxu0 %v972
        %v3194 = vpop.f32.mrf.mxu0
        %v3195 = vadd.f32 0.0, %v3194
        %v3196 = vpop.f32.mrf.mxu0
        %v3197 = vpop.f32.mrf.mxu0
        %v3198 = vadd.f32 0.0, %v3197
        %v3199 = vpop.f32.mrf.mxu0
        %3200 = vmatprep.mubr.bf16.mxu0 0
        %3201 = vmatmul.mubr.bf16.gmra.mxu0 %v973
        %v3202 = vpop.f32.mrf.mxu0
        %v3203 = vadd.f32 0.0, %v3202
        %v3204 = vpop.f32.mrf.mxu0
        %v3205 = vpop.f32.mrf.mxu0
        %v3206 = vadd.f32 0.0, %v3205
        %v3207 = vpop.f32.mrf.mxu0
        %3208 = vmatprep.mubr.bf16.mxu0 0
        %3209 = vmatmul.mubr.bf16.gmra.mxu0 %v974
        %v3210 = vpop.f32.mrf.mxu0
        %v3211 = vadd.f32 0.0, %v3210
        %v3212 = vpop.f32.mrf.mxu0
        %v3213 = vpop.f32.mrf.mxu0
        %v3214 = vadd.f32 0.0, %v3213
        %v3215 = vpop.f32.mrf.mxu0
        %3216 = vmatprep.mubr.bf16.mxu0 0
        %3217 = vmatmul.mubr.bf16.gmra.mxu0 %v975
        %v3218 = vpop.f32.mrf.mxu0
        %v3219 = vadd.f32 0.0, %v3218
        %v3220 = vpop.f32.mrf.mxu0
        %v3221 = vpop.f32.mrf.mxu0
        %v3222 = vadd.f32 0.0, %v3221
        %v3223 = vpop.f32.mrf.mxu0
        %3224 = vmatprep.mubr.bf16.mxu0 0
        %3225 = vmatmul.mubr.bf16.gmra.mxu0 %v976
        %v3226 = vpop.f32.mrf.mxu0
        %v3227 = vadd.f32 0.0, %v3226
        %v3228 = vpop.f32.mrf.mxu0
        %v3229 = vpop.f32.mrf.mxu0
        %v3230 = vadd.f32 0.0, %v3229
        %v3231 = vpop.f32.mrf.mxu0
        %3232 = vmatprep.mubr.bf16.mxu0 0
        %3233 = vmatmul.mubr.bf16.gmra.mxu0 %v977
        %v3234 = vpop.f32.mrf.mxu0
        %v3235 = vadd.f32 0.0, %v3234
        %v3236 = vpop.f32.mrf.mxu0
        %v3237 = vpop.f32.mrf.mxu0
        %v3238 = vadd.f32 0.0, %v3237
        %v3239 = vpop.f32.mrf.mxu0
        %3240 = vmatprep.mubr.bf16.mxu0 0
        %3241 = vmatmul.mubr.bf16.gmra.mxu0 %v978
        %v3242 = vpop.f32.mrf.mxu0
        %v3243 = vadd.f32 0.0, %v3242
        %v3244 = vpop.f32.mrf.mxu0
        %v3245 = vpop.f32.mrf.mxu0
        %v3246 = vadd.f32 0.0, %v3245
        %v3247 = vpop.f32.mrf.mxu0
        %3248 = vmatprep.mubr.bf16.mxu0 0
        %3249 = vmatmul.mubr.bf16.gmra.mxu0 %v979
        %v3250 = vpop.f32.mrf.mxu0
        %v3251 = vadd.f32 0.0, %v3250
        %v3252 = vpop.f32.mrf.mxu0
        %v3253 = vpop.f32.mrf.mxu0
        %v3254 = vadd.f32 0.0, %v3253
        %v3255 = vpop.f32.mrf.mxu0
        %3256 = vmatprep.mubr.bf16.mxu0 0
        %3257 = vmatmul.mubr.bf16.gmra.mxu0 %v980
        %v3258 = vpop.f32.mrf.mxu0
        %v3259 = vadd.f32 0.0, %v3258
        %v3260 = vpop.f32.mrf.mxu0
        %v3261 = vpop.f32.mrf.mxu0
        %v3262 = vadd.f32 0.0, %v3261
        %v3263 = vpop.f32.mrf.mxu0
        %3264 = vmatprep.mubr.bf16.mxu0 0
        %3265 = vmatmul.mubr.bf16.gmra.mxu0 %v981
        %v3266 = vpop.f32.mrf.mxu0
        %v3267 = vadd.f32 0.0, %v3266
        %v3268 = vpop.f32.mrf.mxu0
        %v3269 = vpop.f32.mrf.mxu0
        %v3270 = vadd.f32 0.0, %v3269
        %v3271 = vpop.f32.mrf.mxu0
        %3272 = vmatprep.mubr.bf16.mxu0 0
        %3273 = vmatmul.mubr.bf16.gmra.mxu0 %v982
        %v3274 = vpop.f32.mrf.mxu0
        %v3275 = vadd.f32 0.0, %v3274
        %v3276 = vpop.f32.mrf.mxu0
        %v3277 = vpop.f32.mrf.mxu0
        %v3278 = vadd.f32 0.0, %v3277
        %v3279 = vpop.f32.mrf.mxu0
        %3280 = vmatprep.mubr.bf16.mxu0 0
        %3281 = vmatmul.mubr.bf16.gmra.mxu0 %v983
        %v3282 = vpop.f32.mrf.mxu0
        %v3283 = vadd.f32 0.0, %v3282
        %v3284 = vpop.f32.mrf.mxu0
        %v3285 = vpop.f32.mrf.mxu0
        %v3286 = vadd.f32 0.0, %v3285
        %v3287 = vpop.f32.mrf.mxu0
        %3288 = vmatprep.mubr.bf16.mxu0 0
        %3289 = vmatmul.mubr.bf16.gmra.mxu0 %v984
        %v3290 = vpop.f32.mrf.mxu0
        %v3291 = vadd.f32 0.0, %v3290
        %v3292 = vpop.f32.mrf.mxu0
        %v3293 = vpop.f32.mrf.mxu0
        %v3294 = vadd.f32 0.0, %v3293
        %v3295 = vpop.f32.mrf.mxu0
        %3296 = vdwg.mxu0
        %v3297 = vrot.slane %v3171, 2
        %v3298 = vrot.slane %v3174, 2
        %v3299 = vrot.slane %v3179, 2
        %v3300 = vrot.slane %v3182, 2
        %v3301 = vrot.slane %v3187, 2
        %v3302 = vrot.slane %v3190, 2
        %v3303 = vrot.slane %v3195, 2
        %v3304 = vrot.slane %v3198, 2
        %v3305 = vrot.slane %v3203, 2
        %v3306 = vrot.slane %v3206, 2
        %v3307 = vrot.slane %v3211, 2
        %v3308 = vrot.slane %v3214, 2
        %v3309 = vrot.slane %v3219, 2
        %v3310 = vrot.slane %v3222, 2
        %v3311 = vrot.slane %v3227, 2
        %v3312 = vrot.slane %v3230, 2
        %v3313 = vrot.slane %v3235, 2
        %v3314 = vrot.slane %v3238, 2
        %v3315 = vrot.slane %v3243, 2
        %v3316 = vrot.slane %v3246, 2
        %v3317 = vrot.slane %v3251, 2
        %v3318 = vrot.slane %v3254, 2
        %v3319 = vrot.slane %v3259, 2
        %v3320 = vrot.slane %v3262, 2
        %v3321 = vrot.slane %v3267, 2
        %v3322 = vrot.slane %v3270, 2
        %v3323 = vrot.slane %v3275, 2
        %v3324 = vrot.slane %v3278, 2
        %v3325 = vrot.slane %v3283, 2
        %v3326 = vrot.slane %v3286, 2
        %v3327 = vrot.slane %v3291, 2
        %v3328 = vrot.slane %v3294, 2
        %v3329 = vsel %vm2169, %v3327, %v3328
        %v3330 = vsel %vm2169, %v3326, %v3327
        %v3331 = vsel %vm2169, %v3325, %v3326
        %v3332 = vsel %vm2169, %v3324, %v3325
        %v3333 = vsel %vm2169, %v3323, %v3324
        %v3334 = vsel %vm2169, %v3322, %v3323
        %v3335 = vsel %vm2169, %v3321, %v3322
        %v3336 = vsel %vm2169, %v3320, %v3321
        %v3337 = vsel %vm2169, %v3319, %v3320
        %v3338 = vsel %vm2169, %v3318, %v3319
        %v3339 = vsel %vm2169, %v3317, %v3318
        %v3340 = vsel %vm2169, %v3316, %v3317
        %v3341 = vsel %vm2169, %v3315, %v3316
        %v3342 = vsel %vm2169, %v3314, %v3315
        %v3343 = vsel %vm2169, %v3313, %v3314
        %v3344 = vsel %vm2169, %v3312, %v3313
        %v3345 = vsel %vm2169, %v3311, %v3312
        %v3346 = vsel %vm2169, %v3310, %v3311
        %v3347 = vsel %vm2169, %v3309, %v3310
        %v3348 = vsel %vm2169, %v3308, %v3309
        %v3349 = vsel %vm2169, %v3307, %v3308
        %v3350 = vsel %vm2169, %v3306, %v3307
        %v3351 = vsel %vm2169, %v3305, %v3306
        %v3352 = vsel %vm2169, %v3304, %v3305
        %v3353 = vsel %vm2169, %v3303, %v3304
        %v3354 = vsel %vm2169, %v3302, %v3303
        %v3355 = vsel %vm2169, %v3301, %v3302
        %v3356 = vsel %vm2169, %v3300, %v3301
        %v3357 = vsel %vm2169, %v3299, %v3300
        %v3358 = vsel %vm2169, %v3298, %v3299
        %v3359 = vsel %vm2169, %v3297, %v3298
        %v3360 = vsel %vm2169, %v3328, %v3297
        %v3361 = vsel %vm2234, %v3360, 0.0
        %v3362 = vsel %vm2235, %v3359, 0.0
        %v3363 = vsel %vm2236, %v3358, 0.0
        %v3364 = vsel %vm2237, %v3357, 0.0
        %v3365 = vsel %vm2238, %v3356, 0.0
        %v3366 = vsel %vm2239, %v3355, 0.0
        %v3367 = vsel %vm2240, %v3354, 0.0
        %v3368 = vsel %vm2241, %v3353, 0.0
        %v3369 = vsel %vm2242, %v3352, 0.0
        %v3370 = vsel %vm2243, %v3351, 0.0
        %v3371 = vsel %vm2244, %v3350, 0.0
        %v3372 = vsel %vm2245, %v3349, 0.0
        %v3373 = vsel %vm2246, %v3348, 0.0
        %v3374 = vsel %vm2247, %v3347, 0.0
        %v3375 = vsel %vm2248, %v3346, 0.0
        %v3376 = vsel %vm2249, %v3345, 0.0
        %v3377 = vsel %vm2250, %v3344, 0.0
        %v3378 = vsel %vm2251, %v3343, 0.0
        %v3379 = vsel %vm2252, %v3342, 0.0
        %v3380 = vsel %vm2253, %v3341, 0.0
        %v3381 = vsel %vm2254, %v3340, 0.0
        %v3382 = vsel %vm2255, %v3339, 0.0
        %v3383 = vsel %vm2256, %v3338, 0.0
        %v3384 = vsel %vm2257, %v3337, 0.0
        %v3385 = vsel %vm2258, %v3336, 0.0
        %v3386 = vsel %vm2259, %v3335, 0.0
        %v3387 = vsel %vm2260, %v3334, 0.0
        %v3388 = vsel %vm2261, %v3333, 0.0
        %v3389 = vsel %vm2262, %v3332, 0.0
        %v3390 = vsel %vm2263, %v3331, 0.0
        %v3391 = vsel %vm2264, %v3330, 0.0
        %v3392 = vsel %vm2265, %v3329, 0.0
        %v3393 = vadd.f32 %v3039, %v3361
        %v3394 = vadd.f32 %v3040, %v3362
        %v3395 = vadd.f32 %v3041, %v3363
        %v3396 = vadd.f32 %v3042, %v3364
        %v3397 = vadd.f32 %v3043, %v3365
        %v3398 = vadd.f32 %v3044, %v3366
        %v3399 = vadd.f32 %v3045, %v3367
        %v3400 = vadd.f32 %v3046, %v3368
        %v3401 = vadd.f32 %v3047, %v3369
        %v3402 = vadd.f32 %v3048, %v3370
        %v3403 = vadd.f32 %v3049, %v3371
        %v3404 = vadd.f32 %v3050, %v3372
        %v3405 = vadd.f32 %v3051, %v3373
        %v3406 = vadd.f32 %v3052, %v3374
        %v3407 = vadd.f32 %v3053, %v3375
        %v3408 = vadd.f32 %v3054, %v3376
        %v3409 = vadd.f32 %v3055, %v3377
        %v3410 = vadd.f32 %v3056, %v3378
        %v3411 = vadd.f32 %v3057, %v3379
        %v3412 = vadd.f32 %v3058, %v3380
        %v3413 = vadd.f32 %v3059, %v3381
        %v3414 = vadd.f32 %v3060, %v3382
        %v3415 = vadd.f32 %v3061, %v3383
        %v3416 = vadd.f32 %v3062, %v3384
        %v3417 = vadd.f32 %v3063, %v3385
        %v3418 = vadd.f32 %v3064, %v3386
        %v3419 = vadd.f32 %v3065, %v3387
        %v3420 = vadd.f32 %v3066, %v3388
        %v3421 = vadd.f32 %v3067, %v3389
        %v3422 = vadd.f32 %v3068, %v3390
        %v3423 = vadd.f32 %v3069, %v3391
        %v3424 = vadd.f32 %v3070, %v3392
        %s3425 = scalar_lea.vmem [#allocation8], 256
        %v3426 = vld [vmem:[%s3425] sm:$0xf]
        %v3427 = vld [vmem:[%s3425 + $0x4] sm:$0xf]
        %v3428 = vld [vmem:[%s3425 + $0x8] sm:$0xf]
        %v3429 = vld [vmem:[%s3425 + $0xc] sm:$0xf]
        %v3430 = vld [vmem:[%s3425 + $0x10] sm:$0xf]
        %v3431 = vld [vmem:[%s3425 + $0x14] sm:$0xf]
        %v3432 = vld [vmem:[%s3425 + $0x18] sm:$0xf]
        %v3433 = vld [vmem:[%s3425 + $0x1c] sm:$0xf]
        %v3434 = vld [vmem:[%s3425 + $0x20] sm:$0xf]
        %v3435 = vld [vmem:[%s3425 + $0x24] sm:$0xf]
        %v3436 = vld [vmem:[%s3425 + $0x28] sm:$0xf]
        %v3437 = vld [vmem:[%s3425 + $0x2c] sm:$0xf]
        %v3438 = vld [vmem:[%s3425 + $0x30] sm:$0xf]
        %v3439 = vld [vmem:[%s3425 + $0x34] sm:$0xf]
        %v3440 = vld [vmem:[%s3425 + $0x38] sm:$0xf]
        %v3441 = vld [vmem:[%s3425 + $0x3c] sm:$0xf]
        %v3458 = vunpack.c.l.b16 %v3426
        %v3459 = vunpack.c.l.b16 %v3427
        %v3460 = vunpack.c.l.b16 %v3428
        %v3461 = vunpack.c.l.b16 %v3429
        %v3462 = vunpack.c.l.b16 %v3430
        %v3463 = vunpack.c.l.b16 %v3431
        %v3464 = vunpack.c.l.b16 %v3432
        %v3465 = vunpack.c.l.b16 %v3433
        %v3466 = vunpack.c.l.b16 %v3434
        %v3467 = vunpack.c.l.b16 %v3435
        %v3468 = vunpack.c.l.b16 %v3436
        %v3469 = vunpack.c.l.b16 %v3437
        %v3470 = vunpack.c.l.b16 %v3438
        %v3471 = vunpack.c.l.b16 %v3439
        %v3472 = vunpack.c.l.b16 %v3440
        %v3473 = vunpack.c.l.b16 %v3441
        %v3474 = vpack.c.b16 %v3459, %v3458
        %v3475 = vpack.c.b16 %v3461, %v3460
        %v3476 = vpack.c.b16 %v3463, %v3462
        %v3477 = vpack.c.b16 %v3465, %v3464
        %v3478 = vpack.c.b16 %v3467, %v3466
        %v3479 = vpack.c.b16 %v3469, %v3468
        %v3480 = vpack.c.b16 %v3471, %v3470
        %v3481 = vpack.c.b16 %v3473, %v3472
        %3490 = vmatprep.subr.bf16.mxu0 0
        %3491 = vmatpush1.bf16.msra.mxu0 %v3481
        %3492 = vmatprep.subr.bf16.mxu0 0
        %3493 = vmatpush1.bf16.msra.mxu0 %v3480
        %3494 = vmatprep.subr.bf16.mxu0 0
        %3495 = vmatpush1.bf16.msra.mxu0 %v3479
        %3496 = vmatprep.subr.bf16.mxu0 0
        %3497 = vmatpush1.bf16.msra.mxu0 %v3478
        %3498 = vmatprep.subr.bf16.mxu0 0
        %3499 = vmatpush1.bf16.msra.mxu0 %v3477
        %3500 = vmatprep.subr.bf16.mxu0 0
        %3501 = vmatpush1.bf16.msra.mxu0 %v3476
        %3502 = vmatprep.subr.bf16.mxu0 0
        %3503 = vmatpush1.bf16.msra.mxu0 %v3475
        %3504 = vmatprep.subr.bf16.mxu0 0
        %3505 = vmatpush1.bf16.msra.mxu0 %v3474
        %3506 = vmatprep.subr.bf16.mxu0 0
        %3507 = vmatpush2.bf16.msra.mxu0 0
        %3508 = vmatprep.subr.bf16.mxu0 0
        %3509 = vmatpush2.bf16.msra.mxu0 0
        %3510 = vmatprep.subr.bf16.mxu0 0
        %3511 = vmatpush2.bf16.msra.mxu0 0
        %3512 = vmatprep.subr.bf16.mxu0 0
        %3513 = vmatpush2.bf16.msra.mxu0 0
        %3514 = vmatprep.subr.bf16.mxu0 0
        %3515 = vmatpush2.bf16.msra.mxu0 0
        %3516 = vmatprep.subr.bf16.mxu0 0
        %3517 = vmatpush2.bf16.msra.mxu0 0
        %3518 = vmatprep.subr.bf16.mxu0 0
        %3519 = vmatpush2.bf16.msra.mxu0 0
        %3520 = vmatprep.subr.bf16.mxu0 0
        %3521 = vmatpush2.bf16.msra.mxu0 0
        %3522 = vmatprep.mubr.bf16.mxu0 0
        %3523 = vmatmul.mubr.bf16.gmra.mxu0 %v969
        %v3524 = vpop.f32.mrf.mxu0
        %v3525 = vadd.f32 0.0, %v3524
        %v3526 = vpop.f32.mrf.mxu0
        %v3527 = vpop.f32.mrf.mxu0
        %v3528 = vadd.f32 0.0, %v3527
        %v3529 = vpop.f32.mrf.mxu0
        %3530 = vmatprep.mubr.bf16.mxu0 0
        %3531 = vmatmul.mubr.bf16.gmra.mxu0 %v970
        %v3532 = vpop.f32.mrf.mxu0
        %v3533 = vadd.f32 0.0, %v3532
        %v3534 = vpop.f32.mrf.mxu0
        %v3535 = vpop.f32.mrf.mxu0
        %v3536 = vadd.f32 0.0, %v3535
        %v3537 = vpop.f32.mrf.mxu0
        %3538 = vmatprep.mubr.bf16.mxu0 0
        %3539 = vmatmul.mubr.bf16.gmra.mxu0 %v971
        %v3540 = vpop.f32.mrf.mxu0
        %v3541 = vadd.f32 0.0, %v3540
        %v3542 = vpop.f32.mrf.mxu0
        %v3543 = vpop.f32.mrf.mxu0
        %v3544 = vadd.f32 0.0, %v3543
        %v3545 = vpop.f32.mrf.mxu0
        %3546 = vmatprep.mubr.bf16.mxu0 0
        %3547 = vmatmul.mubr.bf16.gmra.mxu0 %v972
        %v3548 = vpop.f32.mrf.mxu0
        %v3549 = vadd.f32 0.0, %v3548
        %v3550 = vpop.f32.mrf.mxu0
        %v3551 = vpop.f32.mrf.mxu0
        %v3552 = vadd.f32 0.0, %v3551
        %v3553 = vpop.f32.mrf.mxu0
        %3554 = vmatprep.mubr.bf16.mxu0 0
        %3555 = vmatmul.mubr.bf16.gmra.mxu0 %v973
        %v3556 = vpop.f32.mrf.mxu0
        %v3557 = vadd.f32 0.0, %v3556
        %v3558 = vpop.f32.mrf.mxu0
        %v3559 = vpop.f32.mrf.mxu0
        %v3560 = vadd.f32 0.0, %v3559
        %v3561 = vpop.f32.mrf.mxu0
        %3562 = vmatprep.mubr.bf16.mxu0 0
        %3563 = vmatmul.mubr.bf16.gmra.mxu0 %v974
        %v3564 = vpop.f32.mrf.mxu0
        %v3565 = vadd.f32 0.0, %v3564
        %v3566 = vpop.f32.mrf.mxu0
        %v3567 = vpop.f32.mrf.mxu0
        %v3568 = vadd.f32 0.0, %v3567
        %v3569 = vpop.f32.mrf.mxu0
        %3570 = vmatprep.mubr.bf16.mxu0 0
        %3571 = vmatmul.mubr.bf16.gmra.mxu0 %v975
        %v3572 = vpop.f32.mrf.mxu0
        %v3573 = vadd.f32 0.0, %v3572
        %v3574 = vpop.f32.mrf.mxu0
        %v3575 = vpop.f32.mrf.mxu0
        %v3576 = vadd.f32 0.0, %v3575
        %v3577 = vpop.f32.mrf.mxu0
        %3578 = vmatprep.mubr.bf16.mxu0 0
        %3579 = vmatmul.mubr.bf16.gmra.mxu0 %v976
        %v3580 = vpop.f32.mrf.mxu0
        %v3581 = vadd.f32 0.0, %v3580
        %v3582 = vpop.f32.mrf.mxu0
        %v3583 = vpop.f32.mrf.mxu0
        %v3584 = vadd.f32 0.0, %v3583
        %v3585 = vpop.f32.mrf.mxu0
        %3586 = vmatprep.mubr.bf16.mxu0 0
        %3587 = vmatmul.mubr.bf16.gmra.mxu0 %v977
        %v3588 = vpop.f32.mrf.mxu0
        %v3589 = vadd.f32 0.0, %v3588
        %v3590 = vpop.f32.mrf.mxu0
        %v3591 = vpop.f32.mrf.mxu0
        %v3592 = vadd.f32 0.0, %v3591
        %v3593 = vpop.f32.mrf.mxu0
        %3594 = vmatprep.mubr.bf16.mxu0 0
        %3595 = vmatmul.mubr.bf16.gmra.mxu0 %v978
        %v3596 = vpop.f32.mrf.mxu0
        %v3597 = vadd.f32 0.0, %v3596
        %v3598 = vpop.f32.mrf.mxu0
        %v3599 = vpop.f32.mrf.mxu0
        %v3600 = vadd.f32 0.0, %v3599
        %v3601 = vpop.f32.mrf.mxu0
        %3602 = vmatprep.mubr.bf16.mxu0 0
        %3603 = vmatmul.mubr.bf16.gmra.mxu0 %v979
        %v3604 = vpop.f32.mrf.mxu0
        %v3605 = vadd.f32 0.0, %v3604
        %v3606 = vpop.f32.mrf.mxu0
        %v3607 = vpop.f32.mrf.mxu0
        %v3608 = vadd.f32 0.0, %v3607
        %v3609 = vpop.f32.mrf.mxu0
        %3610 = vmatprep.mubr.bf16.mxu0 0
        %3611 = vmatmul.mubr.bf16.gmra.mxu0 %v980
        %v3612 = vpop.f32.mrf.mxu0
        %v3613 = vadd.f32 0.0, %v3612
        %v3614 = vpop.f32.mrf.mxu0
        %v3615 = vpop.f32.mrf.mxu0
        %v3616 = vadd.f32 0.0, %v3615
        %v3617 = vpop.f32.mrf.mxu0
        %3618 = vmatprep.mubr.bf16.mxu0 0
        %3619 = vmatmul.mubr.bf16.gmra.mxu0 %v981
        %v3620 = vpop.f32.mrf.mxu0
        %v3621 = vadd.f32 0.0, %v3620
        %v3622 = vpop.f32.mrf.mxu0
        %v3623 = vpop.f32.mrf.mxu0
        %v3624 = vadd.f32 0.0, %v3623
        %v3625 = vpop.f32.mrf.mxu0
        %3626 = vmatprep.mubr.bf16.mxu0 0
        %3627 = vmatmul.mubr.bf16.gmra.mxu0 %v982
        %v3628 = vpop.f32.mrf.mxu0
        %v3629 = vadd.f32 0.0, %v3628
        %v3630 = vpop.f32.mrf.mxu0
        %v3631 = vpop.f32.mrf.mxu0
        %v3632 = vadd.f32 0.0, %v3631
        %v3633 = vpop.f32.mrf.mxu0
        %3634 = vmatprep.mubr.bf16.mxu0 0
        %3635 = vmatmul.mubr.bf16.gmra.mxu0 %v983
        %v3636 = vpop.f32.mrf.mxu0
        %v3637 = vadd.f32 0.0, %v3636
        %v3638 = vpop.f32.mrf.mxu0
        %v3639 = vpop.f32.mrf.mxu0
        %v3640 = vadd.f32 0.0, %v3639
        %v3641 = vpop.f32.mrf.mxu0
        %3642 = vmatprep.mubr.bf16.mxu0 0
        %3643 = vmatmul.mubr.bf16.gmra.mxu0 %v984
        %v3644 = vpop.f32.mrf.mxu0
        %v3645 = vadd.f32 0.0, %v3644
        %v3646 = vpop.f32.mrf.mxu0
        %v3647 = vpop.f32.mrf.mxu0
        %v3648 = vadd.f32 0.0, %v3647
        %v3649 = vpop.f32.mrf.mxu0
        %3650 = vdwg.mxu0
        %v3651 = vrot.slane %v3525, 6
        %v3652 = vrot.slane %v3528, 6
        %v3653 = vrot.slane %v3533, 6
        %v3654 = vrot.slane %v3536, 6
        %v3655 = vrot.slane %v3541, 6
        %v3656 = vrot.slane %v3544, 6
        %v3657 = vrot.slane %v3549, 6
        %v3658 = vrot.slane %v3552, 6
        %v3659 = vrot.slane %v3557, 6
        %v3660 = vrot.slane %v3560, 6
        %v3661 = vrot.slane %v3565, 6
        %v3662 = vrot.slane %v3568, 6
        %v3663 = vrot.slane %v3573, 6
        %v3664 = vrot.slane %v3576, 6
        %v3665 = vrot.slane %v3581, 6
        %v3666 = vrot.slane %v3584, 6
        %v3667 = vrot.slane %v3589, 6
        %v3668 = vrot.slane %v3592, 6
        %v3669 = vrot.slane %v3597, 6
        %v3670 = vrot.slane %v3600, 6
        %v3671 = vrot.slane %v3605, 6
        %v3672 = vrot.slane %v3608, 6
        %v3673 = vrot.slane %v3613, 6
        %v3674 = vrot.slane %v3616, 6
        %v3675 = vrot.slane %v3621, 6
        %v3676 = vrot.slane %v3624, 6
        %v3677 = vrot.slane %v3629, 6
        %v3678 = vrot.slane %v3632, 6
        %v3679 = vrot.slane %v3637, 6
        %v3680 = vrot.slane %v3640, 6
        %v3681 = vrot.slane %v3645, 6
        %v3682 = vrot.slane %v3648, 6
        %v3683 = vsel %vm2910, %v3681, %v3682
        %v3684 = vsel %vm2910, %v3680, %v3681
        %v3685 = vsel %vm2910, %v3679, %v3680
        %v3686 = vsel %vm2910, %v3678, %v3679
        %v3687 = vsel %vm2910, %v3677, %v3678
        %v3688 = vsel %vm2910, %v3676, %v3677
        %v3689 = vsel %vm2910, %v3675, %v3676
        %v3690 = vsel %vm2910, %v3674, %v3675
        %v3691 = vsel %vm2910, %v3673, %v3674
        %v3692 = vsel %vm2910, %v3672, %v3673
        %v3693 = vsel %vm2910, %v3671, %v3672
        %v3694 = vsel %vm2910, %v3670, %v3671
        %v3695 = vsel %vm2910, %v3669, %v3670
        %v3696 = vsel %vm2910, %v3668, %v3669
        %v3697 = vsel %vm2910, %v3667, %v3668
        %v3698 = vsel %vm2910, %v3666, %v3667
        %v3699 = vsel %vm2910, %v3665, %v3666
        %v3700 = vsel %vm2910, %v3664, %v3665
        %v3701 = vsel %vm2910, %v3663, %v3664
        %v3702 = vsel %vm2910, %v3662, %v3663
        %v3703 = vsel %vm2910, %v3661, %v3662
        %v3704 = vsel %vm2910, %v3660, %v3661
        %v3705 = vsel %vm2910, %v3659, %v3660
        %v3706 = vsel %vm2910, %v3658, %v3659
        %v3707 = vsel %vm2910, %v3657, %v3658
        %v3708 = vsel %vm2910, %v3656, %v3657
        %v3709 = vsel %vm2910, %v3655, %v3656
        %v3710 = vsel %vm2910, %v3654, %v3655
        %v3711 = vsel %vm2910, %v3653, %v3654
        %v3712 = vsel %vm2910, %v3652, %v3653
        %v3713 = vsel %vm2910, %v3651, %v3652
        %v3714 = vsel %vm2910, %v3682, %v3651
        %v3715 = vsel %vm2943, %v3713, 0.0
        %v3716 = vsel %vm2944, %v3712, 0.0
        %v3717 = vsel %vm2945, %v3711, 0.0
        %v3718 = vsel %vm2946, %v3710, 0.0
        %v3719 = vsel %vm2947, %v3709, 0.0
        %v3720 = vsel %vm2948, %v3708, 0.0
        %v3721 = vsel %vm2949, %v3707, 0.0
        %v3722 = vsel %vm2950, %v3706, 0.0
        %v3723 = vsel %vm2951, %v3705, 0.0
        %v3724 = vsel %vm2952, %v3704, 0.0
        %v3725 = vsel %vm2953, %v3703, 0.0
        %v3726 = vsel %vm2954, %v3702, 0.0
        %v3727 = vsel %vm2955, %v3701, 0.0
        %v3728 = vsel %vm2956, %v3700, 0.0
        %v3729 = vsel %vm2957, %v3699, 0.0
        %v3730 = vsel %vm2958, %v3698, 0.0
        %v3731 = vsel %vm2959, %v3697, 0.0
        %v3732 = vsel %vm2960, %v3696, 0.0
        %v3733 = vsel %vm2961, %v3695, 0.0
        %v3734 = vsel %vm2962, %v3694, 0.0
        %v3735 = vsel %vm2963, %v3693, 0.0
        %v3736 = vsel %vm2964, %v3692, 0.0
        %v3737 = vsel %vm2965, %v3691, 0.0
        %v3738 = vsel %vm2966, %v3690, 0.0
        %v3739 = vsel %vm2967, %v3689, 0.0
        %v3740 = vsel %vm2968, %v3688, 0.0
        %v3741 = vsel %vm2969, %v3687, 0.0
        %v3742 = vsel %vm2970, %v3686, 0.0
        %v3743 = vsel %vm2971, %v3685, 0.0
        %v3744 = vsel %vm2972, %v3684, 0.0
        %v3745 = vsel %vm2973, %v3683, 0.0
        %v3746 = vsel %vm2974, %v3714, 0.0
        %v3747 = vadd.f32 %v3393, %v3715
        %v3748 = vadd.f32 %v3394, %v3716
        %v3749 = vadd.f32 %v3395, %v3717
        %v3750 = vadd.f32 %v3396, %v3718
        %v3751 = vadd.f32 %v3397, %v3719
        %v3752 = vadd.f32 %v3398, %v3720
        %v3753 = vadd.f32 %v3399, %v3721
        %v3754 = vadd.f32 %v3400, %v3722
        %v3755 = vadd.f32 %v3401, %v3723
        %v3756 = vadd.f32 %v3402, %v3724
        %v3757 = vadd.f32 %v3403, %v3725
        %v3758 = vadd.f32 %v3404, %v3726
        %v3759 = vadd.f32 %v3405, %v3727
        %v3760 = vadd.f32 %v3406, %v3728
        %v3761 = vadd.f32 %v3407, %v3729
        %v3762 = vadd.f32 %v3408, %v3730
        %v3763 = vadd.f32 %v3409, %v3731
        %v3764 = vadd.f32 %v3410, %v3732
        %v3765 = vadd.f32 %v3411, %v3733
        %v3766 = vadd.f32 %v3412, %v3734
        %v3767 = vadd.f32 %v3413, %v3735
        %v3768 = vadd.f32 %v3414, %v3736
        %v3769 = vadd.f32 %v3415, %v3737
        %v3770 = vadd.f32 %v3416, %v3738
        %v3771 = vadd.f32 %v3417, %v3739
        %v3772 = vadd.f32 %v3418, %v3740
        %v3773 = vadd.f32 %v3419, %v3741
        %v3774 = vadd.f32 %v3420, %v3742
        %v3775 = vadd.f32 %v3421, %v3743
        %v3776 = vadd.f32 %v3422, %v3744
        %v3777 = vadd.f32 %v3423, %v3745
        %v3778 = vadd.f32 %v3424, %v3746
        %s3779 = scalar_lea.vmem [#allocation8], 320
        %v3780 = vld [vmem:[%s3779] sm:$0xf]
        %v3781 = vld [vmem:[%s3779 + $0x4] sm:$0xf]
        %v3782 = vld [vmem:[%s3779 + $0x8] sm:$0xf]
        %v3783 = vld [vmem:[%s3779 + $0xc] sm:$0xf]
        %v3784 = vld [vmem:[%s3779 + $0x10] sm:$0xf]
        %v3785 = vld [vmem:[%s3779 + $0x14] sm:$0xf]
        %v3786 = vld [vmem:[%s3779 + $0x18] sm:$0xf]
        %v3787 = vld [vmem:[%s3779 + $0x1c] sm:$0xf]
        %v3788 = vld [vmem:[%s3779 + $0x20] sm:$0xf]
        %v3789 = vld [vmem:[%s3779 + $0x24] sm:$0xf]
        %v3790 = vld [vmem:[%s3779 + $0x28] sm:$0xf]
        %v3791 = vld [vmem:[%s3779 + $0x2c] sm:$0xf]
        %v3792 = vld [vmem:[%s3779 + $0x30] sm:$0xf]
        %v3793 = vld [vmem:[%s3779 + $0x34] sm:$0xf]
        %v3794 = vld [vmem:[%s3779 + $0x38] sm:$0xf]
        %v3795 = vld [vmem:[%s3779 + $0x3c] sm:$0xf]
        %v3812 = vunpack.c.l.b16 %v3780
        %v3813 = vunpack.c.l.b16 %v3781
        %v3814 = vunpack.c.l.b16 %v3782
        %v3815 = vunpack.c.l.b16 %v3783
        %v3816 = vunpack.c.l.b16 %v3784
        %v3817 = vunpack.c.l.b16 %v3785
        %v3818 = vunpack.c.l.b16 %v3786
        %v3819 = vunpack.c.l.b16 %v3787
        %v3820 = vunpack.c.l.b16 %v3788
        %v3821 = vunpack.c.l.b16 %v3789
        %v3822 = vunpack.c.l.b16 %v3790
        %v3823 = vunpack.c.l.b16 %v3791
        %v3824 = vunpack.c.l.b16 %v3792
        %v3825 = vunpack.c.l.b16 %v3793
        %v3826 = vunpack.c.l.b16 %v3794
        %v3827 = vunpack.c.l.b16 %v3795
        %v3828 = vpack.c.b16 %v3813, %v3812
        %v3829 = vpack.c.b16 %v3815, %v3814
        %v3830 = vpack.c.b16 %v3817, %v3816
        %v3831 = vpack.c.b16 %v3819, %v3818
        %v3832 = vpack.c.b16 %v3821, %v3820
        %v3833 = vpack.c.b16 %v3823, %v3822
        %v3834 = vpack.c.b16 %v3825, %v3824
        %v3835 = vpack.c.b16 %v3827, %v3826
        %3844 = vmatprep.subr.bf16.mxu0 0
        %3845 = vmatpush1.bf16.msra.mxu0 %v3835
        %3846 = vmatprep.subr.bf16.mxu0 0
        %3847 = vmatpush1.bf16.msra.mxu0 %v3834
        %3848 = vmatprep.subr.bf16.mxu0 0
        %3849 = vmatpush1.bf16.msra.mxu0 %v3833
        %3850 = vmatprep.subr.bf16.mxu0 0
        %3851 = vmatpush1.bf16.msra.mxu0 %v3832
        %3852 = vmatprep.subr.bf16.mxu0 0
        %3853 = vmatpush1.bf16.msra.mxu0 %v3831
        %3854 = vmatprep.subr.bf16.mxu0 0
        %3855 = vmatpush1.bf16.msra.mxu0 %v3830
        %3856 = vmatprep.subr.bf16.mxu0 0
        %3857 = vmatpush1.bf16.msra.mxu0 %v3829
        %3858 = vmatprep.subr.bf16.mxu0 0
        %3859 = vmatpush1.bf16.msra.mxu0 %v3828
        %3860 = vmatprep.subr.bf16.mxu0 0
        %3861 = vmatpush2.bf16.msra.mxu0 0
        %3862 = vmatprep.subr.bf16.mxu0 0
        %3863 = vmatpush2.bf16.msra.mxu0 0
        %3864 = vmatprep.subr.bf16.mxu0 0
        %3865 = vmatpush2.bf16.msra.mxu0 0
        %3866 = vmatprep.subr.bf16.mxu0 0
        %3867 = vmatpush2.bf16.msra.mxu0 0
        %3868 = vmatprep.subr.bf16.mxu0 0
        %3869 = vmatpush2.bf16.msra.mxu0 0
        %3870 = vmatprep.subr.bf16.mxu0 0
        %3871 = vmatpush2.bf16.msra.mxu0 0
        %3872 = vmatprep.subr.bf16.mxu0 0
        %3873 = vmatpush2.bf16.msra.mxu0 0
        %3874 = vmatprep.subr.bf16.mxu0 0
        %3875 = vmatpush2.bf16.msra.mxu0 0
        %3876 = vmatprep.mubr.bf16.mxu0 0
        %3877 = vmatmul.mubr.bf16.gmra.mxu0 %v969
        %v3878 = vpop.f32.mrf.mxu0
        %v3879 = vadd.f32 0.0, %v3878
        %v3880 = vpop.f32.mrf.mxu0
        %v3881 = vpop.f32.mrf.mxu0
        %v3882 = vadd.f32 0.0, %v3881
        %v3883 = vpop.f32.mrf.mxu0
        %3884 = vmatprep.mubr.bf16.mxu0 0
        %3885 = vmatmul.mubr.bf16.gmra.mxu0 %v970
        %v3886 = vpop.f32.mrf.mxu0
        %v3887 = vadd.f32 0.0, %v3886
        %v3888 = vpop.f32.mrf.mxu0
        %v3889 = vpop.f32.mrf.mxu0
        %v3890 = vadd.f32 0.0, %v3889
        %v3891 = vpop.f32.mrf.mxu0
        %3892 = vmatprep.mubr.bf16.mxu0 0
        %3893 = vmatmul.mubr.bf16.gmra.mxu0 %v971
        %v3894 = vpop.f32.mrf.mxu0
        %v3895 = vadd.f32 0.0, %v3894
        %v3896 = vpop.f32.mrf.mxu0
        %v3897 = vpop.f32.mrf.mxu0
        %v3898 = vadd.f32 0.0, %v3897
        %v3899 = vpop.f32.mrf.mxu0
        %3900 = vmatprep.mubr.bf16.mxu0 0
        %3901 = vmatmul.mubr.bf16.gmra.mxu0 %v972
        %v3902 = vpop.f32.mrf.mxu0
        %v3903 = vadd.f32 0.0, %v3902
        %v3904 = vpop.f32.mrf.mxu0
        %v3905 = vpop.f32.mrf.mxu0
        %v3906 = vadd.f32 0.0, %v3905
        %v3907 = vpop.f32.mrf.mxu0
        %3908 = vmatprep.mubr.bf16.mxu0 0
        %3909 = vmatmul.mubr.bf16.gmra.mxu0 %v973
        %v3910 = vpop.f32.mrf.mxu0
        %v3911 = vadd.f32 0.0, %v3910
        %v3912 = vpop.f32.mrf.mxu0
        %v3913 = vpop.f32.mrf.mxu0
        %v3914 = vadd.f32 0.0, %v3913
        %v3915 = vpop.f32.mrf.mxu0
        %3916 = vmatprep.mubr.bf16.mxu0 0
        %3917 = vmatmul.mubr.bf16.gmra.mxu0 %v974
        %v3918 = vpop.f32.mrf.mxu0
        %v3919 = vadd.f32 0.0, %v3918
        %v3920 = vpop.f32.mrf.mxu0
        %v3921 = vpop.f32.mrf.mxu0
        %v3922 = vadd.f32 0.0, %v3921
        %v3923 = vpop.f32.mrf.mxu0
        %3924 = vmatprep.mubr.bf16.mxu0 0
        %3925 = vmatmul.mubr.bf16.gmra.mxu0 %v975
        %v3926 = vpop.f32.mrf.mxu0
        %v3927 = vadd.f32 0.0, %v3926
        %v3928 = vpop.f32.mrf.mxu0
        %v3929 = vpop.f32.mrf.mxu0
        %v3930 = vadd.f32 0.0, %v3929
        %v3931 = vpop.f32.mrf.mxu0
        %3932 = vmatprep.mubr.bf16.mxu0 0
        %3933 = vmatmul.mubr.bf16.gmra.mxu0 %v976
        %v3934 = vpop.f32.mrf.mxu0
        %v3935 = vadd.f32 0.0, %v3934
        %v3936 = vpop.f32.mrf.mxu0
        %v3937 = vpop.f32.mrf.mxu0
        %v3938 = vadd.f32 0.0, %v3937
        %v3939 = vpop.f32.mrf.mxu0
        %3940 = vmatprep.mubr.bf16.mxu0 0
        %3941 = vmatmul.mubr.bf16.gmra.mxu0 %v977
        %v3942 = vpop.f32.mrf.mxu0
        %v3943 = vadd.f32 0.0, %v3942
        %v3944 = vpop.f32.mrf.mxu0
        %v3945 = vpop.f32.mrf.mxu0
        %v3946 = vadd.f32 0.0, %v3945
        %v3947 = vpop.f32.mrf.mxu0
        %3948 = vmatprep.mubr.bf16.mxu0 0
        %3949 = vmatmul.mubr.bf16.gmra.mxu0 %v978
        %v3950 = vpop.f32.mrf.mxu0
        %v3951 = vadd.f32 0.0, %v3950
        %v3952 = vpop.f32.mrf.mxu0
        %v3953 = vpop.f32.mrf.mxu0
        %v3954 = vadd.f32 0.0, %v3953
        %v3955 = vpop.f32.mrf.mxu0
        %3956 = vmatprep.mubr.bf16.mxu0 0
        %3957 = vmatmul.mubr.bf16.gmra.mxu0 %v979
        %v3958 = vpop.f32.mrf.mxu0
        %v3959 = vadd.f32 0.0, %v3958
        %v3960 = vpop.f32.mrf.mxu0
        %v3961 = vpop.f32.mrf.mxu0
        %v3962 = vadd.f32 0.0, %v3961
        %v3963 = vpop.f32.mrf.mxu0
        %3964 = vmatprep.mubr.bf16.mxu0 0
        %3965 = vmatmul.mubr.bf16.gmra.mxu0 %v980
        %v3966 = vpop.f32.mrf.mxu0
        %v3967 = vadd.f32 0.0, %v3966
        %v3968 = vpop.f32.mrf.mxu0
        %v3969 = vpop.f32.mrf.mxu0
        %v3970 = vadd.f32 0.0, %v3969
        %v3971 = vpop.f32.mrf.mxu0
        %3972 = vmatprep.mubr.bf16.mxu0 0
        %3973 = vmatmul.mubr.bf16.gmra.mxu0 %v981
        %v3974 = vpop.f32.mrf.mxu0
        %v3975 = vadd.f32 0.0, %v3974
        %v3976 = vpop.f32.mrf.mxu0
        %v3977 = vpop.f32.mrf.mxu0
        %v3978 = vadd.f32 0.0, %v3977
        %v3979 = vpop.f32.mrf.mxu0
        %3980 = vmatprep.mubr.bf16.mxu0 0
        %3981 = vmatmul.mubr.bf16.gmra.mxu0 %v982
        %v3982 = vpop.f32.mrf.mxu0
        %v3983 = vadd.f32 0.0, %v3982
        %v3984 = vpop.f32.mrf.mxu0
        %v3985 = vpop.f32.mrf.mxu0
        %v3986 = vadd.f32 0.0, %v3985
        %v3987 = vpop.f32.mrf.mxu0
        %3988 = vmatprep.mubr.bf16.mxu0 0
        %3989 = vmatmul.mubr.bf16.gmra.mxu0 %v983
        %v3990 = vpop.f32.mrf.mxu0
        %v3991 = vadd.f32 0.0, %v3990
        %v3992 = vpop.f32.mrf.mxu0
        %v3993 = vpop.f32.mrf.mxu0
        %v3994 = vadd.f32 0.0, %v3993
        %v3995 = vpop.f32.mrf.mxu0
        %3996 = vmatprep.mubr.bf16.mxu0 0
        %3997 = vmatmul.mubr.bf16.gmra.mxu0 %v984
        %v3998 = vpop.f32.mrf.mxu0
        %v3999 = vadd.f32 0.0, %v3998
        %v4000 = vpop.f32.mrf.mxu0
        %v4001 = vpop.f32.mrf.mxu0
        %v4002 = vadd.f32 0.0, %v4001
        %v4003 = vpop.f32.mrf.mxu0
        %4004 = vdwg.mxu0
        %v4005 = vrot.slane %v3879, 2
        %v4006 = vrot.slane %v3882, 2
        %v4007 = vrot.slane %v3887, 2
        %v4008 = vrot.slane %v3890, 2
        %v4009 = vrot.slane %v3895, 2
        %v4010 = vrot.slane %v3898, 2
        %v4011 = vrot.slane %v3903, 2
        %v4012 = vrot.slane %v3906, 2
        %v4013 = vrot.slane %v3911, 2
        %v4014 = vrot.slane %v3914, 2
        %v4015 = vrot.slane %v3919, 2
        %v4016 = vrot.slane %v3922, 2
        %v4017 = vrot.slane %v3927, 2
        %v4018 = vrot.slane %v3930, 2
        %v4019 = vrot.slane %v3935, 2
        %v4020 = vrot.slane %v3938, 2
        %v4021 = vrot.slane %v3943, 2
        %v4022 = vrot.slane %v3946, 2
        %v4023 = vrot.slane %v3951, 2
        %v4024 = vrot.slane %v3954, 2
        %v4025 = vrot.slane %v3959, 2
        %v4026 = vrot.slane %v3962, 2
        %v4027 = vrot.slane %v3967, 2
        %v4028 = vrot.slane %v3970, 2
        %v4029 = vrot.slane %v3975, 2
        %v4030 = vrot.slane %v3978, 2
        %v4031 = vrot.slane %v3983, 2
        %v4032 = vrot.slane %v3986, 2
        %v4033 = vrot.slane %v3991, 2
        %v4034 = vrot.slane %v3994, 2
        %v4035 = vrot.slane %v3999, 2
        %v4036 = vrot.slane %v4002, 2
        %v4037 = vsel %vm2169, %v4035, %v4036
        %v4038 = vsel %vm2169, %v4034, %v4035
        %v4039 = vsel %vm2169, %v4033, %v4034
        %v4040 = vsel %vm2169, %v4032, %v4033
        %v4041 = vsel %vm2169, %v4031, %v4032
        %v4042 = vsel %vm2169, %v4030, %v4031
        %v4043 = vsel %vm2169, %v4029, %v4030
        %v4044 = vsel %vm2169, %v4028, %v4029
        %v4045 = vsel %vm2169, %v4027, %v4028
        %v4046 = vsel %vm2169, %v4026, %v4027
        %v4047 = vsel %vm2169, %v4025, %v4026
        %v4048 = vsel %vm2169, %v4024, %v4025
        %v4049 = vsel %vm2169, %v4023, %v4024
        %v4050 = vsel %vm2169, %v4022, %v4023
        %v4051 = vsel %vm2169, %v4021, %v4022
        %v4052 = vsel %vm2169, %v4020, %v4021
        %v4053 = vsel %vm2169, %v4019, %v4020
        %v4054 = vsel %vm2169, %v4018, %v4019
        %v4055 = vsel %vm2169, %v4017, %v4018
        %v4056 = vsel %vm2169, %v4016, %v4017
        %v4057 = vsel %vm2169, %v4015, %v4016
        %v4058 = vsel %vm2169, %v4014, %v4015
        %v4059 = vsel %vm2169, %v4013, %v4014
        %v4060 = vsel %vm2169, %v4012, %v4013
        %v4061 = vsel %vm2169, %v4011, %v4012
        %v4062 = vsel %vm2169, %v4010, %v4011
        %v4063 = vsel %vm2169, %v4009, %v4010
        %v4064 = vsel %vm2169, %v4008, %v4009
        %v4065 = vsel %vm2169, %v4007, %v4008
        %v4066 = vsel %vm2169, %v4006, %v4007
        %v4067 = vsel %vm2169, %v4005, %v4006
        %v4068 = vsel %vm2169, %v4036, %v4005
        %vm4069 = vcmp.lt.s32.totalorder %v490, 10
        %vm4070 = vcmp.lt.s32.totalorder %v491, 10
        %vm4071 = vcmp.lt.s32.totalorder %v492, 10
        %vm4072 = vcmp.lt.s32.totalorder %v493, 10
        %vm4073 = vcmp.lt.s32.totalorder %v494, 10
        %vm4074 = vcmp.lt.s32.totalorder %v495, 10
        %vm4075 = vcmp.lt.s32.totalorder %v496, 10
        %vm4076 = vcmp.lt.s32.totalorder %v497, 10
        %vm4077 = vcmp.lt.s32.totalorder %v498, 10
        %vm4078 = vcmp.lt.s32.totalorder %v499, 10
        %vm4079 = vcmp.lt.s32.totalorder %v500, 10
        %vm4080 = vcmp.lt.s32.totalorder %v501, 10
        %vm4081 = vcmp.lt.s32.totalorder %v502, 10
        %vm4082 = vcmp.lt.s32.totalorder %v503, 10
        %vm4083 = vcmp.lt.s32.totalorder %v504, 10
        %vm4084 = vcmp.lt.s32.totalorder %v505, 10
        %vm4085 = vcmp.lt.s32.totalorder %v506, 10
        %vm4086 = vcmp.lt.s32.totalorder %v507, 10
        %vm4087 = vcmp.lt.s32.totalorder %v508, 10
        %vm4088 = vcmp.lt.s32.totalorder %v509, 10
        %vm4089 = vcmp.lt.s32.totalorder %v510, 10
        %vm4090 = vcmp.lt.s32.totalorder %v511, 10
        %vm4091 = vcmp.lt.s32.totalorder %v512, 10
        %vm4092 = vcmp.lt.s32.totalorder %v513, 10
        %vm4093 = vcmp.lt.s32.totalorder %v514, 10
        %vm4094 = vcmp.lt.s32.totalorder %v515, 10
        %vm4095 = vcmp.lt.s32.totalorder %v516, 10
        %vm4096 = vcmp.lt.s32.totalorder %v517, 10
        %vm4097 = vcmp.lt.s32.totalorder %v518, 10
        %vm4098 = vcmp.lt.s32.totalorder %v519, 10
        %vm4099 = vcmp.lt.s32.totalorder %v520, 10
        %vm4100 = vcmp.lt.s32.totalorder %v521, 10
        %vm4101 = vmand %vm4069, %vm2234
        %vm4102 = vmand %vm4070, %vm2235
        %vm4103 = vmand %vm4071, %vm2236
        %vm4104 = vmand %vm4072, %vm2237
        %vm4105 = vmand %vm4073, %vm2238
        %vm4106 = vmand %vm4074, %vm2239
        %vm4107 = vmand %vm4075, %vm2240
        %vm4108 = vmand %vm4076, %vm2241
        %vm4109 = vmand %vm4077, %vm2242
        %vm4110 = vmand %vm4078, %vm2243
        %vm4111 = vmand %vm4079, %vm2244
        %vm4112 = vmand %vm4080, %vm2245
        %vm4113 = vmand %vm4081, %vm2246
        %vm4114 = vmand %vm4082, %vm2247
        %vm4115 = vmand %vm4083, %vm2248
        %vm4116 = vmand %vm4084, %vm2249
        %vm4117 = vmand %vm4085, %vm2250
        %vm4118 = vmand %vm4086, %vm2251
        %vm4119 = vmand %vm4087, %vm2252
        %vm4120 = vmand %vm4088, %vm2253
        %vm4121 = vmand %vm4089, %vm2254
        %vm4122 = vmand %vm4090, %vm2255
        %vm4123 = vmand %vm4091, %vm2256
        %vm4124 = vmand %vm4092, %vm2257
        %vm4125 = vmand %vm4093, %vm2258
        %vm4126 = vmand %vm4094, %vm2259
        %vm4127 = vmand %vm4095, %vm2260
        %vm4128 = vmand %vm4096, %vm2261
        %vm4129 = vmand %vm4097, %vm2262
        %vm4130 = vmand %vm4098, %vm2263
        %vm4131 = vmand %vm4099, %vm2264
        %vm4132 = vmand %vm4100, %vm2265
        %v4133 = vsel %vm4101, %v4056, 0.0
        %v4134 = vsel %vm4102, %v4055, 0.0
        %v4135 = vsel %vm4103, %v4054, 0.0
        %v4136 = vsel %vm4104, %v4053, 0.0
        %v4137 = vsel %vm4105, %v4052, 0.0
        %v4138 = vsel %vm4106, %v4051, 0.0
        %v4139 = vsel %vm4107, %v4050, 0.0
        %v4140 = vsel %vm4108, %v4049, 0.0
        %v4141 = vsel %vm4109, %v4048, 0.0
        %v4142 = vsel %vm4110, %v4047, 0.0
        %v4143 = vsel %vm4111, %v4046, 0.0
        %v4144 = vsel %vm4112, %v4045, 0.0
        %v4145 = vsel %vm4113, %v4044, 0.0
        %v4146 = vsel %vm4114, %v4043, 0.0
        %v4147 = vsel %vm4115, %v4042, 0.0
        %v4148 = vsel %vm4116, %v4041, 0.0
        %v4149 = vsel %vm4117, %v4040, 0.0
        %v4150 = vsel %vm4118, %v4039, 0.0
        %v4151 = vsel %vm4119, %v4038, 0.0
        %v4152 = vsel %vm4120, %v4037, 0.0
        %v4153 = vsel %vm4121, %v4068, 0.0
        %v4154 = vsel %vm4122, %v4067, 0.0
        %v4155 = vsel %vm4123, %v4066, 0.0
        %v4156 = vsel %vm4124, %v4065, 0.0
        %v4157 = vsel %vm4125, %v4064, 0.0
        %v4158 = vsel %vm4126, %v4063, 0.0
        %v4159 = vsel %vm4127, %v4062, 0.0
        %v4160 = vsel %vm4128, %v4061, 0.0
        %v4161 = vsel %vm4129, %v4060, 0.0
        %v4162 = vsel %vm4130, %v4059, 0.0
        %v4163 = vsel %vm4131, %v4058, 0.0
        %v4164 = vsel %vm4132, %v4057, 0.0
        %v4165 = vadd.f32 %v3747, %v4133
        %v4166 = vadd.f32 %v3748, %v4134
        %v4167 = vadd.f32 %v3749, %v4135
        %v4168 = vadd.f32 %v3750, %v4136
        %v4169 = vadd.f32 %v3751, %v4137
        %v4170 = vadd.f32 %v3752, %v4138
        %v4171 = vadd.f32 %v3753, %v4139
        %v4172 = vadd.f32 %v3754, %v4140
        %v4173 = vadd.f32 %v3755, %v4141
        %v4174 = vadd.f32 %v3756, %v4142
        %v4175 = vadd.f32 %v3757, %v4143
        %v4176 = vadd.f32 %v3758, %v4144
        %v4177 = vadd.f32 %v3759, %v4145
        %v4178 = vadd.f32 %v3760, %v4146
        %v4179 = vadd.f32 %v3761, %v4147
        %v4180 = vadd.f32 %v3762, %v4148
        %v4181 = vadd.f32 %v3763, %v4149
        %v4182 = vadd.f32 %v3764, %v4150
        %v4183 = vadd.f32 %v3765, %v4151
        %v4184 = vadd.f32 %v3766, %v4152
        %v4185 = vadd.f32 %v3767, %v4153
        %v4186 = vadd.f32 %v3768, %v4154
        %v4187 = vadd.f32 %v3769, %v4155
        %v4188 = vadd.f32 %v3770, %v4156
        %v4189 = vadd.f32 %v3771, %v4157
        %v4190 = vadd.f32 %v3772, %v4158
        %v4191 = vadd.f32 %v3773, %v4159
        %v4192 = vadd.f32 %v3774, %v4160
        %v4193 = vadd.f32 %v3775, %v4161
        %v4194 = vadd.f32 %v3776, %v4162
        %v4195 = vadd.f32 %v3777, %v4163
        %v4196 = vadd.f32 %v3778, %v4164
        %s4197 = scalar_lea.vmem [#allocation8], 384
        %v4198 = vld [vmem:[%s4197] sm:$0xf]
        %v4199 = vld [vmem:[%s4197 + $0x4] sm:$0xf]
        %v4200 = vld [vmem:[%s4197 + $0x8] sm:$0xf]
        %v4201 = vld [vmem:[%s4197 + $0xc] sm:$0xf]
        %v4202 = vld [vmem:[%s4197 + $0x10] sm:$0xf]
        %v4203 = vld [vmem:[%s4197 + $0x14] sm:$0xf]
        %v4204 = vld [vmem:[%s4197 + $0x18] sm:$0xf]
        %v4205 = vld [vmem:[%s4197 + $0x1c] sm:$0xf]
        %v4206 = vld [vmem:[%s4197 + $0x20] sm:$0xf]
        %v4207 = vld [vmem:[%s4197 + $0x24] sm:$0xf]
        %v4208 = vld [vmem:[%s4197 + $0x28] sm:$0xf]
        %v4209 = vld [vmem:[%s4197 + $0x2c] sm:$0xf]
        %v4210 = vld [vmem:[%s4197 + $0x30] sm:$0xf]
        %v4211 = vld [vmem:[%s4197 + $0x34] sm:$0xf]
        %v4212 = vld [vmem:[%s4197 + $0x38] sm:$0xf]
        %v4213 = vld [vmem:[%s4197 + $0x3c] sm:$0xf]
        %v4230 = vunpack.c.l.b16 %v4198
        %v4231 = vunpack.c.l.b16 %v4199
        %v4232 = vunpack.c.l.b16 %v4200
        %v4233 = vunpack.c.l.b16 %v4201
        %v4234 = vunpack.c.l.b16 %v4202
        %v4235 = vunpack.c.l.b16 %v4203
        %v4236 = vunpack.c.l.b16 %v4204
        %v4237 = vunpack.c.l.b16 %v4205
        %v4238 = vunpack.c.l.b16 %v4206
        %v4239 = vunpack.c.l.b16 %v4207
        %v4240 = vunpack.c.l.b16 %v4208
        %v4241 = vunpack.c.l.b16 %v4209
        %v4242 = vunpack.c.l.b16 %v4210
        %v4243 = vunpack.c.l.b16 %v4211
        %v4244 = vunpack.c.l.b16 %v4212
        %v4245 = vunpack.c.l.b16 %v4213
        %v4246 = vpack.c.b16 %v4231, %v4230
        %v4247 = vpack.c.b16 %v4233, %v4232
        %v4248 = vpack.c.b16 %v4235, %v4234
        %v4249 = vpack.c.b16 %v4237, %v4236
        %v4250 = vpack.c.b16 %v4239, %v4238
        %v4251 = vpack.c.b16 %v4241, %v4240
        %v4252 = vpack.c.b16 %v4243, %v4242
        %v4253 = vpack.c.b16 %v4245, %v4244
        %4262 = vmatprep.subr.bf16.mxu0 0
        %4263 = vmatpush1.bf16.msra.mxu0 %v4253
        %4264 = vmatprep.subr.bf16.mxu0 0
        %4265 = vmatpush1.bf16.msra.mxu0 %v4252
        %4266 = vmatprep.subr.bf16.mxu0 0
        %4267 = vmatpush1.bf16.msra.mxu0 %v4251
        %4268 = vmatprep.subr.bf16.mxu0 0
        %4269 = vmatpush1.bf16.msra.mxu0 %v4250
        %4270 = vmatprep.subr.bf16.mxu0 0
        %4271 = vmatpush1.bf16.msra.mxu0 %v4249
        %4272 = vmatprep.subr.bf16.mxu0 0
        %4273 = vmatpush1.bf16.msra.mxu0 %v4248
        %4274 = vmatprep.subr.bf16.mxu0 0
        %4275 = vmatpush1.bf16.msra.mxu0 %v4247
        %4276 = vmatprep.subr.bf16.mxu0 0
        %4277 = vmatpush1.bf16.msra.mxu0 %v4246
        %4278 = vmatprep.subr.bf16.mxu0 0
        %4279 = vmatpush2.bf16.msra.mxu0 0
        %4280 = vmatprep.subr.bf16.mxu0 0
        %4281 = vmatpush2.bf16.msra.mxu0 0
        %4282 = vmatprep.subr.bf16.mxu0 0
        %4283 = vmatpush2.bf16.msra.mxu0 0
        %4284 = vmatprep.subr.bf16.mxu0 0
        %4285 = vmatpush2.bf16.msra.mxu0 0
        %4286 = vmatprep.subr.bf16.mxu0 0
        %4287 = vmatpush2.bf16.msra.mxu0 0
        %4288 = vmatprep.subr.bf16.mxu0 0
        %4289 = vmatpush2.bf16.msra.mxu0 0
        %4290 = vmatprep.subr.bf16.mxu0 0
        %4291 = vmatpush2.bf16.msra.mxu0 0
        %4292 = vmatprep.subr.bf16.mxu0 0
        %4293 = vmatpush2.bf16.msra.mxu0 0
        %4294 = vmatprep.mubr.bf16.mxu0 0
        %4295 = vmatmul.mubr.bf16.gmra.mxu0 %v969
        %v4296 = vpop.f32.mrf.mxu0
        %v4297 = vadd.f32 0.0, %v4296
        %v4298 = vpop.f32.mrf.mxu0
        %v4299 = vpop.f32.mrf.mxu0
        %v4300 = vadd.f32 0.0, %v4299
        %v4301 = vpop.f32.mrf.mxu0
        %4302 = vmatprep.mubr.bf16.mxu0 0
        %4303 = vmatmul.mubr.bf16.gmra.mxu0 %v970
        %v4304 = vpop.f32.mrf.mxu0
        %v4305 = vadd.f32 0.0, %v4304
        %v4306 = vpop.f32.mrf.mxu0
        %v4307 = vpop.f32.mrf.mxu0
        %v4308 = vadd.f32 0.0, %v4307
        %v4309 = vpop.f32.mrf.mxu0
        %4310 = vmatprep.mubr.bf16.mxu0 0
        %4311 = vmatmul.mubr.bf16.gmra.mxu0 %v971
        %v4312 = vpop.f32.mrf.mxu0
        %v4313 = vadd.f32 0.0, %v4312
        %v4314 = vpop.f32.mrf.mxu0
        %v4315 = vpop.f32.mrf.mxu0
        %v4316 = vadd.f32 0.0, %v4315
        %v4317 = vpop.f32.mrf.mxu0
        %4318 = vmatprep.mubr.bf16.mxu0 0
        %4319 = vmatmul.mubr.bf16.gmra.mxu0 %v972
        %v4320 = vpop.f32.mrf.mxu0
        %v4321 = vadd.f32 0.0, %v4320
        %v4322 = vpop.f32.mrf.mxu0
        %v4323 = vpop.f32.mrf.mxu0
        %v4324 = vadd.f32 0.0, %v4323
        %v4325 = vpop.f32.mrf.mxu0
        %4326 = vmatprep.mubr.bf16.mxu0 0
        %4327 = vmatmul.mubr.bf16.gmra.mxu0 %v973
        %v4328 = vpop.f32.mrf.mxu0
        %v4329 = vadd.f32 0.0, %v4328
        %v4330 = vpop.f32.mrf.mxu0
        %v4331 = vpop.f32.mrf.mxu0
        %v4332 = vadd.f32 0.0, %v4331
        %v4333 = vpop.f32.mrf.mxu0
        %4334 = vmatprep.mubr.bf16.mxu0 0
        %4335 = vmatmul.mubr.bf16.gmra.mxu0 %v974
        %v4336 = vpop.f32.mrf.mxu0
        %v4337 = vadd.f32 0.0, %v4336
        %v4338 = vpop.f32.mrf.mxu0
        %v4339 = vpop.f32.mrf.mxu0
        %v4340 = vadd.f32 0.0, %v4339
        %v4341 = vpop.f32.mrf.mxu0
        %4342 = vmatprep.mubr.bf16.mxu0 0
        %4343 = vmatmul.mubr.bf16.gmra.mxu0 %v975
        %v4344 = vpop.f32.mrf.mxu0
        %v4345 = vadd.f32 0.0, %v4344
        %v4346 = vpop.f32.mrf.mxu0
        %v4347 = vpop.f32.mrf.mxu0
        %v4348 = vadd.f32 0.0, %v4347
        %v4349 = vpop.f32.mrf.mxu0
        %4350 = vmatprep.mubr.bf16.mxu0 0
        %4351 = vmatmul.mubr.bf16.gmra.mxu0 %v976
        %v4352 = vpop.f32.mrf.mxu0
        %v4353 = vadd.f32 0.0, %v4352
        %v4354 = vpop.f32.mrf.mxu0
        %v4355 = vpop.f32.mrf.mxu0
        %v4356 = vadd.f32 0.0, %v4355
        %v4357 = vpop.f32.mrf.mxu0
        %4358 = vmatprep.mubr.bf16.mxu0 0
        %4359 = vmatmul.mubr.bf16.gmra.mxu0 %v977
        %v4360 = vpop.f32.mrf.mxu0
        %v4361 = vadd.f32 0.0, %v4360
        %v4362 = vpop.f32.mrf.mxu0
        %v4363 = vpop.f32.mrf.mxu0
        %v4364 = vadd.f32 0.0, %v4363
        %v4365 = vpop.f32.mrf.mxu0
        %4366 = vmatprep.mubr.bf16.mxu0 0
        %4367 = vmatmul.mubr.bf16.gmra.mxu0 %v978
        %v4368 = vpop.f32.mrf.mxu0
        %v4369 = vadd.f32 0.0, %v4368
        %v4370 = vpop.f32.mrf.mxu0
        %v4371 = vpop.f32.mrf.mxu0
        %v4372 = vadd.f32 0.0, %v4371
        %v4373 = vpop.f32.mrf.mxu0
        %4374 = vmatprep.mubr.bf16.mxu0 0
        %4375 = vmatmul.mubr.bf16.gmra.mxu0 %v979
        %v4376 = vpop.f32.mrf.mxu0
        %v4377 = vadd.f32 0.0, %v4376
        %v4378 = vpop.f32.mrf.mxu0
        %v4379 = vpop.f32.mrf.mxu0
        %v4380 = vadd.f32 0.0, %v4379
        %v4381 = vpop.f32.mrf.mxu0
        %4382 = vmatprep.mubr.bf16.mxu0 0
        %4383 = vmatmul.mubr.bf16.gmra.mxu0 %v980
        %v4384 = vpop.f32.mrf.mxu0
        %v4385 = vadd.f32 0.0, %v4384
        %v4386 = vpop.f32.mrf.mxu0
        %v4387 = vpop.f32.mrf.mxu0
        %v4388 = vadd.f32 0.0, %v4387
        %v4389 = vpop.f32.mrf.mxu0
        %4390 = vmatprep.mubr.bf16.mxu0 0
        %4391 = vmatmul.mubr.bf16.gmra.mxu0 %v981
        %v4392 = vpop.f32.mrf.mxu0
        %v4393 = vadd.f32 0.0, %v4392
        %v4394 = vpop.f32.mrf.mxu0
        %v4395 = vpop.f32.mrf.mxu0
        %v4396 = vadd.f32 0.0, %v4395
        %v4397 = vpop.f32.mrf.mxu0
        %4398 = vmatprep.mubr.bf16.mxu0 0
        %4399 = vmatmul.mubr.bf16.gmra.mxu0 %v982
        %v4400 = vpop.f32.mrf.mxu0
        %v4401 = vadd.f32 0.0, %v4400
        %v4402 = vpop.f32.mrf.mxu0
        %v4403 = vpop.f32.mrf.mxu0
        %v4404 = vadd.f32 0.0, %v4403
        %v4405 = vpop.f32.mrf.mxu0
        %4406 = vmatprep.mubr.bf16.mxu0 0
        %4407 = vmatmul.mubr.bf16.gmra.mxu0 %v983
        %v4408 = vpop.f32.mrf.mxu0
        %v4409 = vadd.f32 0.0, %v4408
        %v4410 = vpop.f32.mrf.mxu0
        %v4411 = vpop.f32.mrf.mxu0
        %v4412 = vadd.f32 0.0, %v4411
        %v4413 = vpop.f32.mrf.mxu0
        %4414 = vmatprep.mubr.bf16.mxu0 0
        %4415 = vmatmul.mubr.bf16.gmra.mxu0 %v984
        %v4416 = vpop.f32.mrf.mxu0
        %v4417 = vadd.f32 0.0, %v4416
        %v4418 = vpop.f32.mrf.mxu0
        %v4419 = vpop.f32.mrf.mxu0
        %v4420 = vadd.f32 0.0, %v4419
        %v4421 = vpop.f32.mrf.mxu0
        %4422 = vdwg.mxu0
        %v4423 = vsel %vm4069, %v4345, 0.0
        %v4424 = vsel %vm4070, %v4348, 0.0
        %v4425 = vsel %vm4071, %v4353, 0.0
        %v4426 = vsel %vm4072, %v4356, 0.0
        %v4427 = vsel %vm4073, %v4361, 0.0
        %v4428 = vsel %vm4074, %v4364, 0.0
        %v4429 = vsel %vm4075, %v4369, 0.0
        %v4430 = vsel %vm4076, %v4372, 0.0
        %v4431 = vsel %vm4077, %v4377, 0.0
        %v4432 = vsel %vm4078, %v4380, 0.0
        %v4433 = vsel %vm4079, %v4385, 0.0
        %v4434 = vsel %vm4080, %v4388, 0.0
        %v4435 = vsel %vm4081, %v4393, 0.0
        %v4436 = vsel %vm4082, %v4396, 0.0
        %v4437 = vsel %vm4083, %v4401, 0.0
        %v4438 = vsel %vm4084, %v4404, 0.0
        %v4439 = vsel %vm4085, %v4409, 0.0
        %v4440 = vsel %vm4086, %v4412, 0.0
        %v4441 = vsel %vm4087, %v4417, 0.0
        %v4442 = vsel %vm4088, %v4420, 0.0
        %v4443 = vsel %vm4089, %v4297, 0.0
        %v4444 = vsel %vm4090, %v4300, 0.0
        %v4445 = vsel %vm4091, %v4305, 0.0
        %v4446 = vsel %vm4092, %v4308, 0.0
        %v4447 = vsel %vm4093, %v4313, 0.0
        %v4448 = vsel %vm4094, %v4316, 0.0
        %v4449 = vsel %vm4095, %v4321, 0.0
        %v4450 = vsel %vm4096, %v4324, 0.0
        %v4451 = vsel %vm4097, %v4329, 0.0
        %v4452 = vsel %vm4098, %v4332, 0.0
        %v4453 = vsel %vm4099, %v4337, 0.0
        %v4454 = vsel %vm4100, %v4340, 0.0
        %v4455 = vadd.f32 %v4165, %v4423
        %v4456 = vadd.f32 %v4166, %v4424
        %v4457 = vadd.f32 %v4167, %v4425
        %v4458 = vadd.f32 %v4168, %v4426
        %v4459 = vadd.f32 %v4169, %v4427
        %v4460 = vadd.f32 %v4170, %v4428
        %v4461 = vadd.f32 %v4171, %v4429
        %v4462 = vadd.f32 %v4172, %v4430
        %v4463 = vadd.f32 %v4173, %v4431
        %v4464 = vadd.f32 %v4174, %v4432
        %v4465 = vadd.f32 %v4175, %v4433
        %v4466 = vadd.f32 %v4176, %v4434
        %v4467 = vadd.f32 %v4177, %v4435
        %v4468 = vadd.f32 %v4178, %v4436
        %v4469 = vadd.f32 %v4179, %v4437
        %v4470 = vadd.f32 %v4180, %v4438
        %v4471 = vadd.f32 %v4181, %v4439
        %v4472 = vadd.f32 %v4182, %v4440
        %v4473 = vadd.f32 %v4183, %v4441
        %v4474 = vadd.f32 %v4184, %v4442
        %v4475 = vadd.f32 %v4185, %v4443
        %v4476 = vadd.f32 %v4186, %v4444
        %v4477 = vadd.f32 %v4187, %v4445
        %v4478 = vadd.f32 %v4188, %v4446
        %v4479 = vadd.f32 %v4189, %v4447
        %v4480 = vadd.f32 %v4190, %v4448
        %v4481 = vadd.f32 %v4191, %v4449
        %v4482 = vadd.f32 %v4192, %v4450
        %v4483 = vadd.f32 %v4193, %v4451
        %v4484 = vadd.f32 %v4194, %v4452
        %v4485 = vadd.f32 %v4195, %v4453
        %v4486 = vadd.f32 %v4196, %v4454
        %s4487 = scalar_lea.vmem [#allocation8], 448
        %v4488 = vld [vmem:[%s4487] sm:$0xf]
        %v4489 = vld [vmem:[%s4487 + $0x4] sm:$0xf]
        %v4490 = vld [vmem:[%s4487 + $0x8] sm:$0xf]
        %v4491 = vld [vmem:[%s4487 + $0xc] sm:$0xf]
        %v4492 = vld [vmem:[%s4487 + $0x10] sm:$0xf]
        %v4493 = vld [vmem:[%s4487 + $0x14] sm:$0xf]
        %v4494 = vld [vmem:[%s4487 + $0x18] sm:$0xf]
        %v4495 = vld [vmem:[%s4487 + $0x1c] sm:$0xf]
        %v4496 = vld [vmem:[%s4487 + $0x20] sm:$0xf]
        %v4497 = vld [vmem:[%s4487 + $0x24] sm:$0xf]
        %v4498 = vld [vmem:[%s4487 + $0x28] sm:$0xf]
        %v4499 = vld [vmem:[%s4487 + $0x2c] sm:$0xf]
        %v4500 = vld [vmem:[%s4487 + $0x30] sm:$0xf]
        %v4501 = vld [vmem:[%s4487 + $0x34] sm:$0xf]
        %v4502 = vld [vmem:[%s4487 + $0x38] sm:$0xf]
        %v4503 = vld [vmem:[%s4487 + $0x3c] sm:$0xf]
        %v4520 = vunpack.c.l.b16 %v4488
        %v4521 = vunpack.c.l.b16 %v4489
        %v4522 = vunpack.c.l.b16 %v4490
        %v4523 = vunpack.c.l.b16 %v4491
        %v4524 = vunpack.c.l.b16 %v4492
        %v4525 = vunpack.c.l.b16 %v4493
        %v4526 = vunpack.c.l.b16 %v4494
        %v4527 = vunpack.c.l.b16 %v4495
        %v4528 = vunpack.c.l.b16 %v4496
        %v4529 = vunpack.c.l.b16 %v4497
        %v4530 = vunpack.c.l.b16 %v4498
        %v4531 = vunpack.c.l.b16 %v4499
        %v4532 = vunpack.c.l.b16 %v4500
        %v4533 = vunpack.c.l.b16 %v4501
        %v4534 = vunpack.c.l.b16 %v4502
        %v4535 = vunpack.c.l.b16 %v4503
        %v4536 = vpack.c.b16 %v4521, %v4520
        %v4537 = vpack.c.b16 %v4523, %v4522
        %v4538 = vpack.c.b16 %v4525, %v4524
        %v4539 = vpack.c.b16 %v4527, %v4526
        %v4540 = vpack.c.b16 %v4529, %v4528
        %v4541 = vpack.c.b16 %v4531, %v4530
        %v4542 = vpack.c.b16 %v4533, %v4532
        %v4543 = vpack.c.b16 %v4535, %v4534
        %4552 = vmatprep.subr.bf16.mxu0 0
        %4553 = vmatpush1.bf16.msra.mxu0 %v4543
        %4554 = vmatprep.subr.bf16.mxu0 0
        %4555 = vmatpush1.bf16.msra.mxu0 %v4542
        %4556 = vmatprep.subr.bf16.mxu0 0
        %4557 = vmatpush1.bf16.msra.mxu0 %v4541
        %4558 = vmatprep.subr.bf16.mxu0 0
        %4559 = vmatpush1.bf16.msra.mxu0 %v4540
        %4560 = vmatprep.subr.bf16.mxu0 0
        %4561 = vmatpush1.bf16.msra.mxu0 %v4539
        %4562 = vmatprep.subr.bf16.mxu0 0
        %4563 = vmatpush1.bf16.msra.mxu0 %v4538
        %4564 = vmatprep.subr.bf16.mxu0 0
        %4565 = vmatpush1.bf16.msra.mxu0 %v4537
        %4566 = vmatprep.subr.bf16.mxu0 0
        %4567 = vmatpush1.bf16.msra.mxu0 %v4536
        %4568 = vmatprep.subr.bf16.mxu0 0
        %4569 = vmatpush2.bf16.msra.mxu0 0
        %4570 = vmatprep.subr.bf16.mxu0 0
        %4571 = vmatpush2.bf16.msra.mxu0 0
        %4572 = vmatprep.subr.bf16.mxu0 0
        %4573 = vmatpush2.bf16.msra.mxu0 0
        %4574 = vmatprep.subr.bf16.mxu0 0
        %4575 = vmatpush2.bf16.msra.mxu0 0
        %4576 = vmatprep.subr.bf16.mxu0 0
        %4577 = vmatpush2.bf16.msra.mxu0 0
        %4578 = vmatprep.subr.bf16.mxu0 0
        %4579 = vmatpush2.bf16.msra.mxu0 0
        %4580 = vmatprep.subr.bf16.mxu0 0
        %4581 = vmatpush2.bf16.msra.mxu0 0
        %4582 = vmatprep.subr.bf16.mxu0 0
        %4583 = vmatpush2.bf16.msra.mxu0 0
        %4584 = vmatprep.mubr.bf16.mxu0 0
        %4585 = vmatmul.mubr.bf16.gmra.mxu0 %v969
        %v4586 = vpop.f32.mrf.mxu0
        %v4587 = vadd.f32 0.0, %v4586
        %v4588 = vpop.f32.mrf.mxu0
        %v4589 = vpop.f32.mrf.mxu0
        %v4590 = vadd.f32 0.0, %v4589
        %v4591 = vpop.f32.mrf.mxu0
        %4592 = vmatprep.mubr.bf16.mxu0 0
        %4593 = vmatmul.mubr.bf16.gmra.mxu0 %v970
        %v4594 = vpop.f32.mrf.mxu0
        %v4595 = vadd.f32 0.0, %v4594
        %v4596 = vpop.f32.mrf.mxu0
        %v4597 = vpop.f32.mrf.mxu0
        %v4598 = vadd.f32 0.0, %v4597
        %v4599 = vpop.f32.mrf.mxu0
        %4600 = vmatprep.mubr.bf16.mxu0 0
        %4601 = vmatmul.mubr.bf16.gmra.mxu0 %v971
        %v4602 = vpop.f32.mrf.mxu0
        %v4603 = vadd.f32 0.0, %v4602
        %v4604 = vpop.f32.mrf.mxu0
        %v4605 = vpop.f32.mrf.mxu0
        %v4606 = vadd.f32 0.0, %v4605
        %v4607 = vpop.f32.mrf.mxu0
        %4608 = vmatprep.mubr.bf16.mxu0 0
        %4609 = vmatmul.mubr.bf16.gmra.mxu0 %v972
        %v4610 = vpop.f32.mrf.mxu0
        %v4611 = vadd.f32 0.0, %v4610
        %v4612 = vpop.f32.mrf.mxu0
        %v4613 = vpop.f32.mrf.mxu0
        %v4614 = vadd.f32 0.0, %v4613
        %v4615 = vpop.f32.mrf.mxu0
        %4616 = vmatprep.mubr.bf16.mxu0 0
        %4617 = vmatmul.mubr.bf16.gmra.mxu0 %v973
        %v4618 = vpop.f32.mrf.mxu0
        %v4619 = vadd.f32 0.0, %v4618
        %v4620 = vpop.f32.mrf.mxu0
        %v4621 = vpop.f32.mrf.mxu0
        %v4622 = vadd.f32 0.0, %v4621
        %v4623 = vpop.f32.mrf.mxu0
        %4624 = vmatprep.mubr.bf16.mxu0 0
        %4625 = vmatmul.mubr.bf16.gmra.mxu0 %v974
        %v4626 = vpop.f32.mrf.mxu0
        %v4627 = vadd.f32 0.0, %v4626
        %v4628 = vpop.f32.mrf.mxu0
        %v4629 = vpop.f32.mrf.mxu0
        %v4630 = vadd.f32 0.0, %v4629
        %v4631 = vpop.f32.mrf.mxu0
        %4632 = vmatprep.mubr.bf16.mxu0 0
        %4633 = vmatmul.mubr.bf16.gmra.mxu0 %v975
        %v4634 = vpop.f32.mrf.mxu0
        %v4635 = vadd.f32 0.0, %v4634
        %v4636 = vpop.f32.mrf.mxu0
        %v4637 = vpop.f32.mrf.mxu0
        %v4638 = vadd.f32 0.0, %v4637
        %v4639 = vpop.f32.mrf.mxu0
        %4640 = vmatprep.mubr.bf16.mxu0 0
        %4641 = vmatmul.mubr.bf16.gmra.mxu0 %v976
        %v4642 = vpop.f32.mrf.mxu0
        %v4643 = vadd.f32 0.0, %v4642
        %v4644 = vpop.f32.mrf.mxu0
        %v4645 = vpop.f32.mrf.mxu0
        %v4646 = vadd.f32 0.0, %v4645
        %v4647 = vpop.f32.mrf.mxu0
        %4648 = vmatprep.mubr.bf16.mxu0 0
        %4649 = vmatmul.mubr.bf16.gmra.mxu0 %v977
        %v4650 = vpop.f32.mrf.mxu0
        %v4651 = vadd.f32 0.0, %v4650
        %v4652 = vpop.f32.mrf.mxu0
        %v4653 = vpop.f32.mrf.mxu0
        %v4654 = vadd.f32 0.0, %v4653
        %v4655 = vpop.f32.mrf.mxu0
        %4656 = vmatprep.mubr.bf16.mxu0 0
        %4657 = vmatmul.mubr.bf16.gmra.mxu0 %v978
        %v4658 = vpop.f32.mrf.mxu0
        %v4659 = vadd.f32 0.0, %v4658
        %v4660 = vpop.f32.mrf.mxu0
        %v4661 = vpop.f32.mrf.mxu0
        %v4662 = vadd.f32 0.0, %v4661
        %v4663 = vpop.f32.mrf.mxu0
        %4664 = vmatprep.mubr.bf16.mxu0 0
        %4665 = vmatmul.mubr.bf16.gmra.mxu0 %v979
        %v4666 = vpop.f32.mrf.mxu0
        %v4667 = vadd.f32 0.0, %v4666
        %v4668 = vpop.f32.mrf.mxu0
        %v4669 = vpop.f32.mrf.mxu0
        %v4670 = vadd.f32 0.0, %v4669
        %v4671 = vpop.f32.mrf.mxu0
        %4672 = vmatprep.mubr.bf16.mxu0 0
        %4673 = vmatmul.mubr.bf16.gmra.mxu0 %v980
        %v4674 = vpop.f32.mrf.mxu0
        %v4675 = vadd.f32 0.0, %v4674
        %v4676 = vpop.f32.mrf.mxu0
        %v4677 = vpop.f32.mrf.mxu0
        %v4678 = vadd.f32 0.0, %v4677
        %v4679 = vpop.f32.mrf.mxu0
        %4680 = vmatprep.mubr.bf16.mxu0 0
        %4681 = vmatmul.mubr.bf16.gmra.mxu0 %v981
        %v4682 = vpop.f32.mrf.mxu0
        %v4683 = vadd.f32 0.0, %v4682
        %v4684 = vpop.f32.mrf.mxu0
        %v4685 = vpop.f32.mrf.mxu0
        %v4686 = vadd.f32 0.0, %v4685
        %v4687 = vpop.f32.mrf.mxu0
        %4688 = vmatprep.mubr.bf16.mxu0 0
        %4689 = vmatmul.mubr.bf16.gmra.mxu0 %v982
        %v4690 = vpop.f32.mrf.mxu0
        %v4691 = vadd.f32 0.0, %v4690
        %v4692 = vpop.f32.mrf.mxu0
        %v4693 = vpop.f32.mrf.mxu0
        %v4694 = vadd.f32 0.0, %v4693
        %v4695 = vpop.f32.mrf.mxu0
        %4696 = vmatprep.mubr.bf16.mxu0 0
        %4697 = vmatmul.mubr.bf16.gmra.mxu0 %v983
        %v4698 = vpop.f32.mrf.mxu0
        %v4699 = vadd.f32 0.0, %v4698
        %v4700 = vpop.f32.mrf.mxu0
        %v4701 = vpop.f32.mrf.mxu0
        %v4702 = vadd.f32 0.0, %v4701
        %v4703 = vpop.f32.mrf.mxu0
        %4704 = vmatprep.mubr.bf16.mxu0 0
        %4705 = vmatmul.mubr.bf16.gmra.mxu0 %v984
        %v4706 = vpop.f32.mrf.mxu0
        %v4707 = vadd.f32 0.0, %v4706
        %v4708 = vpop.f32.mrf.mxu0
        %v4709 = vpop.f32.mrf.mxu0
        %v4710 = vadd.f32 0.0, %v4709
        %v4711 = vpop.f32.mrf.mxu0
        %4712 = vdwg.mxu0
        %v4713 = vrot.slane %v4587, 6
        %v4714 = vrot.slane %v4590, 6
        %v4715 = vrot.slane %v4595, 6
        %v4716 = vrot.slane %v4598, 6
        %v4717 = vrot.slane %v4603, 6
        %v4718 = vrot.slane %v4606, 6
        %v4719 = vrot.slane %v4611, 6
        %v4720 = vrot.slane %v4614, 6
        %v4721 = vrot.slane %v4619, 6
        %v4722 = vrot.slane %v4622, 6
        %v4723 = vrot.slane %v4627, 6
        %v4724 = vrot.slane %v4630, 6
        %v4725 = vrot.slane %v4635, 6
        %v4726 = vrot.slane %v4638, 6
        %v4727 = vrot.slane %v4643, 6
        %v4728 = vrot.slane %v4646, 6
        %v4729 = vrot.slane %v4651, 6
        %v4730 = vrot.slane %v4654, 6
        %v4731 = vrot.slane %v4659, 6
        %v4732 = vrot.slane %v4662, 6
        %v4733 = vrot.slane %v4667, 6
        %v4734 = vrot.slane %v4670, 6
        %v4735 = vrot.slane %v4675, 6
        %v4736 = vrot.slane %v4678, 6
        %v4737 = vrot.slane %v4683, 6
        %v4738 = vrot.slane %v4686, 6
        %v4739 = vrot.slane %v4691, 6
        %v4740 = vrot.slane %v4694, 6
        %v4741 = vrot.slane %v4699, 6
        %v4742 = vrot.slane %v4702, 6
        %v4743 = vrot.slane %v4707, 6
        %v4744 = vrot.slane %v4710, 6
        %v4745 = vsel %vm2910, %v4743, %v4744
        %v4746 = vsel %vm2910, %v4742, %v4743
        %v4747 = vsel %vm2910, %v4741, %v4742
        %v4748 = vsel %vm2910, %v4740, %v4741
        %v4749 = vsel %vm2910, %v4739, %v4740
        %v4750 = vsel %vm2910, %v4738, %v4739
        %v4751 = vsel %vm2910, %v4737, %v4738
        %v4752 = vsel %vm2910, %v4736, %v4737
        %v4753 = vsel %vm2910, %v4735, %v4736
        %v4754 = vsel %vm2910, %v4734, %v4735
        %v4755 = vsel %vm2910, %v4733, %v4734
        %v4756 = vsel %vm2910, %v4732, %v4733
        %v4757 = vsel %vm2910, %v4731, %v4732
        %v4758 = vsel %vm2910, %v4730, %v4731
        %v4759 = vsel %vm2910, %v4729, %v4730
        %v4760 = vsel %vm2910, %v4728, %v4729
        %v4761 = vsel %vm2910, %v4727, %v4728
        %v4762 = vsel %vm2910, %v4726, %v4727
        %v4763 = vsel %vm2910, %v4725, %v4726
        %v4764 = vsel %vm2910, %v4724, %v4725
        %v4765 = vsel %vm2910, %v4723, %v4724
        %v4766 = vsel %vm2910, %v4722, %v4723
        %v4767 = vsel %vm2910, %v4721, %v4722
        %v4768 = vsel %vm2910, %v4720, %v4721
        %v4769 = vsel %vm2910, %v4719, %v4720
        %v4770 = vsel %vm2910, %v4718, %v4719
        %v4771 = vsel %vm2910, %v4717, %v4718
        %v4772 = vsel %vm2910, %v4716, %v4717
        %v4773 = vsel %vm2910, %v4715, %v4716
        %v4774 = vsel %vm2910, %v4714, %v4715
        %v4775 = vsel %vm2910, %v4713, %v4714
        %v4776 = vsel %vm2910, %v4744, %v4713
        %vm4777 = vmand %vm4069, %vm2943
        %vm4778 = vmand %vm4070, %vm2944
        %vm4779 = vmand %vm4071, %vm2945
        %vm4780 = vmand %vm4072, %vm2946
        %vm4781 = vmand %vm4073, %vm2947
        %vm4782 = vmand %vm4074, %vm2948
        %vm4783 = vmand %vm4075, %vm2949
        %vm4784 = vmand %vm4076, %vm2950
        %vm4785 = vmand %vm4077, %vm2951
        %vm4786 = vmand %vm4078, %vm2952
        %vm4787 = vmand %vm4079, %vm2953
        %vm4788 = vmand %vm4080, %vm2954
        %vm4789 = vmand %vm4081, %vm2955
        %vm4790 = vmand %vm4082, %vm2956
        %vm4791 = vmand %vm4083, %vm2957
        %vm4792 = vmand %vm4084, %vm2958
        %vm4793 = vmand %vm4085, %vm2959
        %vm4794 = vmand %vm4086, %vm2960
        %vm4795 = vmand %vm4087, %vm2961
        %vm4796 = vmand %vm4088, %vm2962
        %vm4797 = vmand %vm4089, %vm2963
        %vm4798 = vmand %vm4090, %vm2964
        %vm4799 = vmand %vm4091, %vm2965
        %vm4800 = vmand %vm4092, %vm2966
        %vm4801 = vmand %vm4093, %vm2967
        %vm4802 = vmand %vm4094, %vm2968
        %vm4803 = vmand %vm4095, %vm2969
        %vm4804 = vmand %vm4096, %vm2970
        %vm4805 = vmand %vm4097, %vm2971
        %vm4806 = vmand %vm4098, %vm2972
        %vm4807 = vmand %vm4099, %vm2973
        %vm4808 = vmand %vm4100, %vm2974
        %v4809 = vsel %vm4777, %v4763, 0.0
        %v4810 = vsel %vm4778, %v4762, 0.0
        %v4811 = vsel %vm4779, %v4761, 0.0
        %v4812 = vsel %vm4780, %v4760, 0.0
        %v4813 = vsel %vm4781, %v4759, 0.0
        %v4814 = vsel %vm4782, %v4758, 0.0
        %v4815 = vsel %vm4783, %v4757, 0.0
        %v4816 = vsel %vm4784, %v4756, 0.0
        %v4817 = vsel %vm4785, %v4755, 0.0
        %v4818 = vsel %vm4786, %v4754, 0.0
        %v4819 = vsel %vm4787, %v4753, 0.0
        %v4820 = vsel %vm4788, %v4752, 0.0
        %v4821 = vsel %vm4789, %v4751, 0.0
        %v4822 = vsel %vm4790, %v4750, 0.0
        %v4823 = vsel %vm4791, %v4749, 0.0
        %v4824 = vsel %vm4792, %v4748, 0.0
        %v4825 = vsel %vm4793, %v4747, 0.0
        %v4826 = vsel %vm4794, %v4746, 0.0
        %v4827 = vsel %vm4795, %v4745, 0.0
        %v4828 = vsel %vm4796, %v4776, 0.0
        %v4829 = vsel %vm4797, %v4775, 0.0
        %v4830 = vsel %vm4798, %v4774, 0.0
        %v4831 = vsel %vm4799, %v4773, 0.0
        %v4832 = vsel %vm4800, %v4772, 0.0
        %v4833 = vsel %vm4801, %v4771, 0.0
        %v4834 = vsel %vm4802, %v4770, 0.0
        %v4835 = vsel %vm4803, %v4769, 0.0
        %v4836 = vsel %vm4804, %v4768, 0.0
        %v4837 = vsel %vm4805, %v4767, 0.0
        %v4838 = vsel %vm4806, %v4766, 0.0
        %v4839 = vsel %vm4807, %v4765, 0.0
        %v4840 = vsel %vm4808, %v4764, 0.0
        %v4841 = vadd.f32 %v4455, %v4809
        %v4842 = vadd.f32 %v4456, %v4810
        %v4843 = vadd.f32 %v4457, %v4811
        %v4844 = vadd.f32 %v4458, %v4812
        %v4845 = vadd.f32 %v4459, %v4813
        %v4846 = vadd.f32 %v4460, %v4814
        %v4847 = vadd.f32 %v4461, %v4815
        %v4848 = vadd.f32 %v4462, %v4816
        %v4849 = vadd.f32 %v4463, %v4817
        %v4850 = vadd.f32 %v4464, %v4818
        %v4851 = vadd.f32 %v4465, %v4819
        %v4852 = vadd.f32 %v4466, %v4820
        %v4853 = vadd.f32 %v4467, %v4821
        %v4854 = vadd.f32 %v4468, %v4822
        %v4855 = vadd.f32 %v4469, %v4823
        %v4856 = vadd.f32 %v4470, %v4824
        %v4857 = vadd.f32 %v4471, %v4825
        %v4858 = vadd.f32 %v4472, %v4826
        %v4859 = vadd.f32 %v4473, %v4827
        %v4860 = vadd.f32 %v4474, %v4828
        %v4861 = vadd.f32 %v4475, %v4829
        %v4862 = vadd.f32 %v4476, %v4830
        %v4863 = vadd.f32 %v4477, %v4831
        %v4864 = vadd.f32 %v4478, %v4832
        %v4865 = vadd.f32 %v4479, %v4833
        %v4866 = vadd.f32 %v4480, %v4834
        %v4867 = vadd.f32 %v4481, %v4835
        %v4868 = vadd.f32 %v4482, %v4836
        %v4869 = vadd.f32 %v4483, %v4837
        %v4870 = vadd.f32 %v4484, %v4838
        %v4871 = vadd.f32 %v4485, %v4839
        %v4872 = vadd.f32 %v4486, %v4840
        %s4873 = scalar_lea.vmem [#allocation8], 512
        %v4874 = vld [vmem:[%s4873] sm:$0xf]
        %v4875 = vld [vmem:[%s4873 + $0x4] sm:$0xf]
        %v4876 = vld [vmem:[%s4873 + $0x8] sm:$0xf]
        %v4877 = vld [vmem:[%s4873 + $0xc] sm:$0xf]
        %v4878 = vld [vmem:[%s4873 + $0x10] sm:$0xf]
        %v4879 = vld [vmem:[%s4873 + $0x14] sm:$0xf]
        %v4880 = vld [vmem:[%s4873 + $0x18] sm:$0xf]
        %v4881 = vld [vmem:[%s4873 + $0x1c] sm:$0xf]
        %v4882 = vld [vmem:[%s4873 + $0x20] sm:$0xf]
        %v4883 = vld [vmem:[%s4873 + $0x24] sm:$0xf]
        %v4884 = vld [vmem:[%s4873 + $0x28] sm:$0xf]
        %v4885 = vld [vmem:[%s4873 + $0x2c] sm:$0xf]
        %v4886 = vld [vmem:[%s4873 + $0x30] sm:$0xf]
        %v4887 = vld [vmem:[%s4873 + $0x34] sm:$0xf]
        %v4888 = vld [vmem:[%s4873 + $0x38] sm:$0xf]
        %v4889 = vld [vmem:[%s4873 + $0x3c] sm:$0xf]
        %v4906 = vunpack.c.l.b16 %v4874
        %v4907 = vunpack.c.l.b16 %v4875
        %v4908 = vunpack.c.l.b16 %v4876
        %v4909 = vunpack.c.l.b16 %v4877
        %v4910 = vunpack.c.l.b16 %v4878
        %v4911 = vunpack.c.l.b16 %v4879
        %v4912 = vunpack.c.l.b16 %v4880
        %v4913 = vunpack.c.l.b16 %v4881
        %v4914 = vunpack.c.l.b16 %v4882
        %v4915 = vunpack.c.l.b16 %v4883
        %v4916 = vunpack.c.l.b16 %v4884
        %v4917 = vunpack.c.l.b16 %v4885
        %v4918 = vunpack.c.l.b16 %v4886
        %v4919 = vunpack.c.l.b16 %v4887
        %v4920 = vunpack.c.l.b16 %v4888
        %v4921 = vunpack.c.l.b16 %v4889
        %v4922 = vpack.c.b16 %v4907, %v4906
        %v4923 = vpack.c.b16 %v4909, %v4908
        %v4924 = vpack.c.b16 %v4911, %v4910
        %v4925 = vpack.c.b16 %v4913, %v4912
        %v4926 = vpack.c.b16 %v4915, %v4914
        %v4927 = vpack.c.b16 %v4917, %v4916
        %v4928 = vpack.c.b16 %v4919, %v4918
        %v4929 = vpack.c.b16 %v4921, %v4920
        %4938 = vmatprep.subr.bf16.mxu0 0
        %4939 = vmatpush1.bf16.msra.mxu0 %v4929
        %4940 = vmatprep.subr.bf16.mxu0 0
        %4941 = vmatpush1.bf16.msra.mxu0 %v4928
        %4942 = vmatprep.subr.bf16.mxu0 0
        %4943 = vmatpush1.bf16.msra.mxu0 %v4927
        %4944 = vmatprep.subr.bf16.mxu0 0
        %4945 = vmatpush1.bf16.msra.mxu0 %v4926
        %4946 = vmatprep.subr.bf16.mxu0 0
        %4947 = vmatpush1.bf16.msra.mxu0 %v4925
        %4948 = vmatprep.subr.bf16.mxu0 0
        %4949 = vmatpush1.bf16.msra.mxu0 %v4924
        %4950 = vmatprep.subr.bf16.mxu0 0
        %4951 = vmatpush1.bf16.msra.mxu0 %v4923
        %4952 = vmatprep.subr.bf16.mxu0 0
        %4953 = vmatpush1.bf16.msra.mxu0 %v4922
        %4954 = vmatprep.subr.bf16.mxu0 0
        %4955 = vmatpush2.bf16.msra.mxu0 0
        %4956 = vmatprep.subr.bf16.mxu0 0
        %4957 = vmatpush2.bf16.msra.mxu0 0
        %4958 = vmatprep.subr.bf16.mxu0 0
        %4959 = vmatpush2.bf16.msra.mxu0 0
        %4960 = vmatprep.subr.bf16.mxu0 0
        %4961 = vmatpush2.bf16.msra.mxu0 0
        %4962 = vmatprep.subr.bf16.mxu0 0
        %4963 = vmatpush2.bf16.msra.mxu0 0
        %4964 = vmatprep.subr.bf16.mxu0 0
        %4965 = vmatpush2.bf16.msra.mxu0 0
        %4966 = vmatprep.subr.bf16.mxu0 0
        %4967 = vmatpush2.bf16.msra.mxu0 0
        %4968 = vmatprep.subr.bf16.mxu0 0
        %4969 = vmatpush2.bf16.msra.mxu0 0
        %4970 = vmatprep.mubr.bf16.mxu0 0
        %4971 = vmatmul.mubr.bf16.gmra.mxu0 %v969
        %v4972 = vpop.f32.mrf.mxu0
        %v4973 = vadd.f32 0.0, %v4972
        %v4974 = vpop.f32.mrf.mxu0
        %v4975 = vpop.f32.mrf.mxu0
        %v4976 = vadd.f32 0.0, %v4975
        %v4977 = vpop.f32.mrf.mxu0
        %4978 = vmatprep.mubr.bf16.mxu0 0
        %4979 = vmatmul.mubr.bf16.gmra.mxu0 %v970
        %v4980 = vpop.f32.mrf.mxu0
        %v4981 = vadd.f32 0.0, %v4980
        %v4982 = vpop.f32.mrf.mxu0
        %v4983 = vpop.f32.mrf.mxu0
        %v4984 = vadd.f32 0.0, %v4983
        %v4985 = vpop.f32.mrf.mxu0
        %4986 = vmatprep.mubr.bf16.mxu0 0
        %4987 = vmatmul.mubr.bf16.gmra.mxu0 %v971
        %v4988 = vpop.f32.mrf.mxu0
        %v4989 = vadd.f32 0.0, %v4988
        %v4990 = vpop.f32.mrf.mxu0
        %v4991 = vpop.f32.mrf.mxu0
        %v4992 = vadd.f32 0.0, %v4991
        %v4993 = vpop.f32.mrf.mxu0
        %4994 = vmatprep.mubr.bf16.mxu0 0
        %4995 = vmatmul.mubr.bf16.gmra.mxu0 %v972
        %v4996 = vpop.f32.mrf.mxu0
        %v4997 = vadd.f32 0.0, %v4996
        %v4998 = vpop.f32.mrf.mxu0
        %v4999 = vpop.f32.mrf.mxu0
        %v5000 = vadd.f32 0.0, %v4999
        %v5001 = vpop.f32.mrf.mxu0
        %5002 = vmatprep.mubr.bf16.mxu0 0
        %5003 = vmatmul.mubr.bf16.gmra.mxu0 %v973
        %v5004 = vpop.f32.mrf.mxu0
        %v5005 = vadd.f32 0.0, %v5004
        %v5006 = vpop.f32.mrf.mxu0
        %v5007 = vpop.f32.mrf.mxu0
        %v5008 = vadd.f32 0.0, %v5007
        %v5009 = vpop.f32.mrf.mxu0
        %5010 = vmatprep.mubr.bf16.mxu0 0
        %5011 = vmatmul.mubr.bf16.gmra.mxu0 %v974
        %v5012 = vpop.f32.mrf.mxu0
        %v5013 = vadd.f32 0.0, %v5012
        %v5014 = vpop.f32.mrf.mxu0
        %v5015 = vpop.f32.mrf.mxu0
        %v5016 = vadd.f32 0.0, %v5015
        %v5017 = vpop.f32.mrf.mxu0
        %5018 = vmatprep.mubr.bf16.mxu0 0
        %5019 = vmatmul.mubr.bf16.gmra.mxu0 %v975
        %v5020 = vpop.f32.mrf.mxu0
        %v5021 = vadd.f32 0.0, %v5020
        %v5022 = vpop.f32.mrf.mxu0
        %v5023 = vpop.f32.mrf.mxu0
        %v5024 = vadd.f32 0.0, %v5023
        %v5025 = vpop.f32.mrf.mxu0
        %5026 = vmatprep.mubr.bf16.mxu0 0
        %5027 = vmatmul.mubr.bf16.gmra.mxu0 %v976
        %v5028 = vpop.f32.mrf.mxu0
        %v5029 = vadd.f32 0.0, %v5028
        %v5030 = vpop.f32.mrf.mxu0
        %v5031 = vpop.f32.mrf.mxu0
        %v5032 = vadd.f32 0.0, %v5031
        %v5033 = vpop.f32.mrf.mxu0
        %5034 = vmatprep.mubr.bf16.mxu0 0
        %5035 = vmatmul.mubr.bf16.gmra.mxu0 %v977
        %v5036 = vpop.f32.mrf.mxu0
        %v5037 = vadd.f32 0.0, %v5036
        %v5038 = vpop.f32.mrf.mxu0
        %v5039 = vpop.f32.mrf.mxu0
        %v5040 = vadd.f32 0.0, %v5039
        %v5041 = vpop.f32.mrf.mxu0
        %5042 = vmatprep.mubr.bf16.mxu0 0
        %5043 = vmatmul.mubr.bf16.gmra.mxu0 %v978
        %v5044 = vpop.f32.mrf.mxu0
        %v5045 = vadd.f32 0.0, %v5044
        %v5046 = vpop.f32.mrf.mxu0
        %v5047 = vpop.f32.mrf.mxu0
        %v5048 = vadd.f32 0.0, %v5047
        %v5049 = vpop.f32.mrf.mxu0
        %5050 = vmatprep.mubr.bf16.mxu0 0
        %5051 = vmatmul.mubr.bf16.gmra.mxu0 %v979
        %v5052 = vpop.f32.mrf.mxu0
        %v5053 = vadd.f32 0.0, %v5052
        %v5054 = vpop.f32.mrf.mxu0
        %v5055 = vpop.f32.mrf.mxu0
        %v5056 = vadd.f32 0.0, %v5055
        %v5057 = vpop.f32.mrf.mxu0
        %5058 = vmatprep.mubr.bf16.mxu0 0
        %5059 = vmatmul.mubr.bf16.gmra.mxu0 %v980
        %v5060 = vpop.f32.mrf.mxu0
        %v5061 = vadd.f32 0.0, %v5060
        %v5062 = vpop.f32.mrf.mxu0
        %v5063 = vpop.f32.mrf.mxu0
        %v5064 = vadd.f32 0.0, %v5063
        %v5065 = vpop.f32.mrf.mxu0
        %5066 = vmatprep.mubr.bf16.mxu0 0
        %5067 = vmatmul.mubr.bf16.gmra.mxu0 %v981
        %v5068 = vpop.f32.mrf.mxu0
        %v5069 = vadd.f32 0.0, %v5068
        %v5070 = vpop.f32.mrf.mxu0
        %v5071 = vpop.f32.mrf.mxu0
        %v5072 = vadd.f32 0.0, %v5071
        %v5073 = vpop.f32.mrf.mxu0
        %5074 = vmatprep.mubr.bf16.mxu0 0
        %5075 = vmatmul.mubr.bf16.gmra.mxu0 %v982
        %v5076 = vpop.f32.mrf.mxu0
        %v5077 = vadd.f32 0.0, %v5076
        %v5078 = vpop.f32.mrf.mxu0
        %v5079 = vpop.f32.mrf.mxu0
        %v5080 = vadd.f32 0.0, %v5079
        %v5081 = vpop.f32.mrf.mxu0
        %5082 = vmatprep.mubr.bf16.mxu0 0
        %5083 = vmatmul.mubr.bf16.gmra.mxu0 %v983
        %v5084 = vpop.f32.mrf.mxu0
        %v5085 = vadd.f32 0.0, %v5084
        %v5086 = vpop.f32.mrf.mxu0
        %v5087 = vpop.f32.mrf.mxu0
        %v5088 = vadd.f32 0.0, %v5087
        %v5089 = vpop.f32.mrf.mxu0
        %5090 = vmatprep.mubr.bf16.mxu0 0
        %5091 = vmatmul.mubr.bf16.gmra.mxu0 %v984
        %v5092 = vpop.f32.mrf.mxu0
        %v5093 = vadd.f32 0.0, %v5092
        %v5094 = vpop.f32.mrf.mxu0
        %v5095 = vpop.f32.mrf.mxu0
        %v5096 = vadd.f32 0.0, %v5095
        %v5097 = vpop.f32.mrf.mxu0
        %5098 = vdwg.mxu0
        %v5099 = vrot.slane %v4973, 4
        %v5100 = vrot.slane %v4976, 4
        %v5101 = vrot.slane %v4981, 4
        %v5102 = vrot.slane %v4984, 4
        %v5103 = vrot.slane %v4989, 4
        %v5104 = vrot.slane %v4992, 4
        %v5105 = vrot.slane %v4997, 4
        %v5106 = vrot.slane %v5000, 4
        %v5107 = vrot.slane %v5005, 4
        %v5108 = vrot.slane %v5008, 4
        %v5109 = vrot.slane %v5013, 4
        %v5110 = vrot.slane %v5016, 4
        %v5111 = vrot.slane %v5021, 4
        %v5112 = vrot.slane %v5024, 4
        %v5113 = vrot.slane %v5029, 4
        %v5114 = vrot.slane %v5032, 4
        %v5115 = vrot.slane %v5037, 4
        %v5116 = vrot.slane %v5040, 4
        %v5117 = vrot.slane %v5045, 4
        %v5118 = vrot.slane %v5048, 4
        %v5119 = vrot.slane %v5053, 4
        %v5120 = vrot.slane %v5056, 4
        %v5121 = vrot.slane %v5061, 4
        %v5122 = vrot.slane %v5064, 4
        %v5123 = vrot.slane %v5069, 4
        %v5124 = vrot.slane %v5072, 4
        %v5125 = vrot.slane %v5077, 4
        %v5126 = vrot.slane %v5080, 4
        %v5127 = vrot.slane %v5085, 4
        %v5128 = vrot.slane %v5088, 4
        %v5129 = vrot.slane %v5093, 4
        %v5130 = vrot.slane %v5096, 4
        %vm5131 = vcmp.lt.s32.totalorder %v458, 4
        %v5132 = vsel %vm5131, %v5129, %v5130
        %v5133 = vsel %vm5131, %v5128, %v5129
        %v5134 = vsel %vm5131, %v5127, %v5128
        %v5135 = vsel %vm5131, %v5126, %v5127
        %v5136 = vsel %vm5131, %v5125, %v5126
        %v5137 = vsel %vm5131, %v5124, %v5125
        %v5138 = vsel %vm5131, %v5123, %v5124
        %v5139 = vsel %vm5131, %v5122, %v5123
        %v5140 = vsel %vm5131, %v5121, %v5122
        %v5141 = vsel %vm5131, %v5120, %v5121
        %v5142 = vsel %vm5131, %v5119, %v5120
        %v5143 = vsel %vm5131, %v5118, %v5119
        %v5144 = vsel %vm5131, %v5117, %v5118
        %v5145 = vsel %vm5131, %v5116, %v5117
        %v5146 = vsel %vm5131, %v5115, %v5116
        %v5147 = vsel %vm5131, %v5114, %v5115
        %v5148 = vsel %vm5131, %v5113, %v5114
        %v5149 = vsel %vm5131, %v5112, %v5113
        %v5150 = vsel %vm5131, %v5111, %v5112
        %v5151 = vsel %vm5131, %v5110, %v5111
        %v5152 = vsel %vm5131, %v5109, %v5110
        %v5153 = vsel %vm5131, %v5108, %v5109
        %v5154 = vsel %vm5131, %v5107, %v5108
        %v5155 = vsel %vm5131, %v5106, %v5107
        %v5156 = vsel %vm5131, %v5105, %v5106
        %v5157 = vsel %vm5131, %v5104, %v5105
        %v5158 = vsel %vm5131, %v5103, %v5104
        %v5159 = vsel %vm5131, %v5102, %v5103
        %v5160 = vsel %vm5131, %v5101, %v5102
        %v5161 = vsel %vm5131, %v5100, %v5101
        %v5162 = vsel %vm5131, %v5099, %v5100
        %v5163 = vsel %vm5131, %v5130, %v5099
        %vm5164 = vcmp.ge.s32.totalorder %v490, 12
        %vm5165 = vcmp.ge.s32.totalorder %v491, 12
        %vm5166 = vcmp.ge.s32.totalorder %v492, 12
        %vm5167 = vcmp.ge.s32.totalorder %v493, 12
        %vm5168 = vcmp.ge.s32.totalorder %v494, 12
        %vm5169 = vcmp.ge.s32.totalorder %v495, 12
        %vm5170 = vcmp.ge.s32.totalorder %v496, 12
        %vm5171 = vcmp.ge.s32.totalorder %v497, 12
        %vm5172 = vcmp.ge.s32.totalorder %v498, 12
        %vm5173 = vcmp.ge.s32.totalorder %v499, 12
        %vm5174 = vcmp.ge.s32.totalorder %v500, 12
        %vm5175 = vcmp.ge.s32.totalorder %v501, 12
        %vm5176 = vcmp.ge.s32.totalorder %v502, 12
        %vm5177 = vcmp.ge.s32.totalorder %v503, 12
        %vm5178 = vcmp.ge.s32.totalorder %v504, 12
        %vm5179 = vcmp.ge.s32.totalorder %v505, 12
        %vm5180 = vcmp.ge.s32.totalorder %v506, 12
        %vm5181 = vcmp.ge.s32.totalorder %v507, 12
        %vm5182 = vcmp.ge.s32.totalorder %v508, 12
        %vm5183 = vcmp.ge.s32.totalorder %v509, 12
        %vm5184 = vcmp.ge.s32.totalorder %v510, 12
        %vm5185 = vcmp.ge.s32.totalorder %v511, 12
        %vm5186 = vcmp.ge.s32.totalorder %v512, 12
        %vm5187 = vcmp.ge.s32.totalorder %v513, 12
        %vm5188 = vcmp.ge.s32.totalorder %v514, 12
        %vm5189 = vcmp.ge.s32.totalorder %v515, 12
        %vm5190 = vcmp.ge.s32.totalorder %v516, 12
        %vm5191 = vcmp.ge.s32.totalorder %v517, 12
        %vm5192 = vcmp.ge.s32.totalorder %v518, 12
        %vm5193 = vcmp.ge.s32.totalorder %v519, 12
        %vm5194 = vcmp.ge.s32.totalorder %v520, 12
        %vm5195 = vcmp.ge.s32.totalorder %v521, 12
        %vm5196 = vcmp.ge.s32.totalorder %v522, 12
        %vm5197 = vcmp.ge.s32.totalorder %v523, 12
        %vm5198 = vcmp.ge.s32.totalorder %v524, 12
        %vm5199 = vcmp.ge.s32.totalorder %v525, 12
        %vm5200 = vcmp.ge.s32.totalorder %v526, 12
        %vm5201 = vcmp.ge.s32.totalorder %v527, 12
        %vm5202 = vcmp.ge.s32.totalorder %v528, 12
        %vm5203 = vcmp.ge.s32.totalorder %v529, 12
        %vm5204 = vcmp.ge.s32.totalorder %v530, 12
        %vm5205 = vcmp.ge.s32.totalorder %v531, 12
        %vm5206 = vcmp.ge.s32.totalorder %v532, 12
        %vm5207 = vcmp.ge.s32.totalorder %v533, 12
        %vm5208 = vcmp.ge.s32.totalorder %v534, 12
        %vm5209 = vcmp.ge.s32.totalorder %v535, 12
        %vm5210 = vcmp.ge.s32.totalorder %v536, 12
        %vm5211 = vcmp.ge.s32.totalorder %v537, 12
        %vm5212 = vcmp.ge.s32.totalorder %v538, 12
        %vm5213 = vcmp.ge.s32.totalorder %v539, 12
        %vm5214 = vcmp.ge.s32.totalorder %v540, 12
        %vm5215 = vcmp.ge.s32.totalorder %v541, 12
        %vm5216 = vcmp.ge.s32.totalorder %v542, 12
        %vm5217 = vcmp.ge.s32.totalorder %v543, 12
        %vm5218 = vcmp.ge.s32.totalorder %v544, 12
        %vm5219 = vcmp.ge.s32.totalorder %v545, 12
        %vm5220 = vcmp.ge.s32.totalorder %v546, 12
        %vm5221 = vcmp.ge.s32.totalorder %v547, 12
        %vm5222 = vcmp.ge.s32.totalorder %v548, 12
        %vm5223 = vcmp.ge.s32.totalorder %v549, 12
        %vm5224 = vcmp.ge.s32.totalorder %v550, 12
        %vm5225 = vcmp.ge.s32.totalorder %v551, 12
        %vm5226 = vcmp.ge.s32.totalorder %v552, 12
        %vm5227 = vcmp.ge.s32.totalorder %v553, 12
        %vm5228 = vmand %vm5164, %vm5196
        %vm5229 = vmand %vm5165, %vm5197
        %vm5230 = vmand %vm5166, %vm5198
        %vm5231 = vmand %vm5167, %vm5199
        %vm5232 = vmand %vm5168, %vm5200
        %vm5233 = vmand %vm5169, %vm5201
        %vm5234 = vmand %vm5170, %vm5202
        %vm5235 = vmand %vm5171, %vm5203
        %vm5236 = vmand %vm5172, %vm5204
        %vm5237 = vmand %vm5173, %vm5205
        %vm5238 = vmand %vm5174, %vm5206
        %vm5239 = vmand %vm5175, %vm5207
        %vm5240 = vmand %vm5176, %vm5208
        %vm5241 = vmand %vm5177, %vm5209
        %vm5242 = vmand %vm5178, %vm5210
        %vm5243 = vmand %vm5179, %vm5211
        %vm5244 = vmand %vm5180, %vm5212
        %vm5245 = vmand %vm5181, %vm5213
        %vm5246 = vmand %vm5182, %vm5214
        %vm5247 = vmand %vm5183, %vm5215
        %vm5248 = vmand %vm5184, %vm5216
        %vm5249 = vmand %vm5185, %vm5217
        %vm5250 = vmand %vm5186, %vm5218
        %vm5251 = vmand %vm5187, %vm5219
        %vm5252 = vmand %vm5188, %vm5220
        %vm5253 = vmand %vm5189, %vm5221
        %vm5254 = vmand %vm5190, %vm5222
        %vm5255 = vmand %vm5191, %vm5223
        %vm5256 = vmand %vm5192, %vm5224
        %vm5257 = vmand %vm5193, %vm5225
        %vm5258 = vmand %vm5194, %vm5226
        %vm5259 = vmand %vm5195, %vm5227
        %v5260 = vsel %vm5228, %v5156, 0.0
        %v5261 = vsel %vm5229, %v5155, 0.0
        %v5262 = vsel %vm5230, %v5154, 0.0
        %v5263 = vsel %vm5231, %v5153, 0.0
        %v5264 = vsel %vm5232, %v5152, 0.0
        %v5265 = vsel %vm5233, %v5151, 0.0
        %v5266 = vsel %vm5234, %v5150, 0.0
        %v5267 = vsel %vm5235, %v5149, 0.0
        %v5268 = vsel %vm5236, %v5148, 0.0
        %v5269 = vsel %vm5237, %v5147, 0.0
        %v5270 = vsel %vm5238, %v5146, 0.0
        %v5271 = vsel %vm5239, %v5145, 0.0
        %v5272 = vsel %vm5240, %v5144, 0.0
        %v5273 = vsel %vm5241, %v5143, 0.0
        %v5274 = vsel %vm5242, %v5142, 0.0
        %v5275 = vsel %vm5243, %v5141, 0.0
        %v5276 = vsel %vm5244, %v5140, 0.0
        %v5277 = vsel %vm5245, %v5139, 0.0
        %v5278 = vsel %vm5246, %v5138, 0.0
        %v5279 = vsel %vm5247, %v5137, 0.0
        %v5280 = vsel %vm5248, %v5136, 0.0
        %v5281 = vsel %vm5249, %v5135, 0.0
        %v5282 = vsel %vm5250, %v5134, 0.0
        %v5283 = vsel %vm5251, %v5133, 0.0
        %v5284 = vsel %vm5252, %v5132, 0.0
        %v5285 = vsel %vm5253, %v5163, 0.0
        %v5286 = vsel %vm5254, %v5162, 0.0
        %v5287 = vsel %vm5255, %v5161, 0.0
        %v5288 = vsel %vm5256, %v5160, 0.0
        %v5289 = vsel %vm5257, %v5159, 0.0
        %v5290 = vsel %vm5258, %v5158, 0.0
        %v5291 = vsel %vm5259, %v5157, 0.0
        %v5292 = vadd.f32 %v1552, %v5260
        %v5293 = vadd.f32 %v1555, %v5261
        %v5294 = vadd.f32 %v1560, %v5262
        %v5295 = vadd.f32 %v1563, %v5263
        %v5296 = vadd.f32 %v1568, %v5264
        %v5297 = vadd.f32 %v1571, %v5265
        %v5298 = vadd.f32 %v1576, %v5266
        %v5299 = vadd.f32 %v1579, %v5267
        %v5300 = vadd.f32 %v1584, %v5268
        %v5301 = vadd.f32 %v1587, %v5269
        %v5302 = vadd.f32 %v1592, %v5270
        %v5303 = vadd.f32 %v1595, %v5271
        %v5304 = vadd.f32 %v1600, %v5272
        %v5305 = vadd.f32 %v1603, %v5273
        %v5306 = vadd.f32 %v1608, %v5274
        %v5307 = vadd.f32 %v1611, %v5275
        %v5308 = vadd.f32 %v1616, %v5276
        %v5309 = vadd.f32 %v1619, %v5277
        %v5310 = vadd.f32 %v1624, %v5278
        %v5311 = vadd.f32 %v1627, %v5279
        %v5312 = vadd.f32 %v1632, %v5280
        %v5313 = vadd.f32 %v1635, %v5281
        %v5314 = vadd.f32 %v1640, %v5282
        %v5315 = vadd.f32 %v1643, %v5283
        %v5316 = vadd.f32 %v1648, %v5284
        %v5317 = vadd.f32 %v1651, %v5285
        %v5318 = vadd.f32 %v1656, %v5286
        %v5319 = vadd.f32 %v1659, %v5287
        %v5320 = vadd.f32 %v1664, %v5288
        %v5321 = vadd.f32 %v1667, %v5289
        %v5322 = vadd.f32 %v1672, %v5290
        %v5323 = vadd.f32 %v1675, %v5291
        %s5324 = scalar_lea.vmem [#allocation8], 576
        %v5325 = vld [vmem:[%s5324] sm:$0xf]
        %v5326 = vld [vmem:[%s5324 + $0x4] sm:$0xf]
        %v5327 = vld [vmem:[%s5324 + $0x8] sm:$0xf]
        %v5328 = vld [vmem:[%s5324 + $0xc] sm:$0xf]
        %v5329 = vld [vmem:[%s5324 + $0x10] sm:$0xf]
        %v5330 = vld [vmem:[%s5324 + $0x14] sm:$0xf]
        %v5331 = vld [vmem:[%s5324 + $0x18] sm:$0xf]
        %v5332 = vld [vmem:[%s5324 + $0x1c] sm:$0xf]
        %v5333 = vld [vmem:[%s5324 + $0x20] sm:$0xf]
        %v5334 = vld [vmem:[%s5324 + $0x24] sm:$0xf]
        %v5335 = vld [vmem:[%s5324 + $0x28] sm:$0xf]
        %v5336 = vld [vmem:[%s5324 + $0x2c] sm:$0xf]
        %v5337 = vld [vmem:[%s5324 + $0x30] sm:$0xf]
        %v5338 = vld [vmem:[%s5324 + $0x34] sm:$0xf]
        %v5339 = vld [vmem:[%s5324 + $0x38] sm:$0xf]
        %v5340 = vld [vmem:[%s5324 + $0x3c] sm:$0xf]
        %v5357 = vunpack.c.l.b16 %v5325
        %v5358 = vunpack.c.l.b16 %v5326
        %v5359 = vunpack.c.l.b16 %v5327
        %v5360 = vunpack.c.l.b16 %v5328
        %v5361 = vunpack.c.l.b16 %v5329
        %v5362 = vunpack.c.l.b16 %v5330
        %v5363 = vunpack.c.l.b16 %v5331
        %v5364 = vunpack.c.l.b16 %v5332
        %v5365 = vunpack.c.l.b16 %v5333
        %v5366 = vunpack.c.l.b16 %v5334
        %v5367 = vunpack.c.l.b16 %v5335
        %v5368 = vunpack.c.l.b16 %v5336
        %v5369 = vunpack.c.l.b16 %v5337
        %v5370 = vunpack.c.l.b16 %v5338
        %v5371 = vunpack.c.l.b16 %v5339
        %v5372 = vunpack.c.l.b16 %v5340
        %v5373 = vpack.c.b16 %v5358, %v5357
        %v5374 = vpack.c.b16 %v5360, %v5359
        %v5375 = vpack.c.b16 %v5362, %v5361
        %v5376 = vpack.c.b16 %v5364, %v5363
        %v5377 = vpack.c.b16 %v5366, %v5365
        %v5378 = vpack.c.b16 %v5368, %v5367
        %v5379 = vpack.c.b16 %v5370, %v5369
        %v5380 = vpack.c.b16 %v5372, %v5371
        %5389 = vmatprep.subr.bf16.mxu0 0
        %5390 = vmatpush1.bf16.msra.mxu0 %v5380
        %5391 = vmatprep.subr.bf16.mxu0 0
        %5392 = vmatpush1.bf16.msra.mxu0 %v5379
        %5393 = vmatprep.subr.bf16.mxu0 0
        %5394 = vmatpush1.bf16.msra.mxu0 %v5378
        %5395 = vmatprep.subr.bf16.mxu0 0
        %5396 = vmatpush1.bf16.msra.mxu0 %v5377
        %5397 = vmatprep.subr.bf16.mxu0 0
        %5398 = vmatpush1.bf16.msra.mxu0 %v5376
        %5399 = vmatprep.subr.bf16.mxu0 0
        %5400 = vmatpush1.bf16.msra.mxu0 %v5375
        %5401 = vmatprep.subr.bf16.mxu0 0
        %5402 = vmatpush1.bf16.msra.mxu0 %v5374
        %5403 = vmatprep.subr.bf16.mxu0 0
        %5404 = vmatpush1.bf16.msra.mxu0 %v5373
        %5405 = vmatprep.subr.bf16.mxu0 0
        %5406 = vmatpush2.bf16.msra.mxu0 0
        %5407 = vmatprep.subr.bf16.mxu0 0
        %5408 = vmatpush2.bf16.msra.mxu0 0
        %5409 = vmatprep.subr.bf16.mxu0 0
        %5410 = vmatpush2.bf16.msra.mxu0 0
        %5411 = vmatprep.subr.bf16.mxu0 0
        %5412 = vmatpush2.bf16.msra.mxu0 0
        %5413 = vmatprep.subr.bf16.mxu0 0
        %5414 = vmatpush2.bf16.msra.mxu0 0
        %5415 = vmatprep.subr.bf16.mxu0 0
        %5416 = vmatpush2.bf16.msra.mxu0 0
        %5417 = vmatprep.subr.bf16.mxu0 0
        %5418 = vmatpush2.bf16.msra.mxu0 0
        %5419 = vmatprep.subr.bf16.mxu0 0
        %5420 = vmatpush2.bf16.msra.mxu0 0
        %5421 = vmatprep.mubr.bf16.mxu0 0
        %5422 = vmatmul.mubr.bf16.gmra.mxu0 %v969
        %v5423 = vpop.f32.mrf.mxu0
        %v5424 = vadd.f32 0.0, %v5423
        %v5425 = vpop.f32.mrf.mxu0
        %v5426 = vpop.f32.mrf.mxu0
        %v5427 = vadd.f32 0.0, %v5426
        %v5428 = vpop.f32.mrf.mxu0
        %5429 = vmatprep.mubr.bf16.mxu0 0
        %5430 = vmatmul.mubr.bf16.gmra.mxu0 %v970
        %v5431 = vpop.f32.mrf.mxu0
        %v5432 = vadd.f32 0.0, %v5431
        %v5433 = vpop.f32.mrf.mxu0
        %v5434 = vpop.f32.mrf.mxu0
        %v5435 = vadd.f32 0.0, %v5434
        %v5436 = vpop.f32.mrf.mxu0
        %5437 = vmatprep.mubr.bf16.mxu0 0
        %5438 = vmatmul.mubr.bf16.gmra.mxu0 %v971
        %v5439 = vpop.f32.mrf.mxu0
        %v5440 = vadd.f32 0.0, %v5439
        %v5441 = vpop.f32.mrf.mxu0
        %v5442 = vpop.f32.mrf.mxu0
        %v5443 = vadd.f32 0.0, %v5442
        %v5444 = vpop.f32.mrf.mxu0
        %5445 = vmatprep.mubr.bf16.mxu0 0
        %5446 = vmatmul.mubr.bf16.gmra.mxu0 %v972
        %v5447 = vpop.f32.mrf.mxu0
        %v5448 = vadd.f32 0.0, %v5447
        %v5449 = vpop.f32.mrf.mxu0
        %v5450 = vpop.f32.mrf.mxu0
        %v5451 = vadd.f32 0.0, %v5450
        %v5452 = vpop.f32.mrf.mxu0
        %5453 = vmatprep.mubr.bf16.mxu0 0
        %5454 = vmatmul.mubr.bf16.gmra.mxu0 %v973
        %v5455 = vpop.f32.mrf.mxu0
        %v5456 = vadd.f32 0.0, %v5455
        %v5457 = vpop.f32.mrf.mxu0
        %v5458 = vpop.f32.mrf.mxu0
        %v5459 = vadd.f32 0.0, %v5458
        %v5460 = vpop.f32.mrf.mxu0
        %5461 = vmatprep.mubr.bf16.mxu0 0
        %5462 = vmatmul.mubr.bf16.gmra.mxu0 %v974
        %v5463 = vpop.f32.mrf.mxu0
        %v5464 = vadd.f32 0.0, %v5463
        %v5465 = vpop.f32.mrf.mxu0
        %v5466 = vpop.f32.mrf.mxu0
        %v5467 = vadd.f32 0.0, %v5466
        %v5468 = vpop.f32.mrf.mxu0
        %5469 = vmatprep.mubr.bf16.mxu0 0
        %5470 = vmatmul.mubr.bf16.gmra.mxu0 %v975
        %v5471 = vpop.f32.mrf.mxu0
        %v5472 = vadd.f32 0.0, %v5471
        %v5473 = vpop.f32.mrf.mxu0
        %v5474 = vpop.f32.mrf.mxu0
        %v5475 = vadd.f32 0.0, %v5474
        %v5476 = vpop.f32.mrf.mxu0
        %5477 = vmatprep.mubr.bf16.mxu0 0
        %5478 = vmatmul.mubr.bf16.gmra.mxu0 %v976
        %v5479 = vpop.f32.mrf.mxu0
        %v5480 = vadd.f32 0.0, %v5479
        %v5481 = vpop.f32.mrf.mxu0
        %v5482 = vpop.f32.mrf.mxu0
        %v5483 = vadd.f32 0.0, %v5482
        %v5484 = vpop.f32.mrf.mxu0
        %5485 = vmatprep.mubr.bf16.mxu0 0
        %5486 = vmatmul.mubr.bf16.gmra.mxu0 %v977
        %v5487 = vpop.f32.mrf.mxu0
        %v5488 = vadd.f32 0.0, %v5487
        %v5489 = vpop.f32.mrf.mxu0
        %v5490 = vpop.f32.mrf.mxu0
        %v5491 = vadd.f32 0.0, %v5490
        %v5492 = vpop.f32.mrf.mxu0
        %5493 = vmatprep.mubr.bf16.mxu0 0
        %5494 = vmatmul.mubr.bf16.gmra.mxu0 %v978
        %v5495 = vpop.f32.mrf.mxu0
        %v5496 = vadd.f32 0.0, %v5495
        %v5497 = vpop.f32.mrf.mxu0
        %v5498 = vpop.f32.mrf.mxu0
        %v5499 = vadd.f32 0.0, %v5498
        %v5500 = vpop.f32.mrf.mxu0
        %5501 = vmatprep.mubr.bf16.mxu0 0
        %5502 = vmatmul.mubr.bf16.gmra.mxu0 %v979
        %v5503 = vpop.f32.mrf.mxu0
        %v5504 = vadd.f32 0.0, %v5503
        %v5505 = vpop.f32.mrf.mxu0
        %v5506 = vpop.f32.mrf.mxu0
        %v5507 = vadd.f32 0.0, %v5506
        %v5508 = vpop.f32.mrf.mxu0
        %5509 = vmatprep.mubr.bf16.mxu0 0
        %5510 = vmatmul.mubr.bf16.gmra.mxu0 %v980
        %v5511 = vpop.f32.mrf.mxu0
        %v5512 = vadd.f32 0.0, %v5511
        %v5513 = vpop.f32.mrf.mxu0
        %v5514 = vpop.f32.mrf.mxu0
        %v5515 = vadd.f32 0.0, %v5514
        %v5516 = vpop.f32.mrf.mxu0
        %5517 = vmatprep.mubr.bf16.mxu0 0
        %5518 = vmatmul.mubr.bf16.gmra.mxu0 %v981
        %v5519 = vpop.f32.mrf.mxu0
        %v5520 = vadd.f32 0.0, %v5519
        %v5521 = vpop.f32.mrf.mxu0
        %v5522 = vpop.f32.mrf.mxu0
        %v5523 = vadd.f32 0.0, %v5522
        %v5524 = vpop.f32.mrf.mxu0
        %5525 = vmatprep.mubr.bf16.mxu0 0
        %5526 = vmatmul.mubr.bf16.gmra.mxu0 %v982
        %v5527 = vpop.f32.mrf.mxu0
        %v5528 = vadd.f32 0.0, %v5527
        %v5529 = vpop.f32.mrf.mxu0
        %v5530 = vpop.f32.mrf.mxu0
        %v5531 = vadd.f32 0.0, %v5530
        %v5532 = vpop.f32.mrf.mxu0
        %5533 = vmatprep.mubr.bf16.mxu0 0
        %5534 = vmatmul.mubr.bf16.gmra.mxu0 %v983
        %v5535 = vpop.f32.mrf.mxu0
        %v5536 = vadd.f32 0.0, %v5535
        %v5537 = vpop.f32.mrf.mxu0
        %v5538 = vpop.f32.mrf.mxu0
        %v5539 = vadd.f32 0.0, %v5538
        %v5540 = vpop.f32.mrf.mxu0
        %5541 = vmatprep.mubr.bf16.mxu0 0
        %5542 = vmatmul.mubr.bf16.gmra.mxu0 %v984
        %v5543 = vpop.f32.mrf.mxu0
        %v5544 = vadd.f32 0.0, %v5543
        %v5545 = vpop.f32.mrf.mxu0
        %v5546 = vpop.f32.mrf.mxu0
        %v5547 = vadd.f32 0.0, %v5546
        %v5548 = vpop.f32.mrf.mxu0
        %5549 = vdwg.mxu0
        %v5550 = vsel %vm5164, %v5456, 0.0
        %v5551 = vsel %vm5165, %v5459, 0.0
        %v5552 = vsel %vm5166, %v5464, 0.0
        %v5553 = vsel %vm5167, %v5467, 0.0
        %v5554 = vsel %vm5168, %v5472, 0.0
        %v5555 = vsel %vm5169, %v5475, 0.0
        %v5556 = vsel %vm5170, %v5480, 0.0
        %v5557 = vsel %vm5171, %v5483, 0.0
        %v5558 = vsel %vm5172, %v5488, 0.0
        %v5559 = vsel %vm5173, %v5491, 0.0
        %v5560 = vsel %vm5174, %v5496, 0.0
        %v5561 = vsel %vm5175, %v5499, 0.0
        %v5562 = vsel %vm5176, %v5504, 0.0
        %v5563 = vsel %vm5177, %v5507, 0.0
        %v5564 = vsel %vm5178, %v5512, 0.0
        %v5565 = vsel %vm5179, %v5515, 0.0
        %v5566 = vsel %vm5180, %v5520, 0.0
        %v5567 = vsel %vm5181, %v5523, 0.0
        %v5568 = vsel %vm5182, %v5528, 0.0
        %v5569 = vsel %vm5183, %v5531, 0.0
        %v5570 = vsel %vm5184, %v5536, 0.0
        %v5571 = vsel %vm5185, %v5539, 0.0
        %v5572 = vsel %vm5186, %v5544, 0.0
        %v5573 = vsel %vm5187, %v5547, 0.0
        %v5574 = vsel %vm5188, %v5424, 0.0
        %v5575 = vsel %vm5189, %v5427, 0.0
        %v5576 = vsel %vm5190, %v5432, 0.0
        %v5577 = vsel %vm5191, %v5435, 0.0
        %v5578 = vsel %vm5192, %v5440, 0.0
        %v5579 = vsel %vm5193, %v5443, 0.0
        %v5580 = vsel %vm5194, %v5448, 0.0
        %v5581 = vsel %vm5195, %v5451, 0.0
        %v5582 = vadd.f32 %v5292, %v5550
        %v5583 = vadd.f32 %v5293, %v5551
        %v5584 = vadd.f32 %v5294, %v5552
        %v5585 = vadd.f32 %v5295, %v5553
        %v5586 = vadd.f32 %v5296, %v5554
        %v5587 = vadd.f32 %v5297, %v5555
        %v5588 = vadd.f32 %v5298, %v5556
        %v5589 = vadd.f32 %v5299, %v5557
        %v5590 = vadd.f32 %v5300, %v5558
        %v5591 = vadd.f32 %v5301, %v5559
        %v5592 = vadd.f32 %v5302, %v5560
        %v5593 = vadd.f32 %v5303, %v5561
        %v5594 = vadd.f32 %v5304, %v5562
        %v5595 = vadd.f32 %v5305, %v5563
        %v5596 = vadd.f32 %v5306, %v5564
        %v5597 = vadd.f32 %v5307, %v5565
        %v5598 = vadd.f32 %v5308, %v5566
        %v5599 = vadd.f32 %v5309, %v5567
        %v5600 = vadd.f32 %v5310, %v5568
        %v5601 = vadd.f32 %v5311, %v5569
        %v5602 = vadd.f32 %v5312, %v5570
        %v5603 = vadd.f32 %v5313, %v5571
        %v5604 = vadd.f32 %v5314, %v5572
        %v5605 = vadd.f32 %v5315, %v5573
        %v5606 = vadd.f32 %v5316, %v5574
        %v5607 = vadd.f32 %v5317, %v5575
        %v5608 = vadd.f32 %v5318, %v5576
        %v5609 = vadd.f32 %v5319, %v5577
        %v5610 = vadd.f32 %v5320, %v5578
        %v5611 = vadd.f32 %v5321, %v5579
        %v5612 = vadd.f32 %v5322, %v5580
        %v5613 = vadd.f32 %v5323, %v5581
        %s5614 = scalar_lea.vmem [#allocation8], 640
        %v5615 = vld [vmem:[%s5614] sm:$0xf]
        %v5616 = vld [vmem:[%s5614 + $0x4] sm:$0xf]
        %v5617 = vld [vmem:[%s5614 + $0x8] sm:$0xf]
        %v5618 = vld [vmem:[%s5614 + $0xc] sm:$0xf]
        %v5619 = vld [vmem:[%s5614 + $0x10] sm:$0xf]
        %v5620 = vld [vmem:[%s5614 + $0x14] sm:$0xf]
        %v5621 = vld [vmem:[%s5614 + $0x18] sm:$0xf]
        %v5622 = vld [vmem:[%s5614 + $0x1c] sm:$0xf]
        %v5623 = vld [vmem:[%s5614 + $0x20] sm:$0xf]
        %v5624 = vld [vmem:[%s5614 + $0x24] sm:$0xf]
        %v5625 = vld [vmem:[%s5614 + $0x28] sm:$0xf]
        %v5626 = vld [vmem:[%s5614 + $0x2c] sm:$0xf]
        %v5627 = vld [vmem:[%s5614 + $0x30] sm:$0xf]
        %v5628 = vld [vmem:[%s5614 + $0x34] sm:$0xf]
        %v5629 = vld [vmem:[%s5614 + $0x38] sm:$0xf]
        %v5630 = vld [vmem:[%s5614 + $0x3c] sm:$0xf]
        %v5647 = vunpack.c.l.b16 %v5615
        %v5648 = vunpack.c.l.b16 %v5616
        %v5649 = vunpack.c.l.b16 %v5617
        %v5650 = vunpack.c.l.b16 %v5618
        %v5651 = vunpack.c.l.b16 %v5619
        %v5652 = vunpack.c.l.b16 %v5620
        %v5653 = vunpack.c.l.b16 %v5621
        %v5654 = vunpack.c.l.b16 %v5622
        %v5655 = vunpack.c.l.b16 %v5623
        %v5656 = vunpack.c.l.b16 %v5624
        %v5657 = vunpack.c.l.b16 %v5625
        %v5658 = vunpack.c.l.b16 %v5626
        %v5659 = vunpack.c.l.b16 %v5627
        %v5660 = vunpack.c.l.b16 %v5628
        %v5661 = vunpack.c.l.b16 %v5629
        %v5662 = vunpack.c.l.b16 %v5630
        %v5663 = vpack.c.b16 %v5648, %v5647
        %v5664 = vpack.c.b16 %v5650, %v5649
        %v5665 = vpack.c.b16 %v5652, %v5651
        %v5666 = vpack.c.b16 %v5654, %v5653
        %v5667 = vpack.c.b16 %v5656, %v5655
        %v5668 = vpack.c.b16 %v5658, %v5657
        %v5669 = vpack.c.b16 %v5660, %v5659
        %v5670 = vpack.c.b16 %v5662, %v5661
        %5679 = vmatprep.subr.bf16.mxu0 0
        %5680 = vmatpush1.bf16.msra.mxu0 %v5670
        %5681 = vmatprep.subr.bf16.mxu0 0
        %5682 = vmatpush1.bf16.msra.mxu0 %v5669
        %5683 = vmatprep.subr.bf16.mxu0 0
        %5684 = vmatpush1.bf16.msra.mxu0 %v5668
        %5685 = vmatprep.subr.bf16.mxu0 0
        %5686 = vmatpush1.bf16.msra.mxu0 %v5667
        %5687 = vmatprep.subr.bf16.mxu0 0
        %5688 = vmatpush1.bf16.msra.mxu0 %v5666
        %5689 = vmatprep.subr.bf16.mxu0 0
        %5690 = vmatpush1.bf16.msra.mxu0 %v5665
        %5691 = vmatprep.subr.bf16.mxu0 0
        %5692 = vmatpush1.bf16.msra.mxu0 %v5664
        %5693 = vmatprep.subr.bf16.mxu0 0
        %5694 = vmatpush1.bf16.msra.mxu0 %v5663
        %5695 = vmatprep.subr.bf16.mxu0 0
        %5696 = vmatpush2.bf16.msra.mxu0 0
        %5697 = vmatprep.subr.bf16.mxu0 0
        %5698 = vmatpush2.bf16.msra.mxu0 0
        %5699 = vmatprep.subr.bf16.mxu0 0
        %5700 = vmatpush2.bf16.msra.mxu0 0
        %5701 = vmatprep.subr.bf16.mxu0 0
        %5702 = vmatpush2.bf16.msra.mxu0 0
        %5703 = vmatprep.subr.bf16.mxu0 0
        %5704 = vmatpush2.bf16.msra.mxu0 0
        %5705 = vmatprep.subr.bf16.mxu0 0
        %5706 = vmatpush2.bf16.msra.mxu0 0
        %5707 = vmatprep.subr.bf16.mxu0 0
        %5708 = vmatpush2.bf16.msra.mxu0 0
        %5709 = vmatprep.subr.bf16.mxu0 0
        %5710 = vmatpush2.bf16.msra.mxu0 0
        %5711 = vmatprep.mubr.bf16.mxu0 0
        %5712 = vmatmul.mubr.bf16.gmra.mxu0 %v969
        %v5713 = vpop.f32.mrf.mxu0
        %v5714 = vadd.f32 0.0, %v5713
        %v5715 = vpop.f32.mrf.mxu0
        %v5716 = vpop.f32.mrf.mxu0
        %v5717 = vadd.f32 0.0, %v5716
        %v5718 = vpop.f32.mrf.mxu0
        %5719 = vmatprep.mubr.bf16.mxu0 0
        %5720 = vmatmul.mubr.bf16.gmra.mxu0 %v970
        %v5721 = vpop.f32.mrf.mxu0
        %v5722 = vadd.f32 0.0, %v5721
        %v5723 = vpop.f32.mrf.mxu0
        %v5724 = vpop.f32.mrf.mxu0
        %v5725 = vadd.f32 0.0, %v5724
        %v5726 = vpop.f32.mrf.mxu0
        %5727 = vmatprep.mubr.bf16.mxu0 0
        %5728 = vmatmul.mubr.bf16.gmra.mxu0 %v971
        %v5729 = vpop.f32.mrf.mxu0
        %v5730 = vadd.f32 0.0, %v5729
        %v5731 = vpop.f32.mrf.mxu0
        %v5732 = vpop.f32.mrf.mxu0
        %v5733 = vadd.f32 0.0, %v5732
        %v5734 = vpop.f32.mrf.mxu0
        %5735 = vmatprep.mubr.bf16.mxu0 0
        %5736 = vmatmul.mubr.bf16.gmra.mxu0 %v972
        %v5737 = vpop.f32.mrf.mxu0
        %v5738 = vadd.f32 0.0, %v5737
        %v5739 = vpop.f32.mrf.mxu0
        %v5740 = vpop.f32.mrf.mxu0
        %v5741 = vadd.f32 0.0, %v5740
        %v5742 = vpop.f32.mrf.mxu0
        %5743 = vmatprep.mubr.bf16.mxu0 0
        %5744 = vmatmul.mubr.bf16.gmra.mxu0 %v973
        %v5745 = vpop.f32.mrf.mxu0
        %v5746 = vadd.f32 0.0, %v5745
        %v5747 = vpop.f32.mrf.mxu0
        %v5748 = vpop.f32.mrf.mxu0
        %v5749 = vadd.f32 0.0, %v5748
        %v5750 = vpop.f32.mrf.mxu0
        %5751 = vmatprep.mubr.bf16.mxu0 0
        %5752 = vmatmul.mubr.bf16.gmra.mxu0 %v974
        %v5753 = vpop.f32.mrf.mxu0
        %v5754 = vadd.f32 0.0, %v5753
        %v5755 = vpop.f32.mrf.mxu0
        %v5756 = vpop.f32.mrf.mxu0
        %v5757 = vadd.f32 0.0, %v5756
        %v5758 = vpop.f32.mrf.mxu0
        %5759 = vmatprep.mubr.bf16.mxu0 0
        %5760 = vmatmul.mubr.bf16.gmra.mxu0 %v975
        %v5761 = vpop.f32.mrf.mxu0
        %v5762 = vadd.f32 0.0, %v5761
        %v5763 = vpop.f32.mrf.mxu0
        %v5764 = vpop.f32.mrf.mxu0
        %v5765 = vadd.f32 0.0, %v5764
        %v5766 = vpop.f32.mrf.mxu0
        %5767 = vmatprep.mubr.bf16.mxu0 0
        %5768 = vmatmul.mubr.bf16.gmra.mxu0 %v976
        %v5769 = vpop.f32.mrf.mxu0
        %v5770 = vadd.f32 0.0, %v5769
        %v5771 = vpop.f32.mrf.mxu0
        %v5772 = vpop.f32.mrf.mxu0
        %v5773 = vadd.f32 0.0, %v5772
        %v5774 = vpop.f32.mrf.mxu0
        %5775 = vmatprep.mubr.bf16.mxu0 0
        %5776 = vmatmul.mubr.bf16.gmra.mxu0 %v977
        %v5777 = vpop.f32.mrf.mxu0
        %v5778 = vadd.f32 0.0, %v5777
        %v5779 = vpop.f32.mrf.mxu0
        %v5780 = vpop.f32.mrf.mxu0
        %v5781 = vadd.f32 0.0, %v5780
        %v5782 = vpop.f32.mrf.mxu0
        %5783 = vmatprep.mubr.bf16.mxu0 0
        %5784 = vmatmul.mubr.bf16.gmra.mxu0 %v978
        %v5785 = vpop.f32.mrf.mxu0
        %v5786 = vadd.f32 0.0, %v5785
        %v5787 = vpop.f32.mrf.mxu0
        %v5788 = vpop.f32.mrf.mxu0
        %v5789 = vadd.f32 0.0, %v5788
        %v5790 = vpop.f32.mrf.mxu0
        %5791 = vmatprep.mubr.bf16.mxu0 0
        %5792 = vmatmul.mubr.bf16.gmra.mxu0 %v979
        %v5793 = vpop.f32.mrf.mxu0
        %v5794 = vadd.f32 0.0, %v5793
        %v5795 = vpop.f32.mrf.mxu0
        %v5796 = vpop.f32.mrf.mxu0
        %v5797 = vadd.f32 0.0, %v5796
        %v5798 = vpop.f32.mrf.mxu0
        %5799 = vmatprep.mubr.bf16.mxu0 0
        %5800 = vmatmul.mubr.bf16.gmra.mxu0 %v980
        %v5801 = vpop.f32.mrf.mxu0
        %v5802 = vadd.f32 0.0, %v5801
        %v5803 = vpop.f32.mrf.mxu0
        %v5804 = vpop.f32.mrf.mxu0
        %v5805 = vadd.f32 0.0, %v5804
        %v5806 = vpop.f32.mrf.mxu0
        %5807 = vmatprep.mubr.bf16.mxu0 0
        %5808 = vmatmul.mubr.bf16.gmra.mxu0 %v981
        %v5809 = vpop.f32.mrf.mxu0
        %v5810 = vadd.f32 0.0, %v5809
        %v5811 = vpop.f32.mrf.mxu0
        %v5812 = vpop.f32.mrf.mxu0
        %v5813 = vadd.f32 0.0, %v5812
        %v5814 = vpop.f32.mrf.mxu0
        %5815 = vmatprep.mubr.bf16.mxu0 0
        %5816 = vmatmul.mubr.bf16.gmra.mxu0 %v982
        %v5817 = vpop.f32.mrf.mxu0
        %v5818 = vadd.f32 0.0, %v5817
        %v5819 = vpop.f32.mrf.mxu0
        %v5820 = vpop.f32.mrf.mxu0
        %v5821 = vadd.f32 0.0, %v5820
        %v5822 = vpop.f32.mrf.mxu0
        %5823 = vmatprep.mubr.bf16.mxu0 0
        %5824 = vmatmul.mubr.bf16.gmra.mxu0 %v983
        %v5825 = vpop.f32.mrf.mxu0
        %v5826 = vadd.f32 0.0, %v5825
        %v5827 = vpop.f32.mrf.mxu0
        %v5828 = vpop.f32.mrf.mxu0
        %v5829 = vadd.f32 0.0, %v5828
        %v5830 = vpop.f32.mrf.mxu0
        %5831 = vmatprep.mubr.bf16.mxu0 0
        %5832 = vmatmul.mubr.bf16.gmra.mxu0 %v984
        %v5833 = vpop.f32.mrf.mxu0
        %v5834 = vadd.f32 0.0, %v5833
        %v5835 = vpop.f32.mrf.mxu0
        %v5836 = vpop.f32.mrf.mxu0
        %v5837 = vadd.f32 0.0, %v5836
        %v5838 = vpop.f32.mrf.mxu0
        %5839 = vdwg.mxu0
        %v5840 = vrot.slane %v5714, 4
        %v5841 = vrot.slane %v5717, 4
        %v5842 = vrot.slane %v5722, 4
        %v5843 = vrot.slane %v5725, 4
        %v5844 = vrot.slane %v5730, 4
        %v5845 = vrot.slane %v5733, 4
        %v5846 = vrot.slane %v5738, 4
        %v5847 = vrot.slane %v5741, 4
        %v5848 = vrot.slane %v5746, 4
        %v5849 = vrot.slane %v5749, 4
        %v5850 = vrot.slane %v5754, 4
        %v5851 = vrot.slane %v5757, 4
        %v5852 = vrot.slane %v5762, 4
        %v5853 = vrot.slane %v5765, 4
        %v5854 = vrot.slane %v5770, 4
        %v5855 = vrot.slane %v5773, 4
        %v5856 = vrot.slane %v5778, 4
        %v5857 = vrot.slane %v5781, 4
        %v5858 = vrot.slane %v5786, 4
        %v5859 = vrot.slane %v5789, 4
        %v5860 = vrot.slane %v5794, 4
        %v5861 = vrot.slane %v5797, 4
        %v5862 = vrot.slane %v5802, 4
        %v5863 = vrot.slane %v5805, 4
        %v5864 = vrot.slane %v5810, 4
        %v5865 = vrot.slane %v5813, 4
        %v5866 = vrot.slane %v5818, 4
        %v5867 = vrot.slane %v5821, 4
        %v5868 = vrot.slane %v5826, 4
        %v5869 = vrot.slane %v5829, 4
        %v5870 = vrot.slane %v5834, 4
        %v5871 = vrot.slane %v5837, 4
        %v5872 = vsel %vm5131, %v5870, %v5871
        %v5873 = vsel %vm5131, %v5869, %v5870
        %v5874 = vsel %vm5131, %v5868, %v5869
        %v5875 = vsel %vm5131, %v5867, %v5868
        %v5876 = vsel %vm5131, %v5866, %v5867
        %v5877 = vsel %vm5131, %v5865, %v5866
        %v5878 = vsel %vm5131, %v5864, %v5865
        %v5879 = vsel %vm5131, %v5863, %v5864
        %v5880 = vsel %vm5131, %v5862, %v5863
        %v5881 = vsel %vm5131, %v5861, %v5862
        %v5882 = vsel %vm5131, %v5860, %v5861
        %v5883 = vsel %vm5131, %v5859, %v5860
        %v5884 = vsel %vm5131, %v5858, %v5859
        %v5885 = vsel %vm5131, %v5857, %v5858
        %v5886 = vsel %vm5131, %v5856, %v5857
        %v5887 = vsel %vm5131, %v5855, %v5856
        %v5888 = vsel %vm5131, %v5854, %v5855
        %v5889 = vsel %vm5131, %v5853, %v5854
        %v5890 = vsel %vm5131, %v5852, %v5853
        %v5891 = vsel %vm5131, %v5851, %v5852
        %v5892 = vsel %vm5131, %v5850, %v5851
        %v5893 = vsel %vm5131, %v5849, %v5850
        %v5894 = vsel %vm5131, %v5848, %v5849
        %v5895 = vsel %vm5131, %v5847, %v5848
        %v5896 = vsel %vm5131, %v5846, %v5847
        %v5897 = vsel %vm5131, %v5845, %v5846
        %v5898 = vsel %vm5131, %v5844, %v5845
        %v5899 = vsel %vm5131, %v5843, %v5844
        %v5900 = vsel %vm5131, %v5842, %v5843
        %v5901 = vsel %vm5131, %v5841, %v5842
        %v5902 = vsel %vm5131, %v5840, %v5841
        %v5903 = vsel %vm5131, %v5871, %v5840
        %vm5904 = vcmp.lt.s32.totalorder %v522, 4
        %vm5905 = vcmp.lt.s32.totalorder %v523, 4
        %vm5906 = vcmp.lt.s32.totalorder %v524, 4
        %vm5907 = vcmp.lt.s32.totalorder %v525, 4
        %vm5908 = vcmp.lt.s32.totalorder %v526, 4
        %vm5909 = vcmp.lt.s32.totalorder %v527, 4
        %vm5910 = vcmp.lt.s32.totalorder %v528, 4
        %vm5911 = vcmp.lt.s32.totalorder %v529, 4
        %vm5912 = vcmp.lt.s32.totalorder %v530, 4
        %vm5913 = vcmp.lt.s32.totalorder %v531, 4
        %vm5914 = vcmp.lt.s32.totalorder %v532, 4
        %vm5915 = vcmp.lt.s32.totalorder %v533, 4
        %vm5916 = vcmp.lt.s32.totalorder %v534, 4
        %vm5917 = vcmp.lt.s32.totalorder %v535, 4
        %vm5918 = vcmp.lt.s32.totalorder %v536, 4
        %vm5919 = vcmp.lt.s32.totalorder %v537, 4
        %vm5920 = vcmp.lt.s32.totalorder %v538, 4
        %vm5921 = vcmp.lt.s32.totalorder %v539, 4
        %vm5922 = vcmp.lt.s32.totalorder %v540, 4
        %vm5923 = vcmp.lt.s32.totalorder %v541, 4
        %vm5924 = vcmp.lt.s32.totalorder %v542, 4
        %vm5925 = vcmp.lt.s32.totalorder %v543, 4
        %vm5926 = vcmp.lt.s32.totalorder %v544, 4
        %vm5927 = vcmp.lt.s32.totalorder %v545, 4
        %vm5928 = vcmp.lt.s32.totalorder %v546, 4
        %vm5929 = vcmp.lt.s32.totalorder %v547, 4
        %vm5930 = vcmp.lt.s32.totalorder %v548, 4
        %vm5931 = vcmp.lt.s32.totalorder %v549, 4
        %vm5932 = vcmp.lt.s32.totalorder %v550, 4
        %vm5933 = vcmp.lt.s32.totalorder %v551, 4
        %vm5934 = vcmp.lt.s32.totalorder %v552, 4
        %vm5935 = vcmp.lt.s32.totalorder %v553, 4
        %vm5936 = vmand %vm5164, %vm5904
        %vm5937 = vmand %vm5165, %vm5905
        %vm5938 = vmand %vm5166, %vm5906
        %vm5939 = vmand %vm5167, %vm5907
        %vm5940 = vmand %vm5168, %vm5908
        %vm5941 = vmand %vm5169, %vm5909
        %vm5942 = vmand %vm5170, %vm5910
        %vm5943 = vmand %vm5171, %vm5911
        %vm5944 = vmand %vm5172, %vm5912
        %vm5945 = vmand %vm5173, %vm5913
        %vm5946 = vmand %vm5174, %vm5914
        %vm5947 = vmand %vm5175, %vm5915
        %vm5948 = vmand %vm5176, %vm5916
        %vm5949 = vmand %vm5177, %vm5917
        %vm5950 = vmand %vm5178, %vm5918
        %vm5951 = vmand %vm5179, %vm5919
        %vm5952 = vmand %vm5180, %vm5920
        %vm5953 = vmand %vm5181, %vm5921
        %vm5954 = vmand %vm5182, %vm5922
        %vm5955 = vmand %vm5183, %vm5923
        %vm5956 = vmand %vm5184, %vm5924
        %vm5957 = vmand %vm5185, %vm5925
        %vm5958 = vmand %vm5186, %vm5926
        %vm5959 = vmand %vm5187, %vm5927
        %vm5960 = vmand %vm5188, %vm5928
        %vm5961 = vmand %vm5189, %vm5929
        %vm5962 = vmand %vm5190, %vm5930
        %vm5963 = vmand %vm5191, %vm5931
        %vm5964 = vmand %vm5192, %vm5932
        %vm5965 = vmand %vm5193, %vm5933
        %vm5966 = vmand %vm5194, %vm5934
        %vm5967 = vmand %vm5195, %vm5935
        %v5968 = vsel %vm5936, %v5893, 0.0
        %v5969 = vsel %vm5937, %v5892, 0.0
        %v5970 = vsel %vm5938, %v5891, 0.0
        %v5971 = vsel %vm5939, %v5890, 0.0
        %v5972 = vsel %vm5940, %v5889, 0.0
        %v5973 = vsel %vm5941, %v5888, 0.0
        %v5974 = vsel %vm5942, %v5887, 0.0
        %v5975 = vsel %vm5943, %v5886, 0.0
        %v5976 = vsel %vm5944, %v5885, 0.0
        %v5977 = vsel %vm5945, %v5884, 0.0
        %v5978 = vsel %vm5946, %v5883, 0.0
        %v5979 = vsel %vm5947, %v5882, 0.0
        %v5980 = vsel %vm5948, %v5881, 0.0
        %v5981 = vsel %vm5949, %v5880, 0.0
        %v5982 = vsel %vm5950, %v5879, 0.0
        %v5983 = vsel %vm5951, %v5878, 0.0
        %v5984 = vsel %vm5952, %v5877, 0.0
        %v5985 = vsel %vm5953, %v5876, 0.0
        %v5986 = vsel %vm5954, %v5875, 0.0
        %v5987 = vsel %vm5955, %v5874, 0.0
        %v5988 = vsel %vm5956, %v5873, 0.0
        %v5989 = vsel %vm5957, %v5872, 0.0
        %v5990 = vsel %vm5958, %v5903, 0.0
        %v5991 = vsel %vm5959, %v5902, 0.0
        %v5992 = vsel %vm5960, %v5901, 0.0
        %v5993 = vsel %vm5961, %v5900, 0.0
        %v5994 = vsel %vm5962, %v5899, 0.0
        %v5995 = vsel %vm5963, %v5898, 0.0
        %v5996 = vsel %vm5964, %v5897, 0.0
        %v5997 = vsel %vm5965, %v5896, 0.0
        %v5998 = vsel %vm5966, %v5895, 0.0
        %v5999 = vsel %vm5967, %v5894, 0.0
        %v6000 = vadd.f32 %v5582, %v5968
        %v6001 = vadd.f32 %v5583, %v5969
        %v6002 = vadd.f32 %v5584, %v5970
        %v6003 = vadd.f32 %v5585, %v5971
        %v6004 = vadd.f32 %v5586, %v5972
        %v6005 = vadd.f32 %v5587, %v5973
        %v6006 = vadd.f32 %v5588, %v5974
        %v6007 = vadd.f32 %v5589, %v5975
        %v6008 = vadd.f32 %v5590, %v5976
        %v6009 = vadd.f32 %v5591, %v5977
        %v6010 = vadd.f32 %v5592, %v5978
        %v6011 = vadd.f32 %v5593, %v5979
        %v6012 = vadd.f32 %v5594, %v5980
        %v6013 = vadd.f32 %v5595, %v5981
        %v6014 = vadd.f32 %v5596, %v5982
        %v6015 = vadd.f32 %v5597, %v5983
        %v6016 = vadd.f32 %v5598, %v5984
        %v6017 = vadd.f32 %v5599, %v5985
        %v6018 = vadd.f32 %v5600, %v5986
        %v6019 = vadd.f32 %v5601, %v5987
        %v6020 = vadd.f32 %v5602, %v5988
        %v6021 = vadd.f32 %v5603, %v5989
        %v6022 = vadd.f32 %v5604, %v5990
        %v6023 = vadd.f32 %v5605, %v5991
        %v6024 = vadd.f32 %v5606, %v5992
        %v6025 = vadd.f32 %v5607, %v5993
        %v6026 = vadd.f32 %v5608, %v5994
        %v6027 = vadd.f32 %v5609, %v5995
        %v6028 = vadd.f32 %v5610, %v5996
        %v6029 = vadd.f32 %v5611, %v5997
        %v6030 = vadd.f32 %v5612, %v5998
        %v6031 = vadd.f32 %v5613, %v5999
        %s6032 = scalar_lea.vmem [#allocation8], 704
        %v6033 = vld [vmem:[%s6032] sm:$0xf]
        %v6034 = vld [vmem:[%s6032 + $0x4] sm:$0xf]
        %v6035 = vld [vmem:[%s6032 + $0x8] sm:$0xf]
        %v6036 = vld [vmem:[%s6032 + $0xc] sm:$0xf]
        %v6037 = vld [vmem:[%s6032 + $0x10] sm:$0xf]
        %v6038 = vld [vmem:[%s6032 + $0x14] sm:$0xf]
        %v6039 = vld [vmem:[%s6032 + $0x18] sm:$0xf]
        %v6040 = vld [vmem:[%s6032 + $0x1c] sm:$0xf]
        %v6041 = vld [vmem:[%s6032 + $0x20] sm:$0xf]
        %v6042 = vld [vmem:[%s6032 + $0x24] sm:$0xf]
        %v6043 = vld [vmem:[%s6032 + $0x28] sm:$0xf]
        %v6044 = vld [vmem:[%s6032 + $0x2c] sm:$0xf]
        %v6045 = vld [vmem:[%s6032 + $0x30] sm:$0xf]
        %v6046 = vld [vmem:[%s6032 + $0x34] sm:$0xf]
        %v6047 = vld [vmem:[%s6032 + $0x38] sm:$0xf]
        %v6048 = vld [vmem:[%s6032 + $0x3c] sm:$0xf]
        %v6065 = vunpack.c.l.b16 %v6033
        %v6066 = vunpack.c.l.b16 %v6034
        %v6067 = vunpack.c.l.b16 %v6035
        %v6068 = vunpack.c.l.b16 %v6036
        %v6069 = vunpack.c.l.b16 %v6037
        %v6070 = vunpack.c.l.b16 %v6038
        %v6071 = vunpack.c.l.b16 %v6039
        %v6072 = vunpack.c.l.b16 %v6040
        %v6073 = vunpack.c.l.b16 %v6041
        %v6074 = vunpack.c.l.b16 %v6042
        %v6075 = vunpack.c.l.b16 %v6043
        %v6076 = vunpack.c.l.b16 %v6044
        %v6077 = vunpack.c.l.b16 %v6045
        %v6078 = vunpack.c.l.b16 %v6046
        %v6079 = vunpack.c.l.b16 %v6047
        %v6080 = vunpack.c.l.b16 %v6048
        %v6081 = vpack.c.b16 %v6066, %v6065
        %v6082 = vpack.c.b16 %v6068, %v6067
        %v6083 = vpack.c.b16 %v6070, %v6069
        %v6084 = vpack.c.b16 %v6072, %v6071
        %v6085 = vpack.c.b16 %v6074, %v6073
        %v6086 = vpack.c.b16 %v6076, %v6075
        %v6087 = vpack.c.b16 %v6078, %v6077
        %v6088 = vpack.c.b16 %v6080, %v6079
        %6097 = vmatprep.subr.bf16.mxu0 0
        %6098 = vmatpush1.bf16.msra.mxu0 %v6088
        %6099 = vmatprep.subr.bf16.mxu0 0
        %6100 = vmatpush1.bf16.msra.mxu0 %v6087
        %6101 = vmatprep.subr.bf16.mxu0 0
        %6102 = vmatpush1.bf16.msra.mxu0 %v6086
        %6103 = vmatprep.subr.bf16.mxu0 0
        %6104 = vmatpush1.bf16.msra.mxu0 %v6085
        %6105 = vmatprep.subr.bf16.mxu0 0
        %6106 = vmatpush1.bf16.msra.mxu0 %v6084
        %6107 = vmatprep.subr.bf16.mxu0 0
        %6108 = vmatpush1.bf16.msra.mxu0 %v6083
        %6109 = vmatprep.subr.bf16.mxu0 0
        %6110 = vmatpush1.bf16.msra.mxu0 %v6082
        %6111 = vmatprep.subr.bf16.mxu0 0
        %6112 = vmatpush1.bf16.msra.mxu0 %v6081
        %6113 = vmatprep.subr.bf16.mxu0 0
        %6114 = vmatpush2.bf16.msra.mxu0 0
        %6115 = vmatprep.subr.bf16.mxu0 0
        %6116 = vmatpush2.bf16.msra.mxu0 0
        %6117 = vmatprep.subr.bf16.mxu0 0
        %6118 = vmatpush2.bf16.msra.mxu0 0
        %6119 = vmatprep.subr.bf16.mxu0 0
        %6120 = vmatpush2.bf16.msra.mxu0 0
        %6121 = vmatprep.subr.bf16.mxu0 0
        %6122 = vmatpush2.bf16.msra.mxu0 0
        %6123 = vmatprep.subr.bf16.mxu0 0
        %6124 = vmatpush2.bf16.msra.mxu0 0
        %6125 = vmatprep.subr.bf16.mxu0 0
        %6126 = vmatpush2.bf16.msra.mxu0 0
        %6127 = vmatprep.subr.bf16.mxu0 0
        %6128 = vmatpush2.bf16.msra.mxu0 0
        %6129 = vmatprep.mubr.bf16.mxu0 0
        %6130 = vmatmul.mubr.bf16.gmra.mxu0 %v969
        %v6131 = vpop.f32.mrf.mxu0
        %v6132 = vadd.f32 0.0, %v6131
        %v6133 = vpop.f32.mrf.mxu0
        %v6134 = vpop.f32.mrf.mxu0
        %v6135 = vadd.f32 0.0, %v6134
        %v6136 = vpop.f32.mrf.mxu0
        %6137 = vmatprep.mubr.bf16.mxu0 0
        %6138 = vmatmul.mubr.bf16.gmra.mxu0 %v970
        %v6139 = vpop.f32.mrf.mxu0
        %v6140 = vadd.f32 0.0, %v6139
        %v6141 = vpop.f32.mrf.mxu0
        %v6142 = vpop.f32.mrf.mxu0
        %v6143 = vadd.f32 0.0, %v6142
        %v6144 = vpop.f32.mrf.mxu0
        %6145 = vmatprep.mubr.bf16.mxu0 0
        %6146 = vmatmul.mubr.bf16.gmra.mxu0 %v971
        %v6147 = vpop.f32.mrf.mxu0
        %v6148 = vadd.f32 0.0, %v6147
        %v6149 = vpop.f32.mrf.mxu0
        %v6150 = vpop.f32.mrf.mxu0
        %v6151 = vadd.f32 0.0, %v6150
        %v6152 = vpop.f32.mrf.mxu0
        %6153 = vmatprep.mubr.bf16.mxu0 0
        %6154 = vmatmul.mubr.bf16.gmra.mxu0 %v972
        %v6155 = vpop.f32.mrf.mxu0
        %v6156 = vadd.f32 0.0, %v6155
        %v6157 = vpop.f32.mrf.mxu0
        %v6158 = vpop.f32.mrf.mxu0
        %v6159 = vadd.f32 0.0, %v6158
        %v6160 = vpop.f32.mrf.mxu0
        %6161 = vmatprep.mubr.bf16.mxu0 0
        %6162 = vmatmul.mubr.bf16.gmra.mxu0 %v973
        %v6163 = vpop.f32.mrf.mxu0
        %v6164 = vadd.f32 0.0, %v6163
        %v6165 = vpop.f32.mrf.mxu0
        %v6166 = vpop.f32.mrf.mxu0
        %v6167 = vadd.f32 0.0, %v6166
        %v6168 = vpop.f32.mrf.mxu0
        %6169 = vmatprep.mubr.bf16.mxu0 0
        %6170 = vmatmul.mubr.bf16.gmra.mxu0 %v974
        %v6171 = vpop.f32.mrf.mxu0
        %v6172 = vadd.f32 0.0, %v6171
        %v6173 = vpop.f32.mrf.mxu0
        %v6174 = vpop.f32.mrf.mxu0
        %v6175 = vadd.f32 0.0, %v6174
        %v6176 = vpop.f32.mrf.mxu0
        %6177 = vmatprep.mubr.bf16.mxu0 0
        %6178 = vmatmul.mubr.bf16.gmra.mxu0 %v975
        %v6179 = vpop.f32.mrf.mxu0
        %v6180 = vadd.f32 0.0, %v6179
        %v6181 = vpop.f32.mrf.mxu0
        %v6182 = vpop.f32.mrf.mxu0
        %v6183 = vadd.f32 0.0, %v6182
        %v6184 = vpop.f32.mrf.mxu0
        %6185 = vmatprep.mubr.bf16.mxu0 0
        %6186 = vmatmul.mubr.bf16.gmra.mxu0 %v976
        %v6187 = vpop.f32.mrf.mxu0
        %v6188 = vadd.f32 0.0, %v6187
        %v6189 = vpop.f32.mrf.mxu0
        %v6190 = vpop.f32.mrf.mxu0
        %v6191 = vadd.f32 0.0, %v6190
        %v6192 = vpop.f32.mrf.mxu0
        %6193 = vmatprep.mubr.bf16.mxu0 0
        %6194 = vmatmul.mubr.bf16.gmra.mxu0 %v977
        %v6195 = vpop.f32.mrf.mxu0
        %v6196 = vadd.f32 0.0, %v6195
        %v6197 = vpop.f32.mrf.mxu0
        %v6198 = vpop.f32.mrf.mxu0
        %v6199 = vadd.f32 0.0, %v6198
        %v6200 = vpop.f32.mrf.mxu0
        %6201 = vmatprep.mubr.bf16.mxu0 0
        %6202 = vmatmul.mubr.bf16.gmra.mxu0 %v978
        %v6203 = vpop.f32.mrf.mxu0
        %v6204 = vadd.f32 0.0, %v6203
        %v6205 = vpop.f32.mrf.mxu0
        %v6206 = vpop.f32.mrf.mxu0
        %v6207 = vadd.f32 0.0, %v6206
        %v6208 = vpop.f32.mrf.mxu0
        %6209 = vmatprep.mubr.bf16.mxu0 0
        %6210 = vmatmul.mubr.bf16.gmra.mxu0 %v979
        %v6211 = vpop.f32.mrf.mxu0
        %v6212 = vadd.f32 0.0, %v6211
        %v6213 = vpop.f32.mrf.mxu0
        %v6214 = vpop.f32.mrf.mxu0
        %v6215 = vadd.f32 0.0, %v6214
        %v6216 = vpop.f32.mrf.mxu0
        %6217 = vmatprep.mubr.bf16.mxu0 0
        %6218 = vmatmul.mubr.bf16.gmra.mxu0 %v980
        %v6219 = vpop.f32.mrf.mxu0
        %v6220 = vadd.f32 0.0, %v6219
        %v6221 = vpop.f32.mrf.mxu0
        %v6222 = vpop.f32.mrf.mxu0
        %v6223 = vadd.f32 0.0, %v6222
        %v6224 = vpop.f32.mrf.mxu0
        %6225 = vmatprep.mubr.bf16.mxu0 0
        %6226 = vmatmul.mubr.bf16.gmra.mxu0 %v981
        %v6227 = vpop.f32.mrf.mxu0
        %v6228 = vadd.f32 0.0, %v6227
        %v6229 = vpop.f32.mrf.mxu0
        %v6230 = vpop.f32.mrf.mxu0
        %v6231 = vadd.f32 0.0, %v6230
        %v6232 = vpop.f32.mrf.mxu0
        %6233 = vmatprep.mubr.bf16.mxu0 0
        %6234 = vmatmul.mubr.bf16.gmra.mxu0 %v982
        %v6235 = vpop.f32.mrf.mxu0
        %v6236 = vadd.f32 0.0, %v6235
        %v6237 = vpop.f32.mrf.mxu0
        %v6238 = vpop.f32.mrf.mxu0
        %v6239 = vadd.f32 0.0, %v6238
        %v6240 = vpop.f32.mrf.mxu0
        %6241 = vmatprep.mubr.bf16.mxu0 0
        %6242 = vmatmul.mubr.bf16.gmra.mxu0 %v983
        %v6243 = vpop.f32.mrf.mxu0
        %v6244 = vadd.f32 0.0, %v6243
        %v6245 = vpop.f32.mrf.mxu0
        %v6246 = vpop.f32.mrf.mxu0
        %v6247 = vadd.f32 0.0, %v6246
        %v6248 = vpop.f32.mrf.mxu0
        %6249 = vmatprep.mubr.bf16.mxu0 0
        %6250 = vmatmul.mubr.bf16.gmra.mxu0 %v984
        %v6251 = vpop.f32.mrf.mxu0
        %v6252 = vadd.f32 0.0, %v6251
        %v6253 = vpop.f32.mrf.mxu0
        %v6254 = vpop.f32.mrf.mxu0
        %v6255 = vadd.f32 0.0, %v6254
        %v6256 = vpop.f32.mrf.mxu0
        %6257 = vdwg.mxu0
        %v6258 = vrot.slane %v6132, 4
        %v6259 = vrot.slane %v6135, 4
        %v6260 = vrot.slane %v6140, 4
        %v6261 = vrot.slane %v6143, 4
        %v6262 = vrot.slane %v6148, 4
        %v6263 = vrot.slane %v6151, 4
        %v6264 = vrot.slane %v6156, 4
        %v6265 = vrot.slane %v6159, 4
        %v6266 = vrot.slane %v6164, 4
        %v6267 = vrot.slane %v6167, 4
        %v6268 = vrot.slane %v6172, 4
        %v6269 = vrot.slane %v6175, 4
        %v6270 = vrot.slane %v6180, 4
        %v6271 = vrot.slane %v6183, 4
        %v6272 = vrot.slane %v6188, 4
        %v6273 = vrot.slane %v6191, 4
        %v6274 = vrot.slane %v6196, 4
        %v6275 = vrot.slane %v6199, 4
        %v6276 = vrot.slane %v6204, 4
        %v6277 = vrot.slane %v6207, 4
        %v6278 = vrot.slane %v6212, 4
        %v6279 = vrot.slane %v6215, 4
        %v6280 = vrot.slane %v6220, 4
        %v6281 = vrot.slane %v6223, 4
        %v6282 = vrot.slane %v6228, 4
        %v6283 = vrot.slane %v6231, 4
        %v6284 = vrot.slane %v6236, 4
        %v6285 = vrot.slane %v6239, 4
        %v6286 = vrot.slane %v6244, 4
        %v6287 = vrot.slane %v6247, 4
        %v6288 = vrot.slane %v6252, 4
        %v6289 = vrot.slane %v6255, 4
        %v6290 = vsel %vm5131, %v6288, %v6289
        %v6291 = vsel %vm5131, %v6287, %v6288
        %v6292 = vsel %vm5131, %v6286, %v6287
        %v6293 = vsel %vm5131, %v6285, %v6286
        %v6294 = vsel %vm5131, %v6284, %v6285
        %v6295 = vsel %vm5131, %v6283, %v6284
        %v6296 = vsel %vm5131, %v6282, %v6283
        %v6297 = vsel %vm5131, %v6281, %v6282
        %v6298 = vsel %vm5131, %v6280, %v6281
        %v6299 = vsel %vm5131, %v6279, %v6280
        %v6300 = vsel %vm5131, %v6278, %v6279
        %v6301 = vsel %vm5131, %v6277, %v6278
        %v6302 = vsel %vm5131, %v6276, %v6277
        %v6303 = vsel %vm5131, %v6275, %v6276
        %v6304 = vsel %vm5131, %v6274, %v6275
        %v6305 = vsel %vm5131, %v6273, %v6274
        %v6306 = vsel %vm5131, %v6272, %v6273
        %v6307 = vsel %vm5131, %v6271, %v6272
        %v6308 = vsel %vm5131, %v6270, %v6271
        %v6309 = vsel %vm5131, %v6269, %v6270
        %v6310 = vsel %vm5131, %v6268, %v6269
        %v6311 = vsel %vm5131, %v6267, %v6268
        %v6312 = vsel %vm5131, %v6266, %v6267
        %v6313 = vsel %vm5131, %v6265, %v6266
        %v6314 = vsel %vm5131, %v6264, %v6265
        %v6315 = vsel %vm5131, %v6263, %v6264
        %v6316 = vsel %vm5131, %v6262, %v6263
        %v6317 = vsel %vm5131, %v6261, %v6262
        %v6318 = vsel %vm5131, %v6260, %v6261
        %v6319 = vsel %vm5131, %v6259, %v6260
        %v6320 = vsel %vm5131, %v6258, %v6259
        %v6321 = vsel %vm5131, %v6289, %v6258
        %v6322 = vsel %vm5196, %v6290, 0.0
        %v6323 = vsel %vm5197, %v6321, 0.0
        %v6324 = vsel %vm5198, %v6320, 0.0
        %v6325 = vsel %vm5199, %v6319, 0.0
        %v6326 = vsel %vm5200, %v6318, 0.0
        %v6327 = vsel %vm5201, %v6317, 0.0
        %v6328 = vsel %vm5202, %v6316, 0.0
        %v6329 = vsel %vm5203, %v6315, 0.0
        %v6330 = vsel %vm5204, %v6314, 0.0
        %v6331 = vsel %vm5205, %v6313, 0.0
        %v6332 = vsel %vm5206, %v6312, 0.0
        %v6333 = vsel %vm5207, %v6311, 0.0
        %v6334 = vsel %vm5208, %v6310, 0.0
        %v6335 = vsel %vm5209, %v6309, 0.0
        %v6336 = vsel %vm5210, %v6308, 0.0
        %v6337 = vsel %vm5211, %v6307, 0.0
        %v6338 = vsel %vm5212, %v6306, 0.0
        %v6339 = vsel %vm5213, %v6305, 0.0
        %v6340 = vsel %vm5214, %v6304, 0.0
        %v6341 = vsel %vm5215, %v6303, 0.0
        %v6342 = vsel %vm5216, %v6302, 0.0
        %v6343 = vsel %vm5217, %v6301, 0.0
        %v6344 = vsel %vm5218, %v6300, 0.0
        %v6345 = vsel %vm5219, %v6299, 0.0
        %v6346 = vsel %vm5220, %v6298, 0.0
        %v6347 = vsel %vm5221, %v6297, 0.0
        %v6348 = vsel %vm5222, %v6296, 0.0
        %v6349 = vsel %vm5223, %v6295, 0.0
        %v6350 = vsel %vm5224, %v6294, 0.0
        %v6351 = vsel %vm5225, %v6293, 0.0
        %v6352 = vsel %vm5226, %v6292, 0.0
        %v6353 = vsel %vm5227, %v6291, 0.0
        %v6354 = vadd.f32 %v6000, %v6322
        %v6355 = vadd.f32 %v6001, %v6323
        %v6356 = vadd.f32 %v6002, %v6324
        %v6357 = vadd.f32 %v6003, %v6325
        %v6358 = vadd.f32 %v6004, %v6326
        %v6359 = vadd.f32 %v6005, %v6327
        %v6360 = vadd.f32 %v6006, %v6328
        %v6361 = vadd.f32 %v6007, %v6329
        %v6362 = vadd.f32 %v6008, %v6330
        %v6363 = vadd.f32 %v6009, %v6331
        %v6364 = vadd.f32 %v6010, %v6332
        %v6365 = vadd.f32 %v6011, %v6333
        %v6366 = vadd.f32 %v6012, %v6334
        %v6367 = vadd.f32 %v6013, %v6335
        %v6368 = vadd.f32 %v6014, %v6336
        %v6369 = vadd.f32 %v6015, %v6337
        %v6370 = vadd.f32 %v6016, %v6338
        %v6371 = vadd.f32 %v6017, %v6339
        %v6372 = vadd.f32 %v6018, %v6340
        %v6373 = vadd.f32 %v6019, %v6341
        %v6374 = vadd.f32 %v6020, %v6342
        %v6375 = vadd.f32 %v6021, %v6343
        %v6376 = vadd.f32 %v6022, %v6344
        %v6377 = vadd.f32 %v6023, %v6345
        %v6378 = vadd.f32 %v6024, %v6346
        %v6379 = vadd.f32 %v6025, %v6347
        %v6380 = vadd.f32 %v6026, %v6348
        %v6381 = vadd.f32 %v6027, %v6349
        %v6382 = vadd.f32 %v6028, %v6350
        %v6383 = vadd.f32 %v6029, %v6351
        %v6384 = vadd.f32 %v6030, %v6352
        %v6385 = vadd.f32 %v6031, %v6353
        %s6386 = scalar_lea.vmem [#allocation8], 768
        %v6387 = vld [vmem:[%s6386] sm:$0xf]
        %v6388 = vld [vmem:[%s6386 + $0x4] sm:$0xf]
        %v6389 = vld [vmem:[%s6386 + $0x8] sm:$0xf]
        %v6390 = vld [vmem:[%s6386 + $0xc] sm:$0xf]
        %v6391 = vld [vmem:[%s6386 + $0x10] sm:$0xf]
        %v6392 = vld [vmem:[%s6386 + $0x14] sm:$0xf]
        %v6393 = vld [vmem:[%s6386 + $0x18] sm:$0xf]
        %v6394 = vld [vmem:[%s6386 + $0x1c] sm:$0xf]
        %v6395 = vld [vmem:[%s6386 + $0x20] sm:$0xf]
        %v6396 = vld [vmem:[%s6386 + $0x24] sm:$0xf]
        %v6397 = vld [vmem:[%s6386 + $0x28] sm:$0xf]
        %v6398 = vld [vmem:[%s6386 + $0x2c] sm:$0xf]
        %v6399 = vld [vmem:[%s6386 + $0x30] sm:$0xf]
        %v6400 = vld [vmem:[%s6386 + $0x34] sm:$0xf]
        %v6401 = vld [vmem:[%s6386 + $0x38] sm:$0xf]
        %v6402 = vld [vmem:[%s6386 + $0x3c] sm:$0xf]
        %v6419 = vunpack.c.l.b16 %v6387
        %v6420 = vunpack.c.l.b16 %v6388
        %v6421 = vunpack.c.l.b16 %v6389
        %v6422 = vunpack.c.l.b16 %v6390
        %v6423 = vunpack.c.l.b16 %v6391
        %v6424 = vunpack.c.l.b16 %v6392
        %v6425 = vunpack.c.l.b16 %v6393
        %v6426 = vunpack.c.l.b16 %v6394
        %v6427 = vunpack.c.l.b16 %v6395
        %v6428 = vunpack.c.l.b16 %v6396
        %v6429 = vunpack.c.l.b16 %v6397
        %v6430 = vunpack.c.l.b16 %v6398
        %v6431 = vunpack.c.l.b16 %v6399
        %v6432 = vunpack.c.l.b16 %v6400
        %v6433 = vunpack.c.l.b16 %v6401
        %v6434 = vunpack.c.l.b16 %v6402
        %v6435 = vpack.c.b16 %v6420, %v6419
        %v6436 = vpack.c.b16 %v6422, %v6421
        %v6437 = vpack.c.b16 %v6424, %v6423
        %v6438 = vpack.c.b16 %v6426, %v6425
        %v6439 = vpack.c.b16 %v6428, %v6427
        %v6440 = vpack.c.b16 %v6430, %v6429
        %v6441 = vpack.c.b16 %v6432, %v6431
        %v6442 = vpack.c.b16 %v6434, %v6433
        %6451 = vmatprep.subr.bf16.mxu0 0
        %6452 = vmatpush1.bf16.msra.mxu0 %v6442
        %6453 = vmatprep.subr.bf16.mxu0 0
        %6454 = vmatpush1.bf16.msra.mxu0 %v6441
        %6455 = vmatprep.subr.bf16.mxu0 0
        %6456 = vmatpush1.bf16.msra.mxu0 %v6440
        %6457 = vmatprep.subr.bf16.mxu0 0
        %6458 = vmatpush1.bf16.msra.mxu0 %v6439
        %6459 = vmatprep.subr.bf16.mxu0 0
        %6460 = vmatpush1.bf16.msra.mxu0 %v6438
        %6461 = vmatprep.subr.bf16.mxu0 0
        %6462 = vmatpush1.bf16.msra.mxu0 %v6437
        %6463 = vmatprep.subr.bf16.mxu0 0
        %6464 = vmatpush1.bf16.msra.mxu0 %v6436
        %6465 = vmatprep.subr.bf16.mxu0 0
        %6466 = vmatpush1.bf16.msra.mxu0 %v6435
        %6467 = vmatprep.subr.bf16.mxu0 0
        %6468 = vmatpush2.bf16.msra.mxu0 0
        %6469 = vmatprep.subr.bf16.mxu0 0
        %6470 = vmatpush2.bf16.msra.mxu0 0
        %6471 = vmatprep.subr.bf16.mxu0 0
        %6472 = vmatpush2.bf16.msra.mxu0 0
        %6473 = vmatprep.subr.bf16.mxu0 0
        %6474 = vmatpush2.bf16.msra.mxu0 0
        %6475 = vmatprep.subr.bf16.mxu0 0
        %6476 = vmatpush2.bf16.msra.mxu0 0
        %6477 = vmatprep.subr.bf16.mxu0 0
        %6478 = vmatpush2.bf16.msra.mxu0 0
        %6479 = vmatprep.subr.bf16.mxu0 0
        %6480 = vmatpush2.bf16.msra.mxu0 0
        %6481 = vmatprep.subr.bf16.mxu0 0
        %6482 = vmatpush2.bf16.msra.mxu0 0
        %6483 = vmatprep.mubr.bf16.mxu0 0
        %6484 = vmatmul.mubr.bf16.gmra.mxu0 %v969
        %v6485 = vpop.f32.mrf.mxu0
        %v6486 = vadd.f32 0.0, %v6485
        %v6487 = vpop.f32.mrf.mxu0
        %v6488 = vpop.f32.mrf.mxu0
        %v6489 = vadd.f32 0.0, %v6488
        %v6490 = vpop.f32.mrf.mxu0
        %6491 = vmatprep.mubr.bf16.mxu0 0
        %6492 = vmatmul.mubr.bf16.gmra.mxu0 %v970
        %v6493 = vpop.f32.mrf.mxu0
        %v6494 = vadd.f32 0.0, %v6493
        %v6495 = vpop.f32.mrf.mxu0
        %v6496 = vpop.f32.mrf.mxu0
        %v6497 = vadd.f32 0.0, %v6496
        %v6498 = vpop.f32.mrf.mxu0
        %6499 = vmatprep.mubr.bf16.mxu0 0
        %6500 = vmatmul.mubr.bf16.gmra.mxu0 %v971
        %v6501 = vpop.f32.mrf.mxu0
        %v6502 = vadd.f32 0.0, %v6501
        %v6503 = vpop.f32.mrf.mxu0
        %v6504 = vpop.f32.mrf.mxu0
        %v6505 = vadd.f32 0.0, %v6504
        %v6506 = vpop.f32.mrf.mxu0
        %6507 = vmatprep.mubr.bf16.mxu0 0
        %6508 = vmatmul.mubr.bf16.gmra.mxu0 %v972
        %v6509 = vpop.f32.mrf.mxu0
        %v6510 = vadd.f32 0.0, %v6509
        %v6511 = vpop.f32.mrf.mxu0
        %v6512 = vpop.f32.mrf.mxu0
        %v6513 = vadd.f32 0.0, %v6512
        %v6514 = vpop.f32.mrf.mxu0
        %6515 = vmatprep.mubr.bf16.mxu0 0
        %6516 = vmatmul.mubr.bf16.gmra.mxu0 %v973
        %v6517 = vpop.f32.mrf.mxu0
        %v6518 = vadd.f32 0.0, %v6517
        %v6519 = vpop.f32.mrf.mxu0
        %v6520 = vpop.f32.mrf.mxu0
        %v6521 = vadd.f32 0.0, %v6520
        %v6522 = vpop.f32.mrf.mxu0
        %6523 = vmatprep.mubr.bf16.mxu0 0
        %6524 = vmatmul.mubr.bf16.gmra.mxu0 %v974
        %v6525 = vpop.f32.mrf.mxu0
        %v6526 = vadd.f32 0.0, %v6525
        %v6527 = vpop.f32.mrf.mxu0
        %v6528 = vpop.f32.mrf.mxu0
        %v6529 = vadd.f32 0.0, %v6528
        %v6530 = vpop.f32.mrf.mxu0
        %6531 = vmatprep.mubr.bf16.mxu0 0
        %6532 = vmatmul.mubr.bf16.gmra.mxu0 %v975
        %v6533 = vpop.f32.mrf.mxu0
        %v6534 = vadd.f32 0.0, %v6533
        %v6535 = vpop.f32.mrf.mxu0
        %v6536 = vpop.f32.mrf.mxu0
        %v6537 = vadd.f32 0.0, %v6536
        %v6538 = vpop.f32.mrf.mxu0
        %6539 = vmatprep.mubr.bf16.mxu0 0
        %6540 = vmatmul.mubr.bf16.gmra.mxu0 %v976
        %v6541 = vpop.f32.mrf.mxu0
        %v6542 = vadd.f32 0.0, %v6541
        %v6543 = vpop.f32.mrf.mxu0
        %v6544 = vpop.f32.mrf.mxu0
        %v6545 = vadd.f32 0.0, %v6544
        %v6546 = vpop.f32.mrf.mxu0
        %6547 = vmatprep.mubr.bf16.mxu0 0
        %6548 = vmatmul.mubr.bf16.gmra.mxu0 %v977
        %v6549 = vpop.f32.mrf.mxu0
        %v6550 = vadd.f32 0.0, %v6549
        %v6551 = vpop.f32.mrf.mxu0
        %v6552 = vpop.f32.mrf.mxu0
        %v6553 = vadd.f32 0.0, %v6552
        %v6554 = vpop.f32.mrf.mxu0
        %6555 = vmatprep.mubr.bf16.mxu0 0
        %6556 = vmatmul.mubr.bf16.gmra.mxu0 %v978
        %v6557 = vpop.f32.mrf.mxu0
        %v6558 = vadd.f32 0.0, %v6557
        %v6559 = vpop.f32.mrf.mxu0
        %v6560 = vpop.f32.mrf.mxu0
        %v6561 = vadd.f32 0.0, %v6560
        %v6562 = vpop.f32.mrf.mxu0
        %6563 = vmatprep.mubr.bf16.mxu0 0
        %6564 = vmatmul.mubr.bf16.gmra.mxu0 %v979
        %v6565 = vpop.f32.mrf.mxu0
        %v6566 = vadd.f32 0.0, %v6565
        %v6567 = vpop.f32.mrf.mxu0
        %v6568 = vpop.f32.mrf.mxu0
        %v6569 = vadd.f32 0.0, %v6568
        %v6570 = vpop.f32.mrf.mxu0
        %6571 = vmatprep.mubr.bf16.mxu0 0
        %6572 = vmatmul.mubr.bf16.gmra.mxu0 %v980
        %v6573 = vpop.f32.mrf.mxu0
        %v6574 = vadd.f32 0.0, %v6573
        %v6575 = vpop.f32.mrf.mxu0
        %v6576 = vpop.f32.mrf.mxu0
        %v6577 = vadd.f32 0.0, %v6576
        %v6578 = vpop.f32.mrf.mxu0
        %6579 = vmatprep.mubr.bf16.mxu0 0
        %6580 = vmatmul.mubr.bf16.gmra.mxu0 %v981
        %v6581 = vpop.f32.mrf.mxu0
        %v6582 = vadd.f32 0.0, %v6581
        %v6583 = vpop.f32.mrf.mxu0
        %v6584 = vpop.f32.mrf.mxu0
        %v6585 = vadd.f32 0.0, %v6584
        %v6586 = vpop.f32.mrf.mxu0
        %6587 = vmatprep.mubr.bf16.mxu0 0
        %6588 = vmatmul.mubr.bf16.gmra.mxu0 %v982
        %v6589 = vpop.f32.mrf.mxu0
        %v6590 = vadd.f32 0.0, %v6589
        %v6591 = vpop.f32.mrf.mxu0
        %v6592 = vpop.f32.mrf.mxu0
        %v6593 = vadd.f32 0.0, %v6592
        %v6594 = vpop.f32.mrf.mxu0
        %6595 = vmatprep.mubr.bf16.mxu0 0
        %6596 = vmatmul.mubr.bf16.gmra.mxu0 %v983
        %v6597 = vpop.f32.mrf.mxu0
        %v6598 = vadd.f32 0.0, %v6597
        %v6599 = vpop.f32.mrf.mxu0
        %v6600 = vpop.f32.mrf.mxu0
        %v6601 = vadd.f32 0.0, %v6600
        %v6602 = vpop.f32.mrf.mxu0
        %6603 = vmatprep.mubr.bf16.mxu0 0
        %6604 = vmatmul.mubr.bf16.gmra.mxu0 %v984
        %v6605 = vpop.f32.mrf.mxu0
        %v6606 = vadd.f32 0.0, %v6605
        %v6607 = vpop.f32.mrf.mxu0
        %v6608 = vpop.f32.mrf.mxu0
        %v6609 = vadd.f32 0.0, %v6608
        %v6610 = vpop.f32.mrf.mxu0
        %6611 = vdwg.mxu0
        %v6612 = vrot.slane %v6486, 4
        %v6613 = vrot.slane %v6489, 4
        %v6614 = vrot.slane %v6494, 4
        %v6615 = vrot.slane %v6497, 4
        %v6616 = vrot.slane %v6502, 4
        %v6617 = vrot.slane %v6505, 4
        %v6618 = vrot.slane %v6510, 4
        %v6619 = vrot.slane %v6513, 4
        %v6620 = vrot.slane %v6518, 4
        %v6621 = vrot.slane %v6521, 4
        %v6622 = vrot.slane %v6526, 4
        %v6623 = vrot.slane %v6529, 4
        %v6624 = vrot.slane %v6534, 4
        %v6625 = vrot.slane %v6537, 4
        %v6626 = vrot.slane %v6542, 4
        %v6627 = vrot.slane %v6545, 4
        %v6628 = vrot.slane %v6550, 4
        %v6629 = vrot.slane %v6553, 4
        %v6630 = vrot.slane %v6558, 4
        %v6631 = vrot.slane %v6561, 4
        %v6632 = vrot.slane %v6566, 4
        %v6633 = vrot.slane %v6569, 4
        %v6634 = vrot.slane %v6574, 4
        %v6635 = vrot.slane %v6577, 4
        %v6636 = vrot.slane %v6582, 4
        %v6637 = vrot.slane %v6585, 4
        %v6638 = vrot.slane %v6590, 4
        %v6639 = vrot.slane %v6593, 4
        %v6640 = vrot.slane %v6598, 4
        %v6641 = vrot.slane %v6601, 4
        %v6642 = vrot.slane %v6606, 4
        %v6643 = vrot.slane %v6609, 4
        %v6644 = vsel %vm5131, %v6642, %v6643
        %v6645 = vsel %vm5131, %v6641, %v6642
        %v6646 = vsel %vm5131, %v6640, %v6641
        %v6647 = vsel %vm5131, %v6639, %v6640
        %v6648 = vsel %vm5131, %v6638, %v6639
        %v6649 = vsel %vm5131, %v6637, %v6638
        %v6650 = vsel %vm5131, %v6636, %v6637
        %v6651 = vsel %vm5131, %v6635, %v6636
        %v6652 = vsel %vm5131, %v6634, %v6635
        %v6653 = vsel %vm5131, %v6633, %v6634
        %v6654 = vsel %vm5131, %v6632, %v6633
        %v6655 = vsel %vm5131, %v6631, %v6632
        %v6656 = vsel %vm5131, %v6630, %v6631
        %v6657 = vsel %vm5131, %v6629, %v6630
        %v6658 = vsel %vm5131, %v6628, %v6629
        %v6659 = vsel %vm5131, %v6627, %v6628
        %v6660 = vsel %vm5131, %v6626, %v6627
        %v6661 = vsel %vm5131, %v6625, %v6626
        %v6662 = vsel %vm5131, %v6624, %v6625
        %v6663 = vsel %vm5131, %v6623, %v6624
        %v6664 = vsel %vm5131, %v6622, %v6623
        %v6665 = vsel %vm5131, %v6621, %v6622
        %v6666 = vsel %vm5131, %v6620, %v6621
        %v6667 = vsel %vm5131, %v6619, %v6620
        %v6668 = vsel %vm5131, %v6618, %v6619
        %v6669 = vsel %vm5131, %v6617, %v6618
        %v6670 = vsel %vm5131, %v6616, %v6617
        %v6671 = vsel %vm5131, %v6615, %v6616
        %v6672 = vsel %vm5131, %v6614, %v6615
        %v6673 = vsel %vm5131, %v6613, %v6614
        %v6674 = vsel %vm5131, %v6612, %v6613
        %v6675 = vsel %vm5131, %v6643, %v6612
        %v6676 = vsel %vm5904, %v6673, 0.0
        %v6677 = vsel %vm5905, %v6672, 0.0
        %v6678 = vsel %vm5906, %v6671, 0.0
        %v6679 = vsel %vm5907, %v6670, 0.0
        %v6680 = vsel %vm5908, %v6669, 0.0
        %v6681 = vsel %vm5909, %v6668, 0.0
        %v6682 = vsel %vm5910, %v6667, 0.0
        %v6683 = vsel %vm5911, %v6666, 0.0
        %v6684 = vsel %vm5912, %v6665, 0.0
        %v6685 = vsel %vm5913, %v6664, 0.0
        %v6686 = vsel %vm5914, %v6663, 0.0
        %v6687 = vsel %vm5915, %v6662, 0.0
        %v6688 = vsel %vm5916, %v6661, 0.0
        %v6689 = vsel %vm5917, %v6660, 0.0
        %v6690 = vsel %vm5918, %v6659, 0.0
        %v6691 = vsel %vm5919, %v6658, 0.0
        %v6692 = vsel %vm5920, %v6657, 0.0
        %v6693 = vsel %vm5921, %v6656, 0.0
        %v6694 = vsel %vm5922, %v6655, 0.0
        %v6695 = vsel %vm5923, %v6654, 0.0
        %v6696 = vsel %vm5924, %v6653, 0.0
        %v6697 = vsel %vm5925, %v6652, 0.0
        %v6698 = vsel %vm5926, %v6651, 0.0
        %v6699 = vsel %vm5927, %v6650, 0.0
        %v6700 = vsel %vm5928, %v6649, 0.0
        %v6701 = vsel %vm5929, %v6648, 0.0
        %v6702 = vsel %vm5930, %v6647, 0.0
        %v6703 = vsel %vm5931, %v6646, 0.0
        %v6704 = vsel %vm5932, %v6645, 0.0
        %v6705 = vsel %vm5933, %v6644, 0.0
        %v6706 = vsel %vm5934, %v6675, 0.0
        %v6707 = vsel %vm5935, %v6674, 0.0
        %v6708 = vadd.f32 %v6354, %v6676
        %v6709 = vadd.f32 %v6355, %v6677
        %v6710 = vadd.f32 %v6356, %v6678
        %v6711 = vadd.f32 %v6357, %v6679
        %v6712 = vadd.f32 %v6358, %v6680
        %v6713 = vadd.f32 %v6359, %v6681
        %v6714 = vadd.f32 %v6360, %v6682
        %v6715 = vadd.f32 %v6361, %v6683
        %v6716 = vadd.f32 %v6362, %v6684
        %v6717 = vadd.f32 %v6363, %v6685
        %v6718 = vadd.f32 %v6364, %v6686
        %v6719 = vadd.f32 %v6365, %v6687
        %v6720 = vadd.f32 %v6366, %v6688
        %v6721 = vadd.f32 %v6367, %v6689
        %v6722 = vadd.f32 %v6368, %v6690
        %v6723 = vadd.f32 %v6369, %v6691
        %v6724 = vadd.f32 %v6370, %v6692
        %v6725 = vadd.f32 %v6371, %v6693
        %v6726 = vadd.f32 %v6372, %v6694
        %v6727 = vadd.f32 %v6373, %v6695
        %v6728 = vadd.f32 %v6374, %v6696
        %v6729 = vadd.f32 %v6375, %v6697
        %v6730 = vadd.f32 %v6376, %v6698
        %v6731 = vadd.f32 %v6377, %v6699
        %v6732 = vadd.f32 %v6378, %v6700
        %v6733 = vadd.f32 %v6379, %v6701
        %v6734 = vadd.f32 %v6380, %v6702
        %v6735 = vadd.f32 %v6381, %v6703
        %v6736 = vadd.f32 %v6382, %v6704
        %v6737 = vadd.f32 %v6383, %v6705
        %v6738 = vadd.f32 %v6384, %v6706
        %v6739 = vadd.f32 %v6385, %v6707
        %s6740 = scalar_lea.vmem [#allocation8], 832
        %v6741 = vld [vmem:[%s6740] sm:$0xf]
        %v6742 = vld [vmem:[%s6740 + $0x4] sm:$0xf]
        %v6743 = vld [vmem:[%s6740 + $0x8] sm:$0xf]
        %v6744 = vld [vmem:[%s6740 + $0xc] sm:$0xf]
        %v6745 = vld [vmem:[%s6740 + $0x10] sm:$0xf]
        %v6746 = vld [vmem:[%s6740 + $0x14] sm:$0xf]
        %v6747 = vld [vmem:[%s6740 + $0x18] sm:$0xf]
        %v6748 = vld [vmem:[%s6740 + $0x1c] sm:$0xf]
        %v6749 = vld [vmem:[%s6740 + $0x20] sm:$0xf]
        %v6750 = vld [vmem:[%s6740 + $0x24] sm:$0xf]
        %v6751 = vld [vmem:[%s6740 + $0x28] sm:$0xf]
        %v6752 = vld [vmem:[%s6740 + $0x2c] sm:$0xf]
        %v6753 = vld [vmem:[%s6740 + $0x30] sm:$0xf]
        %v6754 = vld [vmem:[%s6740 + $0x34] sm:$0xf]
        %v6755 = vld [vmem:[%s6740 + $0x38] sm:$0xf]
        %v6756 = vld [vmem:[%s6740 + $0x3c] sm:$0xf]
        %v6773 = vunpack.c.l.b16 %v6741
        %v6774 = vunpack.c.l.b16 %v6742
        %v6775 = vunpack.c.l.b16 %v6743
        %v6776 = vunpack.c.l.b16 %v6744
        %v6777 = vunpack.c.l.b16 %v6745
        %v6778 = vunpack.c.l.b16 %v6746
        %v6779 = vunpack.c.l.b16 %v6747
        %v6780 = vunpack.c.l.b16 %v6748
        %v6781 = vunpack.c.l.b16 %v6749
        %v6782 = vunpack.c.l.b16 %v6750
        %v6783 = vunpack.c.l.b16 %v6751
        %v6784 = vunpack.c.l.b16 %v6752
        %v6785 = vunpack.c.l.b16 %v6753
        %v6786 = vunpack.c.l.b16 %v6754
        %v6787 = vunpack.c.l.b16 %v6755
        %v6788 = vunpack.c.l.b16 %v6756
        %v6789 = vpack.c.b16 %v6774, %v6773
        %v6790 = vpack.c.b16 %v6776, %v6775
        %v6791 = vpack.c.b16 %v6778, %v6777
        %v6792 = vpack.c.b16 %v6780, %v6779
        %v6793 = vpack.c.b16 %v6782, %v6781
        %v6794 = vpack.c.b16 %v6784, %v6783
        %v6795 = vpack.c.b16 %v6786, %v6785
        %v6796 = vpack.c.b16 %v6788, %v6787
        %6805 = vmatprep.subr.bf16.mxu0 0
        %6806 = vmatpush1.bf16.msra.mxu0 %v6796
        %6807 = vmatprep.subr.bf16.mxu0 0
        %6808 = vmatpush1.bf16.msra.mxu0 %v6795
        %6809 = vmatprep.subr.bf16.mxu0 0
        %6810 = vmatpush1.bf16.msra.mxu0 %v6794
        %6811 = vmatprep.subr.bf16.mxu0 0
        %6812 = vmatpush1.bf16.msra.mxu0 %v6793
        %6813 = vmatprep.subr.bf16.mxu0 0
        %6814 = vmatpush1.bf16.msra.mxu0 %v6792
        %6815 = vmatprep.subr.bf16.mxu0 0
        %6816 = vmatpush1.bf16.msra.mxu0 %v6791
        %6817 = vmatprep.subr.bf16.mxu0 0
        %6818 = vmatpush1.bf16.msra.mxu0 %v6790
        %6819 = vmatprep.subr.bf16.mxu0 0
        %6820 = vmatpush1.bf16.msra.mxu0 %v6789
        %6821 = vmatprep.subr.bf16.mxu0 0
        %6822 = vmatpush2.bf16.msra.mxu0 0
        %6823 = vmatprep.subr.bf16.mxu0 0
        %6824 = vmatpush2.bf16.msra.mxu0 0
        %6825 = vmatprep.subr.bf16.mxu0 0
        %6826 = vmatpush2.bf16.msra.mxu0 0
        %6827 = vmatprep.subr.bf16.mxu0 0
        %6828 = vmatpush2.bf16.msra.mxu0 0
        %6829 = vmatprep.subr.bf16.mxu0 0
        %6830 = vmatpush2.bf16.msra.mxu0 0
        %6831 = vmatprep.subr.bf16.mxu0 0
        %6832 = vmatpush2.bf16.msra.mxu0 0
        %6833 = vmatprep.subr.bf16.mxu0 0
        %6834 = vmatpush2.bf16.msra.mxu0 0
        %6835 = vmatprep.subr.bf16.mxu0 0
        %6836 = vmatpush2.bf16.msra.mxu0 0
        %6837 = vmatprep.mubr.bf16.mxu0 0
        %6838 = vmatmul.mubr.bf16.gmra.mxu0 %v969
        %v6839 = vpop.f32.mrf.mxu0
        %v6840 = vadd.f32 0.0, %v6839
        %v6841 = vpop.f32.mrf.mxu0
        %v6842 = vpop.f32.mrf.mxu0
        %v6843 = vadd.f32 0.0, %v6842
        %v6844 = vpop.f32.mrf.mxu0
        %6845 = vmatprep.mubr.bf16.mxu0 0
        %6846 = vmatmul.mubr.bf16.gmra.mxu0 %v970
        %v6847 = vpop.f32.mrf.mxu0
        %v6848 = vadd.f32 0.0, %v6847
        %v6849 = vpop.f32.mrf.mxu0
        %v6850 = vpop.f32.mrf.mxu0
        %v6851 = vadd.f32 0.0, %v6850
        %v6852 = vpop.f32.mrf.mxu0
        %6853 = vmatprep.mubr.bf16.mxu0 0
        %6854 = vmatmul.mubr.bf16.gmra.mxu0 %v971
        %v6855 = vpop.f32.mrf.mxu0
        %v6856 = vadd.f32 0.0, %v6855
        %v6857 = vpop.f32.mrf.mxu0
        %v6858 = vpop.f32.mrf.mxu0
        %v6859 = vadd.f32 0.0, %v6858
        %v6860 = vpop.f32.mrf.mxu0
        %6861 = vmatprep.mubr.bf16.mxu0 0
        %6862 = vmatmul.mubr.bf16.gmra.mxu0 %v972
        %v6863 = vpop.f32.mrf.mxu0
        %v6864 = vadd.f32 0.0, %v6863
        %v6865 = vpop.f32.mrf.mxu0
        %v6866 = vpop.f32.mrf.mxu0
        %v6867 = vadd.f32 0.0, %v6866
        %v6868 = vpop.f32.mrf.mxu0
        %6869 = vmatprep.mubr.bf16.mxu0 0
        %6870 = vmatmul.mubr.bf16.gmra.mxu0 %v973
        %v6871 = vpop.f32.mrf.mxu0
        %v6872 = vadd.f32 0.0, %v6871
        %v6873 = vpop.f32.mrf.mxu0
        %v6874 = vpop.f32.mrf.mxu0
        %v6875 = vadd.f32 0.0, %v6874
        %v6876 = vpop.f32.mrf.mxu0
        %6877 = vmatprep.mubr.bf16.mxu0 0
        %6878 = vmatmul.mubr.bf16.gmra.mxu0 %v974
        %v6879 = vpop.f32.mrf.mxu0
        %v6880 = vadd.f32 0.0, %v6879
        %v6881 = vpop.f32.mrf.mxu0
        %v6882 = vpop.f32.mrf.mxu0
        %v6883 = vadd.f32 0.0, %v6882
        %v6884 = vpop.f32.mrf.mxu0
        %6885 = vmatprep.mubr.bf16.mxu0 0
        %6886 = vmatmul.mubr.bf16.gmra.mxu0 %v975
        %v6887 = vpop.f32.mrf.mxu0
        %v6888 = vadd.f32 0.0, %v6887
        %v6889 = vpop.f32.mrf.mxu0
        %v6890 = vpop.f32.mrf.mxu0
        %v6891 = vadd.f32 0.0, %v6890
        %v6892 = vpop.f32.mrf.mxu0
        %6893 = vmatprep.mubr.bf16.mxu0 0
        %6894 = vmatmul.mubr.bf16.gmra.mxu0 %v976
        %v6895 = vpop.f32.mrf.mxu0
        %v6896 = vadd.f32 0.0, %v6895
        %v6897 = vpop.f32.mrf.mxu0
        %v6898 = vpop.f32.mrf.mxu0
        %v6899 = vadd.f32 0.0, %v6898
        %v6900 = vpop.f32.mrf.mxu0
        %6901 = vmatprep.mubr.bf16.mxu0 0
        %6902 = vmatmul.mubr.bf16.gmra.mxu0 %v977
        %v6903 = vpop.f32.mrf.mxu0
        %v6904 = vadd.f32 0.0, %v6903
        %v6905 = vpop.f32.mrf.mxu0
        %v6906 = vpop.f32.mrf.mxu0
        %v6907 = vadd.f32 0.0, %v6906
        %v6908 = vpop.f32.mrf.mxu0
        %6909 = vmatprep.mubr.bf16.mxu0 0
        %6910 = vmatmul.mubr.bf16.gmra.mxu0 %v978
        %v6911 = vpop.f32.mrf.mxu0
        %v6912 = vadd.f32 0.0, %v6911
        %v6913 = vpop.f32.mrf.mxu0
        %v6914 = vpop.f32.mrf.mxu0
        %v6915 = vadd.f32 0.0, %v6914
        %v6916 = vpop.f32.mrf.mxu0
        %6917 = vmatprep.mubr.bf16.mxu0 0
        %6918 = vmatmul.mubr.bf16.gmra.mxu0 %v979
        %v6919 = vpop.f32.mrf.mxu0
        %v6920 = vadd.f32 0.0, %v6919
        %v6921 = vpop.f32.mrf.mxu0
        %v6922 = vpop.f32.mrf.mxu0
        %v6923 = vadd.f32 0.0, %v6922
        %v6924 = vpop.f32.mrf.mxu0
        %6925 = vmatprep.mubr.bf16.mxu0 0
        %6926 = vmatmul.mubr.bf16.gmra.mxu0 %v980
        %v6927 = vpop.f32.mrf.mxu0
        %v6928 = vadd.f32 0.0, %v6927
        %v6929 = vpop.f32.mrf.mxu0
        %v6930 = vpop.f32.mrf.mxu0
        %v6931 = vadd.f32 0.0, %v6930
        %v6932 = vpop.f32.mrf.mxu0
        %6933 = vmatprep.mubr.bf16.mxu0 0
        %6934 = vmatmul.mubr.bf16.gmra.mxu0 %v981
        %v6935 = vpop.f32.mrf.mxu0
        %v6936 = vadd.f32 0.0, %v6935
        %v6937 = vpop.f32.mrf.mxu0
        %v6938 = vpop.f32.mrf.mxu0
        %v6939 = vadd.f32 0.0, %v6938
        %v6940 = vpop.f32.mrf.mxu0
        %6941 = vmatprep.mubr.bf16.mxu0 0
        %6942 = vmatmul.mubr.bf16.gmra.mxu0 %v982
        %v6943 = vpop.f32.mrf.mxu0
        %v6944 = vadd.f32 0.0, %v6943
        %v6945 = vpop.f32.mrf.mxu0
        %v6946 = vpop.f32.mrf.mxu0
        %v6947 = vadd.f32 0.0, %v6946
        %v6948 = vpop.f32.mrf.mxu0
        %6949 = vmatprep.mubr.bf16.mxu0 0
        %6950 = vmatmul.mubr.bf16.gmra.mxu0 %v983
        %v6951 = vpop.f32.mrf.mxu0
        %v6952 = vadd.f32 0.0, %v6951
        %v6953 = vpop.f32.mrf.mxu0
        %v6954 = vpop.f32.mrf.mxu0
        %v6955 = vadd.f32 0.0, %v6954
        %v6956 = vpop.f32.mrf.mxu0
        %6957 = vmatprep.mubr.bf16.mxu0 0
        %6958 = vmatmul.mubr.bf16.gmra.mxu0 %v984
        %v6959 = vpop.f32.mrf.mxu0
        %v6960 = vadd.f32 0.0, %v6959
        %v6961 = vpop.f32.mrf.mxu0
        %v6962 = vpop.f32.mrf.mxu0
        %v6963 = vadd.f32 0.0, %v6962
        %v6964 = vpop.f32.mrf.mxu0
        %6965 = vdwg.mxu0
        %v6966 = vrot.slane %v6840, 4
        %v6967 = vrot.slane %v6843, 4
        %v6968 = vrot.slane %v6848, 4
        %v6969 = vrot.slane %v6851, 4
        %v6970 = vrot.slane %v6856, 4
        %v6971 = vrot.slane %v6859, 4
        %v6972 = vrot.slane %v6864, 4
        %v6973 = vrot.slane %v6867, 4
        %v6974 = vrot.slane %v6872, 4
        %v6975 = vrot.slane %v6875, 4
        %v6976 = vrot.slane %v6880, 4
        %v6977 = vrot.slane %v6883, 4
        %v6978 = vrot.slane %v6888, 4
        %v6979 = vrot.slane %v6891, 4
        %v6980 = vrot.slane %v6896, 4
        %v6981 = vrot.slane %v6899, 4
        %v6982 = vrot.slane %v6904, 4
        %v6983 = vrot.slane %v6907, 4
        %v6984 = vrot.slane %v6912, 4
        %v6985 = vrot.slane %v6915, 4
        %v6986 = vrot.slane %v6920, 4
        %v6987 = vrot.slane %v6923, 4
        %v6988 = vrot.slane %v6928, 4
        %v6989 = vrot.slane %v6931, 4
        %v6990 = vrot.slane %v6936, 4
        %v6991 = vrot.slane %v6939, 4
        %v6992 = vrot.slane %v6944, 4
        %v6993 = vrot.slane %v6947, 4
        %v6994 = vrot.slane %v6952, 4
        %v6995 = vrot.slane %v6955, 4
        %v6996 = vrot.slane %v6960, 4
        %v6997 = vrot.slane %v6963, 4
        %v6998 = vsel %vm5131, %v6996, %v6997
        %v6999 = vsel %vm5131, %v6995, %v6996
        %v7000 = vsel %vm5131, %v6994, %v6995
        %v7001 = vsel %vm5131, %v6993, %v6994
        %v7002 = vsel %vm5131, %v6992, %v6993
        %v7003 = vsel %vm5131, %v6991, %v6992
        %v7004 = vsel %vm5131, %v6990, %v6991
        %v7005 = vsel %vm5131, %v6989, %v6990
        %v7006 = vsel %vm5131, %v6988, %v6989
        %v7007 = vsel %vm5131, %v6987, %v6988
        %v7008 = vsel %vm5131, %v6986, %v6987
        %v7009 = vsel %vm5131, %v6985, %v6986
        %v7010 = vsel %vm5131, %v6984, %v6985
        %v7011 = vsel %vm5131, %v6983, %v6984
        %v7012 = vsel %vm5131, %v6982, %v6983
        %v7013 = vsel %vm5131, %v6981, %v6982
        %v7014 = vsel %vm5131, %v6980, %v6981
        %v7015 = vsel %vm5131, %v6979, %v6980
        %v7016 = vsel %vm5131, %v6978, %v6979
        %v7017 = vsel %vm5131, %v6977, %v6978
        %v7018 = vsel %vm5131, %v6976, %v6977
        %v7019 = vsel %vm5131, %v6975, %v6976
        %v7020 = vsel %vm5131, %v6974, %v6975
        %v7021 = vsel %vm5131, %v6973, %v6974
        %v7022 = vsel %vm5131, %v6972, %v6973
        %v7023 = vsel %vm5131, %v6971, %v6972
        %v7024 = vsel %vm5131, %v6970, %v6971
        %v7025 = vsel %vm5131, %v6969, %v6970
        %v7026 = vsel %vm5131, %v6968, %v6969
        %v7027 = vsel %vm5131, %v6967, %v6968
        %v7028 = vsel %vm5131, %v6966, %v6967
        %v7029 = vsel %vm5131, %v6997, %v6966
        %vm7030 = vcmp.lt.s32.totalorder %v490, 4
        %vm7031 = vcmp.lt.s32.totalorder %v491, 4
        %vm7032 = vcmp.lt.s32.totalorder %v492, 4
        %vm7033 = vcmp.lt.s32.totalorder %v493, 4
        %vm7034 = vcmp.lt.s32.totalorder %v494, 4
        %vm7035 = vcmp.lt.s32.totalorder %v495, 4
        %vm7036 = vcmp.lt.s32.totalorder %v496, 4
        %vm7037 = vcmp.lt.s32.totalorder %v497, 4
        %vm7038 = vcmp.lt.s32.totalorder %v498, 4
        %vm7039 = vcmp.lt.s32.totalorder %v499, 4
        %vm7040 = vcmp.lt.s32.totalorder %v500, 4
        %vm7041 = vcmp.lt.s32.totalorder %v501, 4
        %vm7042 = vcmp.lt.s32.totalorder %v502, 4
        %vm7043 = vcmp.lt.s32.totalorder %v503, 4
        %vm7044 = vcmp.lt.s32.totalorder %v504, 4
        %vm7045 = vcmp.lt.s32.totalorder %v505, 4
        %vm7046 = vcmp.lt.s32.totalorder %v506, 4
        %vm7047 = vcmp.lt.s32.totalorder %v507, 4
        %vm7048 = vcmp.lt.s32.totalorder %v508, 4
        %vm7049 = vcmp.lt.s32.totalorder %v509, 4
        %vm7050 = vcmp.lt.s32.totalorder %v510, 4
        %vm7051 = vcmp.lt.s32.totalorder %v511, 4
        %vm7052 = vcmp.lt.s32.totalorder %v512, 4
        %vm7053 = vcmp.lt.s32.totalorder %v513, 4
        %vm7054 = vcmp.lt.s32.totalorder %v514, 4
        %vm7055 = vcmp.lt.s32.totalorder %v515, 4
        %vm7056 = vcmp.lt.s32.totalorder %v516, 4
        %vm7057 = vcmp.lt.s32.totalorder %v517, 4
        %vm7058 = vcmp.lt.s32.totalorder %v518, 4
        %vm7059 = vcmp.lt.s32.totalorder %v519, 4
        %vm7060 = vcmp.lt.s32.totalorder %v520, 4
        %vm7061 = vcmp.lt.s32.totalorder %v521, 4
        %vm7062 = vmand %vm7030, %vm5196
        %vm7063 = vmand %vm7031, %vm5197
        %vm7064 = vmand %vm7032, %vm5198
        %vm7065 = vmand %vm7033, %vm5199
        %vm7066 = vmand %vm7034, %vm5200
        %vm7067 = vmand %vm7035, %vm5201
        %vm7068 = vmand %vm7036, %vm5202
        %vm7069 = vmand %vm7037, %vm5203
        %vm7070 = vmand %vm7038, %vm5204
        %vm7071 = vmand %vm7039, %vm5205
        %vm7072 = vmand %vm7040, %vm5206
        %vm7073 = vmand %vm7041, %vm5207
        %vm7074 = vmand %vm7042, %vm5208
        %vm7075 = vmand %vm7043, %vm5209
        %vm7076 = vmand %vm7044, %vm5210
        %vm7077 = vmand %vm7045, %vm5211
        %vm7078 = vmand %vm7046, %vm5212
        %vm7079 = vmand %vm7047, %vm5213
        %vm7080 = vmand %vm7048, %vm5214
        %vm7081 = vmand %vm7049, %vm5215
        %vm7082 = vmand %vm7050, %vm5216
        %vm7083 = vmand %vm7051, %vm5217
        %vm7084 = vmand %vm7052, %vm5218
        %vm7085 = vmand %vm7053, %vm5219
        %vm7086 = vmand %vm7054, %vm5220
        %vm7087 = vmand %vm7055, %vm5221
        %vm7088 = vmand %vm7056, %vm5222
        %vm7089 = vmand %vm7057, %vm5223
        %vm7090 = vmand %vm7058, %vm5224
        %vm7091 = vmand %vm7059, %vm5225
        %vm7092 = vmand %vm7060, %vm5226
        %vm7093 = vmand %vm7061, %vm5227
        %v7094 = vsel %vm7062, %v7006, 0.0
        %v7095 = vsel %vm7063, %v7005, 0.0
        %v7096 = vsel %vm7064, %v7004, 0.0
        %v7097 = vsel %vm7065, %v7003, 0.0
        %v7098 = vsel %vm7066, %v7002, 0.0
        %v7099 = vsel %vm7067, %v7001, 0.0
        %v7100 = vsel %vm7068, %v7000, 0.0
        %v7101 = vsel %vm7069, %v6999, 0.0
        %v7102 = vsel %vm7070, %v6998, 0.0
        %v7103 = vsel %vm7071, %v7029, 0.0
        %v7104 = vsel %vm7072, %v7028, 0.0
        %v7105 = vsel %vm7073, %v7027, 0.0
        %v7106 = vsel %vm7074, %v7026, 0.0
        %v7107 = vsel %vm7075, %v7025, 0.0
        %v7108 = vsel %vm7076, %v7024, 0.0
        %v7109 = vsel %vm7077, %v7023, 0.0
        %v7110 = vsel %vm7078, %v7022, 0.0
        %v7111 = vsel %vm7079, %v7021, 0.0
        %v7112 = vsel %vm7080, %v7020, 0.0
        %v7113 = vsel %vm7081, %v7019, 0.0
        %v7114 = vsel %vm7082, %v7018, 0.0
        %v7115 = vsel %vm7083, %v7017, 0.0
        %v7116 = vsel %vm7084, %v7016, 0.0
        %v7117 = vsel %vm7085, %v7015, 0.0
        %v7118 = vsel %vm7086, %v7014, 0.0
        %v7119 = vsel %vm7087, %v7013, 0.0
        %v7120 = vsel %vm7088, %v7012, 0.0
        %v7121 = vsel %vm7089, %v7011, 0.0
        %v7122 = vsel %vm7090, %v7010, 0.0
        %v7123 = vsel %vm7091, %v7009, 0.0
        %v7124 = vsel %vm7092, %v7008, 0.0
        %v7125 = vsel %vm7093, %v7007, 0.0
        %v7126 = vadd.f32 %v6708, %v7094
        %v7127 = vadd.f32 %v6709, %v7095
        %v7128 = vadd.f32 %v6710, %v7096
        %v7129 = vadd.f32 %v6711, %v7097
        %v7130 = vadd.f32 %v6712, %v7098
        %v7131 = vadd.f32 %v6713, %v7099
        %v7132 = vadd.f32 %v6714, %v7100
        %v7133 = vadd.f32 %v6715, %v7101
        %v7134 = vadd.f32 %v6716, %v7102
        %v7135 = vadd.f32 %v6717, %v7103
        %v7136 = vadd.f32 %v6718, %v7104
        %v7137 = vadd.f32 %v6719, %v7105
        %v7138 = vadd.f32 %v6720, %v7106
        %v7139 = vadd.f32 %v6721, %v7107
        %v7140 = vadd.f32 %v6722, %v7108
        %v7141 = vadd.f32 %v6723, %v7109
        %v7142 = vadd.f32 %v6724, %v7110
        %v7143 = vadd.f32 %v6725, %v7111
        %v7144 = vadd.f32 %v6726, %v7112
        %v7145 = vadd.f32 %v6727, %v7113
        %v7146 = vadd.f32 %v6728, %v7114
        %v7147 = vadd.f32 %v6729, %v7115
        %v7148 = vadd.f32 %v6730, %v7116
        %v7149 = vadd.f32 %v6731, %v7117
        %v7150 = vadd.f32 %v6732, %v7118
        %v7151 = vadd.f32 %v6733, %v7119
        %v7152 = vadd.f32 %v6734, %v7120
        %v7153 = vadd.f32 %v6735, %v7121
        %v7154 = vadd.f32 %v6736, %v7122
        %v7155 = vadd.f32 %v6737, %v7123
        %v7156 = vadd.f32 %v6738, %v7124
        %v7157 = vadd.f32 %v6739, %v7125
        %s7158 = scalar_lea.vmem [#allocation8], 896
        %v7159 = vld [vmem:[%s7158] sm:$0xf]
        %v7160 = vld [vmem:[%s7158 + $0x4] sm:$0xf]
        %v7161 = vld [vmem:[%s7158 + $0x8] sm:$0xf]
        %v7162 = vld [vmem:[%s7158 + $0xc] sm:$0xf]
        %v7163 = vld [vmem:[%s7158 + $0x10] sm:$0xf]
        %v7164 = vld [vmem:[%s7158 + $0x14] sm:$0xf]
        %v7165 = vld [vmem:[%s7158 + $0x18] sm:$0xf]
        %v7166 = vld [vmem:[%s7158 + $0x1c] sm:$0xf]
        %v7167 = vld [vmem:[%s7158 + $0x20] sm:$0xf]
        %v7168 = vld [vmem:[%s7158 + $0x24] sm:$0xf]
        %v7169 = vld [vmem:[%s7158 + $0x28] sm:$0xf]
        %v7170 = vld [vmem:[%s7158 + $0x2c] sm:$0xf]
        %v7171 = vld [vmem:[%s7158 + $0x30] sm:$0xf]
        %v7172 = vld [vmem:[%s7158 + $0x34] sm:$0xf]
        %v7173 = vld [vmem:[%s7158 + $0x38] sm:$0xf]
        %v7174 = vld [vmem:[%s7158 + $0x3c] sm:$0xf]
        %v7191 = vunpack.c.l.b16 %v7159
        %v7192 = vunpack.c.l.b16 %v7160
        %v7193 = vunpack.c.l.b16 %v7161
        %v7194 = vunpack.c.l.b16 %v7162
        %v7195 = vunpack.c.l.b16 %v7163
        %v7196 = vunpack.c.l.b16 %v7164
        %v7197 = vunpack.c.l.b16 %v7165
        %v7198 = vunpack.c.l.b16 %v7166
        %v7199 = vunpack.c.l.b16 %v7167
        %v7200 = vunpack.c.l.b16 %v7168
        %v7201 = vunpack.c.l.b16 %v7169
        %v7202 = vunpack.c.l.b16 %v7170
        %v7203 = vunpack.c.l.b16 %v7171
        %v7204 = vunpack.c.l.b16 %v7172
        %v7205 = vunpack.c.l.b16 %v7173
        %v7206 = vunpack.c.l.b16 %v7174
        %v7207 = vpack.c.b16 %v7192, %v7191
        %v7208 = vpack.c.b16 %v7194, %v7193
        %v7209 = vpack.c.b16 %v7196, %v7195
        %v7210 = vpack.c.b16 %v7198, %v7197
        %v7211 = vpack.c.b16 %v7200, %v7199
        %v7212 = vpack.c.b16 %v7202, %v7201
        %v7213 = vpack.c.b16 %v7204, %v7203
        %v7214 = vpack.c.b16 %v7206, %v7205
        %7223 = vmatprep.subr.bf16.mxu0 0
        %7224 = vmatpush1.bf16.msra.mxu0 %v7214
        %7225 = vmatprep.subr.bf16.mxu0 0
        %7226 = vmatpush1.bf16.msra.mxu0 %v7213
        %7227 = vmatprep.subr.bf16.mxu0 0
        %7228 = vmatpush1.bf16.msra.mxu0 %v7212
        %7229 = vmatprep.subr.bf16.mxu0 0
        %7230 = vmatpush1.bf16.msra.mxu0 %v7211
        %7231 = vmatprep.subr.bf16.mxu0 0
        %7232 = vmatpush1.bf16.msra.mxu0 %v7210
        %7233 = vmatprep.subr.bf16.mxu0 0
        %7234 = vmatpush1.bf16.msra.mxu0 %v7209
        %7235 = vmatprep.subr.bf16.mxu0 0
        %7236 = vmatpush1.bf16.msra.mxu0 %v7208
        %7237 = vmatprep.subr.bf16.mxu0 0
        %7238 = vmatpush1.bf16.msra.mxu0 %v7207
        %7239 = vmatprep.subr.bf16.mxu0 0
        %7240 = vmatpush2.bf16.msra.mxu0 0
        %7241 = vmatprep.subr.bf16.mxu0 0
        %7242 = vmatpush2.bf16.msra.mxu0 0
        %7243 = vmatprep.subr.bf16.mxu0 0
        %7244 = vmatpush2.bf16.msra.mxu0 0
        %7245 = vmatprep.subr.bf16.mxu0 0
        %7246 = vmatpush2.bf16.msra.mxu0 0
        %7247 = vmatprep.subr.bf16.mxu0 0
        %7248 = vmatpush2.bf16.msra.mxu0 0
        %7249 = vmatprep.subr.bf16.mxu0 0
        %7250 = vmatpush2.bf16.msra.mxu0 0
        %7251 = vmatprep.subr.bf16.mxu0 0
        %7252 = vmatpush2.bf16.msra.mxu0 0
        %7253 = vmatprep.subr.bf16.mxu0 0
        %7254 = vmatpush2.bf16.msra.mxu0 0
        %7255 = vmatprep.mubr.bf16.mxu0 0
        %7256 = vmatmul.mubr.bf16.gmra.mxu0 %v969
        %v7257 = vpop.f32.mrf.mxu0
        %v7258 = vadd.f32 0.0, %v7257
        %v7259 = vpop.f32.mrf.mxu0
        %v7260 = vpop.f32.mrf.mxu0
        %v7261 = vadd.f32 0.0, %v7260
        %v7262 = vpop.f32.mrf.mxu0
        %7263 = vmatprep.mubr.bf16.mxu0 0
        %7264 = vmatmul.mubr.bf16.gmra.mxu0 %v970
        %v7265 = vpop.f32.mrf.mxu0
        %v7266 = vadd.f32 0.0, %v7265
        %v7267 = vpop.f32.mrf.mxu0
        %v7268 = vpop.f32.mrf.mxu0
        %v7269 = vadd.f32 0.0, %v7268
        %v7270 = vpop.f32.mrf.mxu0
        %7271 = vmatprep.mubr.bf16.mxu0 0
        %7272 = vmatmul.mubr.bf16.gmra.mxu0 %v971
        %v7273 = vpop.f32.mrf.mxu0
        %v7274 = vadd.f32 0.0, %v7273
        %v7275 = vpop.f32.mrf.mxu0
        %v7276 = vpop.f32.mrf.mxu0
        %v7277 = vadd.f32 0.0, %v7276
        %v7278 = vpop.f32.mrf.mxu0
        %7279 = vmatprep.mubr.bf16.mxu0 0
        %7280 = vmatmul.mubr.bf16.gmra.mxu0 %v972
        %v7281 = vpop.f32.mrf.mxu0
        %v7282 = vadd.f32 0.0, %v7281
        %v7283 = vpop.f32.mrf.mxu0
        %v7284 = vpop.f32.mrf.mxu0
        %v7285 = vadd.f32 0.0, %v7284
        %v7286 = vpop.f32.mrf.mxu0
        %7287 = vmatprep.mubr.bf16.mxu0 0
        %7288 = vmatmul.mubr.bf16.gmra.mxu0 %v973
        %v7289 = vpop.f32.mrf.mxu0
        %v7290 = vadd.f32 0.0, %v7289
        %v7291 = vpop.f32.mrf.mxu0
        %v7292 = vpop.f32.mrf.mxu0
        %v7293 = vadd.f32 0.0, %v7292
        %v7294 = vpop.f32.mrf.mxu0
        %7295 = vmatprep.mubr.bf16.mxu0 0
        %7296 = vmatmul.mubr.bf16.gmra.mxu0 %v974
        %v7297 = vpop.f32.mrf.mxu0
        %v7298 = vadd.f32 0.0, %v7297
        %v7299 = vpop.f32.mrf.mxu0
        %v7300 = vpop.f32.mrf.mxu0
        %v7301 = vadd.f32 0.0, %v7300
        %v7302 = vpop.f32.mrf.mxu0
        %7303 = vmatprep.mubr.bf16.mxu0 0
        %7304 = vmatmul.mubr.bf16.gmra.mxu0 %v975
        %v7305 = vpop.f32.mrf.mxu0
        %v7306 = vadd.f32 0.0, %v7305
        %v7307 = vpop.f32.mrf.mxu0
        %v7308 = vpop.f32.mrf.mxu0
        %v7309 = vadd.f32 0.0, %v7308
        %v7310 = vpop.f32.mrf.mxu0
        %7311 = vmatprep.mubr.bf16.mxu0 0
        %7312 = vmatmul.mubr.bf16.gmra.mxu0 %v976
        %v7313 = vpop.f32.mrf.mxu0
        %v7314 = vadd.f32 0.0, %v7313
        %v7315 = vpop.f32.mrf.mxu0
        %v7316 = vpop.f32.mrf.mxu0
        %v7317 = vadd.f32 0.0, %v7316
        %v7318 = vpop.f32.mrf.mxu0
        %7319 = vmatprep.mubr.bf16.mxu0 0
        %7320 = vmatmul.mubr.bf16.gmra.mxu0 %v977
        %v7321 = vpop.f32.mrf.mxu0
        %v7322 = vadd.f32 0.0, %v7321
        %v7323 = vpop.f32.mrf.mxu0
        %v7324 = vpop.f32.mrf.mxu0
        %v7325 = vadd.f32 0.0, %v7324
        %v7326 = vpop.f32.mrf.mxu0
        %7327 = vmatprep.mubr.bf16.mxu0 0
        %7328 = vmatmul.mubr.bf16.gmra.mxu0 %v978
        %v7329 = vpop.f32.mrf.mxu0
        %v7330 = vadd.f32 0.0, %v7329
        %v7331 = vpop.f32.mrf.mxu0
        %v7332 = vpop.f32.mrf.mxu0
        %v7333 = vadd.f32 0.0, %v7332
        %v7334 = vpop.f32.mrf.mxu0
        %7335 = vmatprep.mubr.bf16.mxu0 0
        %7336 = vmatmul.mubr.bf16.gmra.mxu0 %v979
        %v7337 = vpop.f32.mrf.mxu0
        %v7338 = vadd.f32 0.0, %v7337
        %v7339 = vpop.f32.mrf.mxu0
        %v7340 = vpop.f32.mrf.mxu0
        %v7341 = vadd.f32 0.0, %v7340
        %v7342 = vpop.f32.mrf.mxu0
        %7343 = vmatprep.mubr.bf16.mxu0 0
        %7344 = vmatmul.mubr.bf16.gmra.mxu0 %v980
        %v7345 = vpop.f32.mrf.mxu0
        %v7346 = vadd.f32 0.0, %v7345
        %v7347 = vpop.f32.mrf.mxu0
        %v7348 = vpop.f32.mrf.mxu0
        %v7349 = vadd.f32 0.0, %v7348
        %v7350 = vpop.f32.mrf.mxu0
        %7351 = vmatprep.mubr.bf16.mxu0 0
        %7352 = vmatmul.mubr.bf16.gmra.mxu0 %v981
        %v7353 = vpop.f32.mrf.mxu0
        %v7354 = vadd.f32 0.0, %v7353
        %v7355 = vpop.f32.mrf.mxu0
        %v7356 = vpop.f32.mrf.mxu0
        %v7357 = vadd.f32 0.0, %v7356
        %v7358 = vpop.f32.mrf.mxu0
        %7359 = vmatprep.mubr.bf16.mxu0 0
        %7360 = vmatmul.mubr.bf16.gmra.mxu0 %v982
        %v7361 = vpop.f32.mrf.mxu0
        %v7362 = vadd.f32 0.0, %v7361
        %v7363 = vpop.f32.mrf.mxu0
        %v7364 = vpop.f32.mrf.mxu0
        %v7365 = vadd.f32 0.0, %v7364
        %v7366 = vpop.f32.mrf.mxu0
        %7367 = vmatprep.mubr.bf16.mxu0 0
        %7368 = vmatmul.mubr.bf16.gmra.mxu0 %v983
        %v7369 = vpop.f32.mrf.mxu0
        %v7370 = vadd.f32 0.0, %v7369
        %v7371 = vpop.f32.mrf.mxu0
        %v7372 = vpop.f32.mrf.mxu0
        %v7373 = vadd.f32 0.0, %v7372
        %v7374 = vpop.f32.mrf.mxu0
        %7375 = vmatprep.mubr.bf16.mxu0 0
        %7376 = vmatmul.mubr.bf16.gmra.mxu0 %v984
        %v7377 = vpop.f32.mrf.mxu0
        %v7378 = vadd.f32 0.0, %v7377
        %v7379 = vpop.f32.mrf.mxu0
        %v7380 = vpop.f32.mrf.mxu0
        %v7381 = vadd.f32 0.0, %v7380
        %v7382 = vpop.f32.mrf.mxu0
        %7383 = vdwg.mxu0
        %v7384 = vsel %vm7030, %v7354, 0.0
        %v7385 = vsel %vm7031, %v7357, 0.0
        %v7386 = vsel %vm7032, %v7362, 0.0
        %v7387 = vsel %vm7033, %v7365, 0.0
        %v7388 = vsel %vm7034, %v7370, 0.0
        %v7389 = vsel %vm7035, %v7373, 0.0
        %v7390 = vsel %vm7036, %v7378, 0.0
        %v7391 = vsel %vm7037, %v7381, 0.0
        %v7392 = vsel %vm7038, %v7258, 0.0
        %v7393 = vsel %vm7039, %v7261, 0.0
        %v7394 = vsel %vm7040, %v7266, 0.0
        %v7395 = vsel %vm7041, %v7269, 0.0
        %v7396 = vsel %vm7042, %v7274, 0.0
        %v7397 = vsel %vm7043, %v7277, 0.0
        %v7398 = vsel %vm7044, %v7282, 0.0
        %v7399 = vsel %vm7045, %v7285, 0.0
        %v7400 = vsel %vm7046, %v7290, 0.0
        %v7401 = vsel %vm7047, %v7293, 0.0
        %v7402 = vsel %vm7048, %v7298, 0.0
        %v7403 = vsel %vm7049, %v7301, 0.0
        %v7404 = vsel %vm7050, %v7306, 0.0
        %v7405 = vsel %vm7051, %v7309, 0.0
        %v7406 = vsel %vm7052, %v7314, 0.0
        %v7407 = vsel %vm7053, %v7317, 0.0
        %v7408 = vsel %vm7054, %v7322, 0.0
        %v7409 = vsel %vm7055, %v7325, 0.0
        %v7410 = vsel %vm7056, %v7330, 0.0
        %v7411 = vsel %vm7057, %v7333, 0.0
        %v7412 = vsel %vm7058, %v7338, 0.0
        %v7413 = vsel %vm7059, %v7341, 0.0
        %v7414 = vsel %vm7060, %v7346, 0.0
        %v7415 = vsel %vm7061, %v7349, 0.0
        %v7416 = vadd.f32 %v7126, %v7384
        %v7417 = vadd.f32 %v7127, %v7385
        %v7418 = vadd.f32 %v7128, %v7386
        %v7419 = vadd.f32 %v7129, %v7387
        %v7420 = vadd.f32 %v7130, %v7388
        %v7421 = vadd.f32 %v7131, %v7389
        %v7422 = vadd.f32 %v7132, %v7390
        %v7423 = vadd.f32 %v7133, %v7391
        %v7424 = vadd.f32 %v7134, %v7392
        %v7425 = vadd.f32 %v7135, %v7393
        %v7426 = vadd.f32 %v7136, %v7394
        %v7427 = vadd.f32 %v7137, %v7395
        %v7428 = vadd.f32 %v7138, %v7396
        %v7429 = vadd.f32 %v7139, %v7397
        %v7430 = vadd.f32 %v7140, %v7398
        %v7431 = vadd.f32 %v7141, %v7399
        %v7432 = vadd.f32 %v7142, %v7400
        %v7433 = vadd.f32 %v7143, %v7401
        %v7434 = vadd.f32 %v7144, %v7402
        %v7435 = vadd.f32 %v7145, %v7403
        %v7436 = vadd.f32 %v7146, %v7404
        %v7437 = vadd.f32 %v7147, %v7405
        %v7438 = vadd.f32 %v7148, %v7406
        %v7439 = vadd.f32 %v7149, %v7407
        %v7440 = vadd.f32 %v7150, %v7408
        %v7441 = vadd.f32 %v7151, %v7409
        %v7442 = vadd.f32 %v7152, %v7410
        %v7443 = vadd.f32 %v7153, %v7411
        %v7444 = vadd.f32 %v7154, %v7412
        %v7445 = vadd.f32 %v7155, %v7413
        %v7446 = vadd.f32 %v7156, %v7414
        %v7447 = vadd.f32 %v7157, %v7415
        %s7448 = scalar_lea.vmem [#allocation8], 960
        %v7449 = vld [vmem:[%s7448] sm:$0xf]
        %v7450 = vld [vmem:[%s7448 + $0x4] sm:$0xf]
        %v7451 = vld [vmem:[%s7448 + $0x8] sm:$0xf]
        %v7452 = vld [vmem:[%s7448 + $0xc] sm:$0xf]
        %v7453 = vld [vmem:[%s7448 + $0x10] sm:$0xf]
        %v7454 = vld [vmem:[%s7448 + $0x14] sm:$0xf]
        %v7455 = vld [vmem:[%s7448 + $0x18] sm:$0xf]
        %v7456 = vld [vmem:[%s7448 + $0x1c] sm:$0xf]
        %v7457 = vld [vmem:[%s7448 + $0x20] sm:$0xf]
        %v7458 = vld [vmem:[%s7448 + $0x24] sm:$0xf]
        %v7459 = vld [vmem:[%s7448 + $0x28] sm:$0xf]
        %v7460 = vld [vmem:[%s7448 + $0x2c] sm:$0xf]
        %v7461 = vld [vmem:[%s7448 + $0x30] sm:$0xf]
        %v7462 = vld [vmem:[%s7448 + $0x34] sm:$0xf]
        %v7463 = vld [vmem:[%s7448 + $0x38] sm:$0xf]
        %v7464 = vld [vmem:[%s7448 + $0x3c] sm:$0xf]
        %v7481 = vunpack.c.l.b16 %v7449
        %v7482 = vunpack.c.l.b16 %v7450
        %v7483 = vunpack.c.l.b16 %v7451
        %v7484 = vunpack.c.l.b16 %v7452
        %v7485 = vunpack.c.l.b16 %v7453
        %v7486 = vunpack.c.l.b16 %v7454
        %v7487 = vunpack.c.l.b16 %v7455
        %v7488 = vunpack.c.l.b16 %v7456
        %v7489 = vunpack.c.l.b16 %v7457
        %v7490 = vunpack.c.l.b16 %v7458
        %v7491 = vunpack.c.l.b16 %v7459
        %v7492 = vunpack.c.l.b16 %v7460
        %v7493 = vunpack.c.l.b16 %v7461
        %v7494 = vunpack.c.l.b16 %v7462
        %v7495 = vunpack.c.l.b16 %v7463
        %v7496 = vunpack.c.l.b16 %v7464
        %v7497 = vpack.c.b16 %v7482, %v7481
        %v7498 = vpack.c.b16 %v7484, %v7483
        %v7499 = vpack.c.b16 %v7486, %v7485
        %v7500 = vpack.c.b16 %v7488, %v7487
        %v7501 = vpack.c.b16 %v7490, %v7489
        %v7502 = vpack.c.b16 %v7492, %v7491
        %v7503 = vpack.c.b16 %v7494, %v7493
        %v7504 = vpack.c.b16 %v7496, %v7495
        %7513 = vmatprep.subr.bf16.mxu0 0
        %7514 = vmatpush1.bf16.msra.mxu0 %v7504
        %7515 = vmatprep.subr.bf16.mxu0 0
        %7516 = vmatpush1.bf16.msra.mxu0 %v7503
        %7517 = vmatprep.subr.bf16.mxu0 0
        %7518 = vmatpush1.bf16.msra.mxu0 %v7502
        %7519 = vmatprep.subr.bf16.mxu0 0
        %7520 = vmatpush1.bf16.msra.mxu0 %v7501
        %7521 = vmatprep.subr.bf16.mxu0 0
        %7522 = vmatpush1.bf16.msra.mxu0 %v7500
        %7523 = vmatprep.subr.bf16.mxu0 0
        %7524 = vmatpush1.bf16.msra.mxu0 %v7499
        %7525 = vmatprep.subr.bf16.mxu0 0
        %7526 = vmatpush1.bf16.msra.mxu0 %v7498
        %7527 = vmatprep.subr.bf16.mxu0 0
        %7528 = vmatpush1.bf16.msra.mxu0 %v7497
        %7529 = vmatprep.subr.bf16.mxu0 0
        %7530 = vmatpush2.bf16.msra.mxu0 0
        %7531 = vmatprep.subr.bf16.mxu0 0
        %7532 = vmatpush2.bf16.msra.mxu0 0
        %7533 = vmatprep.subr.bf16.mxu0 0
        %7534 = vmatpush2.bf16.msra.mxu0 0
        %7535 = vmatprep.subr.bf16.mxu0 0
        %7536 = vmatpush2.bf16.msra.mxu0 0
        %7537 = vmatprep.subr.bf16.mxu0 0
        %7538 = vmatpush2.bf16.msra.mxu0 0
        %7539 = vmatprep.subr.bf16.mxu0 0
        %7540 = vmatpush2.bf16.msra.mxu0 0
        %7541 = vmatprep.subr.bf16.mxu0 0
        %7542 = vmatpush2.bf16.msra.mxu0 0
        %7543 = vmatprep.subr.bf16.mxu0 0
        %7544 = vmatpush2.bf16.msra.mxu0 0
        %7545 = vmatprep.mubr.bf16.mxu0 0
        %7546 = vmatmul.mubr.bf16.gmra.mxu0 %v969
        %v7547 = vpop.f32.mrf.mxu0
        %v7548 = vadd.f32 0.0, %v7547
        %v7549 = vpop.f32.mrf.mxu0
        %v7550 = vpop.f32.mrf.mxu0
        %v7551 = vadd.f32 0.0, %v7550
        %v7552 = vpop.f32.mrf.mxu0
        %7553 = vmatprep.mubr.bf16.mxu0 0
        %7554 = vmatmul.mubr.bf16.gmra.mxu0 %v970
        %v7555 = vpop.f32.mrf.mxu0
        %v7556 = vadd.f32 0.0, %v7555
        %v7557 = vpop.f32.mrf.mxu0
        %v7558 = vpop.f32.mrf.mxu0
        %v7559 = vadd.f32 0.0, %v7558
        %v7560 = vpop.f32.mrf.mxu0
        %7561 = vmatprep.mubr.bf16.mxu0 0
        %7562 = vmatmul.mubr.bf16.gmra.mxu0 %v971
        %v7563 = vpop.f32.mrf.mxu0
        %v7564 = vadd.f32 0.0, %v7563
        %v7565 = vpop.f32.mrf.mxu0
        %v7566 = vpop.f32.mrf.mxu0
        %v7567 = vadd.f32 0.0, %v7566
        %v7568 = vpop.f32.mrf.mxu0
        %7569 = vmatprep.mubr.bf16.mxu0 0
        %7570 = vmatmul.mubr.bf16.gmra.mxu0 %v972
        %v7571 = vpop.f32.mrf.mxu0
        %v7572 = vadd.f32 0.0, %v7571
        %v7573 = vpop.f32.mrf.mxu0
        %v7574 = vpop.f32.mrf.mxu0
        %v7575 = vadd.f32 0.0, %v7574
        %v7576 = vpop.f32.mrf.mxu0
        %7577 = vmatprep.mubr.bf16.mxu0 0
        %7578 = vmatmul.mubr.bf16.gmra.mxu0 %v973
        %v7579 = vpop.f32.mrf.mxu0
        %v7580 = vadd.f32 0.0, %v7579
        %v7581 = vpop.f32.mrf.mxu0
        %v7582 = vpop.f32.mrf.mxu0
        %v7583 = vadd.f32 0.0, %v7582
        %v7584 = vpop.f32.mrf.mxu0
        %7585 = vmatprep.mubr.bf16.mxu0 0
        %7586 = vmatmul.mubr.bf16.gmra.mxu0 %v974
        %v7587 = vpop.f32.mrf.mxu0
        %v7588 = vadd.f32 0.0, %v7587
        %v7589 = vpop.f32.mrf.mxu0
        %v7590 = vpop.f32.mrf.mxu0
        %v7591 = vadd.f32 0.0, %v7590
        %v7592 = vpop.f32.mrf.mxu0
        %7593 = vmatprep.mubr.bf16.mxu0 0
        %7594 = vmatmul.mubr.bf16.gmra.mxu0 %v975
        %v7595 = vpop.f32.mrf.mxu0
        %v7596 = vadd.f32 0.0, %v7595
        %v7597 = vpop.f32.mrf.mxu0
        %v7598 = vpop.f32.mrf.mxu0
        %v7599 = vadd.f32 0.0, %v7598
        %v7600 = vpop.f32.mrf.mxu0
        %7601 = vmatprep.mubr.bf16.mxu0 0
        %7602 = vmatmul.mubr.bf16.gmra.mxu0 %v976
        %v7603 = vpop.f32.mrf.mxu0
        %v7604 = vadd.f32 0.0, %v7603
        %v7605 = vpop.f32.mrf.mxu0
        %v7606 = vpop.f32.mrf.mxu0
        %v7607 = vadd.f32 0.0, %v7606
        %v7608 = vpop.f32.mrf.mxu0
        %7609 = vmatprep.mubr.bf16.mxu0 0
        %7610 = vmatmul.mubr.bf16.gmra.mxu0 %v977
        %v7611 = vpop.f32.mrf.mxu0
        %v7612 = vadd.f32 0.0, %v7611
        %v7613 = vpop.f32.mrf.mxu0
        %v7614 = vpop.f32.mrf.mxu0
        %v7615 = vadd.f32 0.0, %v7614
        %v7616 = vpop.f32.mrf.mxu0
        %7617 = vmatprep.mubr.bf16.mxu0 0
        %7618 = vmatmul.mubr.bf16.gmra.mxu0 %v978
        %v7619 = vpop.f32.mrf.mxu0
        %v7620 = vadd.f32 0.0, %v7619
        %v7621 = vpop.f32.mrf.mxu0
        %v7622 = vpop.f32.mrf.mxu0
        %v7623 = vadd.f32 0.0, %v7622
        %v7624 = vpop.f32.mrf.mxu0
        %7625 = vmatprep.mubr.bf16.mxu0 0
        %7626 = vmatmul.mubr.bf16.gmra.mxu0 %v979
        %v7627 = vpop.f32.mrf.mxu0
        %v7628 = vadd.f32 0.0, %v7627
        %v7629 = vpop.f32.mrf.mxu0
        %v7630 = vpop.f32.mrf.mxu0
        %v7631 = vadd.f32 0.0, %v7630
        %v7632 = vpop.f32.mrf.mxu0
        %7633 = vmatprep.mubr.bf16.mxu0 0
        %7634 = vmatmul.mubr.bf16.gmra.mxu0 %v980
        %v7635 = vpop.f32.mrf.mxu0
        %v7636 = vadd.f32 0.0, %v7635
        %v7637 = vpop.f32.mrf.mxu0
        %v7638 = vpop.f32.mrf.mxu0
        %v7639 = vadd.f32 0.0, %v7638
        %v7640 = vpop.f32.mrf.mxu0
        %7641 = vmatprep.mubr.bf16.mxu0 0
        %7642 = vmatmul.mubr.bf16.gmra.mxu0 %v981
        %v7643 = vpop.f32.mrf.mxu0
        %v7644 = vadd.f32 0.0, %v7643
        %v7645 = vpop.f32.mrf.mxu0
        %v7646 = vpop.f32.mrf.mxu0
        %v7647 = vadd.f32 0.0, %v7646
        %v7648 = vpop.f32.mrf.mxu0
        %7649 = vmatprep.mubr.bf16.mxu0 0
        %7650 = vmatmul.mubr.bf16.gmra.mxu0 %v982
        %v7651 = vpop.f32.mrf.mxu0
        %v7652 = vadd.f32 0.0, %v7651
        %v7653 = vpop.f32.mrf.mxu0
        %v7654 = vpop.f32.mrf.mxu0
        %v7655 = vadd.f32 0.0, %v7654
        %v7656 = vpop.f32.mrf.mxu0
        %7657 = vmatprep.mubr.bf16.mxu0 0
        %7658 = vmatmul.mubr.bf16.gmra.mxu0 %v983
        %v7659 = vpop.f32.mrf.mxu0
        %v7660 = vadd.f32 0.0, %v7659
        %v7661 = vpop.f32.mrf.mxu0
        %v7662 = vpop.f32.mrf.mxu0
        %v7663 = vadd.f32 0.0, %v7662
        %v7664 = vpop.f32.mrf.mxu0
        %7665 = vmatprep.mubr.bf16.mxu0 0
        %7666 = vmatmul.mubr.bf16.gmra.mxu0 %v984
        %v7667 = vpop.f32.mrf.mxu0
        %v7668 = vadd.f32 0.0, %v7667
        %v7669 = vpop.f32.mrf.mxu0
        %v7670 = vpop.f32.mrf.mxu0
        %v7671 = vadd.f32 0.0, %v7670
        %v7672 = vpop.f32.mrf.mxu0
        %7673 = vdwg.mxu0
        %v7674 = vrot.slane %v7548, 4
        %v7675 = vrot.slane %v7551, 4
        %v7676 = vrot.slane %v7556, 4
        %v7677 = vrot.slane %v7559, 4
        %v7678 = vrot.slane %v7564, 4
        %v7679 = vrot.slane %v7567, 4
        %v7680 = vrot.slane %v7572, 4
        %v7681 = vrot.slane %v7575, 4
        %v7682 = vrot.slane %v7580, 4
        %v7683 = vrot.slane %v7583, 4
        %v7684 = vrot.slane %v7588, 4
        %v7685 = vrot.slane %v7591, 4
        %v7686 = vrot.slane %v7596, 4
        %v7687 = vrot.slane %v7599, 4
        %v7688 = vrot.slane %v7604, 4
        %v7689 = vrot.slane %v7607, 4
        %v7690 = vrot.slane %v7612, 4
        %v7691 = vrot.slane %v7615, 4
        %v7692 = vrot.slane %v7620, 4
        %v7693 = vrot.slane %v7623, 4
        %v7694 = vrot.slane %v7628, 4
        %v7695 = vrot.slane %v7631, 4
        %v7696 = vrot.slane %v7636, 4
        %v7697 = vrot.slane %v7639, 4
        %v7698 = vrot.slane %v7644, 4
        %v7699 = vrot.slane %v7647, 4
        %v7700 = vrot.slane %v7652, 4
        %v7701 = vrot.slane %v7655, 4
        %v7702 = vrot.slane %v7660, 4
        %v7703 = vrot.slane %v7663, 4
        %v7704 = vrot.slane %v7668, 4
        %v7705 = vrot.slane %v7671, 4
        %v7706 = vsel %vm5131, %v7704, %v7705
        %v7707 = vsel %vm5131, %v7703, %v7704
        %v7708 = vsel %vm5131, %v7702, %v7703
        %v7709 = vsel %vm5131, %v7701, %v7702
        %v7710 = vsel %vm5131, %v7700, %v7701
        %v7711 = vsel %vm5131, %v7699, %v7700
        %v7712 = vsel %vm5131, %v7698, %v7699
        %v7713 = vsel %vm5131, %v7697, %v7698
        %v7714 = vsel %vm5131, %v7696, %v7697
        %v7715 = vsel %vm5131, %v7695, %v7696
        %v7716 = vsel %vm5131, %v7694, %v7695
        %v7717 = vsel %vm5131, %v7693, %v7694
        %v7718 = vsel %vm5131, %v7692, %v7693
        %v7719 = vsel %vm5131, %v7691, %v7692
        %v7720 = vsel %vm5131, %v7690, %v7691
        %v7721 = vsel %vm5131, %v7689, %v7690
        %v7722 = vsel %vm5131, %v7688, %v7689
        %v7723 = vsel %vm5131, %v7687, %v7688
        %v7724 = vsel %vm5131, %v7686, %v7687
        %v7725 = vsel %vm5131, %v7685, %v7686
        %v7726 = vsel %vm5131, %v7684, %v7685
        %v7727 = vsel %vm5131, %v7683, %v7684
        %v7728 = vsel %vm5131, %v7682, %v7683
        %v7729 = vsel %vm5131, %v7681, %v7682
        %v7730 = vsel %vm5131, %v7680, %v7681
        %v7731 = vsel %vm5131, %v7679, %v7680
        %v7732 = vsel %vm5131, %v7678, %v7679
        %v7733 = vsel %vm5131, %v7677, %v7678
        %v7734 = vsel %vm5131, %v7676, %v7677
        %v7735 = vsel %vm5131, %v7675, %v7676
        %v7736 = vsel %vm5131, %v7674, %v7675
        %v7737 = vsel %vm5131, %v7705, %v7674
        %vm7738 = vmand %vm7030, %vm5904
        %vm7739 = vmand %vm7031, %vm5905
        %vm7740 = vmand %vm7032, %vm5906
        %vm7741 = vmand %vm7033, %vm5907
        %vm7742 = vmand %vm7034, %vm5908
        %vm7743 = vmand %vm7035, %vm5909
        %vm7744 = vmand %vm7036, %vm5910
        %vm7745 = vmand %vm7037, %vm5911
        %vm7746 = vmand %vm7038, %vm5912
        %vm7747 = vmand %vm7039, %vm5913
        %vm7748 = vmand %vm7040, %vm5914
        %vm7749 = vmand %vm7041, %vm5915
        %vm7750 = vmand %vm7042, %vm5916
        %vm7751 = vmand %vm7043, %vm5917
        %vm7752 = vmand %vm7044, %vm5918
        %vm7753 = vmand %vm7045, %vm5919
        %vm7754 = vmand %vm7046, %vm5920
        %vm7755 = vmand %vm7047, %vm5921
        %vm7756 = vmand %vm7048, %vm5922
        %vm7757 = vmand %vm7049, %vm5923
        %vm7758 = vmand %vm7050, %vm5924
        %vm7759 = vmand %vm7051, %vm5925
        %vm7760 = vmand %vm7052, %vm5926
        %vm7761 = vmand %vm7053, %vm5927
        %vm7762 = vmand %vm7054, %vm5928
        %vm7763 = vmand %vm7055, %vm5929
        %vm7764 = vmand %vm7056, %vm5930
        %vm7765 = vmand %vm7057, %vm5931
        %vm7766 = vmand %vm7058, %vm5932
        %vm7767 = vmand %vm7059, %vm5933
        %vm7768 = vmand %vm7060, %vm5934
        %vm7769 = vmand %vm7061, %vm5935
        %v7770 = vsel %vm7738, %v7711, 0.0
        %v7771 = vsel %vm7739, %v7710, 0.0
        %v7772 = vsel %vm7740, %v7709, 0.0
        %v7773 = vsel %vm7741, %v7708, 0.0
        %v7774 = vsel %vm7742, %v7707, 0.0
        %v7775 = vsel %vm7743, %v7706, 0.0
        %v7776 = vsel %vm7744, %v7737, 0.0
        %v7777 = vsel %vm7745, %v7736, 0.0
        %v7778 = vsel %vm7746, %v7735, 0.0
        %v7779 = vsel %vm7747, %v7734, 0.0
        %v7780 = vsel %vm7748, %v7733, 0.0
        %v7781 = vsel %vm7749, %v7732, 0.0
        %v7782 = vsel %vm7750, %v7731, 0.0
        %v7783 = vsel %vm7751, %v7730, 0.0
        %v7784 = vsel %vm7752, %v7729, 0.0
        %v7785 = vsel %vm7753, %v7728, 0.0
        %v7786 = vsel %vm7754, %v7727, 0.0
        %v7787 = vsel %vm7755, %v7726, 0.0
        %v7788 = vsel %vm7756, %v7725, 0.0
        %v7789 = vsel %vm7757, %v7724, 0.0
        %v7790 = vsel %vm7758, %v7723, 0.0
        %v7791 = vsel %vm7759, %v7722, 0.0
        %v7792 = vsel %vm7760, %v7721, 0.0
        %v7793 = vsel %vm7761, %v7720, 0.0
        %v7794 = vsel %vm7762, %v7719, 0.0
        %v7795 = vsel %vm7763, %v7718, 0.0
        %v7796 = vsel %vm7764, %v7717, 0.0
        %v7797 = vsel %vm7765, %v7716, 0.0
        %v7798 = vsel %vm7766, %v7715, 0.0
        %v7799 = vsel %vm7767, %v7714, 0.0
        %v7800 = vsel %vm7768, %v7713, 0.0
        %v7801 = vsel %vm7769, %v7712, 0.0
        %v7802 = vadd.f32 %v7416, %v7770
        %v7803 = vadd.f32 %v7417, %v7771
        %v7804 = vadd.f32 %v7418, %v7772
        %v7805 = vadd.f32 %v7419, %v7773
        %v7806 = vadd.f32 %v7420, %v7774
        %v7807 = vadd.f32 %v7421, %v7775
        %v7808 = vadd.f32 %v7422, %v7776
        %v7809 = vadd.f32 %v7423, %v7777
        %v7810 = vadd.f32 %v7424, %v7778
        %v7811 = vadd.f32 %v7425, %v7779
        %v7812 = vadd.f32 %v7426, %v7780
        %v7813 = vadd.f32 %v7427, %v7781
        %v7814 = vadd.f32 %v7428, %v7782
        %v7815 = vadd.f32 %v7429, %v7783
        %v7816 = vadd.f32 %v7430, %v7784
        %v7817 = vadd.f32 %v7431, %v7785
        %v7818 = vadd.f32 %v7432, %v7786
        %v7819 = vadd.f32 %v7433, %v7787
        %v7820 = vadd.f32 %v7434, %v7788
        %v7821 = vadd.f32 %v7435, %v7789
        %v7822 = vadd.f32 %v7436, %v7790
        %v7823 = vadd.f32 %v7437, %v7791
        %v7824 = vadd.f32 %v7438, %v7792
        %v7825 = vadd.f32 %v7439, %v7793
        %v7826 = vadd.f32 %v7440, %v7794
        %v7827 = vadd.f32 %v7441, %v7795
        %v7828 = vadd.f32 %v7442, %v7796
        %v7829 = vadd.f32 %v7443, %v7797
        %v7830 = vadd.f32 %v7444, %v7798
        %v7831 = vadd.f32 %v7445, %v7799
        %v7832 = vadd.f32 %v7446, %v7800
        %v7833 = vadd.f32 %v7447, %v7801
        %v7834 = vmax.f32 %v1084, 0.0
        %v7835 = vmax.f32 %v1087, 0.0
        %v7836 = vmax.f32 %v1092, 0.0
        %v7837 = vmax.f32 %v1095, 0.0
        %v7838 = vmax.f32 %v1100, 0.0
        %v7839 = vmax.f32 %v1103, 0.0
        %v7840 = vmax.f32 %v1108, 0.0
        %v7841 = vmax.f32 %v1111, 0.0
        %v7842 = vmax.f32 %v1116, 0.0
        %v7843 = vmax.f32 %v1119, 0.0
        %v7844 = vmax.f32 %v1124, 0.0
        %v7845 = vmax.f32 %v1127, 0.0
        %v7846 = vmax.f32 %v1132, 0.0
        %v7847 = vmax.f32 %v1135, 0.0
        %v7848 = vmax.f32 %v1140, 0.0
        %v7849 = vmax.f32 %v1143, 0.0
        %v7850 = vmax.f32 %v1148, 0.0
        %v7851 = vmax.f32 %v1151, 0.0
        %v7852 = vmax.f32 %v1156, 0.0
        %v7853 = vmax.f32 %v1159, 0.0
        %v7854 = vmax.f32 %v1164, 0.0
        %v7855 = vmax.f32 %v1167, 0.0
        %v7856 = vmax.f32 %v1172, 0.0
        %v7857 = vmax.f32 %v1175, 0.0
        %v7858 = vmax.f32 %v1180, 0.0
        %v7859 = vmax.f32 %v1183, 0.0
        %v7860 = vmax.f32 %v1188, 0.0
        %v7861 = vmax.f32 %v1191, 0.0
        %v7862 = vmax.f32 %v1196, 0.0
        %v7863 = vmax.f32 %v1199, 0.0
        %v7864 = vmax.f32 %v1204, 0.0
        %v7865 = vmax.f32 %v1207, 0.0
        %v7866 = vpack.c.bf16 %v7835, %v7834
        %v7867 = vpack.c.bf16 %v7837, %v7836
        %v7868 = vpack.c.bf16 %v7839, %v7838
        %v7869 = vpack.c.bf16 %v7841, %v7840
        %v7870 = vpack.c.bf16 %v7843, %v7842
        %v7871 = vpack.c.bf16 %v7845, %v7844
        %v7872 = vpack.c.bf16 %v7847, %v7846
        %v7873 = vpack.c.bf16 %v7849, %v7848
        %v7874 = vpack.c.bf16 %v7851, %v7850
        %v7875 = vpack.c.bf16 %v7853, %v7852
        %v7876 = vpack.c.bf16 %v7855, %v7854
        %v7877 = vpack.c.bf16 %v7857, %v7856
        %v7878 = vpack.c.bf16 %v7859, %v7858
        %v7879 = vpack.c.bf16 %v7861, %v7860
        %v7880 = vpack.c.bf16 %v7863, %v7862
        %v7881 = vpack.c.bf16 %v7865, %v7864
        %v7882 = vld [vmem:[#allocation11] sm:$0xff]
        %v7883 = vld [vmem:[#allocation11 + $0x8] sm:$0xff]
        %v7884 = vld [vmem:[#allocation11 + $0x10] sm:$0xff]
        %v7885 = vld [vmem:[#allocation11 + $0x18] sm:$0xff]
        %v7886 = vld [vmem:[#allocation11 + $0x20] sm:$0xff]
        %v7887 = vld [vmem:[#allocation11 + $0x28] sm:$0xff]
        %v7888 = vld [vmem:[#allocation11 + $0x30] sm:$0xff]
        %v7889 = vld [vmem:[#allocation11 + $0x38] sm:$0xff]
        %v7890 = vld [vmem:[#allocation11 + $0x40] sm:$0xff]
        %v7891 = vld [vmem:[#allocation11 + $0x48] sm:$0xff]
        %v7892 = vld [vmem:[#allocation11 + $0x50] sm:$0xff]
        %v7893 = vld [vmem:[#allocation11 + $0x58] sm:$0xff]
        %v7894 = vld [vmem:[#allocation11 + $0x60] sm:$0xff]
        %v7895 = vld [vmem:[#allocation11 + $0x68] sm:$0xff]
        %v7896 = vld [vmem:[#allocation11 + $0x70] sm:$0xff]
        %v7897 = vld [vmem:[#allocation11 + $0x78] sm:$0xff]
        %v7914 = vunpack.c.l.b16 %v7882
        %v7915 = vunpack.c.h.b16 %v7882
        %v7916 = vunpack.c.l.b16 %v7883
        %v7917 = vunpack.c.h.b16 %v7883
        %v7918 = vunpack.c.l.b16 %v7884
        %v7919 = vunpack.c.h.b16 %v7884
        %v7920 = vunpack.c.l.b16 %v7885
        %v7921 = vunpack.c.h.b16 %v7885
        %v7922 = vunpack.c.l.b16 %v7886
        %v7923 = vunpack.c.h.b16 %v7886
        %v7924 = vunpack.c.l.b16 %v7887
        %v7925 = vunpack.c.h.b16 %v7887
        %v7926 = vunpack.c.l.b16 %v7888
        %v7927 = vunpack.c.h.b16 %v7888
        %v7928 = vunpack.c.l.b16 %v7889
        %v7929 = vunpack.c.h.b16 %v7889
        %v7930 = vunpack.c.l.b16 %v7890
        %v7931 = vunpack.c.h.b16 %v7890
        %v7932 = vunpack.c.l.b16 %v7891
        %v7933 = vunpack.c.h.b16 %v7891
        %v7934 = vunpack.c.l.b16 %v7892
        %v7935 = vunpack.c.h.b16 %v7892
        %v7936 = vunpack.c.l.b16 %v7893
        %v7937 = vunpack.c.h.b16 %v7893
        %v7938 = vunpack.c.l.b16 %v7894
        %v7939 = vunpack.c.h.b16 %v7894
        %v7940 = vunpack.c.l.b16 %v7895
        %v7941 = vunpack.c.h.b16 %v7895
        %v7942 = vunpack.c.l.b16 %v7896
        %v7943 = vunpack.c.h.b16 %v7896
        %v7944 = vunpack.c.l.b16 %v7897
        %v7945 = vunpack.c.h.b16 %v7897
        %v7946 = vpack.c.b16 %v7916, %v7914
        %v7947 = vpack.c.b16 %v7917, %v7915
        %v7948 = vpack.c.b16 %v7920, %v7918
        %v7949 = vpack.c.b16 %v7921, %v7919
        %v7950 = vpack.c.b16 %v7924, %v7922
        %v7951 = vpack.c.b16 %v7925, %v7923
        %v7952 = vpack.c.b16 %v7928, %v7926
        %v7953 = vpack.c.b16 %v7929, %v7927
        %v7954 = vpack.c.b16 %v7932, %v7930
        %v7955 = vpack.c.b16 %v7933, %v7931
        %v7956 = vpack.c.b16 %v7936, %v7934
        %v7957 = vpack.c.b16 %v7937, %v7935
        %v7958 = vpack.c.b16 %v7940, %v7938
        %v7959 = vpack.c.b16 %v7941, %v7939
        %v7960 = vpack.c.b16 %v7944, %v7942
        %v7961 = vpack.c.b16 %v7945, %v7943
        %7978 = vmatprep.subr.bf16.mxu0 %v7961
        %7979 = vmatpush1.bf16.msra.mxu0 %v7960
        %7980 = vmatprep.subr.bf16.mxu0 %v7959
        %7981 = vmatpush1.bf16.msra.mxu0 %v7958
        %7982 = vmatprep.subr.bf16.mxu0 %v7957
        %7983 = vmatpush1.bf16.msra.mxu0 %v7956
        %7984 = vmatprep.subr.bf16.mxu0 %v7955
        %7985 = vmatpush1.bf16.msra.mxu0 %v7954
        %7986 = vmatprep.subr.bf16.mxu0 %v7953
        %7987 = vmatpush1.bf16.msra.mxu0 %v7952
        %7988 = vmatprep.subr.bf16.mxu0 %v7951
        %7989 = vmatpush1.bf16.msra.mxu0 %v7950
        %7990 = vmatprep.subr.bf16.mxu0 %v7949
        %7991 = vmatpush1.bf16.msra.mxu0 %v7948
        %7992 = vmatprep.subr.bf16.mxu0 %v7947
        %7993 = vmatpush1.bf16.msra.mxu0 %v7946
        %7994 = vmatprep.subr.bf16.mxu0 0
        %7995 = vmatpush2.bf16.msra.mxu0 0
        %7996 = vmatprep.subr.bf16.mxu0 0
        %7997 = vmatpush2.bf16.msra.mxu0 0
        %7998 = vmatprep.subr.bf16.mxu0 0
        %7999 = vmatpush2.bf16.msra.mxu0 0
        %8000 = vmatprep.subr.bf16.mxu0 0
        %8001 = vmatpush2.bf16.msra.mxu0 0
        %8002 = vmatprep.subr.bf16.mxu0 0
        %8003 = vmatpush2.bf16.msra.mxu0 0
        %8004 = vmatprep.subr.bf16.mxu0 0
        %8005 = vmatpush2.bf16.msra.mxu0 0
        %8006 = vmatprep.subr.bf16.mxu0 0
        %8007 = vmatpush2.bf16.msra.mxu0 0
        %8008 = vmatprep.subr.bf16.mxu0 0
        %8009 = vmatpush2.bf16.msra.mxu0 0
        %8010 = vmatprep.mubr.bf16.mxu0 0
        %8011 = vmatmul.mubr.bf16.gmra.mxu0 %v7866
        %v8012 = vpop.f32.mrf.mxu0
        %v8013 = vadd.f32 0.0, %v8012
        %v8014 = vpop.f32.mrf.mxu0
        %v8015 = vadd.f32 0.0, %v8014
        %v8016 = vpop.f32.mrf.mxu0
        %v8017 = vadd.f32 0.0, %v8016
        %v8018 = vpop.f32.mrf.mxu0
        %v8019 = vadd.f32 0.0, %v8018
        %8020 = vmatprep.mubr.bf16.mxu0 0
        %8021 = vmatmul.mubr.bf16.gmra.mxu0 %v7867
        %v8022 = vpop.f32.mrf.mxu0
        %v8023 = vadd.f32 0.0, %v8022
        %v8024 = vpop.f32.mrf.mxu0
        %v8025 = vadd.f32 0.0, %v8024
        %v8026 = vpop.f32.mrf.mxu0
        %v8027 = vadd.f32 0.0, %v8026
        %v8028 = vpop.f32.mrf.mxu0
        %v8029 = vadd.f32 0.0, %v8028
        %8030 = vmatprep.mubr.bf16.mxu0 0
        %8031 = vmatmul.mubr.bf16.gmra.mxu0 %v7868
        %v8032 = vpop.f32.mrf.mxu0
        %v8033 = vadd.f32 0.0, %v8032
        %v8034 = vpop.f32.mrf.mxu0
        %v8035 = vadd.f32 0.0, %v8034
        %v8036 = vpop.f32.mrf.mxu0
        %v8037 = vadd.f32 0.0, %v8036
        %v8038 = vpop.f32.mrf.mxu0
        %v8039 = vadd.f32 0.0, %v8038
        %8040 = vmatprep.mubr.bf16.mxu0 0
        %8041 = vmatmul.mubr.bf16.gmra.mxu0 %v7869
        %v8042 = vpop.f32.mrf.mxu0
        %v8043 = vadd.f32 0.0, %v8042
        %v8044 = vpop.f32.mrf.mxu0
        %v8045 = vadd.f32 0.0, %v8044
        %v8046 = vpop.f32.mrf.mxu0
        %v8047 = vadd.f32 0.0, %v8046
        %v8048 = vpop.f32.mrf.mxu0
        %v8049 = vadd.f32 0.0, %v8048
        %8050 = vmatprep.mubr.bf16.mxu0 0
        %8051 = vmatmul.mubr.bf16.gmra.mxu0 %v7870
        %v8052 = vpop.f32.mrf.mxu0
        %v8053 = vadd.f32 0.0, %v8052
        %v8054 = vpop.f32.mrf.mxu0
        %v8055 = vadd.f32 0.0, %v8054
        %v8056 = vpop.f32.mrf.mxu0
        %v8057 = vadd.f32 0.0, %v8056
        %v8058 = vpop.f32.mrf.mxu0
        %v8059 = vadd.f32 0.0, %v8058
        %8060 = vmatprep.mubr.bf16.mxu0 0
        %8061 = vmatmul.mubr.bf16.gmra.mxu0 %v7871
        %v8062 = vpop.f32.mrf.mxu0
        %v8063 = vadd.f32 0.0, %v8062
        %v8064 = vpop.f32.mrf.mxu0
        %v8065 = vadd.f32 0.0, %v8064
        %v8066 = vpop.f32.mrf.mxu0
        %v8067 = vadd.f32 0.0, %v8066
        %v8068 = vpop.f32.mrf.mxu0
        %v8069 = vadd.f32 0.0, %v8068
        %8070 = vmatprep.mubr.bf16.mxu0 0
        %8071 = vmatmul.mubr.bf16.gmra.mxu0 %v7872
        %v8072 = vpop.f32.mrf.mxu0
        %v8073 = vadd.f32 0.0, %v8072
        %v8074 = vpop.f32.mrf.mxu0
        %v8075 = vadd.f32 0.0, %v8074
        %v8076 = vpop.f32.mrf.mxu0
        %v8077 = vadd.f32 0.0, %v8076
        %v8078 = vpop.f32.mrf.mxu0
        %v8079 = vadd.f32 0.0, %v8078
        %8080 = vmatprep.mubr.bf16.mxu0 0
        %8081 = vmatmul.mubr.bf16.gmra.mxu0 %v7873
        %v8082 = vpop.f32.mrf.mxu0
        %v8083 = vadd.f32 0.0, %v8082
        %v8084 = vpop.f32.mrf.mxu0
        %v8085 = vadd.f32 0.0, %v8084
        %v8086 = vpop.f32.mrf.mxu0
        %v8087 = vadd.f32 0.0, %v8086
        %v8088 = vpop.f32.mrf.mxu0
        %v8089 = vadd.f32 0.0, %v8088
        %8090 = vmatprep.mubr.bf16.mxu0 0
        %8091 = vmatmul.mubr.bf16.gmra.mxu0 %v7874
        %v8092 = vpop.f32.mrf.mxu0
        %v8093 = vadd.f32 0.0, %v8092
        %v8094 = vpop.f32.mrf.mxu0
        %v8095 = vadd.f32 0.0, %v8094
        %v8096 = vpop.f32.mrf.mxu0
        %v8097 = vadd.f32 0.0, %v8096
        %v8098 = vpop.f32.mrf.mxu0
        %v8099 = vadd.f32 0.0, %v8098
        %8100 = vmatprep.mubr.bf16.mxu0 0
        %8101 = vmatmul.mubr.bf16.gmra.mxu0 %v7875
        %v8102 = vpop.f32.mrf.mxu0
        %v8103 = vadd.f32 0.0, %v8102
        %v8104 = vpop.f32.mrf.mxu0
        %v8105 = vadd.f32 0.0, %v8104
        %v8106 = vpop.f32.mrf.mxu0
        %v8107 = vadd.f32 0.0, %v8106
        %v8108 = vpop.f32.mrf.mxu0
        %v8109 = vadd.f32 0.0, %v8108
        %8110 = vmatprep.mubr.bf16.mxu0 0
        %8111 = vmatmul.mubr.bf16.gmra.mxu0 %v7876
        %v8112 = vpop.f32.mrf.mxu0
        %v8113 = vadd.f32 0.0, %v8112
        %v8114 = vpop.f32.mrf.mxu0
        %v8115 = vadd.f32 0.0, %v8114
        %v8116 = vpop.f32.mrf.mxu0
        %v8117 = vadd.f32 0.0, %v8116
        %v8118 = vpop.f32.mrf.mxu0
        %v8119 = vadd.f32 0.0, %v8118
        %8120 = vmatprep.mubr.bf16.mxu0 0
        %8121 = vmatmul.mubr.bf16.gmra.mxu0 %v7877
        %v8122 = vpop.f32.mrf.mxu0
        %v8123 = vadd.f32 0.0, %v8122
        %v8124 = vpop.f32.mrf.mxu0
        %v8125 = vadd.f32 0.0, %v8124
        %v8126 = vpop.f32.mrf.mxu0
        %v8127 = vadd.f32 0.0, %v8126
        %v8128 = vpop.f32.mrf.mxu0
        %v8129 = vadd.f32 0.0, %v8128
        %8130 = vmatprep.mubr.bf16.mxu0 0
        %8131 = vmatmul.mubr.bf16.gmra.mxu0 %v7878
        %v8132 = vpop.f32.mrf.mxu0
        %v8133 = vadd.f32 0.0, %v8132
        %v8134 = vpop.f32.mrf.mxu0
        %v8135 = vadd.f32 0.0, %v8134
        %v8136 = vpop.f32.mrf.mxu0
        %v8137 = vadd.f32 0.0, %v8136
        %v8138 = vpop.f32.mrf.mxu0
        %v8139 = vadd.f32 0.0, %v8138
        %8140 = vmatprep.mubr.bf16.mxu0 0
        %8141 = vmatmul.mubr.bf16.gmra.mxu0 %v7879
        %v8142 = vpop.f32.mrf.mxu0
        %v8143 = vadd.f32 0.0, %v8142
        %v8144 = vpop.f32.mrf.mxu0
        %v8145 = vadd.f32 0.0, %v8144
        %v8146 = vpop.f32.mrf.mxu0
        %v8147 = vadd.f32 0.0, %v8146
        %v8148 = vpop.f32.mrf.mxu0
        %v8149 = vadd.f32 0.0, %v8148
        %8150 = vmatprep.mubr.bf16.mxu0 0
        %8151 = vmatmul.mubr.bf16.gmra.mxu0 %v7880
        %v8152 = vpop.f32.mrf.mxu0
        %v8153 = vadd.f32 0.0, %v8152
        %v8154 = vpop.f32.mrf.mxu0
        %v8155 = vadd.f32 0.0, %v8154
        %v8156 = vpop.f32.mrf.mxu0
        %v8157 = vadd.f32 0.0, %v8156
        %v8158 = vpop.f32.mrf.mxu0
        %v8159 = vadd.f32 0.0, %v8158
        %8160 = vmatprep.mubr.bf16.mxu0 0
        %8161 = vmatmul.mubr.bf16.gmra.mxu0 %v7881
        %v8162 = vpop.f32.mrf.mxu0
        %v8163 = vadd.f32 0.0, %v8162
        %v8164 = vpop.f32.mrf.mxu0
        %v8165 = vadd.f32 0.0, %v8164
        %v8166 = vpop.f32.mrf.mxu0
        %v8167 = vadd.f32 0.0, %v8166
        %v8168 = vpop.f32.mrf.mxu0
        %v8169 = vadd.f32 0.0, %v8168
        %8170 = vdwg.mxu0
        %v8171 = vlaneseq
        %v8172 = vshrl.u32 %v8171, 7
        %v8173 = vsub.s32 0, %v8172
        %v8174 = vrot.slane %v876, %v8173
        %v8175 = vlaneseq
        %v8176 = vshrl.u32 %v8175, 7
        %v8177 = vsub.s32 0, %v8176
        %v8178 = vrot.slane %v878, %v8177
        %v8179 = vadd.f32 %v8174, %v8013
        %v8180 = vadd.f32 %v8178, %v8015
        %v8181 = vadd.f32 %v8174, %v8017
        %v8182 = vadd.f32 %v8178, %v8019
        %v8183 = vadd.f32 %v8174, %v8023
        %v8184 = vadd.f32 %v8178, %v8025
        %v8185 = vadd.f32 %v8174, %v8027
        %v8186 = vadd.f32 %v8178, %v8029
        %v8187 = vadd.f32 %v8174, %v8033
        %v8188 = vadd.f32 %v8178, %v8035
        %v8189 = vadd.f32 %v8174, %v8037
        %v8190 = vadd.f32 %v8178, %v8039
        %v8191 = vadd.f32 %v8174, %v8043
        %v8192 = vadd.f32 %v8178, %v8045
        %v8193 = vadd.f32 %v8174, %v8047
        %v8194 = vadd.f32 %v8178, %v8049
        %v8195 = vadd.f32 %v8174, %v8053
        %v8196 = vadd.f32 %v8178, %v8055
        %v8197 = vadd.f32 %v8174, %v8057
        %v8198 = vadd.f32 %v8178, %v8059
        %v8199 = vadd.f32 %v8174, %v8063
        %v8200 = vadd.f32 %v8178, %v8065
        %v8201 = vadd.f32 %v8174, %v8067
        %v8202 = vadd.f32 %v8178, %v8069
        %v8203 = vadd.f32 %v8174, %v8073
        %v8204 = vadd.f32 %v8178, %v8075
        %v8205 = vadd.f32 %v8174, %v8077
        %v8206 = vadd.f32 %v8178, %v8079
        %v8207 = vadd.f32 %v8174, %v8083
        %v8208 = vadd.f32 %v8178, %v8085
        %v8209 = vadd.f32 %v8174, %v8087
        %v8210 = vadd.f32 %v8178, %v8089
        %v8211 = vadd.f32 %v8174, %v8093
        %v8212 = vadd.f32 %v8178, %v8095
        %v8213 = vadd.f32 %v8174, %v8097
        %v8214 = vadd.f32 %v8178, %v8099
        %v8215 = vadd.f32 %v8174, %v8103
        %v8216 = vadd.f32 %v8178, %v8105
        %v8217 = vadd.f32 %v8174, %v8107
        %v8218 = vadd.f32 %v8178, %v8109
        %v8219 = vadd.f32 %v8174, %v8113
        %v8220 = vadd.f32 %v8178, %v8115
        %v8221 = vadd.f32 %v8174, %v8117
        %v8222 = vadd.f32 %v8178, %v8119
        %v8223 = vadd.f32 %v8174, %v8123
        %v8224 = vadd.f32 %v8178, %v8125
        %v8225 = vadd.f32 %v8174, %v8127
        %v8226 = vadd.f32 %v8178, %v8129
        %v8227 = vadd.f32 %v8174, %v8133
        %v8228 = vadd.f32 %v8178, %v8135
        %v8229 = vadd.f32 %v8174, %v8137
        %v8230 = vadd.f32 %v8178, %v8139
        %v8231 = vadd.f32 %v8174, %v8143
        %v8232 = vadd.f32 %v8178, %v8145
        %v8233 = vadd.f32 %v8174, %v8147
        %v8234 = vadd.f32 %v8178, %v8149
        %v8235 = vadd.f32 %v8174, %v8153
        %v8236 = vadd.f32 %v8178, %v8155
        %v8237 = vadd.f32 %v8174, %v8157
        %v8238 = vadd.f32 %v8178, %v8159
        %v8239 = vadd.f32 %v8174, %v8163
        %v8240 = vadd.f32 %v8178, %v8165
        %v8241 = vadd.f32 %v8174, %v8167
        %v8242 = vadd.f32 %v8178, %v8169
        %v8243 = vmax.f32 %v4841, 0.0
        %v8244 = vmax.f32 %v4842, 0.0
        %v8245 = vmax.f32 %v4843, 0.0
        %v8246 = vmax.f32 %v4844, 0.0
        %v8247 = vmax.f32 %v4845, 0.0
        %v8248 = vmax.f32 %v4846, 0.0
        %v8249 = vmax.f32 %v4847, 0.0
        %v8250 = vmax.f32 %v4848, 0.0
        %v8251 = vmax.f32 %v4849, 0.0
        %v8252 = vmax.f32 %v4850, 0.0
        %v8253 = vmax.f32 %v4851, 0.0
        %v8254 = vmax.f32 %v4852, 0.0
        %v8255 = vmax.f32 %v4853, 0.0
        %v8256 = vmax.f32 %v4854, 0.0
        %v8257 = vmax.f32 %v4855, 0.0
        %v8258 = vmax.f32 %v4856, 0.0
        %v8259 = vmax.f32 %v4857, 0.0
        %v8260 = vmax.f32 %v4858, 0.0
        %v8261 = vmax.f32 %v4859, 0.0
        %v8262 = vmax.f32 %v4860, 0.0
        %v8263 = vmax.f32 %v4861, 0.0
        %v8264 = vmax.f32 %v4862, 0.0
        %v8265 = vmax.f32 %v4863, 0.0
        %v8266 = vmax.f32 %v4864, 0.0
        %v8267 = vmax.f32 %v4865, 0.0
        %v8268 = vmax.f32 %v4866, 0.0
        %v8269 = vmax.f32 %v4867, 0.0
        %v8270 = vmax.f32 %v4868, 0.0
        %v8271 = vmax.f32 %v4869, 0.0
        %v8272 = vmax.f32 %v4870, 0.0
        %v8273 = vmax.f32 %v4871, 0.0
        %v8274 = vmax.f32 %v4872, 0.0
        %v8275 = vpack.c.bf16 %v8244, %v8243
        %v8276 = vpack.c.bf16 %v8246, %v8245
        %v8277 = vpack.c.bf16 %v8248, %v8247
        %v8278 = vpack.c.bf16 %v8250, %v8249
        %v8279 = vpack.c.bf16 %v8252, %v8251
        %v8280 = vpack.c.bf16 %v8254, %v8253
        %v8281 = vpack.c.bf16 %v8256, %v8255
        %v8282 = vpack.c.bf16 %v8258, %v8257
        %v8283 = vpack.c.bf16 %v8260, %v8259
        %v8284 = vpack.c.bf16 %v8262, %v8261
        %v8285 = vpack.c.bf16 %v8264, %v8263
        %v8286 = vpack.c.bf16 %v8266, %v8265
        %v8287 = vpack.c.bf16 %v8268, %v8267
        %v8288 = vpack.c.bf16 %v8270, %v8269
        %v8289 = vpack.c.bf16 %v8272, %v8271
        %v8290 = vpack.c.bf16 %v8274, %v8273
        %s8291 = scalar_lea.vmem [#allocation11], 128
        %v8292 = vld [vmem:[%s8291] sm:$0xff]
        %v8293 = vld [vmem:[%s8291 + $0x8] sm:$0xff]
        %v8294 = vld [vmem:[%s8291 + $0x10] sm:$0xff]
        %v8295 = vld [vmem:[%s8291 + $0x18] sm:$0xff]
        %v8296 = vld [vmem:[%s8291 + $0x20] sm:$0xff]
        %v8297 = vld [vmem:[%s8291 + $0x28] sm:$0xff]
        %v8298 = vld [vmem:[%s8291 + $0x30] sm:$0xff]
        %v8299 = vld [vmem:[%s8291 + $0x38] sm:$0xff]
        %v8300 = vld [vmem:[%s8291 + $0x40] sm:$0xff]
        %v8301 = vld [vmem:[%s8291 + $0x48] sm:$0xff]
        %v8302 = vld [vmem:[%s8291 + $0x50] sm:$0xff]
        %v8303 = vld [vmem:[%s8291 + $0x58] sm:$0xff]
        %v8304 = vld [vmem:[%s8291 + $0x60] sm:$0xff]
        %v8305 = vld [vmem:[%s8291 + $0x68] sm:$0xff]
        %v8306 = vld [vmem:[%s8291 + $0x70] sm:$0xff]
        %v8307 = vld [vmem:[%s8291 + $0x78] sm:$0xff]
        %v8324 = vunpack.c.l.b16 %v8292
        %v8325 = vunpack.c.h.b16 %v8292
        %v8326 = vunpack.c.l.b16 %v8293
        %v8327 = vunpack.c.h.b16 %v8293
        %v8328 = vunpack.c.l.b16 %v8294
        %v8329 = vunpack.c.h.b16 %v8294
        %v8330 = vunpack.c.l.b16 %v8295
        %v8331 = vunpack.c.h.b16 %v8295
        %v8332 = vunpack.c.l.b16 %v8296
        %v8333 = vunpack.c.h.b16 %v8296
        %v8334 = vunpack.c.l.b16 %v8297
        %v8335 = vunpack.c.h.b16 %v8297
        %v8336 = vunpack.c.l.b16 %v8298
        %v8337 = vunpack.c.h.b16 %v8298
        %v8338 = vunpack.c.l.b16 %v8299
        %v8339 = vunpack.c.h.b16 %v8299
        %v8340 = vunpack.c.l.b16 %v8300
        %v8341 = vunpack.c.h.b16 %v8300
        %v8342 = vunpack.c.l.b16 %v8301
        %v8343 = vunpack.c.h.b16 %v8301
        %v8344 = vunpack.c.l.b16 %v8302
        %v8345 = vunpack.c.h.b16 %v8302
        %v8346 = vunpack.c.l.b16 %v8303
        %v8347 = vunpack.c.h.b16 %v8303
        %v8348 = vunpack.c.l.b16 %v8304
        %v8349 = vunpack.c.h.b16 %v8304
        %v8350 = vunpack.c.l.b16 %v8305
        %v8351 = vunpack.c.h.b16 %v8305
        %v8352 = vunpack.c.l.b16 %v8306
        %v8353 = vunpack.c.h.b16 %v8306
        %v8354 = vunpack.c.l.b16 %v8307
        %v8355 = vunpack.c.h.b16 %v8307
        %v8356 = vpack.c.b16 %v8326, %v8324
        %v8357 = vpack.c.b16 %v8327, %v8325
        %v8358 = vpack.c.b16 %v8330, %v8328
        %v8359 = vpack.c.b16 %v8331, %v8329
        %v8360 = vpack.c.b16 %v8334, %v8332
        %v8361 = vpack.c.b16 %v8335, %v8333
        %v8362 = vpack.c.b16 %v8338, %v8336
        %v8363 = vpack.c.b16 %v8339, %v8337
        %v8364 = vpack.c.b16 %v8342, %v8340
        %v8365 = vpack.c.b16 %v8343, %v8341
        %v8366 = vpack.c.b16 %v8346, %v8344
        %v8367 = vpack.c.b16 %v8347, %v8345
        %v8368 = vpack.c.b16 %v8350, %v8348
        %v8369 = vpack.c.b16 %v8351, %v8349
        %v8370 = vpack.c.b16 %v8354, %v8352
        %v8371 = vpack.c.b16 %v8355, %v8353
        %8388 = vmatprep.subr.bf16.mxu0 %v8371
        %8389 = vmatpush1.bf16.msra.mxu0 %v8370
        %8390 = vmatprep.subr.bf16.mxu0 %v8369
        %8391 = vmatpush1.bf16.msra.mxu0 %v8368
        %8392 = vmatprep.subr.bf16.mxu0 %v8367
        %8393 = vmatpush1.bf16.msra.mxu0 %v8366
        %8394 = vmatprep.subr.bf16.mxu0 %v8365
        %8395 = vmatpush1.bf16.msra.mxu0 %v8364
        %8396 = vmatprep.subr.bf16.mxu0 %v8363
        %8397 = vmatpush1.bf16.msra.mxu0 %v8362
        %8398 = vmatprep.subr.bf16.mxu0 %v8361
        %8399 = vmatpush1.bf16.msra.mxu0 %v8360
        %8400 = vmatprep.subr.bf16.mxu0 %v8359
        %8401 = vmatpush1.bf16.msra.mxu0 %v8358
        %8402 = vmatprep.subr.bf16.mxu0 %v8357
        %8403 = vmatpush1.bf16.msra.mxu0 %v8356
        %8404 = vmatprep.subr.bf16.mxu0 0
        %8405 = vmatpush2.bf16.msra.mxu0 0
        %8406 = vmatprep.subr.bf16.mxu0 0
        %8407 = vmatpush2.bf16.msra.mxu0 0
        %8408 = vmatprep.subr.bf16.mxu0 0
        %8409 = vmatpush2.bf16.msra.mxu0 0
        %8410 = vmatprep.subr.bf16.mxu0 0
        %8411 = vmatpush2.bf16.msra.mxu0 0
        %8412 = vmatprep.subr.bf16.mxu0 0
        %8413 = vmatpush2.bf16.msra.mxu0 0
        %8414 = vmatprep.subr.bf16.mxu0 0
        %8415 = vmatpush2.bf16.msra.mxu0 0
        %8416 = vmatprep.subr.bf16.mxu0 0
        %8417 = vmatpush2.bf16.msra.mxu0 0
        %8418 = vmatprep.subr.bf16.mxu0 0
        %8419 = vmatpush2.bf16.msra.mxu0 0
        %8420 = vmatprep.mubr.bf16.mxu0 0
        %8421 = vmatmul.mubr.bf16.gmra.mxu0 %v8275
        %v8422 = vpop.f32.mrf.mxu0
        %v8423 = vadd.f32 0.0, %v8422
        %v8424 = vpop.f32.mrf.mxu0
        %v8425 = vadd.f32 0.0, %v8424
        %v8426 = vpop.f32.mrf.mxu0
        %v8427 = vadd.f32 0.0, %v8426
        %v8428 = vpop.f32.mrf.mxu0
        %v8429 = vadd.f32 0.0, %v8428
        %8430 = vmatprep.mubr.bf16.mxu0 0
        %8431 = vmatmul.mubr.bf16.gmra.mxu0 %v8276
        %v8432 = vpop.f32.mrf.mxu0
        %v8433 = vadd.f32 0.0, %v8432
        %v8434 = vpop.f32.mrf.mxu0
        %v8435 = vadd.f32 0.0, %v8434
        %v8436 = vpop.f32.mrf.mxu0
        %v8437 = vadd.f32 0.0, %v8436
        %v8438 = vpop.f32.mrf.mxu0
        %v8439 = vadd.f32 0.0, %v8438
        %8440 = vmatprep.mubr.bf16.mxu0 0
        %8441 = vmatmul.mubr.bf16.gmra.mxu0 %v8277
        %v8442 = vpop.f32.mrf.mxu0
        %v8443 = vadd.f32 0.0, %v8442
        %v8444 = vpop.f32.mrf.mxu0
        %v8445 = vadd.f32 0.0, %v8444
        %v8446 = vpop.f32.mrf.mxu0
        %v8447 = vadd.f32 0.0, %v8446
        %v8448 = vpop.f32.mrf.mxu0
        %v8449 = vadd.f32 0.0, %v8448
        %8450 = vmatprep.mubr.bf16.mxu0 0
        %8451 = vmatmul.mubr.bf16.gmra.mxu0 %v8278
        %v8452 = vpop.f32.mrf.mxu0
        %v8453 = vadd.f32 0.0, %v8452
        %v8454 = vpop.f32.mrf.mxu0
        %v8455 = vadd.f32 0.0, %v8454
        %v8456 = vpop.f32.mrf.mxu0
        %v8457 = vadd.f32 0.0, %v8456
        %v8458 = vpop.f32.mrf.mxu0
        %v8459 = vadd.f32 0.0, %v8458
        %8460 = vmatprep.mubr.bf16.mxu0 0
        %8461 = vmatmul.mubr.bf16.gmra.mxu0 %v8279
        %v8462 = vpop.f32.mrf.mxu0
        %v8463 = vadd.f32 0.0, %v8462
        %v8464 = vpop.f32.mrf.mxu0
        %v8465 = vadd.f32 0.0, %v8464
        %v8466 = vpop.f32.mrf.mxu0
        %v8467 = vadd.f32 0.0, %v8466
        %v8468 = vpop.f32.mrf.mxu0
        %v8469 = vadd.f32 0.0, %v8468
        %8470 = vmatprep.mubr.bf16.mxu0 0
        %8471 = vmatmul.mubr.bf16.gmra.mxu0 %v8280
        %v8472 = vpop.f32.mrf.mxu0
        %v8473 = vadd.f32 0.0, %v8472
        %v8474 = vpop.f32.mrf.mxu0
        %v8475 = vadd.f32 0.0, %v8474
        %v8476 = vpop.f32.mrf.mxu0
        %v8477 = vadd.f32 0.0, %v8476
        %v8478 = vpop.f32.mrf.mxu0
        %v8479 = vadd.f32 0.0, %v8478
        %8480 = vmatprep.mubr.bf16.mxu0 0
        %8481 = vmatmul.mubr.bf16.gmra.mxu0 %v8281
        %v8482 = vpop.f32.mrf.mxu0
        %v8483 = vadd.f32 0.0, %v8482
        %v8484 = vpop.f32.mrf.mxu0
        %v8485 = vadd.f32 0.0, %v8484
        %v8486 = vpop.f32.mrf.mxu0
        %v8487 = vadd.f32 0.0, %v8486
        %v8488 = vpop.f32.mrf.mxu0
        %v8489 = vadd.f32 0.0, %v8488
        %8490 = vmatprep.mubr.bf16.mxu0 0
        %8491 = vmatmul.mubr.bf16.gmra.mxu0 %v8282
        %v8492 = vpop.f32.mrf.mxu0
        %v8493 = vadd.f32 0.0, %v8492
        %v8494 = vpop.f32.mrf.mxu0
        %v8495 = vadd.f32 0.0, %v8494
        %v8496 = vpop.f32.mrf.mxu0
        %v8497 = vadd.f32 0.0, %v8496
        %v8498 = vpop.f32.mrf.mxu0
        %v8499 = vadd.f32 0.0, %v8498
        %8500 = vmatprep.mubr.bf16.mxu0 0
        %8501 = vmatmul.mubr.bf16.gmra.mxu0 %v8283
        %v8502 = vpop.f32.mrf.mxu0
        %v8503 = vadd.f32 0.0, %v8502
        %v8504 = vpop.f32.mrf.mxu0
        %v8505 = vadd.f32 0.0, %v8504
        %v8506 = vpop.f32.mrf.mxu0
        %v8507 = vadd.f32 0.0, %v8506
        %v8508 = vpop.f32.mrf.mxu0
        %v8509 = vadd.f32 0.0, %v8508
        %8510 = vmatprep.mubr.bf16.mxu0 0
        %8511 = vmatmul.mubr.bf16.gmra.mxu0 %v8284
        %v8512 = vpop.f32.mrf.mxu0
        %v8513 = vadd.f32 0.0, %v8512
        %v8514 = vpop.f32.mrf.mxu0
        %v8515 = vadd.f32 0.0, %v8514
        %v8516 = vpop.f32.mrf.mxu0
        %v8517 = vadd.f32 0.0, %v8516
        %v8518 = vpop.f32.mrf.mxu0
        %v8519 = vadd.f32 0.0, %v8518
        %8520 = vmatprep.mubr.bf16.mxu0 0
        %8521 = vmatmul.mubr.bf16.gmra.mxu0 %v8285
        %v8522 = vpop.f32.mrf.mxu0
        %v8523 = vadd.f32 0.0, %v8522
        %v8524 = vpop.f32.mrf.mxu0
        %v8525 = vadd.f32 0.0, %v8524
        %v8526 = vpop.f32.mrf.mxu0
        %v8527 = vadd.f32 0.0, %v8526
        %v8528 = vpop.f32.mrf.mxu0
        %v8529 = vadd.f32 0.0, %v8528
        %8530 = vmatprep.mubr.bf16.mxu0 0
        %8531 = vmatmul.mubr.bf16.gmra.mxu0 %v8286
        %v8532 = vpop.f32.mrf.mxu0
        %v8533 = vadd.f32 0.0, %v8532
        %v8534 = vpop.f32.mrf.mxu0
        %v8535 = vadd.f32 0.0, %v8534
        %v8536 = vpop.f32.mrf.mxu0
        %v8537 = vadd.f32 0.0, %v8536
        %v8538 = vpop.f32.mrf.mxu0
        %v8539 = vadd.f32 0.0, %v8538
        %8540 = vmatprep.mubr.bf16.mxu0 0
        %8541 = vmatmul.mubr.bf16.gmra.mxu0 %v8287
        %v8542 = vpop.f32.mrf.mxu0
        %v8543 = vadd.f32 0.0, %v8542
        %v8544 = vpop.f32.mrf.mxu0
        %v8545 = vadd.f32 0.0, %v8544
        %v8546 = vpop.f32.mrf.mxu0
        %v8547 = vadd.f32 0.0, %v8546
        %v8548 = vpop.f32.mrf.mxu0
        %v8549 = vadd.f32 0.0, %v8548
        %8550 = vmatprep.mubr.bf16.mxu0 0
        %8551 = vmatmul.mubr.bf16.gmra.mxu0 %v8288
        %v8552 = vpop.f32.mrf.mxu0
        %v8553 = vadd.f32 0.0, %v8552
        %v8554 = vpop.f32.mrf.mxu0
        %v8555 = vadd.f32 0.0, %v8554
        %v8556 = vpop.f32.mrf.mxu0
        %v8557 = vadd.f32 0.0, %v8556
        %v8558 = vpop.f32.mrf.mxu0
        %v8559 = vadd.f32 0.0, %v8558
        %8560 = vmatprep.mubr.bf16.mxu0 0
        %8561 = vmatmul.mubr.bf16.gmra.mxu0 %v8289
        %v8562 = vpop.f32.mrf.mxu0
        %v8563 = vadd.f32 0.0, %v8562
        %v8564 = vpop.f32.mrf.mxu0
        %v8565 = vadd.f32 0.0, %v8564
        %v8566 = vpop.f32.mrf.mxu0
        %v8567 = vadd.f32 0.0, %v8566
        %v8568 = vpop.f32.mrf.mxu0
        %v8569 = vadd.f32 0.0, %v8568
        %8570 = vmatprep.mubr.bf16.mxu0 0
        %8571 = vmatmul.mubr.bf16.gmra.mxu0 %v8290
        %v8572 = vpop.f32.mrf.mxu0
        %v8573 = vadd.f32 0.0, %v8572
        %v8574 = vpop.f32.mrf.mxu0
        %v8575 = vadd.f32 0.0, %v8574
        %v8576 = vpop.f32.mrf.mxu0
        %v8577 = vadd.f32 0.0, %v8576
        %v8578 = vpop.f32.mrf.mxu0
        %v8579 = vadd.f32 0.0, %v8578
        %8580 = vdwg.mxu0
        %v8581 = vadd.f32 %v8179, %v8423
        %v8582 = vadd.f32 %v8180, %v8425
        %v8583 = vadd.f32 %v8181, %v8427
        %v8584 = vadd.f32 %v8182, %v8429
        %v8585 = vadd.f32 %v8183, %v8433
        %v8586 = vadd.f32 %v8184, %v8435
        %v8587 = vadd.f32 %v8185, %v8437
        %v8588 = vadd.f32 %v8186, %v8439
        %v8589 = vadd.f32 %v8187, %v8443
        %v8590 = vadd.f32 %v8188, %v8445
        %v8591 = vadd.f32 %v8189, %v8447
        %v8592 = vadd.f32 %v8190, %v8449
        %v8593 = vadd.f32 %v8191, %v8453
        %v8594 = vadd.f32 %v8192, %v8455
        %v8595 = vadd.f32 %v8193, %v8457
        %v8596 = vadd.f32 %v8194, %v8459
        %v8597 = vadd.f32 %v8195, %v8463
        %v8598 = vadd.f32 %v8196, %v8465
        %v8599 = vadd.f32 %v8197, %v8467
        %v8600 = vadd.f32 %v8198, %v8469
        %v8601 = vadd.f32 %v8199, %v8473
        %v8602 = vadd.f32 %v8200, %v8475
        %v8603 = vadd.f32 %v8201, %v8477
        %v8604 = vadd.f32 %v8202, %v8479
        %v8605 = vadd.f32 %v8203, %v8483
        %v8606 = vadd.f32 %v8204, %v8485
        %v8607 = vadd.f32 %v8205, %v8487
        %v8608 = vadd.f32 %v8206, %v8489
        %v8609 = vadd.f32 %v8207, %v8493
        %v8610 = vadd.f32 %v8208, %v8495
        %v8611 = vadd.f32 %v8209, %v8497
        %v8612 = vadd.f32 %v8210, %v8499
        %v8613 = vadd.f32 %v8211, %v8503
        %v8614 = vadd.f32 %v8212, %v8505
        %v8615 = vadd.f32 %v8213, %v8507
        %v8616 = vadd.f32 %v8214, %v8509
        %v8617 = vadd.f32 %v8215, %v8513
        %v8618 = vadd.f32 %v8216, %v8515
        %v8619 = vadd.f32 %v8217, %v8517
        %v8620 = vadd.f32 %v8218, %v8519
        %v8621 = vadd.f32 %v8219, %v8523
        %v8622 = vadd.f32 %v8220, %v8525
        %v8623 = vadd.f32 %v8221, %v8527
        %v8624 = vadd.f32 %v8222, %v8529
        %v8625 = vadd.f32 %v8223, %v8533
        %v8626 = vadd.f32 %v8224, %v8535
        %v8627 = vadd.f32 %v8225, %v8537
        %v8628 = vadd.f32 %v8226, %v8539
        %v8629 = vadd.f32 %v8227, %v8543
        %v8630 = vadd.f32 %v8228, %v8545
        %v8631 = vadd.f32 %v8229, %v8547
        %v8632 = vadd.f32 %v8230, %v8549
        %v8633 = vadd.f32 %v8231, %v8553
        %v8634 = vadd.f32 %v8232, %v8555
        %v8635 = vadd.f32 %v8233, %v8557
        %v8636 = vadd.f32 %v8234, %v8559
        %v8637 = vadd.f32 %v8235, %v8563
        %v8638 = vadd.f32 %v8236, %v8565
        %v8639 = vadd.f32 %v8237, %v8567
        %v8640 = vadd.f32 %v8238, %v8569
        %v8641 = vadd.f32 %v8239, %v8573
        %v8642 = vadd.f32 %v8240, %v8575
        %v8643 = vadd.f32 %v8241, %v8577
        %v8644 = vadd.f32 %v8242, %v8579
        %v8645 = vmax.f32 %v7802, 0.0
        %v8646 = vmax.f32 %v7803, 0.0
        %v8647 = vmax.f32 %v7804, 0.0
        %v8648 = vmax.f32 %v7805, 0.0
        %v8649 = vmax.f32 %v7806, 0.0
        %v8650 = vmax.f32 %v7807, 0.0
        %v8651 = vmax.f32 %v7808, 0.0
        %v8652 = vmax.f32 %v7809, 0.0
        %v8653 = vmax.f32 %v7810, 0.0
        %v8654 = vmax.f32 %v7811, 0.0
        %v8655 = vmax.f32 %v7812, 0.0
        %v8656 = vmax.f32 %v7813, 0.0
        %v8657 = vmax.f32 %v7814, 0.0
        %v8658 = vmax.f32 %v7815, 0.0
        %v8659 = vmax.f32 %v7816, 0.0
        %v8660 = vmax.f32 %v7817, 0.0
        %v8661 = vmax.f32 %v7818, 0.0
        %v8662 = vmax.f32 %v7819, 0.0
        %v8663 = vmax.f32 %v7820, 0.0
        %v8664 = vmax.f32 %v7821, 0.0
        %v8665 = vmax.f32 %v7822, 0.0
        %v8666 = vmax.f32 %v7823, 0.0
        %v8667 = vmax.f32 %v7824, 0.0
        %v8668 = vmax.f32 %v7825, 0.0
        %v8669 = vmax.f32 %v7826, 0.0
        %v8670 = vmax.f32 %v7827, 0.0
        %v8671 = vmax.f32 %v7828, 0.0
        %v8672 = vmax.f32 %v7829, 0.0
        %v8673 = vmax.f32 %v7830, 0.0
        %v8674 = vmax.f32 %v7831, 0.0
        %v8675 = vmax.f32 %v7832, 0.0
        %v8676 = vmax.f32 %v7833, 0.0
        %v8677 = vpack.c.bf16 %v8646, %v8645
        %v8678 = vpack.c.bf16 %v8648, %v8647
        %v8679 = vpack.c.bf16 %v8650, %v8649
        %v8680 = vpack.c.bf16 %v8652, %v8651
        %v8681 = vpack.c.bf16 %v8654, %v8653
        %v8682 = vpack.c.bf16 %v8656, %v8655
        %v8683 = vpack.c.bf16 %v8658, %v8657
        %v8684 = vpack.c.bf16 %v8660, %v8659
        %v8685 = vpack.c.bf16 %v8662, %v8661
        %v8686 = vpack.c.bf16 %v8664, %v8663
        %v8687 = vpack.c.bf16 %v8666, %v8665
        %v8688 = vpack.c.bf16 %v8668, %v8667
        %v8689 = vpack.c.bf16 %v8670, %v8669
        %v8690 = vpack.c.bf16 %v8672, %v8671
        %v8691 = vpack.c.bf16 %v8674, %v8673
        %v8692 = vpack.c.bf16 %v8676, %v8675
        %s8693 = scalar_lea.vmem [#allocation11], 256
        %v8694 = vld [vmem:[%s8693] sm:$0xff]
        %v8695 = vld [vmem:[%s8693 + $0x8] sm:$0xff]
        %v8696 = vld [vmem:[%s8693 + $0x10] sm:$0xff]
        %v8697 = vld [vmem:[%s8693 + $0x18] sm:$0xff]
        %v8698 = vld [vmem:[%s8693 + $0x20] sm:$0xff]
        %v8699 = vld [vmem:[%s8693 + $0x28] sm:$0xff]
        %v8700 = vld [vmem:[%s8693 + $0x30] sm:$0xff]
        %v8701 = vld [vmem:[%s8693 + $0x38] sm:$0xff]
        %v8702 = vld [vmem:[%s8693 + $0x40] sm:$0xff]
        %v8703 = vld [vmem:[%s8693 + $0x48] sm:$0xff]
        %v8704 = vld [vmem:[%s8693 + $0x50] sm:$0xff]
        %v8705 = vld [vmem:[%s8693 + $0x58] sm:$0xff]
        %v8706 = vld [vmem:[%s8693 + $0x60] sm:$0xff]
        %v8707 = vld [vmem:[%s8693 + $0x68] sm:$0xff]
        %v8708 = vld [vmem:[%s8693 + $0x70] sm:$0xff]
        %v8709 = vld [vmem:[%s8693 + $0x78] sm:$0xff]
        %v8726 = vunpack.c.l.b16 %v8694
        %v8727 = vunpack.c.h.b16 %v8694
        %v8728 = vunpack.c.l.b16 %v8695
        %v8729 = vunpack.c.h.b16 %v8695
        %v8730 = vunpack.c.l.b16 %v8696
        %v8731 = vunpack.c.h.b16 %v8696
        %v8732 = vunpack.c.l.b16 %v8697
        %v8733 = vunpack.c.h.b16 %v8697
        %v8734 = vunpack.c.l.b16 %v8698
        %v8735 = vunpack.c.h.b16 %v8698
        %v8736 = vunpack.c.l.b16 %v8699
        %v8737 = vunpack.c.h.b16 %v8699
        %v8738 = vunpack.c.l.b16 %v8700
        %v8739 = vunpack.c.h.b16 %v8700
        %v8740 = vunpack.c.l.b16 %v8701
        %v8741 = vunpack.c.h.b16 %v8701
        %v8742 = vunpack.c.l.b16 %v8702
        %v8743 = vunpack.c.h.b16 %v8702
        %v8744 = vunpack.c.l.b16 %v8703
        %v8745 = vunpack.c.h.b16 %v8703
        %v8746 = vunpack.c.l.b16 %v8704
        %v8747 = vunpack.c.h.b16 %v8704
        %v8748 = vunpack.c.l.b16 %v8705
        %v8749 = vunpack.c.h.b16 %v8705
        %v8750 = vunpack.c.l.b16 %v8706
        %v8751 = vunpack.c.h.b16 %v8706
        %v8752 = vunpack.c.l.b16 %v8707
        %v8753 = vunpack.c.h.b16 %v8707
        %v8754 = vunpack.c.l.b16 %v8708
        %v8755 = vunpack.c.h.b16 %v8708
        %v8756 = vunpack.c.l.b16 %v8709
        %v8757 = vunpack.c.h.b16 %v8709
        %v8758 = vpack.c.b16 %v8728, %v8726
        %v8759 = vpack.c.b16 %v8729, %v8727
        %v8760 = vpack.c.b16 %v8732, %v8730
        %v8761 = vpack.c.b16 %v8733, %v8731
        %v8762 = vpack.c.b16 %v8736, %v8734
        %v8763 = vpack.c.b16 %v8737, %v8735
        %v8764 = vpack.c.b16 %v8740, %v8738
        %v8765 = vpack.c.b16 %v8741, %v8739
        %v8766 = vpack.c.b16 %v8744, %v8742
        %v8767 = vpack.c.b16 %v8745, %v8743
        %v8768 = vpack.c.b16 %v8748, %v8746
        %v8769 = vpack.c.b16 %v8749, %v8747
        %v8770 = vpack.c.b16 %v8752, %v8750
        %v8771 = vpack.c.b16 %v8753, %v8751
        %v8772 = vpack.c.b16 %v8756, %v8754
        %v8773 = vpack.c.b16 %v8757, %v8755
        %8790 = vmatprep.subr.bf16.mxu0 %v8773
        %8791 = vmatpush1.bf16.msra.mxu0 %v8772
        %8792 = vmatprep.subr.bf16.mxu0 %v8771
        %8793 = vmatpush1.bf16.msra.mxu0 %v8770
        %8794 = vmatprep.subr.bf16.mxu0 %v8769
        %8795 = vmatpush1.bf16.msra.mxu0 %v8768
        %8796 = vmatprep.subr.bf16.mxu0 %v8767
        %8797 = vmatpush1.bf16.msra.mxu0 %v8766
        %8798 = vmatprep.subr.bf16.mxu0 %v8765
        %8799 = vmatpush1.bf16.msra.mxu0 %v8764
        %8800 = vmatprep.subr.bf16.mxu0 %v8763
        %8801 = vmatpush1.bf16.msra.mxu0 %v8762
        %8802 = vmatprep.subr.bf16.mxu0 %v8761
        %8803 = vmatpush1.bf16.msra.mxu0 %v8760
        %8804 = vmatprep.subr.bf16.mxu0 %v8759
        %8805 = vmatpush1.bf16.msra.mxu0 %v8758
        %8806 = vmatprep.subr.bf16.mxu0 0
        %8807 = vmatpush2.bf16.msra.mxu0 0
        %8808 = vmatprep.subr.bf16.mxu0 0
        %8809 = vmatpush2.bf16.msra.mxu0 0
        %8810 = vmatprep.subr.bf16.mxu0 0
        %8811 = vmatpush2.bf16.msra.mxu0 0
        %8812 = vmatprep.subr.bf16.mxu0 0
        %8813 = vmatpush2.bf16.msra.mxu0 0
        %8814 = vmatprep.subr.bf16.mxu0 0
        %8815 = vmatpush2.bf16.msra.mxu0 0
        %8816 = vmatprep.subr.bf16.mxu0 0
        %8817 = vmatpush2.bf16.msra.mxu0 0
        %8818 = vmatprep.subr.bf16.mxu0 0
        %8819 = vmatpush2.bf16.msra.mxu0 0
        %8820 = vmatprep.subr.bf16.mxu0 0
        %8821 = vmatpush2.bf16.msra.mxu0 0
        %8822 = vmatprep.mubr.bf16.mxu0 0
        %8823 = vmatmul.mubr.bf16.gmra.mxu0 %v8677
        %v8824 = vpop.f32.mrf.mxu0
        %v8825 = vadd.f32 0.0, %v8824
        %v8826 = vpop.f32.mrf.mxu0
        %v8827 = vadd.f32 0.0, %v8826
        %v8828 = vpop.f32.mrf.mxu0
        %v8829 = vadd.f32 0.0, %v8828
        %v8830 = vpop.f32.mrf.mxu0
        %v8831 = vadd.f32 0.0, %v8830
        %8832 = vmatprep.mubr.bf16.mxu0 0
        %8833 = vmatmul.mubr.bf16.gmra.mxu0 %v8678
        %v8834 = vpop.f32.mrf.mxu0
        %v8835 = vadd.f32 0.0, %v8834
        %v8836 = vpop.f32.mrf.mxu0
        %v8837 = vadd.f32 0.0, %v8836
        %v8838 = vpop.f32.mrf.mxu0
        %v8839 = vadd.f32 0.0, %v8838
        %v8840 = vpop.f32.mrf.mxu0
        %v8841 = vadd.f32 0.0, %v8840
        %8842 = vmatprep.mubr.bf16.mxu0 0
        %8843 = vmatmul.mubr.bf16.gmra.mxu0 %v8679
        %v8844 = vpop.f32.mrf.mxu0
        %v8845 = vadd.f32 0.0, %v8844
        %v8846 = vpop.f32.mrf.mxu0
        %v8847 = vadd.f32 0.0, %v8846
        %v8848 = vpop.f32.mrf.mxu0
        %v8849 = vadd.f32 0.0, %v8848
        %v8850 = vpop.f32.mrf.mxu0
        %v8851 = vadd.f32 0.0, %v8850
        %8852 = vmatprep.mubr.bf16.mxu0 0
        %8853 = vmatmul.mubr.bf16.gmra.mxu0 %v8680
        %v8854 = vpop.f32.mrf.mxu0
        %v8855 = vadd.f32 0.0, %v8854
        %v8856 = vpop.f32.mrf.mxu0
        %v8857 = vadd.f32 0.0, %v8856
        %v8858 = vpop.f32.mrf.mxu0
        %v8859 = vadd.f32 0.0, %v8858
        %v8860 = vpop.f32.mrf.mxu0
        %v8861 = vadd.f32 0.0, %v8860
        %8862 = vmatprep.mubr.bf16.mxu0 0
        %8863 = vmatmul.mubr.bf16.gmra.mxu0 %v8681
        %v8864 = vpop.f32.mrf.mxu0
        %v8865 = vadd.f32 0.0, %v8864
        %v8866 = vpop.f32.mrf.mxu0
        %v8867 = vadd.f32 0.0, %v8866
        %v8868 = vpop.f32.mrf.mxu0
        %v8869 = vadd.f32 0.0, %v8868
        %v8870 = vpop.f32.mrf.mxu0
        %v8871 = vadd.f32 0.0, %v8870
        %8872 = vmatprep.mubr.bf16.mxu0 0
        %8873 = vmatmul.mubr.bf16.gmra.mxu0 %v8682
        %v8874 = vpop.f32.mrf.mxu0
        %v8875 = vadd.f32 0.0, %v8874
        %v8876 = vpop.f32.mrf.mxu0
        %v8877 = vadd.f32 0.0, %v8876
        %v8878 = vpop.f32.mrf.mxu0
        %v8879 = vadd.f32 0.0, %v8878
        %v8880 = vpop.f32.mrf.mxu0
        %v8881 = vadd.f32 0.0, %v8880
        %8882 = vmatprep.mubr.bf16.mxu0 0
        %8883 = vmatmul.mubr.bf16.gmra.mxu0 %v8683
        %v8884 = vpop.f32.mrf.mxu0
        %v8885 = vadd.f32 0.0, %v8884
        %v8886 = vpop.f32.mrf.mxu0
        %v8887 = vadd.f32 0.0, %v8886
        %v8888 = vpop.f32.mrf.mxu0
        %v8889 = vadd.f32 0.0, %v8888
        %v8890 = vpop.f32.mrf.mxu0
        %v8891 = vadd.f32 0.0, %v8890
        %8892 = vmatprep.mubr.bf16.mxu0 0
        %8893 = vmatmul.mubr.bf16.gmra.mxu0 %v8684
        %v8894 = vpop.f32.mrf.mxu0
        %v8895 = vadd.f32 0.0, %v8894
        %v8896 = vpop.f32.mrf.mxu0
        %v8897 = vadd.f32 0.0, %v8896
        %v8898 = vpop.f32.mrf.mxu0
        %v8899 = vadd.f32 0.0, %v8898
        %v8900 = vpop.f32.mrf.mxu0
        %v8901 = vadd.f32 0.0, %v8900
        %8902 = vmatprep.mubr.bf16.mxu0 0
        %8903 = vmatmul.mubr.bf16.gmra.mxu0 %v8685
        %v8904 = vpop.f32.mrf.mxu0
        %v8905 = vadd.f32 0.0, %v8904
        %v8906 = vpop.f32.mrf.mxu0
        %v8907 = vadd.f32 0.0, %v8906
        %v8908 = vpop.f32.mrf.mxu0
        %v8909 = vadd.f32 0.0, %v8908
        %v8910 = vpop.f32.mrf.mxu0
        %v8911 = vadd.f32 0.0, %v8910
        %8912 = vmatprep.mubr.bf16.mxu0 0
        %8913 = vmatmul.mubr.bf16.gmra.mxu0 %v8686
        %v8914 = vpop.f32.mrf.mxu0
        %v8915 = vadd.f32 0.0, %v8914
        %v8916 = vpop.f32.mrf.mxu0
        %v8917 = vadd.f32 0.0, %v8916
        %v8918 = vpop.f32.mrf.mxu0
        %v8919 = vadd.f32 0.0, %v8918
        %v8920 = vpop.f32.mrf.mxu0
        %v8921 = vadd.f32 0.0, %v8920
        %8922 = vmatprep.mubr.bf16.mxu0 0
        %8923 = vmatmul.mubr.bf16.gmra.mxu0 %v8687
        %v8924 = vpop.f32.mrf.mxu0
        %v8925 = vadd.f32 0.0, %v8924
        %v8926 = vpop.f32.mrf.mxu0
        %v8927 = vadd.f32 0.0, %v8926
        %v8928 = vpop.f32.mrf.mxu0
        %v8929 = vadd.f32 0.0, %v8928
        %v8930 = vpop.f32.mrf.mxu0
        %v8931 = vadd.f32 0.0, %v8930
        %8932 = vmatprep.mubr.bf16.mxu0 0
        %8933 = vmatmul.mubr.bf16.gmra.mxu0 %v8688
        %v8934 = vpop.f32.mrf.mxu0
        %v8935 = vadd.f32 0.0, %v8934
        %v8936 = vpop.f32.mrf.mxu0
        %v8937 = vadd.f32 0.0, %v8936
        %v8938 = vpop.f32.mrf.mxu0
        %v8939 = vadd.f32 0.0, %v8938
        %v8940 = vpop.f32.mrf.mxu0
        %v8941 = vadd.f32 0.0, %v8940
        %8942 = vmatprep.mubr.bf16.mxu0 0
        %8943 = vmatmul.mubr.bf16.gmra.mxu0 %v8689
        %v8944 = vpop.f32.mrf.mxu0
        %v8945 = vadd.f32 0.0, %v8944
        %v8946 = vpop.f32.mrf.mxu0
        %v8947 = vadd.f32 0.0, %v8946
        %v8948 = vpop.f32.mrf.mxu0
        %v8949 = vadd.f32 0.0, %v8948
        %v8950 = vpop.f32.mrf.mxu0
        %v8951 = vadd.f32 0.0, %v8950
        %8952 = vmatprep.mubr.bf16.mxu0 0
        %8953 = vmatmul.mubr.bf16.gmra.mxu0 %v8690
        %v8954 = vpop.f32.mrf.mxu0
        %v8955 = vadd.f32 0.0, %v8954
        %v8956 = vpop.f32.mrf.mxu0
        %v8957 = vadd.f32 0.0, %v8956
        %v8958 = vpop.f32.mrf.mxu0
        %v8959 = vadd.f32 0.0, %v8958
        %v8960 = vpop.f32.mrf.mxu0
        %v8961 = vadd.f32 0.0, %v8960
        %8962 = vmatprep.mubr.bf16.mxu0 0
        %8963 = vmatmul.mubr.bf16.gmra.mxu0 %v8691
        %v8964 = vpop.f32.mrf.mxu0
        %v8965 = vadd.f32 0.0, %v8964
        %v8966 = vpop.f32.mrf.mxu0
        %v8967 = vadd.f32 0.0, %v8966
        %v8968 = vpop.f32.mrf.mxu0
        %v8969 = vadd.f32 0.0, %v8968
        %v8970 = vpop.f32.mrf.mxu0
        %v8971 = vadd.f32 0.0, %v8970
        %8972 = vmatprep.mubr.bf16.mxu0 0
        %8973 = vmatmul.mubr.bf16.gmra.mxu0 %v8692
        %v8974 = vpop.f32.mrf.mxu0
        %v8975 = vadd.f32 0.0, %v8974
        %v8976 = vpop.f32.mrf.mxu0
        %v8977 = vadd.f32 0.0, %v8976
        %v8978 = vpop.f32.mrf.mxu0
        %v8979 = vadd.f32 0.0, %v8978
        %v8980 = vpop.f32.mrf.mxu0
        %v8981 = vadd.f32 0.0, %v8980
        %8982 = vdwg.mxu0
        %v8983 = vadd.f32 %v8581, %v8825
        %v8984 = vadd.f32 %v8582, %v8827
        %v8985 = vadd.f32 %v8583, %v8829
        %v8986 = vadd.f32 %v8584, %v8831
        %v8987 = vadd.f32 %v8585, %v8835
        %v8988 = vadd.f32 %v8586, %v8837
        %v8989 = vadd.f32 %v8587, %v8839
        %v8990 = vadd.f32 %v8588, %v8841
        %v8991 = vadd.f32 %v8589, %v8845
        %v8992 = vadd.f32 %v8590, %v8847
        %v8993 = vadd.f32 %v8591, %v8849
        %v8994 = vadd.f32 %v8592, %v8851
        %v8995 = vadd.f32 %v8593, %v8855
        %v8996 = vadd.f32 %v8594, %v8857
        %v8997 = vadd.f32 %v8595, %v8859
        %v8998 = vadd.f32 %v8596, %v8861
        %v8999 = vadd.f32 %v8597, %v8865
        %v9000 = vadd.f32 %v8598, %v8867
        %v9001 = vadd.f32 %v8599, %v8869
        %v9002 = vadd.f32 %v8600, %v8871
        %v9003 = vadd.f32 %v8601, %v8875
        %v9004 = vadd.f32 %v8602, %v8877
        %v9005 = vadd.f32 %v8603, %v8879
        %v9006 = vadd.f32 %v8604, %v8881
        %v9007 = vadd.f32 %v8605, %v8885
        %v9008 = vadd.f32 %v8606, %v8887
        %v9009 = vadd.f32 %v8607, %v8889
        %v9010 = vadd.f32 %v8608, %v8891
        %v9011 = vadd.f32 %v8609, %v8895
        %v9012 = vadd.f32 %v8610, %v8897
        %v9013 = vadd.f32 %v8611, %v8899
        %v9014 = vadd.f32 %v8612, %v8901
        %v9015 = vadd.f32 %v8613, %v8905
        %v9016 = vadd.f32 %v8614, %v8907
        %v9017 = vadd.f32 %v8615, %v8909
        %v9018 = vadd.f32 %v8616, %v8911
        %v9019 = vadd.f32 %v8617, %v8915
        %v9020 = vadd.f32 %v8618, %v8917
        %v9021 = vadd.f32 %v8619, %v8919
        %v9022 = vadd.f32 %v8620, %v8921
        %v9023 = vadd.f32 %v8621, %v8925
        %v9024 = vadd.f32 %v8622, %v8927
        %v9025 = vadd.f32 %v8623, %v8929
        %v9026 = vadd.f32 %v8624, %v8931
        %v9027 = vadd.f32 %v8625, %v8935
        %v9028 = vadd.f32 %v8626, %v8937
        %v9029 = vadd.f32 %v8627, %v8939
        %v9030 = vadd.f32 %v8628, %v8941
        %v9031 = vadd.f32 %v8629, %v8945
        %v9032 = vadd.f32 %v8630, %v8947
        %v9033 = vadd.f32 %v8631, %v8949
        %v9034 = vadd.f32 %v8632, %v8951
        %v9035 = vadd.f32 %v8633, %v8955
        %v9036 = vadd.f32 %v8634, %v8957
        %v9037 = vadd.f32 %v8635, %v8959
        %v9038 = vadd.f32 %v8636, %v8961
        %v9039 = vadd.f32 %v8637, %v8965
        %v9040 = vadd.f32 %v8638, %v8967
        %v9041 = vadd.f32 %v8639, %v8969
        %v9042 = vadd.f32 %v8640, %v8971
        %v9043 = vadd.f32 %v8641, %v8975
        %v9044 = vadd.f32 %v8642, %v8977
        %v9045 = vadd.f32 %v8643, %v8979
        %v9046 = vadd.f32 %v8644, %v8981
        %v9047 = vmax.f32 %v1786, 0.0
        %v9048 = vmax.f32 %v1789, 0.0
        %v9049 = vmax.f32 %v1794, 0.0
        %v9050 = vmax.f32 %v1797, 0.0
        %v9051 = vmax.f32 %v1802, 0.0
        %v9052 = vmax.f32 %v1805, 0.0
        %v9053 = vmax.f32 %v1810, 0.0
        %v9054 = vmax.f32 %v1813, 0.0
        %v9055 = vmax.f32 %v1818, 0.0
        %v9056 = vmax.f32 %v1821, 0.0
        %v9057 = vmax.f32 %v1826, 0.0
        %v9058 = vmax.f32 %v1829, 0.0
        %v9059 = vmax.f32 %v1834, 0.0
        %v9060 = vmax.f32 %v1837, 0.0
        %v9061 = vmax.f32 %v1842, 0.0
        %v9062 = vmax.f32 %v1845, 0.0
        %v9063 = vmax.f32 %v1850, 0.0
        %v9064 = vmax.f32 %v1853, 0.0
        %v9065 = vmax.f32 %v1858, 0.0
        %v9066 = vmax.f32 %v1861, 0.0
        %v9067 = vmax.f32 %v1866, 0.0
        %v9068 = vmax.f32 %v1869, 0.0
        %v9069 = vmax.f32 %v1874, 0.0
        %v9070 = vmax.f32 %v1877, 0.0
        %v9071 = vmax.f32 %v1882, 0.0
        %v9072 = vmax.f32 %v1885, 0.0
        %v9073 = vmax.f32 %v1890, 0.0
        %v9074 = vmax.f32 %v1893, 0.0
        %v9075 = vmax.f32 %v1898, 0.0
        %v9076 = vmax.f32 %v1901, 0.0
        %v9077 = vmax.f32 %v1906, 0.0
        %v9078 = vmax.f32 %v1909, 0.0
        %v9079 = vpack.c.bf16 %v9048, %v9047
        %v9080 = vpack.c.bf16 %v9050, %v9049
        %v9081 = vpack.c.bf16 %v9052, %v9051
        %v9082 = vpack.c.bf16 %v9054, %v9053
        %v9083 = vpack.c.bf16 %v9056, %v9055
        %v9084 = vpack.c.bf16 %v9058, %v9057
        %v9085 = vpack.c.bf16 %v9060, %v9059
        %v9086 = vpack.c.bf16 %v9062, %v9061
        %v9087 = vpack.c.bf16 %v9064, %v9063
        %v9088 = vpack.c.bf16 %v9066, %v9065
        %v9089 = vpack.c.bf16 %v9068, %v9067
        %v9090 = vpack.c.bf16 %v9070, %v9069
        %v9091 = vpack.c.bf16 %v9072, %v9071
        %v9092 = vpack.c.bf16 %v9074, %v9073
        %v9093 = vpack.c.bf16 %v9076, %v9075
        %v9094 = vpack.c.bf16 %v9078, %v9077
        %s9095 = scalar_lea.vmem [#allocation11], 384
        %v9096 = vld [vmem:[%s9095] sm:$0xff]
        %v9097 = vld [vmem:[%s9095 + $0x8] sm:$0xff]
        %v9098 = vld [vmem:[%s9095 + $0x10] sm:$0xff]
        %v9099 = vld [vmem:[%s9095 + $0x18] sm:$0xff]
        %v9100 = vld [vmem:[%s9095 + $0x20] sm:$0xff]
        %v9101 = vld [vmem:[%s9095 + $0x28] sm:$0xff]
        %v9102 = vld [vmem:[%s9095 + $0x30] sm:$0xff]
        %v9103 = vld [vmem:[%s9095 + $0x38] sm:$0xff]
        %v9104 = vld [vmem:[%s9095 + $0x40] sm:$0xff]
        %v9105 = vld [vmem:[%s9095 + $0x48] sm:$0xff]
        %v9106 = vld [vmem:[%s9095 + $0x50] sm:$0xff]
        %v9107 = vld [vmem:[%s9095 + $0x58] sm:$0xff]
        %v9108 = vld [vmem:[%s9095 + $0x60] sm:$0xff]
        %v9109 = vld [vmem:[%s9095 + $0x68] sm:$0xff]
        %v9110 = vld [vmem:[%s9095 + $0x70] sm:$0xff]
        %v9111 = vld [vmem:[%s9095 + $0x78] sm:$0xff]
        %v9128 = vunpack.c.l.b16 %v9096
        %v9129 = vunpack.c.h.b16 %v9096
        %v9130 = vunpack.c.l.b16 %v9097
        %v9131 = vunpack.c.h.b16 %v9097
        %v9132 = vunpack.c.l.b16 %v9098
        %v9133 = vunpack.c.h.b16 %v9098
        %v9134 = vunpack.c.l.b16 %v9099
        %v9135 = vunpack.c.h.b16 %v9099
        %v9136 = vunpack.c.l.b16 %v9100
        %v9137 = vunpack.c.h.b16 %v9100
        %v9138 = vunpack.c.l.b16 %v9101
        %v9139 = vunpack.c.h.b16 %v9101
        %v9140 = vunpack.c.l.b16 %v9102
        %v9141 = vunpack.c.h.b16 %v9102
        %v9142 = vunpack.c.l.b16 %v9103
        %v9143 = vunpack.c.h.b16 %v9103
        %v9144 = vunpack.c.l.b16 %v9104
        %v9145 = vunpack.c.h.b16 %v9104
        %v9146 = vunpack.c.l.b16 %v9105
        %v9147 = vunpack.c.h.b16 %v9105
        %v9148 = vunpack.c.l.b16 %v9106
        %v9149 = vunpack.c.h.b16 %v9106
        %v9150 = vunpack.c.l.b16 %v9107
        %v9151 = vunpack.c.h.b16 %v9107
        %v9152 = vunpack.c.l.b16 %v9108
        %v9153 = vunpack.c.h.b16 %v9108
        %v9154 = vunpack.c.l.b16 %v9109
        %v9155 = vunpack.c.h.b16 %v9109
        %v9156 = vunpack.c.l.b16 %v9110
        %v9157 = vunpack.c.h.b16 %v9110
        %v9158 = vunpack.c.l.b16 %v9111
        %v9159 = vunpack.c.h.b16 %v9111
        %v9160 = vpack.c.b16 %v9130, %v9128
        %v9161 = vpack.c.b16 %v9131, %v9129
        %v9162 = vpack.c.b16 %v9134, %v9132
        %v9163 = vpack.c.b16 %v9135, %v9133
        %v9164 = vpack.c.b16 %v9138, %v9136
        %v9165 = vpack.c.b16 %v9139, %v9137
        %v9166 = vpack.c.b16 %v9142, %v9140
        %v9167 = vpack.c.b16 %v9143, %v9141
        %v9168 = vpack.c.b16 %v9146, %v9144
        %v9169 = vpack.c.b16 %v9147, %v9145
        %v9170 = vpack.c.b16 %v9150, %v9148
        %v9171 = vpack.c.b16 %v9151, %v9149
        %v9172 = vpack.c.b16 %v9154, %v9152
        %v9173 = vpack.c.b16 %v9155, %v9153
        %v9174 = vpack.c.b16 %v9158, %v9156
        %v9175 = vpack.c.b16 %v9159, %v9157
        %9192 = vmatprep.subr.bf16.mxu0 %v9175
        %9193 = vmatpush1.bf16.msra.mxu0 %v9174
        %9194 = vmatprep.subr.bf16.mxu0 %v9173
        %9195 = vmatpush1.bf16.msra.mxu0 %v9172
        %9196 = vmatprep.subr.bf16.mxu0 %v9171
        %9197 = vmatpush1.bf16.msra.mxu0 %v9170
        %9198 = vmatprep.subr.bf16.mxu0 %v9169
        %9199 = vmatpush1.bf16.msra.mxu0 %v9168
        %9200 = vmatprep.subr.bf16.mxu0 %v9167
        %9201 = vmatpush1.bf16.msra.mxu0 %v9166
        %9202 = vmatprep.subr.bf16.mxu0 %v9165
        %9203 = vmatpush1.bf16.msra.mxu0 %v9164
        %9204 = vmatprep.subr.bf16.mxu0 %v9163
        %9205 = vmatpush1.bf16.msra.mxu0 %v9162
        %9206 = vmatprep.subr.bf16.mxu0 %v9161
        %9207 = vmatpush1.bf16.msra.mxu0 %v9160
        %9208 = vmatprep.subr.bf16.mxu0 0
        %9209 = vmatpush2.bf16.msra.mxu0 0
        %9210 = vmatprep.subr.bf16.mxu0 0
        %9211 = vmatpush2.bf16.msra.mxu0 0
        %9212 = vmatprep.subr.bf16.mxu0 0
        %9213 = vmatpush2.bf16.msra.mxu0 0
        %9214 = vmatprep.subr.bf16.mxu0 0
        %9215 = vmatpush2.bf16.msra.mxu0 0
        %9216 = vmatprep.subr.bf16.mxu0 0
        %9217 = vmatpush2.bf16.msra.mxu0 0
        %9218 = vmatprep.subr.bf16.mxu0 0
        %9219 = vmatpush2.bf16.msra.mxu0 0
        %9220 = vmatprep.subr.bf16.mxu0 0
        %9221 = vmatpush2.bf16.msra.mxu0 0
        %9222 = vmatprep.subr.bf16.mxu0 0
        %9223 = vmatpush2.bf16.msra.mxu0 0
        %9224 = vmatprep.mubr.bf16.mxu0 0
        %9225 = vmatmul.mubr.bf16.gmra.mxu0 %v9079
        %v9226 = vpop.f32.mrf.mxu0
        %v9227 = vadd.f32 0.0, %v9226
        %v9228 = vpop.f32.mrf.mxu0
        %v9229 = vadd.f32 0.0, %v9228
        %v9230 = vpop.f32.mrf.mxu0
        %v9231 = vadd.f32 0.0, %v9230
        %v9232 = vpop.f32.mrf.mxu0
        %v9233 = vadd.f32 0.0, %v9232
        %9234 = vmatprep.mubr.bf16.mxu0 0
        %9235 = vmatmul.mubr.bf16.gmra.mxu0 %v9080
        %v9236 = vpop.f32.mrf.mxu0
        %v9237 = vadd.f32 0.0, %v9236
        %v9238 = vpop.f32.mrf.mxu0
        %v9239 = vadd.f32 0.0, %v9238
        %v9240 = vpop.f32.mrf.mxu0
        %v9241 = vadd.f32 0.0, %v9240
        %v9242 = vpop.f32.mrf.mxu0
        %v9243 = vadd.f32 0.0, %v9242
        %9244 = vmatprep.mubr.bf16.mxu0 0
        %9245 = vmatmul.mubr.bf16.gmra.mxu0 %v9081
        %v9246 = vpop.f32.mrf.mxu0
        %v9247 = vadd.f32 0.0, %v9246
        %v9248 = vpop.f32.mrf.mxu0
        %v9249 = vadd.f32 0.0, %v9248
        %v9250 = vpop.f32.mrf.mxu0
        %v9251 = vadd.f32 0.0, %v9250
        %v9252 = vpop.f32.mrf.mxu0
        %v9253 = vadd.f32 0.0, %v9252
        %9254 = vmatprep.mubr.bf16.mxu0 0
        %9255 = vmatmul.mubr.bf16.gmra.mxu0 %v9082
        %v9256 = vpop.f32.mrf.mxu0
        %v9257 = vadd.f32 0.0, %v9256
        %v9258 = vpop.f32.mrf.mxu0
        %v9259 = vadd.f32 0.0, %v9258
        %v9260 = vpop.f32.mrf.mxu0
        %v9261 = vadd.f32 0.0, %v9260
        %v9262 = vpop.f32.mrf.mxu0
        %v9263 = vadd.f32 0.0, %v9262
        %9264 = vmatprep.mubr.bf16.mxu0 0
        %9265 = vmatmul.mubr.bf16.gmra.mxu0 %v9083
        %v9266 = vpop.f32.mrf.mxu0
        %v9267 = vadd.f32 0.0, %v9266
        %v9268 = vpop.f32.mrf.mxu0
        %v9269 = vadd.f32 0.0, %v9268
        %v9270 = vpop.f32.mrf.mxu0
        %v9271 = vadd.f32 0.0, %v9270
        %v9272 = vpop.f32.mrf.mxu0
        %v9273 = vadd.f32 0.0, %v9272
        %9274 = vmatprep.mubr.bf16.mxu0 0
        %9275 = vmatmul.mubr.bf16.gmra.mxu0 %v9084
        %v9276 = vpop.f32.mrf.mxu0
        %v9277 = vadd.f32 0.0, %v9276
        %v9278 = vpop.f32.mrf.mxu0
        %v9279 = vadd.f32 0.0, %v9278
        %v9280 = vpop.f32.mrf.mxu0
        %v9281 = vadd.f32 0.0, %v9280
        %v9282 = vpop.f32.mrf.mxu0
        %v9283 = vadd.f32 0.0, %v9282
        %9284 = vmatprep.mubr.bf16.mxu0 0
        %9285 = vmatmul.mubr.bf16.gmra.mxu0 %v9085
        %v9286 = vpop.f32.mrf.mxu0
        %v9287 = vadd.f32 0.0, %v9286
        %v9288 = vpop.f32.mrf.mxu0
        %v9289 = vadd.f32 0.0, %v9288
        %v9290 = vpop.f32.mrf.mxu0
        %v9291 = vadd.f32 0.0, %v9290
        %v9292 = vpop.f32.mrf.mxu0
        %v9293 = vadd.f32 0.0, %v9292
        %9294 = vmatprep.mubr.bf16.mxu0 0
        %9295 = vmatmul.mubr.bf16.gmra.mxu0 %v9086
        %v9296 = vpop.f32.mrf.mxu0
        %v9297 = vadd.f32 0.0, %v9296
        %v9298 = vpop.f32.mrf.mxu0
        %v9299 = vadd.f32 0.0, %v9298
        %v9300 = vpop.f32.mrf.mxu0
        %v9301 = vadd.f32 0.0, %v9300
        %v9302 = vpop.f32.mrf.mxu0
        %v9303 = vadd.f32 0.0, %v9302
        %9304 = vmatprep.mubr.bf16.mxu0 0
        %9305 = vmatmul.mubr.bf16.gmra.mxu0 %v9087
        %v9306 = vpop.f32.mrf.mxu0
        %v9307 = vadd.f32 0.0, %v9306
        %v9308 = vpop.f32.mrf.mxu0
        %v9309 = vadd.f32 0.0, %v9308
        %v9310 = vpop.f32.mrf.mxu0
        %v9311 = vadd.f32 0.0, %v9310
        %v9312 = vpop.f32.mrf.mxu0
        %v9313 = vadd.f32 0.0, %v9312
        %9314 = vmatprep.mubr.bf16.mxu0 0
        %9315 = vmatmul.mubr.bf16.gmra.mxu0 %v9088
        %v9316 = vpop.f32.mrf.mxu0
        %v9317 = vadd.f32 0.0, %v9316
        %v9318 = vpop.f32.mrf.mxu0
        %v9319 = vadd.f32 0.0, %v9318
        %v9320 = vpop.f32.mrf.mxu0
        %v9321 = vadd.f32 0.0, %v9320
        %v9322 = vpop.f32.mrf.mxu0
        %v9323 = vadd.f32 0.0, %v9322
        %9324 = vmatprep.mubr.bf16.mxu0 0
        %9325 = vmatmul.mubr.bf16.gmra.mxu0 %v9089
        %v9326 = vpop.f32.mrf.mxu0
        %v9327 = vadd.f32 0.0, %v9326
        %v9328 = vpop.f32.mrf.mxu0
        %v9329 = vadd.f32 0.0, %v9328
        %v9330 = vpop.f32.mrf.mxu0
        %v9331 = vadd.f32 0.0, %v9330
        %v9332 = vpop.f32.mrf.mxu0
        %v9333 = vadd.f32 0.0, %v9332
        %9334 = vmatprep.mubr.bf16.mxu0 0
        %9335 = vmatmul.mubr.bf16.gmra.mxu0 %v9090
        %v9336 = vpop.f32.mrf.mxu0
        %v9337 = vadd.f32 0.0, %v9336
        %v9338 = vpop.f32.mrf.mxu0
        %v9339 = vadd.f32 0.0, %v9338
        %v9340 = vpop.f32.mrf.mxu0
        %v9341 = vadd.f32 0.0, %v9340
        %v9342 = vpop.f32.mrf.mxu0
        %v9343 = vadd.f32 0.0, %v9342
        %9344 = vmatprep.mubr.bf16.mxu0 0
        %9345 = vmatmul.mubr.bf16.gmra.mxu0 %v9091
        %v9346 = vpop.f32.mrf.mxu0
        %v9347 = vadd.f32 0.0, %v9346
        %v9348 = vpop.f32.mrf.mxu0
        %v9349 = vadd.f32 0.0, %v9348
        %v9350 = vpop.f32.mrf.mxu0
        %v9351 = vadd.f32 0.0, %v9350
        %v9352 = vpop.f32.mrf.mxu0
        %v9353 = vadd.f32 0.0, %v9352
        %9354 = vmatprep.mubr.bf16.mxu0 0
        %9355 = vmatmul.mubr.bf16.gmra.mxu0 %v9092
        %v9356 = vpop.f32.mrf.mxu0
        %v9357 = vadd.f32 0.0, %v9356
        %v9358 = vpop.f32.mrf.mxu0
        %v9359 = vadd.f32 0.0, %v9358
        %v9360 = vpop.f32.mrf.mxu0
        %v9361 = vadd.f32 0.0, %v9360
        %v9362 = vpop.f32.mrf.mxu0
        %v9363 = vadd.f32 0.0, %v9362
        %9364 = vmatprep.mubr.bf16.mxu0 0
        %9365 = vmatmul.mubr.bf16.gmra.mxu0 %v9093
        %v9366 = vpop.f32.mrf.mxu0
        %v9367 = vadd.f32 0.0, %v9366
        %v9368 = vpop.f32.mrf.mxu0
        %v9369 = vadd.f32 0.0, %v9368
        %v9370 = vpop.f32.mrf.mxu0
        %v9371 = vadd.f32 0.0, %v9370
        %v9372 = vpop.f32.mrf.mxu0
        %v9373 = vadd.f32 0.0, %v9372
        %9374 = vmatprep.mubr.bf16.mxu0 0
        %9375 = vmatmul.mubr.bf16.gmra.mxu0 %v9094
        %v9376 = vpop.f32.mrf.mxu0
        %v9377 = vadd.f32 0.0, %v9376
        %v9378 = vpop.f32.mrf.mxu0
        %v9379 = vadd.f32 0.0, %v9378
        %v9380 = vpop.f32.mrf.mxu0
        %v9381 = vadd.f32 0.0, %v9380
        %v9382 = vpop.f32.mrf.mxu0
        %v9383 = vadd.f32 0.0, %v9382
        %9384 = vdwg.mxu0
        %v9385 = vadd.f32 %v8983, %v9227
        %v9386 = vadd.f32 %v8984, %v9229
        %v9387 = vadd.f32 %v8985, %v9231
        %v9388 = vadd.f32 %v8986, %v9233
        %v9389 = vadd.f32 %v8987, %v9237
        %v9390 = vadd.f32 %v8988, %v9239
        %v9391 = vadd.f32 %v8989, %v9241
        %v9392 = vadd.f32 %v8990, %v9243
        %v9393 = vadd.f32 %v8991, %v9247
        %v9394 = vadd.f32 %v8992, %v9249
        %v9395 = vadd.f32 %v8993, %v9251
        %v9396 = vadd.f32 %v8994, %v9253
        %v9397 = vadd.f32 %v8995, %v9257
        %v9398 = vadd.f32 %v8996, %v9259
        %v9399 = vadd.f32 %v8997, %v9261
        %v9400 = vadd.f32 %v8998, %v9263
        %v9401 = vadd.f32 %v8999, %v9267
        %v9402 = vadd.f32 %v9000, %v9269
        %v9403 = vadd.f32 %v9001, %v9271
        %v9404 = vadd.f32 %v9002, %v9273
        %v9405 = vadd.f32 %v9003, %v9277
        %v9406 = vadd.f32 %v9004, %v9279
        %v9407 = vadd.f32 %v9005, %v9281
        %v9408 = vadd.f32 %v9006, %v9283
        %v9409 = vadd.f32 %v9007, %v9287
        %v9410 = vadd.f32 %v9008, %v9289
        %v9411 = vadd.f32 %v9009, %v9291
        %v9412 = vadd.f32 %v9010, %v9293
        %v9413 = vadd.f32 %v9011, %v9297
        %v9414 = vadd.f32 %v9012, %v9299
        %v9415 = vadd.f32 %v9013, %v9301
        %v9416 = vadd.f32 %v9014, %v9303
        %v9417 = vadd.f32 %v9015, %v9307
        %v9418 = vadd.f32 %v9016, %v9309
        %v9419 = vadd.f32 %v9017, %v9311
        %v9420 = vadd.f32 %v9018, %v9313
        %v9421 = vadd.f32 %v9019, %v9317
        %v9422 = vadd.f32 %v9020, %v9319
        %v9423 = vadd.f32 %v9021, %v9321
        %v9424 = vadd.f32 %v9022, %v9323
        %v9425 = vadd.f32 %v9023, %v9327
        %v9426 = vadd.f32 %v9024, %v9329
        %v9427 = vadd.f32 %v9025, %v9331
        %v9428 = vadd.f32 %v9026, %v9333
        %v9429 = vadd.f32 %v9027, %v9337
        %v9430 = vadd.f32 %v9028, %v9339
        %v9431 = vadd.f32 %v9029, %v9341
        %v9432 = vadd.f32 %v9030, %v9343
        %v9433 = vadd.f32 %v9031, %v9347
        %v9434 = vadd.f32 %v9032, %v9349
        %v9435 = vadd.f32 %v9033, %v9351
        %v9436 = vadd.f32 %v9034, %v9353
        %v9437 = vadd.f32 %v9035, %v9357
        %v9438 = vadd.f32 %v9036, %v9359
        %v9439 = vadd.f32 %v9037, %v9361
        %v9440 = vadd.f32 %v9038, %v9363
        %v9441 = vadd.f32 %v9039, %v9367
        %v9442 = vadd.f32 %v9040, %v9369
        %v9443 = vadd.f32 %v9041, %v9371
        %v9444 = vadd.f32 %v9042, %v9373
        %v9445 = vadd.f32 %v9043, %v9377
        %v9446 = vadd.f32 %v9044, %v9379
        %v9447 = vadd.f32 %v9045, %v9381
        %v9448 = vadd.f32 %v9046, %v9383
        %9449 = vst [vmem:[%s423] sm:$0xff] %v9385
        %9450 = vst [vmem:[%s423 + $0x8] sm:$0xff] %v9386
        %9451 = vst [vmem:[%s423 + $0x10] sm:$0xff] %v9387
        %9452 = vst [vmem:[%s423 + $0x18] sm:$0xff] %v9388
        %9453 = vst [vmem:[%s423 + $0x20] sm:$0xff] %v9389
        %9454 = vst [vmem:[%s423 + $0x28] sm:$0xff] %v9390
        %9455 = vst [vmem:[%s423 + $0x30] sm:$0xff] %v9391
        %9456 = vst [vmem:[%s423 + $0x38] sm:$0xff] %v9392
        %9457 = vst [vmem:[%s423 + $0x40] sm:$0xff] %v9393
        %9458 = vst [vmem:[%s423 + $0x48] sm:$0xff] %v9394
        %9459 = vst [vmem:[%s423 + $0x50] sm:$0xff] %v9395
        %9460 = vst [vmem:[%s423 + $0x58] sm:$0xff] %v9396
        %9461 = vst [vmem:[%s423 + $0x60] sm:$0xff] %v9397
        %9462 = vst [vmem:[%s423 + $0x68] sm:$0xff] %v9398
        %9463 = vst [vmem:[%s423 + $0x70] sm:$0xff] %v9399
        %9464 = vst [vmem:[%s423 + $0x78] sm:$0xff] %v9400
        %9465 = vst [vmem:[%s423 + $0x80] sm:$0xff] %v9401
        %9466 = vst [vmem:[%s423 + $0x88] sm:$0xff] %v9402
        %9467 = vst [vmem:[%s423 + $0x90] sm:$0xff] %v9403
        %9468 = vst [vmem:[%s423 + $0x98] sm:$0xff] %v9404
        %9469 = vst [vmem:[%s423 + $0xa0] sm:$0xff] %v9405
        %9470 = vst [vmem:[%s423 + $0xa8] sm:$0xff] %v9406
        %9471 = vst [vmem:[%s423 + $0xb0] sm:$0xff] %v9407
        %9472 = vst [vmem:[%s423 + $0xb8] sm:$0xff] %v9408
        %9473 = vst [vmem:[%s423 + $0xc0] sm:$0xff] %v9409
        %9474 = vst [vmem:[%s423 + $0xc8] sm:$0xff] %v9410
        %9475 = vst [vmem:[%s423 + $0xd0] sm:$0xff] %v9411
        %9476 = vst [vmem:[%s423 + $0xd8] sm:$0xff] %v9412
        %9477 = vst [vmem:[%s423 + $0xe0] sm:$0xff] %v9413
        %9478 = vst [vmem:[%s423 + $0xe8] sm:$0xff] %v9414
        %9479 = vst [vmem:[%s423 + $0xf0] sm:$0xff] %v9415
        %9480 = vst [vmem:[%s423 + $0xf8] sm:$0xff] %v9416
        %9481 = vst [vmem:[%s423 + $0x100] sm:$0xff] %v9417
        %9482 = vst [vmem:[%s423 + $0x108] sm:$0xff] %v9418
        %9483 = vst [vmem:[%s423 + $0x110] sm:$0xff] %v9419
        %9484 = vst [vmem:[%s423 + $0x118] sm:$0xff] %v9420
        %9485 = vst [vmem:[%s423 + $0x120] sm:$0xff] %v9421
        %9486 = vst [vmem:[%s423 + $0x128] sm:$0xff] %v9422
        %9487 = vst [vmem:[%s423 + $0x130] sm:$0xff] %v9423
        %9488 = vst [vmem:[%s423 + $0x138] sm:$0xff] %v9424
        %9489 = vst [vmem:[%s423 + $0x140] sm:$0xff] %v9425
        %9490 = vst [vmem:[%s423 + $0x148] sm:$0xff] %v9426
        %9491 = vst [vmem:[%s423 + $0x150] sm:$0xff] %v9427
        %9492 = vst [vmem:[%s423 + $0x158] sm:$0xff] %v9428
        %9493 = vst [vmem:[%s423 + $0x160] sm:$0xff] %v9429
        %9494 = vst [vmem:[%s423 + $0x168] sm:$0xff] %v9430
        %9495 = vst [vmem:[%s423 + $0x170] sm:$0xff] %v9431
        %9496 = vst [vmem:[%s423 + $0x178] sm:$0xff] %v9432
        %9497 = vst [vmem:[%s423 + $0x180] sm:$0xff] %v9433
        %9498 = vst [vmem:[%s423 + $0x188] sm:$0xff] %v9434
        %9499 = vst [vmem:[%s423 + $0x190] sm:$0xff] %v9435
        %9500 = vst [vmem:[%s423 + $0x198] sm:$0xff] %v9436
        %9501 = vst [vmem:[%s423 + $0x1a0] sm:$0xff] %v9437
        %9502 = vst [vmem:[%s423 + $0x1a8] sm:$0xff] %v9438
        %9503 = vst [vmem:[%s423 + $0x1b0] sm:$0xff] %v9439
        %9504 = vst [vmem:[%s423 + $0x1b8] sm:$0xff] %v9440
        %9505 = vst [vmem:[%s423 + $0x1c0] sm:$0xff] %v9441
        %9506 = vst [vmem:[%s423 + $0x1c8] sm:$0xff] %v9442
        %9507 = vst [vmem:[%s423 + $0x1d0] sm:$0xff] %v9443
        %9508 = vst [vmem:[%s423 + $0x1d8] sm:$0xff] %v9444
        %9509 = vst [vmem:[%s423 + $0x1e0] sm:$0xff] %v9445
        %9510 = vst [vmem:[%s423 + $0x1e8] sm:$0xff] %v9446
        %9511 = vst [vmem:[%s423 + $0x1f0] sm:$0xff] %v9447
        %9512 = vst [vmem:[%s423 + $0x1f8] sm:$0xff] %v9448
        %s9513 = sand.u32 %s231, 1
        %s9514 = scalar_lea.sflag [#allocation4], %s9513
        %s9515 = sand.u32 %s231, 1
        %s9516 = smul.addr %s9515, 512
        %s9517 = scalar_lea.vmem [#allocation13], %s9516
        // Predicated region
        $region81: #{tpu_custom_call.1} parent=55 // pred_check
          %p9518 = pneg %p241
        $region82: #{tpu_custom_call.1} parent=55 // pred_check_branch
          %9520 = sbr.rel (%p9518) target = $region84
        $region83: #{tpu_custom_call.1} parent=55 // pred_region
          %s9522 = ssub.s32 8192, 8192
          %9523 = vsyncadd %s9514, %s9522
          %s9524 = smul.addr %s29, 64
          %s9525 = smul.addr %s9524, 128
          %s9526 = scalar_lea.hbm %s9, %s9525
          %s9527 = sshll.u32 %s9517, 4
          %s9528 = int_to_ptr.vmem [resolvable:$true] %s9527
          %9533 = dma.vmem_to_hbm [thread:$0]  %s9528, 8192, %s9526, %s9514, 256, 256, 16
        $region84: #{tpu_custom_call.1} parent=55 // pred_fallthru
          _
      $region56: #{tpu_custom_call.1} parent=5 // pred_fallthru
        _
      %p9534 = scmp.le.s32.totalorder 2, %s24
      // Predicated region
      $region85: #{tpu_custom_call.1} parent=5 // pred_check
        %p9535 = pneg %p9534
      $region86: #{tpu_custom_call.1} parent=5 // pred_check_branch
        %9537 = sbr.rel (%p9535) target = $region88
      $region87: #{tpu_custom_call.1} parent=5 // pred_region
        %s9538 = ssub.s32 %s24, 2
        // Predicated region
        $region89: #{tpu_custom_call.1} parent=87 // pred_check
          %p9539 = pneg %p247
        $region90: #{tpu_custom_call.1} parent=87 // pred_check_branch
          %9541 = sbr.rel (%p9539) target = $region92
        $region91: #{tpu_custom_call.1} parent=87 // pred_region
          %s9542 = sand.u32 %s232, 1
          %s9543 = scalar_lea.sflag [#allocation4], %s9542
          %s9544 = sand.u32 %s232, 1
          %s9545 = smul.addr %s9544, 512
          %s9546 = scalar_lea.vmem [#allocation13], %s9545
          %9547 = dma.done %s9543, 8192
        $region92: #{tpu_custom_call.1} parent=87 // pred_fallthru
          _
      $region88: #{tpu_custom_call.1} parent=5 // pred_fallthru
        _
    $region6: #{tpu_custom_call.1} parent=1 // loop_footer
      %s28 = sadd.s32 1, %s24
    $region7: #{tpu_custom_call.1} parent=1 // loop_footer_branch
      %23 = sbr.rel target = $region3
    $region8: #{tpu_custom_call.1} parent=1 // loop_exit
      _
    %9548 = vsyncpa [#allocation3], 1
    %s9549 = scalar_lea.sflag [#allocation3], 1
    %9550 = vsyncpa %s9549, 1
    %9551 = vsyncpa [#allocation6], 1
    %9552 = vsyncpa [#allocation9], 1
    %9553 = vsyncpa [#allocation12], 1
    %9554 = vsyncpa [#allocation4], 1
    %s9555 = scalar_lea.sflag [#allocation4], 1
    %9556 = vsyncpa %s9555, 1

</llo_original>
